<compile_context>
chip_gen: v7x
topology: tpu7x:2x2x1
jax: 0.10.0
libtpu: 0.0.40
codegen_flags: <defaults>
</compile_context>

<pallas_src>
from functools import partial

import jax
import jax.numpy as jnp
from jax import lax
from jax.experimental import pallas as pl
from jax.experimental.pallas import tpu as pltpu


# ------------------------------------------------------------------ fused kernel
def _attention_kernel(x_ref, wqkv_ref, wout_ref, bout_ref, o_ref, *, heads, scale):
    # x_ref    : (1, n, dim)        one batch element
    # wqkv_ref : (dim, 3*inner)     QKV projection (already transposed to in x out)
    # wout_ref : (inner, dim)       output projection (in x out)
    # bout_ref : (1, dim)           output projection bias
    # o_ref    : (1, n, dim)
    n = x_ref.shape[1]
    dim = x_ref.shape[2]
    inner = wout_ref.shape[0]
    dh = inner // heads

    x = x_ref[0]                                                   # (n, dim)

    # Single big MXU contraction for Q, K and V of all heads at once.
    qkv = jnp.dot(x, wqkv_ref[...], preferred_element_type=jnp.float32)  # (n, 3*inner)

    acc = jnp.zeros((n, dim), jnp.float32)
    for h in range(heads):                                         # static unroll
        q = qkv[:, h * dh:(h + 1) * dh]                            # (n, dh)
        k = qkv[:, inner + h * dh: inner + (h + 1) * dh]           # (n, dh)
        v = qkv[:, 2 * inner + h * dh: 2 * inner + (h + 1) * dh]   # (n, dh)

        # dots = q @ k^T  (contract head dim) -> lane-dense (n, n) tile
        dots = lax.dot_general(q, k, (((1,), (1,)), ((), ())),
                               preferred_element_type=jnp.float32) * scale

        # numerically-stable softmax over keys (last / lane axis)
        dots = dots - jnp.max(dots, axis=-1, keepdims=True)
        p = jnp.exp(dots)
        attn = p / jnp.sum(p, axis=-1, keepdims=True)

        ctx = jnp.dot(attn, v, preferred_element_type=jnp.float32)  # (n, dh)

        # Fold the output projection into the head loop:
        #   concat_h(ctx_h) @ W_out  ==  sum_h ctx_h @ W_out[h*dh:(h+1)*dh, :]
        acc = acc + jnp.dot(ctx, wout_ref[h * dh:(h + 1) * dh, :],
                            preferred_element_type=jnp.float32)

    o_ref[0] = (acc + bout_ref[...]).astype(o_ref.dtype)


# ------------------------------------------------------------------ wrapper
def attention_forward(x, params, *, heads):
    """x: (b, n, dim) f32. params hold PyTorch-layout weights (out_feat, in_feat)."""
    b, n, dim = x.shape
    w_qkv = jnp.transpose(params["w_qkv"]).astype(jnp.float32)      # (dim, 3*inner)
    w_out = jnp.transpose(params["w_out"]).astype(jnp.float32)      # (inner, dim)
    b_out = params["b_out"].reshape(1, dim).astype(jnp.float32)     # (1, dim)
    inner = w_out.shape[0]
    scale = float(dim) ** (-0.5)                                    # spec: dim, not dim_head

    kernel = partial(_attention_kernel, heads=heads, scale=scale)

    flops = (2 * b * n * dim * 3 * inner          # QKV projection
             + 4 * b * n * n * inner              # q@k^T and attn@v over all heads
             + 2 * b * n * inner * dim)           # output projection
    bytes_accessed = 4 * (x.size + w_qkv.size + w_out.size + b_out.size + b * n * dim)
    cost = pl.CostEstimate(flops=flops,
                           transcendentals=b * heads * n * n,
                           bytes_accessed=bytes_accessed)

    return pl.pallas_call(
        kernel,
        out_shape=jax.ShapeDtypeStruct((b, n, dim), jnp.float32),
        grid=(b,),
        in_specs=[
            pl.BlockSpec((1, n, dim), lambda i: (i, 0, 0)),
            pl.BlockSpec((dim, 3 * inner), lambda i: (0, 0)),
            pl.BlockSpec((inner, dim), lambda i: (0, 0)),
            pl.BlockSpec((1, dim), lambda i: (0, 0)),
        ],
        out_specs=pl.BlockSpec((1, n, dim), lambda i: (i, 0, 0)),
        compiler_params=pltpu.CompilerParams(dimension_semantics=("parallel",)),
        cost_estimate=cost,
    )(x.astype(jnp.float32), w_qkv, w_out, b_out)


# ------------------------------------------------------------------ params
def init_params(key, dim, heads, dim_head):
    inner = heads * dim_head
    k1, k2, k3 = jax.random.split(key, 3)
    # PyTorch nn.Linear layout: (out_features, in_features)
    w_qkv = 0.1 * jax.random.normal(k1, (3 * inner, dim), jnp.float32)
    w_out = 0.05 * jax.random.normal(k2, (dim, inner), jnp.float32)
    b_out = 0.05 * jax.random.normal(k3, (dim,), jnp.float32)
    return dict(w_qkv=w_qkv, w_out=w_out, b_out=b_out)


# ------------------------------------------------------------------ pure-JAX reference
def reference_forward(x, params, *, heads):
    b, n, dim = x.shape
    scale = float(dim) ** (-0.5)
    qkv = x @ jnp.transpose(params["w_qkv"])                        # (b, n, 3*inner)
    q, k, v = jnp.split(qkv, 3, axis=-1)

    def split_heads(t):
        return t.reshape(b, n, heads, -1).transpose(0, 2, 1, 3)      # (b, h, n, d)

    q, k, v = map(split_heads, (q, k, v))
    dots = jnp.einsum("bhid,bhjd->bhij", q, k) * scale
    attn = jax.nn.softmax(dots, axis=-1)
    out = jnp.einsum("bhij,bhjd->bhid", attn, v)
    out = out.transpose(0, 2, 1, 3).reshape(b, n, -1)
    return out @ jnp.transpose(params["w_out"]) + params["b_out"]


if __name__ == "__main__":
    key = jax.random.PRNGKey(0)
    kx, kp = jax.random.split(key)

    B, N, DIM = 2, 128, 32          # batch, sequence, model dim
    HEADS, DIM_HEAD = 8, 64         # module defaults -> inner_dim = 512

    x = jax.random.normal(kx, (B, N, DIM), jnp.float32)
    params = init_params(kp, DIM, HEADS, DIM_HEAD)

    out = attention_forward(x, params, heads=HEADS)
    out = jax.block_until_ready(out)
    assert out.shape == (B, N, DIM), out.shape

    ref = reference_forward(x, params, heads=HEADS)
    max_err = float(jnp.max(jnp.abs(out - ref)))
    if not bool(jnp.allclose(out, ref, rtol=1e-3, atol=1e-3)):
        raise AssertionError(f"Pallas Attention mismatch vs reference, max abs err={max_err}")

    print("KERNEL_OK")
</pallas_src>

<mosaic_0001>
module attributes {stable_mosaic.version = 11 : i64} {
  func.func @_attention_kernel(%arg0: i32, %arg1: memref<1x128x32xf32, #tpu.memory_space<vmem>>, %arg2: memref<32x1536xf32, #tpu.memory_space<vmem>>, %arg3: memref<512x32xf32, #tpu.memory_space<vmem>>, %arg4: memref<1x32xf32, #tpu.memory_space<vmem>>, %arg5: memref<1x128x32xf32, #tpu.memory_space<vmem>>) attributes {dimension_semantics = [#tpu.dimension_semantics<parallel>], iteration_bounds = array<i64: 2>, scalar_prefetch = 0 : i64, scratch_operands = 0 : i64, tpu.core_type = #tpu.core_type<tc>, window_params = [{transform_indices = @transform_0, window_bounds = array<i64: 1, 128, 32>}, {pipeline_mode = #tpu.pipeline_mode<synchronous>, transform_indices = @transform_1, window_bounds = array<i64: 32, 1536>}, {pipeline_mode = #tpu.pipeline_mode<synchronous>, transform_indices = @transform_2, window_bounds = array<i64: 512, 32>}, {pipeline_mode = #tpu.pipeline_mode<synchronous>, transform_indices = @transform_3, window_bounds = array<i64: 1, 32>}, {transform_indices = @transform_4, window_bounds = array<i64: 1, 128, 32>}]} {
    %c0 = arith.constant 0 : index
    %c0_0 = arith.constant 0 : index
    %c0_1 = arith.constant 0 : index
    %0 = vector.load %arg1[%c0, %c0_0, %c0_1] : memref<1x128x32xf32, #tpu.memory_space<vmem>>, vector<1x128x32xf32>
    %1 = vector.shape_cast %0 : vector<1x128x32xf32> to vector<128x32xf32>
    %c0_2 = arith.constant 0 : index
    %c0_3 = arith.constant 0 : index
    %2 = vector.load %arg2[%c0_2, %c0_3] : memref<32x1536xf32, #tpu.memory_space<vmem>>, vector<32x1536xf32>
    %cst = arith.constant dense<0.000000e+00> : vector<128x1536xf32>
    %3 = tpu.matmul %1, %2, %cst {dimension_numbers = #tpu.dot_dimension_numbers<[1], [0], [0], [1], [0, 0, 1, 1], [], []>} : vector<128x32xf32>, vector<32x1536xf32>, vector<128x1536xf32> -> vector<128x1536xf32>
    %cst_4 = arith.constant 0.000000e+00 : f32
    %4 = vector.broadcast %cst_4 : f32 to vector<128x32xf32>
    %5 = vector.extract_strided_slice %3 {offsets = [0, 0], sizes = [128, 64], strides = [1, 1]} : vector<128x1536xf32> to vector<128x64xf32>
    %6 = vector.extract_strided_slice %3 {offsets = [0, 512], sizes = [128, 64], strides = [1, 1]} : vector<128x1536xf32> to vector<128x64xf32>
    %7 = vector.extract_strided_slice %3 {offsets = [0, 1024], sizes = [128, 64], strides = [1, 1]} : vector<128x1536xf32> to vector<128x64xf32>
    %cst_5 = arith.constant dense<0.000000e+00> : vector<128x128xf32>
    %8 = tpu.matmul %5, %6, %cst_5 {dimension_numbers = #tpu.dot_dimension_numbers<[1], [1], [0], [0], [0, 0, 1, 0], [], []>} : vector<128x64xf32>, vector<128x64xf32>, vector<128x128xf32> -> vector<128x128xf32>
    %cst_6 = arith.constant 0.176776692 : f32
    %9 = vector.broadcast %cst_6 : f32 to vector<128x128xf32>
    %10 = arith.mulf %8, %9 : vector<128x128xf32>
    %cst_7 = arith.constant dense<0xFF800000> : vector<128xf32>
    %11 = vector.multi_reduction <maximumf>, %10, %cst_7 [1] : vector<128x128xf32> to vector<128xf32>
    %12 = vector.shape_cast %11 : vector<128xf32> to vector<128x1xf32>
    %13 = vector.broadcast %12 : vector<128x1xf32> to vector<128x128xf32>
    %14 = arith.subf %10, %13 : vector<128x128xf32>
    %15 = math.exp %14 : vector<128x128xf32>
    %cst_8 = arith.constant dense<0.000000e+00> : vector<128xf32>
    %16 = vector.multi_reduction <add>, %15, %cst_8 [1] : vector<128x128xf32> to vector<128xf32>
    %17 = vector.shape_cast %16 : vector<128xf32> to vector<128x1xf32>
    %18 = vector.broadcast %17 : vector<128x1xf32> to vector<128x128xf32>
    %19 = arith.divf %15, %18 : vector<128x128xf32>
    %cst_9 = arith.constant dense<0.000000e+00> : vector<128x64xf32>
    %20 = tpu.matmul %19, %7, %cst_9 {dimension_numbers = #tpu.dot_dimension_numbers<[1], [0], [0], [1], [0, 0, 1, 1], [], []>} : vector<128x128xf32>, vector<128x64xf32>, vector<128x64xf32> -> vector<128x64xf32>
    %c0_10 = arith.constant 0 : index
    %c0_11 = arith.constant 0 : index
    %21 = vector.load %arg3[%c0_10, %c0_11] : memref<512x32xf32, #tpu.memory_space<vmem>>, vector<64x32xf32>
    %cst_12 = arith.constant dense<0.000000e+00> : vector<128x32xf32>
    %22 = tpu.matmul %20, %21, %cst_12 {dimension_numbers = #tpu.dot_dimension_numbers<[1], [0], [0], [1], [0, 0, 1, 1], [], []>} : vector<128x64xf32>, vector<64x32xf32>, vector<128x32xf32> -> vector<128x32xf32>
    %23 = arith.addf %4, %22 : vector<128x32xf32>
    %24 = vector.extract_strided_slice %3 {offsets = [0, 64], sizes = [128, 64], strides = [1, 1]} : vector<128x1536xf32> to vector<128x64xf32>
    %25 = vector.extract_strided_slice %3 {offsets = [0, 576], sizes = [128, 64], strides = [1, 1]} : vector<128x1536xf32> to vector<128x64xf32>
    %26 = vector.extract_strided_slice %3 {offsets = [0, 1088], sizes = [128, 64], strides = [1, 1]} : vector<128x1536xf32> to vector<128x64xf32>
    %cst_13 = arith.constant dense<0.000000e+00> : vector<128x128xf32>
    %27 = tpu.matmul %24, %25, %cst_13 {dimension_numbers = #tpu.dot_dimension_numbers<[1], [1], [0], [0], [0, 0, 1, 0], [], []>} : vector<128x64xf32>, vector<128x64xf32>, vector<128x128xf32> -> vector<128x128xf32>
    %cst_14 = arith.constant 0.176776692 : f32
    %28 = vector.broadcast %cst_14 : f32 to vector<128x128xf32>
    %29 = arith.mulf %27, %28 : vector<128x128xf32>
    %cst_15 = arith.constant dense<0xFF800000> : vector<128xf32>
    %30 = vector.multi_reduction <maximumf>, %29, %cst_15 [1] : vector<128x128xf32> to vector<128xf32>
    %31 = vector.shape_cast %30 : vector<128xf32> to vector<128x1xf32>
    %32 = vector.broadcast %31 : vector<128x1xf32> to vector<128x128xf32>
    %33 = arith.subf %29, %32 : vector<128x128xf32>
    %34 = math.exp %33 : vector<128x128xf32>
    %cst_16 = arith.constant dense<0.000000e+00> : vector<128xf32>
    %35 = vector.multi_reduction <add>, %34, %cst_16 [1] : vector<128x128xf32> to vector<128xf32>
    %36 = vector.shape_cast %35 : vector<128xf32> to vector<128x1xf32>
    %37 = vector.broadcast %36 : vector<128x1xf32> to vector<128x128xf32>
    %38 = arith.divf %34, %37 : vector<128x128xf32>
    %cst_17 = arith.constant dense<0.000000e+00> : vector<128x64xf32>
    %39 = tpu.matmul %38, %26, %cst_17 {dimension_numbers = #tpu.dot_dimension_numbers<[1], [0], [0], [1], [0, 0, 1, 1], [], []>} : vector<128x128xf32>, vector<128x64xf32>, vector<128x64xf32> -> vector<128x64xf32>
    %c64 = arith.constant 64 : index
    %c0_18 = arith.constant 0 : index
    %40 = vector.load %arg3[%c64, %c0_18] : memref<512x32xf32, #tpu.memory_space<vmem>>, vector<64x32xf32>
    %cst_19 = arith.constant dense<0.000000e+00> : vector<128x32xf32>
    %41 = tpu.matmul %39, %40, %cst_19 {dimension_numbers = #tpu.dot_dimension_numbers<[1], [0], [0], [1], [0, 0, 1, 1], [], []>} : vector<128x64xf32>, vector<64x32xf32>, vector<128x32xf32> -> vector<128x32xf32>
    %42 = arith.addf %23, %41 : vector<128x32xf32>
    %43 = vector.extract_strided_slice %3 {offsets = [0, 128], sizes = [128, 64], strides = [1, 1]} : vector<128x1536xf32> to vector<128x64xf32>
    %44 = vector.extract_strided_slice %3 {offsets = [0, 640], sizes = [128, 64], strides = [1, 1]} : vector<128x1536xf32> to vector<128x64xf32>
    %45 = vector.extract_strided_slice %3 {offsets = [0, 1152], sizes = [128, 64], strides = [1, 1]} : vector<128x1536xf32> to vector<128x64xf32>
    %cst_20 = arith.constant dense<0.000000e+00> : vector<128x128xf32>
    %46 = tpu.matmul %43, %44, %cst_20 {dimension_numbers = #tpu.dot_dimension_numbers<[1], [1], [0], [0], [0, 0, 1, 0], [], []>} : vector<128x64xf32>, vector<128x64xf32>, vector<128x128xf32> -> vector<128x128xf32>
    %cst_21 = arith.constant 0.176776692 : f32
    %47 = vector.broadcast %cst_21 : f32 to vector<128x128xf32>
    %48 = arith.mulf %46, %47 : vector<128x128xf32>
    %cst_22 = arith.constant dense<0xFF800000> : vector<128xf32>
    %49 = vector.multi_reduction <maximumf>, %48, %cst_22 [1] : vector<128x128xf32> to vector<128xf32>
    %50 = vector.shape_cast %49 : vector<128xf32> to vector<128x1xf32>
    %51 = vector.broadcast %50 : vector<128x1xf32> to vector<128x128xf32>
    %52 = arith.subf %48, %51 : vector<128x128xf32>
    %53 = math.exp %52 : vector<128x128xf32>
    %cst_23 = arith.constant dense<0.000000e+00> : vector<128xf32>
    %54 = vector.multi_reduction <add>, %53, %cst_23 [1] : vector<128x128xf32> to vector<128xf32>
    %55 = vector.shape_cast %54 : vector<128xf32> to vector<128x1xf32>
    %56 = vector.broadcast %55 : vector<128x1xf32> to vector<128x128xf32>
    %57 = arith.divf %53, %56 : vector<128x128xf32>
    %cst_24 = arith.constant dense<0.000000e+00> : vector<128x64xf32>
    %58 = tpu.matmul %57, %45, %cst_24 {dimension_numbers = #tpu.dot_dimension_numbers<[1], [0], [0], [1], [0, 0, 1, 1], [], []>} : vector<128x128xf32>, vector<128x64xf32>, vector<128x64xf32> -> vector<128x64xf32>
    %c128 = arith.constant 128 : index
    %c0_25 = arith.constant 0 : index
    %59 = vector.load %arg3[%c128, %c0_25] : memref<512x32xf32, #tpu.memory_space<vmem>>, vector<64x32xf32>
    %cst_26 = arith.constant dense<0.000000e+00> : vector<128x32xf32>
    %60 = tpu.matmul %58, %59, %cst_26 {dimension_numbers = #tpu.dot_dimension_numbers<[1], [0], [0], [1], [0, 0, 1, 1], [], []>} : vector<128x64xf32>, vector<64x32xf32>, vector<128x32xf32> -> vector<128x32xf32>
    %61 = arith.addf %42, %60 : vector<128x32xf32>
    %62 = vector.extract_strided_slice %3 {offsets = [0, 192], sizes = [128, 64], strides = [1, 1]} : vector<128x1536xf32> to vector<128x64xf32>
    %63 = vector.extract_strided_slice %3 {offsets = [0, 704], sizes = [128, 64], strides = [1, 1]} : vector<128x1536xf32> to vector<128x64xf32>
    %64 = vector.extract_strided_slice %3 {offsets = [0, 1216], sizes = [128, 64], strides = [1, 1]} : vector<128x1536xf32> to vector<128x64xf32>
    %cst_27 = arith.constant dense<0.000000e+00> : vector<128x128xf32>
    %65 = tpu.matmul %62, %63, %cst_27 {dimension_numbers = #tpu.dot_dimension_numbers<[1], [1], [0], [0], [0, 0, 1, 0], [], []>} : vector<128x64xf32>, vector<128x64xf32>, vector<128x128xf32> -> vector<128x128xf32>
    %cst_28 = arith.constant 0.176776692 : f32
    %66 = vector.broadcast %cst_28 : f32 to vector<128x128xf32>
    %67 = arith.mulf %65, %66 : vector<128x128xf32>
    %cst_29 = arith.constant dense<0xFF800000> : vector<128xf32>
    %68 = vector.multi_reduction <maximumf>, %67, %cst_29 [1] : vector<128x128xf32> to vector<128xf32>
    %69 = vector.shape_cast %68 : vector<128xf32> to vector<128x1xf32>
    %70 = vector.broadcast %69 : vector<128x1xf32> to vector<128x128xf32>
    %71 = arith.subf %67, %70 : vector<128x128xf32>
    %72 = math.exp %71 : vector<128x128xf32>
    %cst_30 = arith.constant dense<0.000000e+00> : vector<128xf32>
    %73 = vector.multi_reduction <add>, %72, %cst_30 [1] : vector<128x128xf32> to vector<128xf32>
    %74 = vector.shape_cast %73 : vector<128xf32> to vector<128x1xf32>
    %75 = vector.broadcast %74 : vector<128x1xf32> to vector<128x128xf32>
    %76 = arith.divf %72, %75 : vector<128x128xf32>
    %cst_31 = arith.constant dense<0.000000e+00> : vector<128x64xf32>
    %77 = tpu.matmul %76, %64, %cst_31 {dimension_numbers = #tpu.dot_dimension_numbers<[1], [0], [0], [1], [0, 0, 1, 1], [], []>} : vector<128x128xf32>, vector<128x64xf32>, vector<128x64xf32> -> vector<128x64xf32>
    %c192 = arith.constant 192 : index
    %c0_32 = arith.constant 0 : index
    %78 = vector.load %arg3[%c192, %c0_32] : memref<512x32xf32, #tpu.memory_space<vmem>>, vector<64x32xf32>
    %cst_33 = arith.constant dense<0.000000e+00> : vector<128x32xf32>
    %79 = tpu.matmul %77, %78, %cst_33 {dimension_numbers = #tpu.dot_dimension_numbers<[1], [0], [0], [1], [0, 0, 1, 1], [], []>} : vector<128x64xf32>, vector<64x32xf32>, vector<128x32xf32> -> vector<128x32xf32>
    %80 = arith.addf %61, %79 : vector<128x32xf32>
    %81 = vector.extract_strided_slice %3 {offsets = [0, 256], sizes = [128, 64], strides = [1, 1]} : vector<128x1536xf32> to vector<128x64xf32>
    %82 = vector.extract_strided_slice %3 {offsets = [0, 768], sizes = [128, 64], strides = [1, 1]} : vector<128x1536xf32> to vector<128x64xf32>
    %83 = vector.extract_strided_slice %3 {offsets = [0, 1280], sizes = [128, 64], strides = [1, 1]} : vector<128x1536xf32> to vector<128x64xf32>
    %cst_34 = arith.constant dense<0.000000e+00> : vector<128x128xf32>
    %84 = tpu.matmul %81, %82, %cst_34 {dimension_numbers = #tpu.dot_dimension_numbers<[1], [1], [0], [0], [0, 0, 1, 0], [], []>} : vector<128x64xf32>, vector<128x64xf32>, vector<128x128xf32> -> vector<128x128xf32>
    %cst_35 = arith.constant 0.176776692 : f32
    %85 = vector.broadcast %cst_35 : f32 to vector<128x128xf32>
    %86 = arith.mulf %84, %85 : vector<128x128xf32>
    %cst_36 = arith.constant dense<0xFF800000> : vector<128xf32>
    %87 = vector.multi_reduction <maximumf>, %86, %cst_36 [1] : vector<128x128xf32> to vector<128xf32>
    %88 = vector.shape_cast %87 : vector<128xf32> to vector<128x1xf32>
    %89 = vector.broadcast %88 : vector<128x1xf32> to vector<128x128xf32>
    %90 = arith.subf %86, %89 : vector<128x128xf32>
    %91 = math.exp %90 : vector<128x128xf32>
    %cst_37 = arith.constant dense<0.000000e+00> : vector<128xf32>
    %92 = vector.multi_reduction <add>, %91, %cst_37 [1] : vector<128x128xf32> to vector<128xf32>
    %93 = vector.shape_cast %92 : vector<128xf32> to vector<128x1xf32>
    %94 = vector.broadcast %93 : vector<128x1xf32> to vector<128x128xf32>
    %95 = arith.divf %91, %94 : vector<128x128xf32>
    %cst_38 = arith.constant dense<0.000000e+00> : vector<128x64xf32>
    %96 = tpu.matmul %95, %83, %cst_38 {dimension_numbers = #tpu.dot_dimension_numbers<[1], [0], [0], [1], [0, 0, 1, 1], [], []>} : vector<128x128xf32>, vector<128x64xf32>, vector<128x64xf32> -> vector<128x64xf32>
    %c256 = arith.constant 256 : index
    %c0_39 = arith.constant 0 : index
    %97 = vector.load %arg3[%c256, %c0_39] : memref<512x32xf32, #tpu.memory_space<vmem>>, vector<64x32xf32>
    %cst_40 = arith.constant dense<0.000000e+00> : vector<128x32xf32>
    %98 = tpu.matmul %96, %97, %cst_40 {dimension_numbers = #tpu.dot_dimension_numbers<[1], [0], [0], [1], [0, 0, 1, 1], [], []>} : vector<128x64xf32>, vector<64x32xf32>, vector<128x32xf32> -> vector<128x32xf32>
    %99 = arith.addf %80, %98 : vector<128x32xf32>
    %100 = vector.extract_strided_slice %3 {offsets = [0, 320], sizes = [128, 64], strides = [1, 1]} : vector<128x1536xf32> to vector<128x64xf32>
    %101 = vector.extract_strided_slice %3 {offsets = [0, 832], sizes = [128, 64], strides = [1, 1]} : vector<128x1536xf32> to vector<128x64xf32>
    %102 = vector.extract_strided_slice %3 {offsets = [0, 1344], sizes = [128, 64], strides = [1, 1]} : vector<128x1536xf32> to vector<128x64xf32>
    %cst_41 = arith.constant dense<0.000000e+00> : vector<128x128xf32>
    %103 = tpu.matmul %100, %101, %cst_41 {dimension_numbers = #tpu.dot_dimension_numbers<[1], [1], [0], [0], [0, 0, 1, 0], [], []>} : vector<128x64xf32>, vector<128x64xf32>, vector<128x128xf32> -> vector<128x128xf32>
    %cst_42 = arith.constant 0.176776692 : f32
    %104 = vector.broadcast %cst_42 : f32 to vector<128x128xf32>
    %105 = arith.mulf %103, %104 : vector<128x128xf32>
    %cst_43 = arith.constant dense<0xFF800000> : vector<128xf32>
    %106 = vector.multi_reduction <maximumf>, %105, %cst_43 [1] : vector<128x128xf32> to vector<128xf32>
    %107 = vector.shape_cast %106 : vector<128xf32> to vector<128x1xf32>
    %108 = vector.broadcast %107 : vector<128x1xf32> to vector<128x128xf32>
    %109 = arith.subf %105, %108 : vector<128x128xf32>
    %110 = math.exp %109 : vector<128x128xf32>
    %cst_44 = arith.constant dense<0.000000e+00> : vector<128xf32>
    %111 = vector.multi_reduction <add>, %110, %cst_44 [1] : vector<128x128xf32> to vector<128xf32>
    %112 = vector.shape_cast %111 : vector<128xf32> to vector<128x1xf32>
    %113 = vector.broadcast %112 : vector<128x1xf32> to vector<128x128xf32>
    %114 = arith.divf %110, %113 : vector<128x128xf32>
    %cst_45 = arith.constant dense<0.000000e+00> : vector<128x64xf32>
    %115 = tpu.matmul %114, %102, %cst_45 {dimension_numbers = #tpu.dot_dimension_numbers<[1], [0], [0], [1], [0, 0, 1, 1], [], []>} : vector<128x128xf32>, vector<128x64xf32>, vector<128x64xf32> -> vector<128x64xf32>
    %c320 = arith.constant 320 : index
    %c0_46 = arith.constant 0 : index
    %116 = vector.load %arg3[%c320, %c0_46] : memref<512x32xf32, #tpu.memory_space<vmem>>, vector<64x32xf32>
    %cst_47 = arith.constant dense<0.000000e+00> : vector<128x32xf32>
    %117 = tpu.matmul %115, %116, %cst_47 {dimension_numbers = #tpu.dot_dimension_numbers<[1], [0], [0], [1], [0, 0, 1, 1], [], []>} : vector<128x64xf32>, vector<64x32xf32>, vector<128x32xf32> -> vector<128x32xf32>
    %118 = arith.addf %99, %117 : vector<128x32xf32>
    %119 = vector.extract_strided_slice %3 {offsets = [0, 384], sizes = [128, 64], strides = [1, 1]} : vector<128x1536xf32> to vector<128x64xf32>
    %120 = vector.extract_strided_slice %3 {offsets = [0, 896], sizes = [128, 64], strides = [1, 1]} : vector<128x1536xf32> to vector<128x64xf32>
    %121 = vector.extract_strided_slice %3 {offsets = [0, 1408], sizes = [128, 64], strides = [1, 1]} : vector<128x1536xf32> to vector<128x64xf32>
    %cst_48 = arith.constant dense<0.000000e+00> : vector<128x128xf32>
    %122 = tpu.matmul %119, %120, %cst_48 {dimension_numbers = #tpu.dot_dimension_numbers<[1], [1], [0], [0], [0, 0, 1, 0], [], []>} : vector<128x64xf32>, vector<128x64xf32>, vector<128x128xf32> -> vector<128x128xf32>
    %cst_49 = arith.constant 0.176776692 : f32
    %123 = vector.broadcast %cst_49 : f32 to vector<128x128xf32>
    %124 = arith.mulf %122, %123 : vector<128x128xf32>
    %cst_50 = arith.constant dense<0xFF800000> : vector<128xf32>
    %125 = vector.multi_reduction <maximumf>, %124, %cst_50 [1] : vector<128x128xf32> to vector<128xf32>
    %126 = vector.shape_cast %125 : vector<128xf32> to vector<128x1xf32>
    %127 = vector.broadcast %126 : vector<128x1xf32> to vector<128x128xf32>
    %128 = arith.subf %124, %127 : vector<128x128xf32>
    %129 = math.exp %128 : vector<128x128xf32>
    %cst_51 = arith.constant dense<0.000000e+00> : vector<128xf32>
    %130 = vector.multi_reduction <add>, %129, %cst_51 [1] : vector<128x128xf32> to vector<128xf32>
    %131 = vector.shape_cast %130 : vector<128xf32> to vector<128x1xf32>
    %132 = vector.broadcast %131 : vector<128x1xf32> to vector<128x128xf32>
    %133 = arith.divf %129, %132 : vector<128x128xf32>
    %cst_52 = arith.constant dense<0.000000e+00> : vector<128x64xf32>
    %134 = tpu.matmul %133, %121, %cst_52 {dimension_numbers = #tpu.dot_dimension_numbers<[1], [0], [0], [1], [0, 0, 1, 1], [], []>} : vector<128x128xf32>, vector<128x64xf32>, vector<128x64xf32> -> vector<128x64xf32>
    %c384 = arith.constant 384 : index
    %c0_53 = arith.constant 0 : index
    %135 = vector.load %arg3[%c384, %c0_53] : memref<512x32xf32, #tpu.memory_space<vmem>>, vector<64x32xf32>
    %cst_54 = arith.constant dense<0.000000e+00> : vector<128x32xf32>
    %136 = tpu.matmul %134, %135, %cst_54 {dimension_numbers = #tpu.dot_dimension_numbers<[1], [0], [0], [1], [0, 0, 1, 1], [], []>} : vector<128x64xf32>, vector<64x32xf32>, vector<128x32xf32> -> vector<128x32xf32>
    %137 = arith.addf %118, %136 : vector<128x32xf32>
    %138 = vector.extract_strided_slice %3 {offsets = [0, 448], sizes = [128, 64], strides = [1, 1]} : vector<128x1536xf32> to vector<128x64xf32>
    %139 = vector.extract_strided_slice %3 {offsets = [0, 960], sizes = [128, 64], strides = [1, 1]} : vector<128x1536xf32> to vector<128x64xf32>
    %140 = vector.extract_strided_slice %3 {offsets = [0, 1472], sizes = [128, 64], strides = [1, 1]} : vector<128x1536xf32> to vector<128x64xf32>
    %cst_55 = arith.constant dense<0.000000e+00> : vector<128x128xf32>
    %141 = tpu.matmul %138, %139, %cst_55 {dimension_numbers = #tpu.dot_dimension_numbers<[1], [1], [0], [0], [0, 0, 1, 0], [], []>} : vector<128x64xf32>, vector<128x64xf32>, vector<128x128xf32> -> vector<128x128xf32>
    %cst_56 = arith.constant 0.176776692 : f32
    %142 = vector.broadcast %cst_56 : f32 to vector<128x128xf32>
    %143 = arith.mulf %141, %142 : vector<128x128xf32>
    %cst_57 = arith.constant dense<0xFF800000> : vector<128xf32>
    %144 = vector.multi_reduction <maximumf>, %143, %cst_57 [1] : vector<128x128xf32> to vector<128xf32>
    %145 = vector.shape_cast %144 : vector<128xf32> to vector<128x1xf32>
    %146 = vector.broadcast %145 : vector<128x1xf32> to vector<128x128xf32>
    %147 = arith.subf %143, %146 : vector<128x128xf32>
    %148 = math.exp %147 : vector<128x128xf32>
    %cst_58 = arith.constant dense<0.000000e+00> : vector<128xf32>
    %149 = vector.multi_reduction <add>, %148, %cst_58 [1] : vector<128x128xf32> to vector<128xf32>
    %150 = vector.shape_cast %149 : vector<128xf32> to vector<128x1xf32>
    %151 = vector.broadcast %150 : vector<128x1xf32> to vector<128x128xf32>
    %152 = arith.divf %148, %151 : vector<128x128xf32>
    %cst_59 = arith.constant dense<0.000000e+00> : vector<128x64xf32>
    %153 = tpu.matmul %152, %140, %cst_59 {dimension_numbers = #tpu.dot_dimension_numbers<[1], [0], [0], [1], [0, 0, 1, 1], [], []>} : vector<128x128xf32>, vector<128x64xf32>, vector<128x64xf32> -> vector<128x64xf32>
    %c448 = arith.constant 448 : index
    %c0_60 = arith.constant 0 : index
    %154 = vector.load %arg3[%c448, %c0_60] : memref<512x32xf32, #tpu.memory_space<vmem>>, vector<64x32xf32>
    %cst_61 = arith.constant dense<0.000000e+00> : vector<128x32xf32>
    %155 = tpu.matmul %153, %154, %cst_61 {dimension_numbers = #tpu.dot_dimension_numbers<[1], [0], [0], [1], [0, 0, 1, 1], [], []>} : vector<128x64xf32>, vector<64x32xf32>, vector<128x32xf32> -> vector<128x32xf32>
    %156 = arith.addf %137, %155 : vector<128x32xf32>
    %c0_62 = arith.constant 0 : index
    %c0_63 = arith.constant 0 : index
    %157 = vector.load %arg4[%c0_62, %c0_63] : memref<1x32xf32, #tpu.memory_space<vmem>>, vector<1x32xf32>
    %158 = vector.broadcast %157 : vector<1x32xf32> to vector<128x32xf32>
    %159 = arith.addf %156, %158 : vector<128x32xf32>
    %c0_64 = arith.constant 0 : index
    %c0_65 = arith.constant 0 : index
    %c0_66 = arith.constant 0 : index
    %160 = vector.load %arg5[%c0_64, %c0_65, %c0_66] : memref<1x128x32xf32, #tpu.memory_space<vmem>>, vector<1x128x32xf32>
    %161 = vector.shape_cast %160 : vector<1x128x32xf32> to vector<128x32xf32>
    %162 = vector.shape_cast %159 : vector<128x32xf32> to vector<1x128x32xf32>
    tpu.vector_store %arg5[%c0_64, %c0_65, %c0_66], %162 {strides = array<i32>} : memref<1x128x32xf32, #tpu.memory_space<vmem>>, vector<1x128x32xf32>,
    return
  }
  func.func @transform_0(%arg0: i32) -> (i32, i32, i32) {
    %c0_i32 = arith.constant 0 : i32
    %c0_i32_0 = arith.constant 0 : i32
    %c0_i32_1 = arith.constant 0 : i32
    return %arg0, %c0_i32, %c0_i32_0 : i32, i32, i32
  }
  func.func @transform_1(%arg0: i32) -> (i32, i32) {
    %c0_i32 = arith.constant 0 : i32
    %c0_i32_0 = arith.constant 0 : i32
    %c0_i32_1 = arith.constant 0 : i32
    return %c0_i32, %c0_i32_0 : i32, i32
  }
  func.func @transform_2(%arg0: i32) -> (i32, i32) {
    %c0_i32 = arith.constant 0 : i32
    %c0_i32_0 = arith.constant 0 : i32
    %c0_i32_1 = arith.constant 0 : i32
    return %c0_i32, %c0_i32_0 : i32, i32
  }
  func.func @transform_3(%arg0: i32) -> (i32, i32) {
    %c0_i32 = arith.constant 0 : i32
    %c0_i32_0 = arith.constant 0 : i32
    %c0_i32_1 = arith.constant 0 : i32
    return %c0_i32, %c0_i32_0 : i32, i32
  }
  func.func @transform_4(%arg0: i32) -> (i32, i32, i32) {
    %c0_i32 = arith.constant 0 : i32
    %c0_i32_0 = arith.constant 0 : i32
    %c0_i32_1 = arith.constant 0 : i32
    return %arg0, %c0_i32, %c0_i32_0 : i32, i32, i32
  }
}

</mosaic_0001>

<llo_original>
// kernel: tpu_custom_call.1
$region0: #{tpu_custom_call.1}
  #allocation0 [shape = 'u32[]', space=smem, size = 0x4, offset = 0x4, fixed_abs, tag = 'smem constant byte address 0x4 - core index']
  #allocation1 [shape = 'u32[144,128]{1,0:T(1,128)}', space=vmem, size = 0x12000, scoped, tag = 'internal scratch']
  %s0 = inlined_call_operand.vmem [shape: f32[2,128,32], index: 0, kind: input, shape index: {}]
  %s1 = inlined_call_operand.vmem [shape: f32[32,1536], index: 1, kind: input, shape index: {}]
  %s2 = inlined_call_operand.vmem [shape: f32[512,32], index: 2, kind: input, shape index: {}]
  %s3 = inlined_call_operand.vmem [shape: f32[1,32], index: 3, kind: input, shape index: {}]
  %s4 = inlined_call_operand.vmem [shape: f32[2,128,32], index: 4, kind: output, shape index: {}]
  %s5 = sld [smem:[#allocation0]]
  $region49: #{tpu_custom_call.1} parent=0
    _
  %s7 = ssub.s32 1, %s5
  %s8 = scalar_select 0, %s7, %s5
  loop: start=0, step=1, limit=4
  $region2: #{tpu_custom_call.1} parent=0 // loop_pre_header
    _
  $region3: #{tpu_custom_call.1} parent=0 // loop_header
    %s10 = sphi 0, %s14
    %p11 = scmp.ge.s32.totalorder %s10, 4
    %s20 = sphi 0, %s22
    %s23 = sphi 0, %s20
    %s24 = sphi 0, %s23
    %s40 = sphi 0, %s24
    %s44 = sphi 0, %s44
    %s46 = sphi 0, %s44
    %s47 = sphi 0, %s46
    %s61 = sphi 0, %s47
    %s65 = sphi 0, %s65
    %s67 = sphi 0, %s65
    %s68 = sphi 0, %s67
    %s82 = sphi 0, %s68
    %s86 = sphi 0, %s86
    %s88 = sphi 0, %s86
    %s89 = sphi 0, %s88
    %s103 = sphi 0, %s89
    %s109 = sphi 0, %s111
    %s112 = sphi 0, %s109
    %s113 = sphi 0, %s112
    %s129 = sphi 0, %s113
  $region4: #{tpu_custom_call.1} parent=0 // loop_header_branch
    %13 = sbr.rel (%p11) target = $region8
  $region5: #{tpu_custom_call.1} parent=0 // loop_body
    %s15 = ssub.s32 %s10, 1
    %s16 = ssub.s32 %s10, 2
    %s17 = sadd.s32 %s10, 1
    %s18 = ssub.s32 %s10, %s17
    %p19 = scmp.eq.s32.totalorder %s18, 0
    %s21 = sadd.s32 %s20, 1
    %s22 = scalar_select %p19, %s20, %s21
    %p25 = pneg %p19
    %p26 = scmp.eq.s32.totalorder %s10, 1
    %p27 = por %p25, %p26
    %p28 = scmp.ne.s32.totalorder %s20, %s23
    %p29 = scmp.eq.s32.totalorder %s10, 0
    %p30 = por %p28, %p29
    %p31 = scmp.ne.s32.totalorder %s20, %s23
    %p32 = scmp.eq.s32.totalorder %s15, 1
    %p33 = por %p31, %p32
    %p34 = scmp.ne.s32.totalorder %s23, %s24
    %p35 = scmp.eq.s32.totalorder %s15, 0
    %p36 = por %p34, %p35
    %p37 = scmp.ne.s32.totalorder %s23, %s24
    %p38 = scmp.eq.s32.totalorder %s16, 1
    %p39 = por %p37, %p38
    %p41 = scmp.ne.s32.totalorder %s24, %s40
    %p42 = scmp.eq.s32.totalorder %s16, 0
    %p43 = por %p41, %p42
    %s45 = sadd.s32 %s44, 1
    %p48 = scmp.eq.s32.totalorder %s10, 1
    %p49 = scmp.ne.s32.totalorder %s44, %s46
    %p50 = scmp.eq.s32.totalorder %s10, 0
    %p51 = por %p49, %p50
    %p52 = scmp.ne.s32.totalorder %s44, %s46
    %p53 = scmp.eq.s32.totalorder %s15, 1
    %p54 = por %p52, %p53
    %p55 = scmp.ne.s32.totalorder %s46, %s47
    %p56 = scmp.eq.s32.totalorder %s15, 0
    %p57 = por %p55, %p56
    %p58 = scmp.ne.s32.totalorder %s46, %s47
    %p59 = scmp.eq.s32.totalorder %s16, 1
    %p60 = por %p58, %p59
    %p62 = scmp.ne.s32.totalorder %s47, %s61
    %p63 = scmp.eq.s32.totalorder %s16, 0
    %p64 = por %p62, %p63
    %s66 = sadd.s32 %s65, 1
    %p69 = scmp.eq.s32.totalorder %s10, 1
    %p70 = scmp.ne.s32.totalorder %s65, %s67
    %p71 = scmp.eq.s32.totalorder %s10, 0
    %p72 = por %p70, %p71
    %p73 = scmp.ne.s32.totalorder %s65, %s67
    %p74 = scmp.eq.s32.totalorder %s15, 1
    %p75 = por %p73, %p74
    %p76 = scmp.ne.s32.totalorder %s67, %s68
    %p77 = scmp.eq.s32.totalorder %s15, 0
    %p78 = por %p76, %p77
    %p79 = scmp.ne.s32.totalorder %s67, %s68
    %p80 = scmp.eq.s32.totalorder %s16, 1
    %p81 = por %p79, %p80
    %p83 = scmp.ne.s32.totalorder %s68, %s82
    %p84 = scmp.eq.s32.totalorder %s16, 0
    %p85 = por %p83, %p84
    %s87 = sadd.s32 %s86, 1
    %p90 = scmp.eq.s32.totalorder %s10, 1
    %p91 = scmp.ne.s32.totalorder %s86, %s88
    %p92 = scmp.eq.s32.totalorder %s10, 0
    %p93 = por %p91, %p92
    %p94 = scmp.ne.s32.totalorder %s86, %s88
    %p95 = scmp.eq.s32.totalorder %s15, 1
    %p96 = por %p94, %p95
    %p97 = scmp.ne.s32.totalorder %s88, %s89
    %p98 = scmp.eq.s32.totalorder %s15, 0
    %p99 = por %p97, %p98
    %p100 = scmp.ne.s32.totalorder %s88, %s89
    %p101 = scmp.eq.s32.totalorder %s16, 1
    %p102 = por %p100, %p101
    %p104 = scmp.ne.s32.totalorder %s89, %s103
    %p105 = scmp.eq.s32.totalorder %s16, 0
    %p106 = por %p104, %p105
    %s107 = ssub.s32 %s10, %s17
    %p108 = scmp.eq.s32.totalorder %s107, 0
    %s110 = sadd.s32 %s109, 1
    %s111 = scalar_select %p108, %s109, %s110
    %p114 = pneg %p108
    %p115 = scmp.eq.s32.totalorder %s10, 1
    %p116 = por %p114, %p115
    %p117 = scmp.ne.s32.totalorder %s109, %s112
    %p118 = scmp.eq.s32.totalorder %s10, 0
    %p119 = por %p117, %p118
    %p120 = scmp.ne.s32.totalorder %s109, %s112
    %p121 = scmp.eq.s32.totalorder %s15, 1
    %p122 = por %p120, %p121
    %p123 = scmp.ne.s32.totalorder %s112, %s113
    %p124 = scmp.eq.s32.totalorder %s15, 0
    %p125 = por %p123, %p124
    %p126 = scmp.ne.s32.totalorder %s112, %s113
    %p127 = scmp.eq.s32.totalorder %s16, 1
    %p128 = por %p126, %p127
    %p130 = scmp.ne.s32.totalorder %s113, %s129
    %p131 = scmp.eq.s32.totalorder %s16, 0
    %p132 = por %p130, %p131
    %p133 = scmp.le.s32.totalorder 1, %s10
    %p134 = scmp.lt.s32.totalorder %s10, 3
    %p135 = pnand %p133, %p134
    %p136 = pneg %p135
    // Predicated region
    $region9: #{tpu_custom_call.1} parent=5 // pred_check
      _
    $region10: #{tpu_custom_call.1} parent=5 // pred_check_branch
      %138 = sbr.rel (%p135) target = $region12
    $region11: #{tpu_custom_call.1} parent=5 // pred_region
      %s139 = ssub.s32 %s10, 1
      // Predicated region
      $region13: #{tpu_custom_call.1} parent=11 // pred_check
        %p140 = pneg %p57
      $region14: #{tpu_custom_call.1} parent=11 // pred_check_branch
        %142 = sbr.rel (%p140) target = $region16
      $region15: #{tpu_custom_call.1} parent=11 // pred_region
        _
      $region16: #{tpu_custom_call.1} parent=11 // pred_fallthru
        _
      // Predicated region
      $region17: #{tpu_custom_call.1} parent=11 // pred_check
        %p143 = pneg %p78
      $region18: #{tpu_custom_call.1} parent=11 // pred_check_branch
        %145 = sbr.rel (%p143) target = $region20
      $region19: #{tpu_custom_call.1} parent=11 // pred_region
        _
      $region20: #{tpu_custom_call.1} parent=11 // pred_fallthru
        _
      // Predicated region
      $region21: #{tpu_custom_call.1} parent=11 // pred_check
        %p146 = pneg %p99
      $region22: #{tpu_custom_call.1} parent=11 // pred_check_branch
        %148 = sbr.rel (%p146) target = $region24
      $region23: #{tpu_custom_call.1} parent=11 // pred_region
        _
      $region24: #{tpu_custom_call.1} parent=11 // pred_fallthru
        _
    $region12: #{tpu_custom_call.1} parent=5 // pred_fallthru
      _
    %p149 = scmp.lt.s32.totalorder %s10, 2
    // Predicated region
    $region25: #{tpu_custom_call.1} parent=5 // pred_check
      %p150 = pneg %p149
    $region26: #{tpu_custom_call.1} parent=5 // pred_check_branch
      %152 = sbr.rel (%p150) target = $region28
    $region27: #{tpu_custom_call.1} parent=5 // pred_region
      // Predicated region
      $region29: #{tpu_custom_call.1} parent=27 // pred_check
        %p153 = pneg %p30
      $region30: #{tpu_custom_call.1} parent=27 // pred_check_branch
        %155 = sbr.rel (%p153) target = $region32
      $region31: #{tpu_custom_call.1} parent=27 // pred_region
        %p156 = scmp.lt.s32.totalorder %s10, 1
        %s157 = scalar_select %p156, %s10, 1
        %s158 = smul.addr %s157, 16
        %s159 = smul.addr %s158, 8
        %s160 = scalar_lea.vmem %s0, %s159
      $region32: #{tpu_custom_call.1} parent=27 // pred_fallthru
        _
    $region28: #{tpu_custom_call.1} parent=5 // pred_fallthru
      _
    %p161 = scmp.le.s32.totalorder 1, %s10
    %p162 = scmp.lt.s32.totalorder %s10, 3
    %p163 = pnand %p161, %p162
    %p164 = pneg %p163
    // Predicated region
    $region33: #{tpu_custom_call.1} parent=5 // pred_check
      _
    $region34: #{tpu_custom_call.1} parent=5 // pred_check_branch
      %166 = sbr.rel (%p163) target = $region36
    $region35: #{tpu_custom_call.1} parent=5 // pred_region
      %s167 = ssub.s32 %s10, 1
      %p168 = scmp.lt.s32.totalorder %s15, 1
      %s169 = scalar_select %p168, %s15, 1
      %s170 = smul.addr %s169, 16
      %s171 = smul.addr %s170, 8
      %s172 = scalar_lea.vmem %s0, %s171
      %p173 = pneg %p36
      %p174 = pneg %p33
      %p175 = pneg %p57
      %p176 = pneg %p54
      %p177 = pneg %p78
      %p178 = pneg %p75
      %p179 = pneg %p99
      %p180 = pneg %p96
      %p181 = pneg %p125
      %p182 = pneg %p122
      %p183 = scmp.lt.s32.totalorder %s15, 1
      %s184 = scalar_select %p183, %s15, 1
      %s185 = smul.addr %s184, 16
      %s186 = smul.addr %s185, 8
      %s187 = scalar_lea.vmem %s4, %s186
      %p188 = scmp.lt.s32.totalorder %s15, 1
      %s189 = scalar_select %p188, %s15, 1
      %s190 = smul.addr %s189, 16
      %s191 = smul.addr %s190, 8
      %s192 = scalar_lea.vmem %s0, %s191
      %p193 = scmp.lt.s32.totalorder %s15, 1
      %s194 = scalar_select %p193, %s15, 1
      %s195 = smul.addr %s194, 16
      %s196 = smul.addr %s195, 8
      %s197 = scalar_lea.vmem %s4, %s196
      %v198 = vld [vmem:[%s192] sm:$0xff]
      %v199 = vld [vmem:[%s192 + $0x8] sm:$0xff]
      %v200 = vld [vmem:[%s192 + $0x10] sm:$0xff]
      %v201 = vld [vmem:[%s192 + $0x18] sm:$0xff]
      %v202 = vld [vmem:[%s192 + $0x20] sm:$0xff]
      %v203 = vld [vmem:[%s192 + $0x28] sm:$0xff]
      %v204 = vld [vmem:[%s192 + $0x30] sm:$0xff]
      %v205 = vld [vmem:[%s192 + $0x38] sm:$0xff]
      %v206 = vld [vmem:[%s192 + $0x40] sm:$0xff]
      %v207 = vld [vmem:[%s192 + $0x48] sm:$0xff]
      %v208 = vld [vmem:[%s192 + $0x50] sm:$0xff]
      %v209 = vld [vmem:[%s192 + $0x58] sm:$0xff]
      %v210 = vld [vmem:[%s192 + $0x60] sm:$0xff]
      %v211 = vld [vmem:[%s192 + $0x68] sm:$0xff]
      %v212 = vld [vmem:[%s192 + $0x70] sm:$0xff]
      %v213 = vld [vmem:[%s192 + $0x78] sm:$0xff]
      %v214 = vld [vmem:[%s1] sm:$0xff]
      %v215 = vld [vmem:[%s1 + $0x8] sm:$0xff]
      %v216 = vld [vmem:[%s1 + $0x10] sm:$0xff]
      %v217 = vld [vmem:[%s1 + $0x18] sm:$0xff]
      %v218 = vld [vmem:[%s1 + $0x20] sm:$0xff]
      %v219 = vld [vmem:[%s1 + $0x28] sm:$0xff]
      %v220 = vld [vmem:[%s1 + $0x30] sm:$0xff]
      %v221 = vld [vmem:[%s1 + $0x38] sm:$0xff]
      %v222 = vld [vmem:[%s1 + $0x40] sm:$0xff]
      %v223 = vld [vmem:[%s1 + $0x48] sm:$0xff]
      %v224 = vld [vmem:[%s1 + $0x50] sm:$0xff]
      %v225 = vld [vmem:[%s1 + $0x58] sm:$0xff]
      %v226 = vld [vmem:[%s1 + $0x60] sm:$0xff]
      %v227 = vld [vmem:[%s1 + $0x68] sm:$0xff]
      %v228 = vld [vmem:[%s1 + $0x70] sm:$0xff]
      %v229 = vld [vmem:[%s1 + $0x78] sm:$0xff]
      %v230 = vld [vmem:[%s1 + $0x80] sm:$0xff]
      %v231 = vld [vmem:[%s1 + $0x88] sm:$0xff]
      %v232 = vld [vmem:[%s1 + $0x90] sm:$0xff]
      %v233 = vld [vmem:[%s1 + $0x98] sm:$0xff]
      %v234 = vld [vmem:[%s1 + $0xa0] sm:$0xff]
      %v235 = vld [vmem:[%s1 + $0xa8] sm:$0xff]
      %v236 = vld [vmem:[%s1 + $0xb0] sm:$0xff]
      %v237 = vld [vmem:[%s1 + $0xb8] sm:$0xff]
      %v238 = vld [vmem:[%s1 + $0xc0] sm:$0xff]
      %v239 = vld [vmem:[%s1 + $0xc8] sm:$0xff]
      %v240 = vld [vmem:[%s1 + $0xd0] sm:$0xff]
      %v241 = vld [vmem:[%s1 + $0xd8] sm:$0xff]
      %v242 = vld [vmem:[%s1 + $0xe0] sm:$0xff]
      %v243 = vld [vmem:[%s1 + $0xe8] sm:$0xff]
      %v244 = vld [vmem:[%s1 + $0xf0] sm:$0xff]
      %v245 = vld [vmem:[%s1 + $0xf8] sm:$0xff]
      %v246 = vld [vmem:[%s1 + $0x100] sm:$0xff]
      %v247 = vld [vmem:[%s1 + $0x108] sm:$0xff]
      %v248 = vld [vmem:[%s1 + $0x110] sm:$0xff]
      %v249 = vld [vmem:[%s1 + $0x118] sm:$0xff]
      %v250 = vld [vmem:[%s1 + $0x120] sm:$0xff]
      %v251 = vld [vmem:[%s1 + $0x128] sm:$0xff]
      %v252 = vld [vmem:[%s1 + $0x130] sm:$0xff]
      %v253 = vld [vmem:[%s1 + $0x138] sm:$0xff]
      %v254 = vld [vmem:[%s1 + $0x140] sm:$0xff]
      %v255 = vld [vmem:[%s1 + $0x148] sm:$0xff]
      %v256 = vld [vmem:[%s1 + $0x150] sm:$0xff]
      %v257 = vld [vmem:[%s1 + $0x158] sm:$0xff]
      %v258 = vld [vmem:[%s1 + $0x160] sm:$0xff]
      %v259 = vld [vmem:[%s1 + $0x168] sm:$0xff]
      %v260 = vld [vmem:[%s1 + $0x170] sm:$0xff]
      %v261 = vld [vmem:[%s1 + $0x178] sm:$0xff]
      %vm262 = vcmask 261120
      %v264 = vsel %vm262, %v198, 0
      %v267 = vsel %vm262, %v199, 0
      %v270 = vsel %vm262, %v200, 0
      %v273 = vsel %vm262, %v201, 0
      %v276 = vsel %vm262, %v202, 0
      %v279 = vsel %vm262, %v203, 0
      %v282 = vsel %vm262, %v204, 0
      %v285 = vsel %vm262, %v205, 0
      %v288 = vsel %vm262, %v206, 0
      %v291 = vsel %vm262, %v207, 0
      %v294 = vsel %vm262, %v208, 0
      %v297 = vsel %vm262, %v209, 0
      %v300 = vsel %vm262, %v210, 0
      %v303 = vsel %vm262, %v211, 0
      %v306 = vsel %vm262, %v212, 0
      %v309 = vsel %vm262, %v213, 0
      %311 = vmatprep.subr.mxu0 %v215
      %312 = vmatpush1.msra.mxu0 %v214
      %313 = vmatprep.subr.mxu0 %v227
      %314 = vmatpush1.msra.mxu0 %v226
      %315 = vmatprep.subr.mxu0 %v239
      %316 = vmatpush1.msra.mxu0 %v238
      %317 = vmatprep.subr.mxu0 %v251
      %318 = vmatpush1.msra.mxu0 %v250
      %319 = vmatprep.subr.mxu0 0.0
      %320 = vmatpush1.msra.mxu0 0.0
      %321 = vmatprep.subr.mxu0 0.0
      %322 = vmatpush1.msra.mxu0 0.0
      %323 = vmatprep.subr.mxu0 0.0
      %324 = vmatpush1.msra.mxu0 0.0
      %325 = vmatprep.subr.mxu0 0.0
      %326 = vmatpush1.msra.mxu0 0.0
      %327 = vmatprep.subr.mxu0 0.0
      %328 = vmatpush1.msra.mxu0 0.0
      %329 = vmatprep.subr.mxu0 0.0
      %330 = vmatpush1.msra.mxu0 0.0
      %331 = vmatprep.subr.mxu0 0.0
      %332 = vmatpush1.msra.mxu0 0.0
      %333 = vmatprep.subr.mxu0 0.0
      %334 = vmatpush1.msra.mxu0 0.0
      %335 = vmatprep.subr.mxu0 0.0
      %336 = vmatpush1.msra.mxu0 0.0
      %337 = vmatprep.subr.mxu0 0.0
      %338 = vmatpush1.msra.mxu0 0.0
      %339 = vmatprep.subr.mxu0 0.0
      %340 = vmatpush1.msra.mxu0 0.0
      %341 = vmatprep.subr.mxu0 0.0
      %342 = vmatpush1.msra.mxu0 0.0
      %343 = vmatprep.subr.mxu0 0.0
      %344 = vmatpush1.msra.mxu0 0.0
      %345 = vmatprep.subr.mxu0 0.0
      %346 = vmatpush1.msra.mxu0 0.0
      %347 = vmatprep.subr.mxu0 0.0
      %348 = vmatpush1.msra.mxu0 0.0
      %349 = vmatprep.subr.mxu0 0.0
      %350 = vmatpush1.msra.mxu0 0.0
      %351 = vmatprep.subr.mxu0 0.0
      %352 = vmatpush1.msra.mxu0 0.0
      %353 = vmatprep.subr.mxu0 0.0
      %354 = vmatpush1.msra.mxu0 0.0
      %355 = vmatprep.subr.mxu0 0.0
      %356 = vmatpush1.msra.mxu0 0.0
      %357 = vmatprep.subr.mxu0 0.0
      %358 = vmatpush1.msra.mxu0 0.0
      %359 = vmatprep.subr.mxu0 0.0
      %360 = vmatpush1.msra.mxu0 0.0
      %361 = vmatprep.subr.mxu0 0.0
      %362 = vmatpush1.msra.mxu0 0.0
      %363 = vmatprep.subr.mxu0 0.0
      %364 = vmatpush1.msra.mxu0 0.0
      %365 = vmatprep.subr.mxu0 0.0
      %366 = vmatpush1.msra.mxu0 0.0
      %367 = vmatprep.subr.mxu0 0.0
      %368 = vmatpush1.msra.mxu0 0.0
      %369 = vmatprep.subr.mxu0 0.0
      %370 = vmatpush1.msra.mxu0 0.0
      %371 = vmatprep.subr.mxu0 0.0
      %372 = vmatpush1.msra.mxu0 0.0
      %373 = vmatprep.subr.mxu0 0.0
      %374 = vmatpush1.msra.mxu0 0.0
      %375 = vmatprep.mubr.f32.mxu0 0.0
      %376 = vmatmul.mubr.f32.gmra.mrb[0].mxu0 %v264
      %v377 = vpop.f32.mrb[0].mxu0
      %v378 = vadd.f32 0.0, %v377
      %v379 = vpop.f32.mrb[0].mxu0
      %v380 = vadd.f32 0.0, %v379
      %381 = vmatprep.mubr.f32.mxu0 0.0
      %382 = vmatmul.mubr.f32.gmra.mrb[0].mxu0 %v267
      %v383 = vpop.f32.mrb[0].mxu0
      %v384 = vadd.f32 0.0, %v383
      %v385 = vpop.f32.mrb[0].mxu0
      %v386 = vadd.f32 0.0, %v385
      %387 = vmatprep.mubr.f32.mxu0 0.0
      %388 = vmatmul.mubr.f32.gmra.mrb[0].mxu0 %v270
      %v389 = vpop.f32.mrb[0].mxu0
      %v390 = vadd.f32 0.0, %v389
      %v391 = vpop.f32.mrb[0].mxu0
      %v392 = vadd.f32 0.0, %v391
      %393 = vmatprep.mubr.f32.mxu0 0.0
      %394 = vmatmul.mubr.f32.gmra.mrb[0].mxu0 %v273
      %v395 = vpop.f32.mrb[0].mxu0
      %v396 = vadd.f32 0.0, %v395
      %v397 = vpop.f32.mrb[0].mxu0
      %v398 = vadd.f32 0.0, %v397
      %399 = vmatprep.mubr.f32.mxu0 0.0
      %400 = vmatmul.mubr.f32.gmra.mrb[0].mxu0 %v276
      %v401 = vpop.f32.mrb[0].mxu0
      %v402 = vadd.f32 0.0, %v401
      %v403 = vpop.f32.mrb[0].mxu0
      %v404 = vadd.f32 0.0, %v403
      %405 = vmatprep.mubr.f32.mxu0 0.0
      %406 = vmatmul.mubr.f32.gmra.mrb[0].mxu0 %v279
      %v407 = vpop.f32.mrb[0].mxu0
      %v408 = vadd.f32 0.0, %v407
      %v409 = vpop.f32.mrb[0].mxu0
      %v410 = vadd.f32 0.0, %v409
      %411 = vmatprep.mubr.f32.mxu0 0.0
      %412 = vmatmul.mubr.f32.gmra.mrb[0].mxu0 %v282
      %v413 = vpop.f32.mrb[0].mxu0
      %v414 = vadd.f32 0.0, %v413
      %v415 = vpop.f32.mrb[0].mxu0
      %v416 = vadd.f32 0.0, %v415
      %417 = vmatprep.mubr.f32.mxu0 0.0
      %418 = vmatmul.mubr.f32.gmra.mrb[0].mxu0 %v285
      %v419 = vpop.f32.mrb[0].mxu0
      %v420 = vadd.f32 0.0, %v419
      %v421 = vpop.f32.mrb[0].mxu0
      %v422 = vadd.f32 0.0, %v421
      %423 = vmatprep.mubr.f32.mxu0 0.0
      %424 = vmatmul.mubr.f32.gmra.mrb[0].mxu0 %v288
      %v425 = vpop.f32.mrb[0].mxu0
      %v426 = vadd.f32 0.0, %v425
      %v427 = vpop.f32.mrb[0].mxu0
      %v428 = vadd.f32 0.0, %v427
      %429 = vmatprep.mubr.f32.mxu0 0.0
      %430 = vmatmul.mubr.f32.gmra.mrb[0].mxu0 %v291
      %v431 = vpop.f32.mrb[0].mxu0
      %v432 = vadd.f32 0.0, %v431
      %v433 = vpop.f32.mrb[0].mxu0
      %v434 = vadd.f32 0.0, %v433
      %435 = vmatprep.mubr.f32.mxu0 0.0
      %436 = vmatmul.mubr.f32.gmra.mrb[0].mxu0 %v294
      %v437 = vpop.f32.mrb[0].mxu0
      %v438 = vadd.f32 0.0, %v437
      %v439 = vpop.f32.mrb[0].mxu0
      %v440 = vadd.f32 0.0, %v439
      %441 = vmatprep.mubr.f32.mxu0 0.0
      %442 = vmatmul.mubr.f32.gmra.mrb[0].mxu0 %v297
      %v443 = vpop.f32.mrb[0].mxu0
      %v444 = vadd.f32 0.0, %v443
      %v445 = vpop.f32.mrb[0].mxu0
      %v446 = vadd.f32 0.0, %v445
      %447 = vmatprep.mubr.f32.mxu0 0.0
      %448 = vmatmul.mubr.f32.gmra.mrb[0].mxu0 %v300
      %v449 = vpop.f32.mrb[0].mxu0
      %v450 = vadd.f32 0.0, %v449
      %v451 = vpop.f32.mrb[0].mxu0
      %v452 = vadd.f32 0.0, %v451
      %453 = vmatprep.mubr.f32.mxu0 0.0
      %454 = vmatmul.mubr.f32.gmra.mrb[0].mxu0 %v303
      %v455 = vpop.f32.mrb[0].mxu0
      %v456 = vadd.f32 0.0, %v455
      %v457 = vpop.f32.mrb[0].mxu0
      %v458 = vadd.f32 0.0, %v457
      %459 = vmatprep.mubr.f32.mxu0 0.0
      %460 = vmatmul.mubr.f32.gmra.mrb[0].mxu0 %v306
      %v461 = vpop.f32.mrb[0].mxu0
      %v462 = vadd.f32 0.0, %v461
      %v463 = vpop.f32.mrb[0].mxu0
      %v464 = vadd.f32 0.0, %v463
      %465 = vmatprep.mubr.f32.mxu0 0.0
      %466 = vmatmul.mubr.f32.gmra.mrb[0].mxu0 %v309
      %v467 = vpop.f32.mrb[0].mxu0
      %v468 = vadd.f32 0.0, %v467
      %v469 = vpop.f32.mrb[0].mxu0
      %v470 = vadd.f32 0.0, %v469
      %471 = vdwg.mxu0
      %472 = vmatprep.subr.mxu0 %v217
      %473 = vmatpush1.msra.mxu0 %v216
      %474 = vmatprep.subr.mxu0 %v229
      %475 = vmatpush1.msra.mxu0 %v228
      %476 = vmatprep.subr.mxu0 %v241
      %477 = vmatpush1.msra.mxu0 %v240
      %478 = vmatprep.subr.mxu0 %v253
      %479 = vmatpush1.msra.mxu0 %v252
      %480 = vmatprep.subr.mxu0 0.0
      %481 = vmatpush1.msra.mxu0 0.0
      %482 = vmatprep.subr.mxu0 0.0
      %483 = vmatpush1.msra.mxu0 0.0
      %484 = vmatprep.subr.mxu0 0.0
      %485 = vmatpush1.msra.mxu0 0.0
      %486 = vmatprep.subr.mxu0 0.0
      %487 = vmatpush1.msra.mxu0 0.0
      %488 = vmatprep.subr.mxu0 0.0
      %489 = vmatpush1.msra.mxu0 0.0
      %490 = vmatprep.subr.mxu0 0.0
      %491 = vmatpush1.msra.mxu0 0.0
      %492 = vmatprep.subr.mxu0 0.0
      %493 = vmatpush1.msra.mxu0 0.0
      %494 = vmatprep.subr.mxu0 0.0
      %495 = vmatpush1.msra.mxu0 0.0
      %496 = vmatprep.subr.mxu0 0.0
      %497 = vmatpush1.msra.mxu0 0.0
      %498 = vmatprep.subr.mxu0 0.0
      %499 = vmatpush1.msra.mxu0 0.0
      %500 = vmatprep.subr.mxu0 0.0
      %501 = vmatpush1.msra.mxu0 0.0
      %502 = vmatprep.subr.mxu0 0.0
      %503 = vmatpush1.msra.mxu0 0.0
      %504 = vmatprep.subr.mxu0 0.0
      %505 = vmatpush1.msra.mxu0 0.0
      %506 = vmatprep.subr.mxu0 0.0
      %507 = vmatpush1.msra.mxu0 0.0
      %508 = vmatprep.subr.mxu0 0.0
      %509 = vmatpush1.msra.mxu0 0.0
      %510 = vmatprep.subr.mxu0 0.0
      %511 = vmatpush1.msra.mxu0 0.0
      %512 = vmatprep.subr.mxu0 0.0
      %513 = vmatpush1.msra.mxu0 0.0
      %514 = vmatprep.subr.mxu0 0.0
      %515 = vmatpush1.msra.mxu0 0.0
      %516 = vmatprep.subr.mxu0 0.0
      %517 = vmatpush1.msra.mxu0 0.0
      %518 = vmatprep.subr.mxu0 0.0
      %519 = vmatpush1.msra.mxu0 0.0
      %520 = vmatprep.subr.mxu0 0.0
      %521 = vmatpush1.msra.mxu0 0.0
      %522 = vmatprep.subr.mxu0 0.0
      %523 = vmatpush1.msra.mxu0 0.0
      %524 = vmatprep.subr.mxu0 0.0
      %525 = vmatpush1.msra.mxu0 0.0
      %526 = vmatprep.subr.mxu0 0.0
      %527 = vmatpush1.msra.mxu0 0.0
      %528 = vmatprep.subr.mxu0 0.0
      %529 = vmatpush1.msra.mxu0 0.0
      %530 = vmatprep.subr.mxu0 0.0
      %531 = vmatpush1.msra.mxu0 0.0
      %532 = vmatprep.subr.mxu0 0.0
      %533 = vmatpush1.msra.mxu0 0.0
      %534 = vmatprep.subr.mxu0 0.0
      %535 = vmatpush1.msra.mxu0 0.0
      %536 = vmatprep.mubr.f32.mxu0 0.0
      %537 = vmatmul.mubr.f32.gmra.mrb[0].mxu0 %v264
      %v538 = vpop.f32.mrb[0].mxu0
      %v539 = vadd.f32 0.0, %v538
      %v540 = vpop.f32.mrb[0].mxu0
      %v541 = vadd.f32 0.0, %v540
      %542 = vmatprep.mubr.f32.mxu0 0.0
      %543 = vmatmul.mubr.f32.gmra.mrb[0].mxu0 %v267
      %v544 = vpop.f32.mrb[0].mxu0
      %v545 = vadd.f32 0.0, %v544
      %v546 = vpop.f32.mrb[0].mxu0
      %v547 = vadd.f32 0.0, %v546
      %548 = vmatprep.mubr.f32.mxu0 0.0
      %549 = vmatmul.mubr.f32.gmra.mrb[0].mxu0 %v270
      %v550 = vpop.f32.mrb[0].mxu0
      %v551 = vadd.f32 0.0, %v550
      %v552 = vpop.f32.mrb[0].mxu0
      %v553 = vadd.f32 0.0, %v552
      %554 = vmatprep.mubr.f32.mxu0 0.0
      %555 = vmatmul.mubr.f32.gmra.mrb[0].mxu0 %v273
      %v556 = vpop.f32.mrb[0].mxu0
      %v557 = vadd.f32 0.0, %v556
      %v558 = vpop.f32.mrb[0].mxu0
      %v559 = vadd.f32 0.0, %v558
      %560 = vmatprep.mubr.f32.mxu0 0.0
      %561 = vmatmul.mubr.f32.gmra.mrb[0].mxu0 %v276
      %v562 = vpop.f32.mrb[0].mxu0
      %v563 = vadd.f32 0.0, %v562
      %v564 = vpop.f32.mrb[0].mxu0
      %v565 = vadd.f32 0.0, %v564
      %566 = vmatprep.mubr.f32.mxu0 0.0
      %567 = vmatmul.mubr.f32.gmra.mrb[0].mxu0 %v279
      %v568 = vpop.f32.mrb[0].mxu0
      %v569 = vadd.f32 0.0, %v568
      %v570 = vpop.f32.mrb[0].mxu0
      %v571 = vadd.f32 0.0, %v570
      %572 = vmatprep.mubr.f32.mxu0 0.0
      %573 = vmatmul.mubr.f32.gmra.mrb[0].mxu0 %v282
      %v574 = vpop.f32.mrb[0].mxu0
      %v575 = vadd.f32 0.0, %v574
      %v576 = vpop.f32.mrb[0].mxu0
      %v577 = vadd.f32 0.0, %v576
      %578 = vmatprep.mubr.f32.mxu0 0.0
      %579 = vmatmul.mubr.f32.gmra.mrb[0].mxu0 %v285
      %v580 = vpop.f32.mrb[0].mxu0
      %v581 = vadd.f32 0.0, %v580
      %v582 = vpop.f32.mrb[0].mxu0
      %v583 = vadd.f32 0.0, %v582
      %584 = vmatprep.mubr.f32.mxu0 0.0
      %585 = vmatmul.mubr.f32.gmra.mrb[0].mxu0 %v288
      %v586 = vpop.f32.mrb[0].mxu0
      %v587 = vadd.f32 0.0, %v586
      %v588 = vpop.f32.mrb[0].mxu0
      %v589 = vadd.f32 0.0, %v588
      %590 = vmatprep.mubr.f32.mxu0 0.0
      %591 = vmatmul.mubr.f32.gmra.mrb[0].mxu0 %v291
      %v592 = vpop.f32.mrb[0].mxu0
      %v593 = vadd.f32 0.0, %v592
      %v594 = vpop.f32.mrb[0].mxu0
      %v595 = vadd.f32 0.0, %v594
      %596 = vmatprep.mubr.f32.mxu0 0.0
      %597 = vmatmul.mubr.f32.gmra.mrb[0].mxu0 %v294
      %v598 = vpop.f32.mrb[0].mxu0
      %v599 = vadd.f32 0.0, %v598
      %v600 = vpop.f32.mrb[0].mxu0
      %v601 = vadd.f32 0.0, %v600
      %602 = vmatprep.mubr.f32.mxu0 0.0
      %603 = vmatmul.mubr.f32.gmra.mrb[0].mxu0 %v297
      %v604 = vpop.f32.mrb[0].mxu0
      %v605 = vadd.f32 0.0, %v604
      %v606 = vpop.f32.mrb[0].mxu0
      %v607 = vadd.f32 0.0, %v606
      %608 = vmatprep.mubr.f32.mxu0 0.0
      %609 = vmatmul.mubr.f32.gmra.mrb[0].mxu0 %v300
      %v610 = vpop.f32.mrb[0].mxu0
      %v611 = vadd.f32 0.0, %v610
      %v612 = vpop.f32.mrb[0].mxu0
      %v613 = vadd.f32 0.0, %v612
      %614 = vmatprep.mubr.f32.mxu0 0.0
      %615 = vmatmul.mubr.f32.gmra.mrb[0].mxu0 %v303
      %v616 = vpop.f32.mrb[0].mxu0
      %v617 = vadd.f32 0.0, %v616
      %v618 = vpop.f32.mrb[0].mxu0
      %v619 = vadd.f32 0.0, %v618
      %620 = vmatprep.mubr.f32.mxu0 0.0
      %621 = vmatmul.mubr.f32.gmra.mrb[0].mxu0 %v306
      %v622 = vpop.f32.mrb[0].mxu0
      %v623 = vadd.f32 0.0, %v622
      %v624 = vpop.f32.mrb[0].mxu0
      %v625 = vadd.f32 0.0, %v624
      %626 = vmatprep.mubr.f32.mxu0 0.0
      %627 = vmatmul.mubr.f32.gmra.mrb[0].mxu0 %v309
      %v628 = vpop.f32.mrb[0].mxu0
      %v629 = vadd.f32 0.0, %v628
      %v630 = vpop.f32.mrb[0].mxu0
      %v631 = vadd.f32 0.0, %v630
      %632 = vdwg.mxu0
      %633 = vmatprep.subr.mxu0 %v219
      %634 = vmatpush1.msra.mxu0 %v218
      %635 = vmatprep.subr.mxu0 %v231
      %636 = vmatpush1.msra.mxu0 %v230
      %637 = vmatprep.subr.mxu0 %v243
      %638 = vmatpush1.msra.mxu0 %v242
      %639 = vmatprep.subr.mxu0 %v255
      %640 = vmatpush1.msra.mxu0 %v254
      %641 = vmatprep.subr.mxu0 0.0
      %642 = vmatpush1.msra.mxu0 0.0
      %643 = vmatprep.subr.mxu0 0.0
      %644 = vmatpush1.msra.mxu0 0.0
      %645 = vmatprep.subr.mxu0 0.0
      %646 = vmatpush1.msra.mxu0 0.0
      %647 = vmatprep.subr.mxu0 0.0
      %648 = vmatpush1.msra.mxu0 0.0
      %649 = vmatprep.subr.mxu0 0.0
      %650 = vmatpush1.msra.mxu0 0.0
      %651 = vmatprep.subr.mxu0 0.0
      %652 = vmatpush1.msra.mxu0 0.0
      %653 = vmatprep.subr.mxu0 0.0
      %654 = vmatpush1.msra.mxu0 0.0
      %655 = vmatprep.subr.mxu0 0.0
      %656 = vmatpush1.msra.mxu0 0.0
      %657 = vmatprep.subr.mxu0 0.0
      %658 = vmatpush1.msra.mxu0 0.0
      %659 = vmatprep.subr.mxu0 0.0
      %660 = vmatpush1.msra.mxu0 0.0
      %661 = vmatprep.subr.mxu0 0.0
      %662 = vmatpush1.msra.mxu0 0.0
      %663 = vmatprep.subr.mxu0 0.0
      %664 = vmatpush1.msra.mxu0 0.0
      %665 = vmatprep.subr.mxu0 0.0
      %666 = vmatpush1.msra.mxu0 0.0
      %667 = vmatprep.subr.mxu0 0.0
      %668 = vmatpush1.msra.mxu0 0.0
      %669 = vmatprep.subr.mxu0 0.0
      %670 = vmatpush1.msra.mxu0 0.0
      %671 = vmatprep.subr.mxu0 0.0
      %672 = vmatpush1.msra.mxu0 0.0
      %673 = vmatprep.subr.mxu0 0.0
      %674 = vmatpush1.msra.mxu0 0.0
      %675 = vmatprep.subr.mxu0 0.0
      %676 = vmatpush1.msra.mxu0 0.0
      %677 = vmatprep.subr.mxu0 0.0
      %678 = vmatpush1.msra.mxu0 0.0
      %679 = vmatprep.subr.mxu0 0.0
      %680 = vmatpush1.msra.mxu0 0.0
      %681 = vmatprep.subr.mxu0 0.0
      %682 = vmatpush1.msra.mxu0 0.0
      %683 = vmatprep.subr.mxu0 0.0
      %684 = vmatpush1.msra.mxu0 0.0
      %685 = vmatprep.subr.mxu0 0.0
      %686 = vmatpush1.msra.mxu0 0.0
      %687 = vmatprep.subr.mxu0 0.0
      %688 = vmatpush1.msra.mxu0 0.0
      %689 = vmatprep.subr.mxu0 0.0
      %690 = vmatpush1.msra.mxu0 0.0
      %691 = vmatprep.subr.mxu0 0.0
      %692 = vmatpush1.msra.mxu0 0.0
      %693 = vmatprep.subr.mxu0 0.0
      %694 = vmatpush1.msra.mxu0 0.0
      %695 = vmatprep.subr.mxu0 0.0
      %696 = vmatpush1.msra.mxu0 0.0
      %697 = vmatprep.mubr.f32.mxu0 0.0
      %698 = vmatmul.mubr.f32.gmra.mrb[0].mxu0 %v264
      %v699 = vpop.f32.mrb[0].mxu0
      %v700 = vadd.f32 0.0, %v699
      %v701 = vpop.f32.mrb[0].mxu0
      %v702 = vadd.f32 0.0, %v701
      %703 = vmatprep.mubr.f32.mxu0 0.0
      %704 = vmatmul.mubr.f32.gmra.mrb[0].mxu0 %v267
      %v705 = vpop.f32.mrb[0].mxu0
      %v706 = vadd.f32 0.0, %v705
      %v707 = vpop.f32.mrb[0].mxu0
      %v708 = vadd.f32 0.0, %v707
      %709 = vmatprep.mubr.f32.mxu0 0.0
      %710 = vmatmul.mubr.f32.gmra.mrb[0].mxu0 %v270
      %v711 = vpop.f32.mrb[0].mxu0
      %v712 = vadd.f32 0.0, %v711
      %v713 = vpop.f32.mrb[0].mxu0
      %v714 = vadd.f32 0.0, %v713
      %715 = vmatprep.mubr.f32.mxu0 0.0
      %716 = vmatmul.mubr.f32.gmra.mrb[0].mxu0 %v273
      %v717 = vpop.f32.mrb[0].mxu0
      %v718 = vadd.f32 0.0, %v717
      %v719 = vpop.f32.mrb[0].mxu0
      %v720 = vadd.f32 0.0, %v719
      %721 = vmatprep.mubr.f32.mxu0 0.0
      %722 = vmatmul.mubr.f32.gmra.mrb[0].mxu0 %v276
      %v723 = vpop.f32.mrb[0].mxu0
      %v724 = vadd.f32 0.0, %v723
      %v725 = vpop.f32.mrb[0].mxu0
      %v726 = vadd.f32 0.0, %v725
      %727 = vmatprep.mubr.f32.mxu0 0.0
      %728 = vmatmul.mubr.f32.gmra.mrb[0].mxu0 %v279
      %v729 = vpop.f32.mrb[0].mxu0
      %v730 = vadd.f32 0.0, %v729
      %v731 = vpop.f32.mrb[0].mxu0
      %v732 = vadd.f32 0.0, %v731
      %733 = vmatprep.mubr.f32.mxu0 0.0
      %734 = vmatmul.mubr.f32.gmra.mrb[0].mxu0 %v282
      %v735 = vpop.f32.mrb[0].mxu0
      %v736 = vadd.f32 0.0, %v735
      %v737 = vpop.f32.mrb[0].mxu0
      %v738 = vadd.f32 0.0, %v737
      %739 = vmatprep.mubr.f32.mxu0 0.0
      %740 = vmatmul.mubr.f32.gmra.mrb[0].mxu0 %v285
      %v741 = vpop.f32.mrb[0].mxu0
      %v742 = vadd.f32 0.0, %v741
      %v743 = vpop.f32.mrb[0].mxu0
      %v744 = vadd.f32 0.0, %v743
      %745 = vmatprep.mubr.f32.mxu0 0.0
      %746 = vmatmul.mubr.f32.gmra.mrb[0].mxu0 %v288
      %v747 = vpop.f32.mrb[0].mxu0
      %v748 = vadd.f32 0.0, %v747
      %v749 = vpop.f32.mrb[0].mxu0
      %v750 = vadd.f32 0.0, %v749
      %751 = vmatprep.mubr.f32.mxu0 0.0
      %752 = vmatmul.mubr.f32.gmra.mrb[0].mxu0 %v291
      %v753 = vpop.f32.mrb[0].mxu0
      %v754 = vadd.f32 0.0, %v753
      %v755 = vpop.f32.mrb[0].mxu0
      %v756 = vadd.f32 0.0, %v755
      %757 = vmatprep.mubr.f32.mxu0 0.0
      %758 = vmatmul.mubr.f32.gmra.mrb[0].mxu0 %v294
      %v759 = vpop.f32.mrb[0].mxu0
      %v760 = vadd.f32 0.0, %v759
      %v761 = vpop.f32.mrb[0].mxu0
      %v762 = vadd.f32 0.0, %v761
      %763 = vmatprep.mubr.f32.mxu0 0.0
      %764 = vmatmul.mubr.f32.gmra.mrb[0].mxu0 %v297
      %v765 = vpop.f32.mrb[0].mxu0
      %v766 = vadd.f32 0.0, %v765
      %v767 = vpop.f32.mrb[0].mxu0
      %v768 = vadd.f32 0.0, %v767
      %769 = vmatprep.mubr.f32.mxu0 0.0
      %770 = vmatmul.mubr.f32.gmra.mrb[0].mxu0 %v300
      %v771 = vpop.f32.mrb[0].mxu0
      %v772 = vadd.f32 0.0, %v771
      %v773 = vpop.f32.mrb[0].mxu0
      %v774 = vadd.f32 0.0, %v773
      %775 = vmatprep.mubr.f32.mxu0 0.0
      %776 = vmatmul.mubr.f32.gmra.mrb[0].mxu0 %v303
      %v777 = vpop.f32.mrb[0].mxu0
      %v778 = vadd.f32 0.0, %v777
      %v779 = vpop.f32.mrb[0].mxu0
      %v780 = vadd.f32 0.0, %v779
      %781 = vmatprep.mubr.f32.mxu0 0.0
      %782 = vmatmul.mubr.f32.gmra.mrb[0].mxu0 %v306
      %v783 = vpop.f32.mrb[0].mxu0
      %v784 = vadd.f32 0.0, %v783
      %v785 = vpop.f32.mrb[0].mxu0
      %v786 = vadd.f32 0.0, %v785
      %787 = vmatprep.mubr.f32.mxu0 0.0
      %788 = vmatmul.mubr.f32.gmra.mrb[0].mxu0 %v309
      %v789 = vpop.f32.mrb[0].mxu0
      %v790 = vadd.f32 0.0, %v789
      %v791 = vpop.f32.mrb[0].mxu0
      %v792 = vadd.f32 0.0, %v791
      %793 = vdwg.mxu0
      %794 = vmatprep.subr.mxu0 %v221
      %795 = vmatpush1.msra.mxu0 %v220
      %796 = vmatprep.subr.mxu0 %v233
      %797 = vmatpush1.msra.mxu0 %v232
      %798 = vmatprep.subr.mxu0 %v245
      %799 = vmatpush1.msra.mxu0 %v244
      %800 = vmatprep.subr.mxu0 %v257
      %801 = vmatpush1.msra.mxu0 %v256
      %802 = vmatprep.subr.mxu0 0.0
      %803 = vmatpush1.msra.mxu0 0.0
      %804 = vmatprep.subr.mxu0 0.0
      %805 = vmatpush1.msra.mxu0 0.0
      %806 = vmatprep.subr.mxu0 0.0
      %807 = vmatpush1.msra.mxu0 0.0
      %808 = vmatprep.subr.mxu0 0.0
      %809 = vmatpush1.msra.mxu0 0.0
      %810 = vmatprep.subr.mxu0 0.0
      %811 = vmatpush1.msra.mxu0 0.0
      %812 = vmatprep.subr.mxu0 0.0
      %813 = vmatpush1.msra.mxu0 0.0
      %814 = vmatprep.subr.mxu0 0.0
      %815 = vmatpush1.msra.mxu0 0.0
      %816 = vmatprep.subr.mxu0 0.0
      %817 = vmatpush1.msra.mxu0 0.0
      %818 = vmatprep.subr.mxu0 0.0
      %819 = vmatpush1.msra.mxu0 0.0
      %820 = vmatprep.subr.mxu0 0.0
      %821 = vmatpush1.msra.mxu0 0.0
      %822 = vmatprep.subr.mxu0 0.0
      %823 = vmatpush1.msra.mxu0 0.0
      %824 = vmatprep.subr.mxu0 0.0
      %825 = vmatpush1.msra.mxu0 0.0
      %826 = vmatprep.subr.mxu0 0.0
      %827 = vmatpush1.msra.mxu0 0.0
      %828 = vmatprep.subr.mxu0 0.0
      %829 = vmatpush1.msra.mxu0 0.0
      %830 = vmatprep.subr.mxu0 0.0
      %831 = vmatpush1.msra.mxu0 0.0
      %832 = vmatprep.subr.mxu0 0.0
      %833 = vmatpush1.msra.mxu0 0.0
      %834 = vmatprep.subr.mxu0 0.0
      %835 = vmatpush1.msra.mxu0 0.0
      %836 = vmatprep.subr.mxu0 0.0
      %837 = vmatpush1.msra.mxu0 0.0
      %838 = vmatprep.subr.mxu0 0.0
      %839 = vmatpush1.msra.mxu0 0.0
      %840 = vmatprep.subr.mxu0 0.0
      %841 = vmatpush1.msra.mxu0 0.0
      %842 = vmatprep.subr.mxu0 0.0
      %843 = vmatpush1.msra.mxu0 0.0
      %844 = vmatprep.subr.mxu0 0.0
      %845 = vmatpush1.msra.mxu0 0.0
      %846 = vmatprep.subr.mxu0 0.0
      %847 = vmatpush1.msra.mxu0 0.0
      %848 = vmatprep.subr.mxu0 0.0
      %849 = vmatpush1.msra.mxu0 0.0
      %850 = vmatprep.subr.mxu0 0.0
      %851 = vmatpush1.msra.mxu0 0.0
      %852 = vmatprep.subr.mxu0 0.0
      %853 = vmatpush1.msra.mxu0 0.0
      %854 = vmatprep.subr.mxu0 0.0
      %855 = vmatpush1.msra.mxu0 0.0
      %856 = vmatprep.subr.mxu0 0.0
      %857 = vmatpush1.msra.mxu0 0.0
      %858 = vmatprep.mubr.f32.mxu0 0.0
      %859 = vmatmul.mubr.f32.gmra.mrb[0].mxu0 %v264
      %v860 = vpop.f32.mrb[0].mxu0
      %v861 = vadd.f32 0.0, %v860
      %v862 = vpop.f32.mrb[0].mxu0
      %v863 = vadd.f32 0.0, %v862
      %864 = vmatprep.mubr.f32.mxu0 0.0
      %865 = vmatmul.mubr.f32.gmra.mrb[0].mxu0 %v267
      %v866 = vpop.f32.mrb[0].mxu0
      %v867 = vadd.f32 0.0, %v866
      %v868 = vpop.f32.mrb[0].mxu0
      %v869 = vadd.f32 0.0, %v868
      %870 = vmatprep.mubr.f32.mxu0 0.0
      %871 = vmatmul.mubr.f32.gmra.mrb[0].mxu0 %v270
      %v872 = vpop.f32.mrb[0].mxu0
      %v873 = vadd.f32 0.0, %v872
      %v874 = vpop.f32.mrb[0].mxu0
      %v875 = vadd.f32 0.0, %v874
      %876 = vmatprep.mubr.f32.mxu0 0.0
      %877 = vmatmul.mubr.f32.gmra.mrb[0].mxu0 %v273
      %v878 = vpop.f32.mrb[0].mxu0
      %v879 = vadd.f32 0.0, %v878
      %v880 = vpop.f32.mrb[0].mxu0
      %v881 = vadd.f32 0.0, %v880
      %882 = vmatprep.mubr.f32.mxu0 0.0
      %883 = vmatmul.mubr.f32.gmra.mrb[0].mxu0 %v276
      %v884 = vpop.f32.mrb[0].mxu0
      %v885 = vadd.f32 0.0, %v884
      %v886 = vpop.f32.mrb[0].mxu0
      %v887 = vadd.f32 0.0, %v886
      %888 = vmatprep.mubr.f32.mxu0 0.0
      %889 = vmatmul.mubr.f32.gmra.mrb[0].mxu0 %v279
      %v890 = vpop.f32.mrb[0].mxu0
      %v891 = vadd.f32 0.0, %v890
      %v892 = vpop.f32.mrb[0].mxu0
      %v893 = vadd.f32 0.0, %v892
      %894 = vmatprep.mubr.f32.mxu0 0.0
      %895 = vmatmul.mubr.f32.gmra.mrb[0].mxu0 %v282
      %v896 = vpop.f32.mrb[0].mxu0
      %v897 = vadd.f32 0.0, %v896
      %v898 = vpop.f32.mrb[0].mxu0
      %v899 = vadd.f32 0.0, %v898
      %900 = vmatprep.mubr.f32.mxu0 0.0
      %901 = vmatmul.mubr.f32.gmra.mrb[0].mxu0 %v285
      %v902 = vpop.f32.mrb[0].mxu0
      %v903 = vadd.f32 0.0, %v902
      %v904 = vpop.f32.mrb[0].mxu0
      %v905 = vadd.f32 0.0, %v904
      %906 = vmatprep.mubr.f32.mxu0 0.0
      %907 = vmatmul.mubr.f32.gmra.mrb[0].mxu0 %v288
      %v908 = vpop.f32.mrb[0].mxu0
      %v909 = vadd.f32 0.0, %v908
      %v910 = vpop.f32.mrb[0].mxu0
      %v911 = vadd.f32 0.0, %v910
      %912 = vmatprep.mubr.f32.mxu0 0.0
      %913 = vmatmul.mubr.f32.gmra.mrb[0].mxu0 %v291
      %v914 = vpop.f32.mrb[0].mxu0
      %v915 = vadd.f32 0.0, %v914
      %v916 = vpop.f32.mrb[0].mxu0
      %v917 = vadd.f32 0.0, %v916
      %918 = vmatprep.mubr.f32.mxu0 0.0
      %919 = vmatmul.mubr.f32.gmra.mrb[0].mxu0 %v294
      %v920 = vpop.f32.mrb[0].mxu0
      %v921 = vadd.f32 0.0, %v920
      %v922 = vpop.f32.mrb[0].mxu0
      %v923 = vadd.f32 0.0, %v922
      %924 = vmatprep.mubr.f32.mxu0 0.0
      %925 = vmatmul.mubr.f32.gmra.mrb[0].mxu0 %v297
      %v926 = vpop.f32.mrb[0].mxu0
      %v927 = vadd.f32 0.0, %v926
      %v928 = vpop.f32.mrb[0].mxu0
      %v929 = vadd.f32 0.0, %v928
      %930 = vmatprep.mubr.f32.mxu0 0.0
      %931 = vmatmul.mubr.f32.gmra.mrb[0].mxu0 %v300
      %v932 = vpop.f32.mrb[0].mxu0
      %v933 = vadd.f32 0.0, %v932
      %v934 = vpop.f32.mrb[0].mxu0
      %v935 = vadd.f32 0.0, %v934
      %936 = vmatprep.mubr.f32.mxu0 0.0
      %937 = vmatmul.mubr.f32.gmra.mrb[0].mxu0 %v303
      %v938 = vpop.f32.mrb[0].mxu0
      %v939 = vadd.f32 0.0, %v938
      %v940 = vpop.f32.mrb[0].mxu0
      %v941 = vadd.f32 0.0, %v940
      %942 = vmatprep.mubr.f32.mxu0 0.0
      %943 = vmatmul.mubr.f32.gmra.mrb[0].mxu0 %v306
      %v944 = vpop.f32.mrb[0].mxu0
      %v945 = vadd.f32 0.0, %v944
      %v946 = vpop.f32.mrb[0].mxu0
      %v947 = vadd.f32 0.0, %v946
      %948 = vmatprep.mubr.f32.mxu0 0.0
      %949 = vmatmul.mubr.f32.gmra.mrb[0].mxu0 %v309
      %v950 = vpop.f32.mrb[0].mxu0
      %v951 = vadd.f32 0.0, %v950
      %v952 = vpop.f32.mrb[0].mxu0
      %v953 = vadd.f32 0.0, %v952
      %954 = vdwg.mxu0
      %955 = vmatprep.subr.mxu0 %v223
      %956 = vmatpush1.msra.mxu0 %v222
      %957 = vmatprep.subr.mxu0 %v235
      %958 = vmatpush1.msra.mxu0 %v234
      %959 = vmatprep.subr.mxu0 %v247
      %960 = vmatpush1.msra.mxu0 %v246
      %961 = vmatprep.subr.mxu0 %v259
      %962 = vmatpush1.msra.mxu0 %v258
      %963 = vmatprep.subr.mxu0 0.0
      %964 = vmatpush1.msra.mxu0 0.0
      %965 = vmatprep.subr.mxu0 0.0
      %966 = vmatpush1.msra.mxu0 0.0
      %967 = vmatprep.subr.mxu0 0.0
      %968 = vmatpush1.msra.mxu0 0.0
      %969 = vmatprep.subr.mxu0 0.0
      %970 = vmatpush1.msra.mxu0 0.0
      %971 = vmatprep.subr.mxu0 0.0
      %972 = vmatpush1.msra.mxu0 0.0
      %973 = vmatprep.subr.mxu0 0.0
      %974 = vmatpush1.msra.mxu0 0.0
      %975 = vmatprep.subr.mxu0 0.0
      %976 = vmatpush1.msra.mxu0 0.0
      %977 = vmatprep.subr.mxu0 0.0
      %978 = vmatpush1.msra.mxu0 0.0
      %979 = vmatprep.subr.mxu0 0.0
      %980 = vmatpush1.msra.mxu0 0.0
      %981 = vmatprep.subr.mxu0 0.0
      %982 = vmatpush1.msra.mxu0 0.0
      %983 = vmatprep.subr.mxu0 0.0
      %984 = vmatpush1.msra.mxu0 0.0
      %985 = vmatprep.subr.mxu0 0.0
      %986 = vmatpush1.msra.mxu0 0.0
      %987 = vmatprep.subr.mxu0 0.0
      %988 = vmatpush1.msra.mxu0 0.0
      %989 = vmatprep.subr.mxu0 0.0
      %990 = vmatpush1.msra.mxu0 0.0
      %991 = vmatprep.subr.mxu0 0.0
      %992 = vmatpush1.msra.mxu0 0.0
      %993 = vmatprep.subr.mxu0 0.0
      %994 = vmatpush1.msra.mxu0 0.0
      %995 = vmatprep.subr.mxu0 0.0
      %996 = vmatpush1.msra.mxu0 0.0
      %997 = vmatprep.subr.mxu0 0.0
      %998 = vmatpush1.msra.mxu0 0.0
      %999 = vmatprep.subr.mxu0 0.0
      %1000 = vmatpush1.msra.mxu0 0.0
      %1001 = vmatprep.subr.mxu0 0.0
      %1002 = vmatpush1.msra.mxu0 0.0
      %1003 = vmatprep.subr.mxu0 0.0
      %1004 = vmatpush1.msra.mxu0 0.0
      %1005 = vmatprep.subr.mxu0 0.0
      %1006 = vmatpush1.msra.mxu0 0.0
      %1007 = vmatprep.subr.mxu0 0.0
      %1008 = vmatpush1.msra.mxu0 0.0
      %1009 = vmatprep.subr.mxu0 0.0
      %1010 = vmatpush1.msra.mxu0 0.0
      %1011 = vmatprep.subr.mxu0 0.0
      %1012 = vmatpush1.msra.mxu0 0.0
      %1013 = vmatprep.subr.mxu0 0.0
      %1014 = vmatpush1.msra.mxu0 0.0
      %1015 = vmatprep.subr.mxu0 0.0
      %1016 = vmatpush1.msra.mxu0 0.0
      %1017 = vmatprep.subr.mxu0 0.0
      %1018 = vmatpush1.msra.mxu0 0.0
      %1019 = vmatprep.mubr.f32.mxu0 0.0
      %1020 = vmatmul.mubr.f32.gmra.mrb[0].mxu0 %v264
      %v1021 = vpop.f32.mrb[0].mxu0
      %v1022 = vadd.f32 0.0, %v1021
      %v1023 = vpop.f32.mrb[0].mxu0
      %v1024 = vadd.f32 0.0, %v1023
      %1025 = vmatprep.mubr.f32.mxu0 0.0
      %1026 = vmatmul.mubr.f32.gmra.mrb[0].mxu0 %v267
      %v1027 = vpop.f32.mrb[0].mxu0
      %v1028 = vadd.f32 0.0, %v1027
      %v1029 = vpop.f32.mrb[0].mxu0
      %v1030 = vadd.f32 0.0, %v1029
      %1031 = vmatprep.mubr.f32.mxu0 0.0
      %1032 = vmatmul.mubr.f32.gmra.mrb[0].mxu0 %v270
      %v1033 = vpop.f32.mrb[0].mxu0
      %v1034 = vadd.f32 0.0, %v1033
      %v1035 = vpop.f32.mrb[0].mxu0
      %v1036 = vadd.f32 0.0, %v1035
      %1037 = vmatprep.mubr.f32.mxu0 0.0
      %1038 = vmatmul.mubr.f32.gmra.mrb[0].mxu0 %v273
      %v1039 = vpop.f32.mrb[0].mxu0
      %v1040 = vadd.f32 0.0, %v1039
      %v1041 = vpop.f32.mrb[0].mxu0
      %v1042 = vadd.f32 0.0, %v1041
      %1043 = vmatprep.mubr.f32.mxu0 0.0
      %1044 = vmatmul.mubr.f32.gmra.mrb[0].mxu0 %v276
      %v1045 = vpop.f32.mrb[0].mxu0
      %v1046 = vadd.f32 0.0, %v1045
      %v1047 = vpop.f32.mrb[0].mxu0
      %v1048 = vadd.f32 0.0, %v1047
      %1049 = vmatprep.mubr.f32.mxu0 0.0
      %1050 = vmatmul.mubr.f32.gmra.mrb[0].mxu0 %v279
      %v1051 = vpop.f32.mrb[0].mxu0
      %v1052 = vadd.f32 0.0, %v1051
      %v1053 = vpop.f32.mrb[0].mxu0
      %v1054 = vadd.f32 0.0, %v1053
      %1055 = vmatprep.mubr.f32.mxu0 0.0
      %1056 = vmatmul.mubr.f32.gmra.mrb[0].mxu0 %v282
      %v1057 = vpop.f32.mrb[0].mxu0
      %v1058 = vadd.f32 0.0, %v1057
      %v1059 = vpop.f32.mrb[0].mxu0
      %v1060 = vadd.f32 0.0, %v1059
      %1061 = vmatprep.mubr.f32.mxu0 0.0
      %1062 = vmatmul.mubr.f32.gmra.mrb[0].mxu0 %v285
      %v1063 = vpop.f32.mrb[0].mxu0
      %v1064 = vadd.f32 0.0, %v1063
      %v1065 = vpop.f32.mrb[0].mxu0
      %v1066 = vadd.f32 0.0, %v1065
      %1067 = vmatprep.mubr.f32.mxu0 0.0
      %1068 = vmatmul.mubr.f32.gmra.mrb[0].mxu0 %v288
      %v1069 = vpop.f32.mrb[0].mxu0
      %v1070 = vadd.f32 0.0, %v1069
      %v1071 = vpop.f32.mrb[0].mxu0
      %v1072 = vadd.f32 0.0, %v1071
      %1073 = vmatprep.mubr.f32.mxu0 0.0
      %1074 = vmatmul.mubr.f32.gmra.mrb[0].mxu0 %v291
      %v1075 = vpop.f32.mrb[0].mxu0
      %v1076 = vadd.f32 0.0, %v1075
      %v1077 = vpop.f32.mrb[0].mxu0
      %v1078 = vadd.f32 0.0, %v1077
      %1079 = vmatprep.mubr.f32.mxu0 0.0
      %1080 = vmatmul.mubr.f32.gmra.mrb[0].mxu0 %v294
      %v1081 = vpop.f32.mrb[0].mxu0
      %v1082 = vadd.f32 0.0, %v1081
      %v1083 = vpop.f32.mrb[0].mxu0
      %v1084 = vadd.f32 0.0, %v1083
      %1085 = vmatprep.mubr.f32.mxu0 0.0
      %1086 = vmatmul.mubr.f32.gmra.mrb[0].mxu0 %v297
      %v1087 = vpop.f32.mrb[0].mxu0
      %v1088 = vadd.f32 0.0, %v1087
      %v1089 = vpop.f32.mrb[0].mxu0
      %v1090 = vadd.f32 0.0, %v1089
      %1091 = vmatprep.mubr.f32.mxu0 0.0
      %1092 = vmatmul.mubr.f32.gmra.mrb[0].mxu0 %v300
      %v1093 = vpop.f32.mrb[0].mxu0
      %v1094 = vadd.f32 0.0, %v1093
      %v1095 = vpop.f32.mrb[0].mxu0
      %v1096 = vadd.f32 0.0, %v1095
      %1097 = vmatprep.mubr.f32.mxu0 0.0
      %1098 = vmatmul.mubr.f32.gmra.mrb[0].mxu0 %v303
      %v1099 = vpop.f32.mrb[0].mxu0
      %v1100 = vadd.f32 0.0, %v1099
      %v1101 = vpop.f32.mrb[0].mxu0
      %v1102 = vadd.f32 0.0, %v1101
      %1103 = vmatprep.mubr.f32.mxu0 0.0
      %1104 = vmatmul.mubr.f32.gmra.mrb[0].mxu0 %v306
      %v1105 = vpop.f32.mrb[0].mxu0
      %v1106 = vadd.f32 0.0, %v1105
      %v1107 = vpop.f32.mrb[0].mxu0
      %v1108 = vadd.f32 0.0, %v1107
      %1109 = vmatprep.mubr.f32.mxu0 0.0
      %1110 = vmatmul.mubr.f32.gmra.mrb[0].mxu0 %v309
      %v1111 = vpop.f32.mrb[0].mxu0
      %v1112 = vadd.f32 0.0, %v1111
      %v1113 = vpop.f32.mrb[0].mxu0
      %v1114 = vadd.f32 0.0, %v1113
      %1115 = vdwg.mxu0
      %1116 = vmatprep.subr.mxu0 %v225
      %1117 = vmatpush1.msra.mxu0 %v224
      %1118 = vmatprep.subr.mxu0 %v237
      %1119 = vmatpush1.msra.mxu0 %v236
      %1120 = vmatprep.subr.mxu0 %v249
      %1121 = vmatpush1.msra.mxu0 %v248
      %1122 = vmatprep.subr.mxu0 %v261
      %1123 = vmatpush1.msra.mxu0 %v260
      %1124 = vmatprep.subr.mxu0 0.0
      %1125 = vmatpush1.msra.mxu0 0.0
      %1126 = vmatprep.subr.mxu0 0.0
      %1127 = vmatpush1.msra.mxu0 0.0
      %1128 = vmatprep.subr.mxu0 0.0
      %1129 = vmatpush1.msra.mxu0 0.0
      %1130 = vmatprep.subr.mxu0 0.0
      %1131 = vmatpush1.msra.mxu0 0.0
      %1132 = vmatprep.subr.mxu0 0.0
      %1133 = vmatpush1.msra.mxu0 0.0
      %1134 = vmatprep.subr.mxu0 0.0
      %1135 = vmatpush1.msra.mxu0 0.0
      %1136 = vmatprep.subr.mxu0 0.0
      %1137 = vmatpush1.msra.mxu0 0.0
      %1138 = vmatprep.subr.mxu0 0.0
      %1139 = vmatpush1.msra.mxu0 0.0
      %1140 = vmatprep.subr.mxu0 0.0
      %1141 = vmatpush1.msra.mxu0 0.0
      %1142 = vmatprep.subr.mxu0 0.0
      %1143 = vmatpush1.msra.mxu0 0.0
      %1144 = vmatprep.subr.mxu0 0.0
      %1145 = vmatpush1.msra.mxu0 0.0
      %1146 = vmatprep.subr.mxu0 0.0
      %1147 = vmatpush1.msra.mxu0 0.0
      %1148 = vmatprep.subr.mxu0 0.0
      %1149 = vmatpush1.msra.mxu0 0.0
      %1150 = vmatprep.subr.mxu0 0.0
      %1151 = vmatpush1.msra.mxu0 0.0
      %1152 = vmatprep.subr.mxu0 0.0
      %1153 = vmatpush1.msra.mxu0 0.0
      %1154 = vmatprep.subr.mxu0 0.0
      %1155 = vmatpush1.msra.mxu0 0.0
      %1156 = vmatprep.subr.mxu0 0.0
      %1157 = vmatpush1.msra.mxu0 0.0
      %1158 = vmatprep.subr.mxu0 0.0
      %1159 = vmatpush1.msra.mxu0 0.0
      %1160 = vmatprep.subr.mxu0 0.0
      %1161 = vmatpush1.msra.mxu0 0.0
      %1162 = vmatprep.subr.mxu0 0.0
      %1163 = vmatpush1.msra.mxu0 0.0
      %1164 = vmatprep.subr.mxu0 0.0
      %1165 = vmatpush1.msra.mxu0 0.0
      %1166 = vmatprep.subr.mxu0 0.0
      %1167 = vmatpush1.msra.mxu0 0.0
      %1168 = vmatprep.subr.mxu0 0.0
      %1169 = vmatpush1.msra.mxu0 0.0
      %1170 = vmatprep.subr.mxu0 0.0
      %1171 = vmatpush1.msra.mxu0 0.0
      %1172 = vmatprep.subr.mxu0 0.0
      %1173 = vmatpush1.msra.mxu0 0.0
      %1174 = vmatprep.subr.mxu0 0.0
      %1175 = vmatpush1.msra.mxu0 0.0
      %1176 = vmatprep.subr.mxu0 0.0
      %1177 = vmatpush1.msra.mxu0 0.0
      %1178 = vmatprep.subr.mxu0 0.0
      %1179 = vmatpush1.msra.mxu0 0.0
      %1180 = vmatprep.mubr.f32.mxu0 0.0
      %1181 = vmatmul.mubr.f32.gmra.mrb[0].mxu0 %v264
      %v1182 = vpop.f32.mrb[0].mxu0
      %v1183 = vadd.f32 0.0, %v1182
      %v1184 = vpop.f32.mrb[0].mxu0
      %v1185 = vadd.f32 0.0, %v1184
      %1186 = vmatprep.mubr.f32.mxu0 0.0
      %1187 = vmatmul.mubr.f32.gmra.mrb[0].mxu0 %v267
      %v1188 = vpop.f32.mrb[0].mxu0
      %v1189 = vadd.f32 0.0, %v1188
      %v1190 = vpop.f32.mrb[0].mxu0
      %v1191 = vadd.f32 0.0, %v1190
      %1192 = vmatprep.mubr.f32.mxu0 0.0
      %1193 = vmatmul.mubr.f32.gmra.mrb[0].mxu0 %v270
      %v1194 = vpop.f32.mrb[0].mxu0
      %v1195 = vadd.f32 0.0, %v1194
      %v1196 = vpop.f32.mrb[0].mxu0
      %v1197 = vadd.f32 0.0, %v1196
      %1198 = vmatprep.mubr.f32.mxu0 0.0
      %1199 = vmatmul.mubr.f32.gmra.mrb[0].mxu0 %v273
      %v1200 = vpop.f32.mrb[0].mxu0
      %v1201 = vadd.f32 0.0, %v1200
      %v1202 = vpop.f32.mrb[0].mxu0
      %v1203 = vadd.f32 0.0, %v1202
      %1204 = vmatprep.mubr.f32.mxu0 0.0
      %1205 = vmatmul.mubr.f32.gmra.mrb[0].mxu0 %v276
      %v1206 = vpop.f32.mrb[0].mxu0
      %v1207 = vadd.f32 0.0, %v1206
      %v1208 = vpop.f32.mrb[0].mxu0
      %v1209 = vadd.f32 0.0, %v1208
      %1210 = vmatprep.mubr.f32.mxu0 0.0
      %1211 = vmatmul.mubr.f32.gmra.mrb[0].mxu0 %v279
      %v1212 = vpop.f32.mrb[0].mxu0
      %v1213 = vadd.f32 0.0, %v1212
      %v1214 = vpop.f32.mrb[0].mxu0
      %v1215 = vadd.f32 0.0, %v1214
      %1216 = vmatprep.mubr.f32.mxu0 0.0
      %1217 = vmatmul.mubr.f32.gmra.mrb[0].mxu0 %v282
      %v1218 = vpop.f32.mrb[0].mxu0
      %v1219 = vadd.f32 0.0, %v1218
      %v1220 = vpop.f32.mrb[0].mxu0
      %v1221 = vadd.f32 0.0, %v1220
      %1222 = vmatprep.mubr.f32.mxu0 0.0
      %1223 = vmatmul.mubr.f32.gmra.mrb[0].mxu0 %v285
      %v1224 = vpop.f32.mrb[0].mxu0
      %v1225 = vadd.f32 0.0, %v1224
      %v1226 = vpop.f32.mrb[0].mxu0
      %v1227 = vadd.f32 0.0, %v1226
      %1228 = vmatprep.mubr.f32.mxu0 0.0
      %1229 = vmatmul.mubr.f32.gmra.mrb[0].mxu0 %v288
      %v1230 = vpop.f32.mrb[0].mxu0
      %v1231 = vadd.f32 0.0, %v1230
      %v1232 = vpop.f32.mrb[0].mxu0
      %v1233 = vadd.f32 0.0, %v1232
      %1234 = vmatprep.mubr.f32.mxu0 0.0
      %1235 = vmatmul.mubr.f32.gmra.mrb[0].mxu0 %v291
      %v1236 = vpop.f32.mrb[0].mxu0
      %v1237 = vadd.f32 0.0, %v1236
      %v1238 = vpop.f32.mrb[0].mxu0
      %v1239 = vadd.f32 0.0, %v1238
      %1240 = vmatprep.mubr.f32.mxu0 0.0
      %1241 = vmatmul.mubr.f32.gmra.mrb[0].mxu0 %v294
      %v1242 = vpop.f32.mrb[0].mxu0
      %v1243 = vadd.f32 0.0, %v1242
      %v1244 = vpop.f32.mrb[0].mxu0
      %v1245 = vadd.f32 0.0, %v1244
      %1246 = vmatprep.mubr.f32.mxu0 0.0
      %1247 = vmatmul.mubr.f32.gmra.mrb[0].mxu0 %v297
      %v1248 = vpop.f32.mrb[0].mxu0
      %v1249 = vadd.f32 0.0, %v1248
      %v1250 = vpop.f32.mrb[0].mxu0
      %v1251 = vadd.f32 0.0, %v1250
      %1252 = vmatprep.mubr.f32.mxu0 0.0
      %1253 = vmatmul.mubr.f32.gmra.mrb[0].mxu0 %v300
      %v1254 = vpop.f32.mrb[0].mxu0
      %v1255 = vadd.f32 0.0, %v1254
      %v1256 = vpop.f32.mrb[0].mxu0
      %v1257 = vadd.f32 0.0, %v1256
      %1258 = vmatprep.mubr.f32.mxu0 0.0
      %1259 = vmatmul.mubr.f32.gmra.mrb[0].mxu0 %v303
      %v1260 = vpop.f32.mrb[0].mxu0
      %v1261 = vadd.f32 0.0, %v1260
      %v1262 = vpop.f32.mrb[0].mxu0
      %v1263 = vadd.f32 0.0, %v1262
      %1264 = vmatprep.mubr.f32.mxu0 0.0
      %1265 = vmatmul.mubr.f32.gmra.mrb[0].mxu0 %v306
      %v1266 = vpop.f32.mrb[0].mxu0
      %v1267 = vadd.f32 0.0, %v1266
      %v1268 = vpop.f32.mrb[0].mxu0
      %v1269 = vadd.f32 0.0, %v1268
      %1270 = vmatprep.mubr.f32.mxu0 0.0
      %1271 = vmatmul.mubr.f32.gmra.mrb[0].mxu0 %v309
      %v1272 = vpop.f32.mrb[0].mxu0
      %v1273 = vadd.f32 0.0, %v1272
      %v1274 = vpop.f32.mrb[0].mxu0
      %v1275 = vadd.f32 0.0, %v1274
      %1276 = vdwg.mxu0
      %vm1277 = vcmask 523264
      %v1279 = vsel %vm1277, %v378, 0
      %v1282 = vsel %vm1277, %v384, 0
      %v1285 = vsel %vm1277, %v390, 0
      %v1288 = vsel %vm1277, %v396, 0
      %v1291 = vsel %vm1277, %v402, 0
      %v1294 = vsel %vm1277, %v408, 0
      %v1297 = vsel %vm1277, %v414, 0
      %v1300 = vsel %vm1277, %v420, 0
      %v1303 = vsel %vm1277, %v426, 0
      %v1306 = vsel %vm1277, %v432, 0
      %v1309 = vsel %vm1277, %v438, 0
      %v1312 = vsel %vm1277, %v444, 0
      %v1315 = vsel %vm1277, %v450, 0
      %v1318 = vsel %vm1277, %v456, 0
      %v1321 = vsel %vm1277, %v462, 0
      %v1324 = vsel %vm1277, %v468, 0
      %v1327 = vsel %vm1277, %v700, 0
      %v1330 = vsel %vm1277, %v706, 0
      %v1333 = vsel %vm1277, %v712, 0
      %v1336 = vsel %vm1277, %v718, 0
      %v1339 = vsel %vm1277, %v724, 0
      %v1342 = vsel %vm1277, %v730, 0
      %v1345 = vsel %vm1277, %v736, 0
      %v1348 = vsel %vm1277, %v742, 0
      %v1351 = vsel %vm1277, %v748, 0
      %v1354 = vsel %vm1277, %v754, 0
      %v1357 = vsel %vm1277, %v760, 0
      %v1360 = vsel %vm1277, %v766, 0
      %v1363 = vsel %vm1277, %v772, 0
      %v1366 = vsel %vm1277, %v778, 0
      %v1369 = vsel %vm1277, %v784, 0
      %v1372 = vsel %vm1277, %v790, 0
      %1374 = vmatprep.subr.mxu0 0.0
      %1375 = vmatpush1.xpose.msra.mxu0 %v1327
      %1376 = vmatprep.subr.mxu0 0.0
      %1377 = vmatpush1.xpose.msra.mxu0 %v1330
      %1378 = vmatprep.subr.mxu0 0.0
      %1379 = vmatpush1.xpose.msra.mxu0 %v1333
      %1380 = vmatprep.subr.mxu0 0.0
      %1381 = vmatpush1.xpose.msra.mxu0 %v1336
      %1382 = vmatprep.subr.mxu0 0.0
      %1383 = vmatpush1.xpose.msra.mxu0 %v1339
      %1384 = vmatprep.subr.mxu0 0.0
      %1385 = vmatpush1.xpose.msra.mxu0 %v1342
      %1386 = vmatprep.subr.mxu0 0.0
      %1387 = vmatpush1.xpose.msra.mxu0 %v1345
      %1388 = vmatprep.subr.mxu0 0.0
      %1389 = vmatpush1.xpose.msra.mxu0 %v1348
      %1390 = vmatprep.subr.mxu0 0.0
      %1391 = vmatpush1.xpose.msra.mxu0 %v1351
      %1392 = vmatprep.subr.mxu0 0.0
      %1393 = vmatpush1.xpose.msra.mxu0 %v1354
      %1394 = vmatprep.subr.mxu0 0.0
      %1395 = vmatpush1.xpose.msra.mxu0 %v1357
      %1396 = vmatprep.subr.mxu0 0.0
      %1397 = vmatpush1.xpose.msra.mxu0 %v1360
      %1398 = vmatprep.subr.mxu0 0.0
      %1399 = vmatpush1.xpose.msra.mxu0 %v1363
      %1400 = vmatprep.subr.mxu0 0.0
      %1401 = vmatpush1.xpose.msra.mxu0 %v1366
      %1402 = vmatprep.subr.mxu0 0.0
      %1403 = vmatpush1.xpose.msra.mxu0 %v1369
      %1404 = vmatprep.subr.mxu0 0.0
      %1405 = vmatpush1.xpose.msra.mxu0 %v1372
      %1406 = vmatprep.subr.mxu0 0.0
      %1407 = vmatpush1.xpose.msra.mxu0 0.0
      %1408 = vmatprep.subr.mxu0 0.0
      %1409 = vmatpush1.xpose.msra.mxu0 0.0
      %1410 = vmatprep.subr.mxu0 0.0
      %1411 = vmatpush1.xpose.msra.mxu0 0.0
      %1412 = vmatprep.subr.mxu0 0.0
      %1413 = vmatpush1.xpose.msra.mxu0 0.0
      %1414 = vmatprep.subr.mxu0 0.0
      %1415 = vmatpush1.xpose.msra.mxu0 0.0
      %1416 = vmatprep.subr.mxu0 0.0
      %1417 = vmatpush1.xpose.msra.mxu0 0.0
      %1418 = vmatprep.subr.mxu0 0.0
      %1419 = vmatpush1.xpose.msra.mxu0 0.0
      %1420 = vmatprep.subr.mxu0 0.0
      %1421 = vmatpush1.xpose.msra.mxu0 0.0
      %1422 = vmatprep.subr.mxu0 0.0
      %1423 = vmatpush1.xpose.msra.mxu0 0.0
      %1424 = vmatprep.subr.mxu0 0.0
      %1425 = vmatpush1.xpose.msra.mxu0 0.0
      %1426 = vmatprep.subr.mxu0 0.0
      %1427 = vmatpush1.xpose.msra.mxu0 0.0
      %1428 = vmatprep.subr.mxu0 0.0
      %1429 = vmatpush1.xpose.msra.mxu0 0.0
      %1430 = vmatprep.subr.mxu0 0.0
      %1431 = vmatpush1.xpose.msra.mxu0 0.0
      %1432 = vmatprep.subr.mxu0 0.0
      %1433 = vmatpush1.xpose.msra.mxu0 0.0
      %1434 = vmatprep.subr.mxu0 0.0
      %1435 = vmatpush1.xpose.msra.mxu0 0.0
      %1436 = vmatprep.subr.mxu0 0.0
      %1437 = vmatpush1.xpose.msra.mxu0 0.0
      %1438 = vmatprep.mubr.f32.mxu0 0.0
      %1439 = vmatmul.mubr.f32.gmra.mrb[0].mxu0 %v1279
      %v1440 = vpop.f32.mrb[0].mxu0
      %v1441 = vadd.f32 0.0, %v1440
      %v1442 = vpop.f32.mrb[0].mxu0
      %1443 = vmatprep.mubr.f32.mxu0 0.0
      %1444 = vmatmul.mubr.f32.gmra.mrb[0].mxu0 %v1282
      %v1445 = vpop.f32.mrb[0].mxu0
      %v1446 = vadd.f32 0.0, %v1445
      %v1447 = vpop.f32.mrb[0].mxu0
      %1448 = vmatprep.mubr.f32.mxu0 0.0
      %1449 = vmatmul.mubr.f32.gmra.mrb[0].mxu0 %v1285
      %v1450 = vpop.f32.mrb[0].mxu0
      %v1451 = vadd.f32 0.0, %v1450
      %v1452 = vpop.f32.mrb[0].mxu0
      %1453 = vmatprep.mubr.f32.mxu0 0.0
      %1454 = vmatmul.mubr.f32.gmra.mrb[0].mxu0 %v1288
      %v1455 = vpop.f32.mrb[0].mxu0
      %v1456 = vadd.f32 0.0, %v1455
      %v1457 = vpop.f32.mrb[0].mxu0
      %1458 = vmatprep.mubr.f32.mxu0 0.0
      %1459 = vmatmul.mubr.f32.gmra.mrb[0].mxu0 %v1291
      %v1460 = vpop.f32.mrb[0].mxu0
      %v1461 = vadd.f32 0.0, %v1460
      %v1462 = vpop.f32.mrb[0].mxu0
      %1463 = vmatprep.mubr.f32.mxu0 0.0
      %1464 = vmatmul.mubr.f32.gmra.mrb[0].mxu0 %v1294
      %v1465 = vpop.f32.mrb[0].mxu0
      %v1466 = vadd.f32 0.0, %v1465
      %v1467 = vpop.f32.mrb[0].mxu0
      %1468 = vmatprep.mubr.f32.mxu0 0.0
      %1469 = vmatmul.mubr.f32.gmra.mrb[0].mxu0 %v1297
      %v1470 = vpop.f32.mrb[0].mxu0
      %v1471 = vadd.f32 0.0, %v1470
      %v1472 = vpop.f32.mrb[0].mxu0
      %1473 = vmatprep.mubr.f32.mxu0 0.0
      %1474 = vmatmul.mubr.f32.gmra.mrb[0].mxu0 %v1300
      %v1475 = vpop.f32.mrb[0].mxu0
      %v1476 = vadd.f32 0.0, %v1475
      %v1477 = vpop.f32.mrb[0].mxu0
      %1478 = vmatprep.mubr.f32.mxu0 0.0
      %1479 = vmatmul.mubr.f32.gmra.mrb[0].mxu0 %v1303
      %v1480 = vpop.f32.mrb[0].mxu0
      %v1481 = vadd.f32 0.0, %v1480
      %v1482 = vpop.f32.mrb[0].mxu0
      %1483 = vmatprep.mubr.f32.mxu0 0.0
      %1484 = vmatmul.mubr.f32.gmra.mrb[0].mxu0 %v1306
      %v1485 = vpop.f32.mrb[0].mxu0
      %v1486 = vadd.f32 0.0, %v1485
      %v1487 = vpop.f32.mrb[0].mxu0
      %1488 = vmatprep.mubr.f32.mxu0 0.0
      %1489 = vmatmul.mubr.f32.gmra.mrb[0].mxu0 %v1309
      %v1490 = vpop.f32.mrb[0].mxu0
      %v1491 = vadd.f32 0.0, %v1490
      %v1492 = vpop.f32.mrb[0].mxu0
      %1493 = vmatprep.mubr.f32.mxu0 0.0
      %1494 = vmatmul.mubr.f32.gmra.mrb[0].mxu0 %v1312
      %v1495 = vpop.f32.mrb[0].mxu0
      %v1496 = vadd.f32 0.0, %v1495
      %v1497 = vpop.f32.mrb[0].mxu0
      %1498 = vmatprep.mubr.f32.mxu0 0.0
      %1499 = vmatmul.mubr.f32.gmra.mrb[0].mxu0 %v1315
      %v1500 = vpop.f32.mrb[0].mxu0
      %v1501 = vadd.f32 0.0, %v1500
      %v1502 = vpop.f32.mrb[0].mxu0
      %1503 = vmatprep.mubr.f32.mxu0 0.0
      %1504 = vmatmul.mubr.f32.gmra.mrb[0].mxu0 %v1318
      %v1505 = vpop.f32.mrb[0].mxu0
      %v1506 = vadd.f32 0.0, %v1505
      %v1507 = vpop.f32.mrb[0].mxu0
      %1508 = vmatprep.mubr.f32.mxu0 0.0
      %1509 = vmatmul.mubr.f32.gmra.mrb[0].mxu0 %v1321
      %v1510 = vpop.f32.mrb[0].mxu0
      %v1511 = vadd.f32 0.0, %v1510
      %v1512 = vpop.f32.mrb[0].mxu0
      %1513 = vmatprep.mubr.f32.mxu0 0.0
      %1514 = vmatmul.mubr.f32.gmra.mrb[0].mxu0 %v1324
      %v1515 = vpop.f32.mrb[0].mxu0
      %v1516 = vadd.f32 0.0, %v1515
      %v1517 = vpop.f32.mrb[0].mxu0
      %1518 = vdwg.mxu0
      %v1519 = vmul.f32 %v1441, 0.17677669
      %v1520 = vmul.f32 %v1446, 0.17677669
      %v1521 = vmul.f32 %v1451, 0.17677669
      %v1522 = vmul.f32 %v1456, 0.17677669
      %v1523 = vmul.f32 %v1461, 0.17677669
      %v1524 = vmul.f32 %v1466, 0.17677669
      %v1525 = vmul.f32 %v1471, 0.17677669
      %v1526 = vmul.f32 %v1476, 0.17677669
      %v1527 = vmul.f32 %v1481, 0.17677669
      %v1528 = vmul.f32 %v1486, 0.17677669
      %v1529 = vmul.f32 %v1491, 0.17677669
      %v1530 = vmul.f32 %v1496, 0.17677669
      %v1531 = vmul.f32 %v1501, 0.17677669
      %v1532 = vmul.f32 %v1506, 0.17677669
      %v1533 = vmul.f32 %v1511, 0.17677669
      %v1534 = vmul.f32 %v1516, 0.17677669
      %1535 = vmax.xlane.f32.xlu0 %v1519
      %v1536 = vpop.xlane.xlu0 %1535
      %1537 = vmax.xlane.f32.xlu0 %v1520
      %v1538 = vpop.xlane.xlu0 %1537
      %1539 = vmax.xlane.f32.xlu0 %v1521
      %v1540 = vpop.xlane.xlu0 %1539
      %1541 = vmax.xlane.f32.xlu0 %v1522
      %v1542 = vpop.xlane.xlu0 %1541
      %1543 = vmax.xlane.f32.xlu0 %v1523
      %v1544 = vpop.xlane.xlu0 %1543
      %1545 = vmax.xlane.f32.xlu0 %v1524
      %v1546 = vpop.xlane.xlu0 %1545
      %1547 = vmax.xlane.f32.xlu0 %v1525
      %v1548 = vpop.xlane.xlu0 %1547
      %1549 = vmax.xlane.f32.xlu0 %v1526
      %v1550 = vpop.xlane.xlu0 %1549
      %1551 = vmax.xlane.f32.xlu0 %v1527
      %v1552 = vpop.xlane.xlu0 %1551
      %1553 = vmax.xlane.f32.xlu0 %v1528
      %v1554 = vpop.xlane.xlu0 %1553
      %1555 = vmax.xlane.f32.xlu0 %v1529
      %v1556 = vpop.xlane.xlu0 %1555
      %1557 = vmax.xlane.f32.xlu0 %v1530
      %v1558 = vpop.xlane.xlu0 %1557
      %1559 = vmax.xlane.f32.xlu0 %v1531
      %v1560 = vpop.xlane.xlu0 %1559
      %1561 = vmax.xlane.f32.xlu0 %v1532
      %v1562 = vpop.xlane.xlu0 %1561
      %1563 = vmax.xlane.f32.xlu0 %v1533
      %v1564 = vpop.xlane.xlu0 %1563
      %1565 = vmax.xlane.f32.xlu0 %v1534
      %v1566 = vpop.xlane.xlu0 %1565
      %v1567 = vsub.f32 %v1519, %v1536
      %v1568 = vsub.f32 %v1520, %v1538
      %v1569 = vsub.f32 %v1521, %v1540
      %v1570 = vsub.f32 %v1522, %v1542
      %v1571 = vsub.f32 %v1523, %v1544
      %v1572 = vsub.f32 %v1524, %v1546
      %v1573 = vsub.f32 %v1525, %v1548
      %v1574 = vsub.f32 %v1526, %v1550
      %v1575 = vsub.f32 %v1527, %v1552
      %v1576 = vsub.f32 %v1528, %v1554
      %v1577 = vsub.f32 %v1529, %v1556
      %v1578 = vsub.f32 %v1530, %v1558
      %v1579 = vsub.f32 %v1531, %v1560
      %v1580 = vsub.f32 %v1532, %v1562
      %v1581 = vsub.f32 %v1533, %v1564
      %v1582 = vsub.f32 %v1534, %v1566
      %v1583 = vmul.f32 %v1567, 1.442695
      %v1584 = vpow.pop %v1583
      %v1585 = vmul.f32 %v1568, 1.442695
      %v1586 = vpow.pop %v1585
      %v1587 = vmul.f32 %v1569, 1.442695
      %v1588 = vpow.pop %v1587
      %v1589 = vmul.f32 %v1570, 1.442695
      %v1590 = vpow.pop %v1589
      %v1591 = vmul.f32 %v1571, 1.442695
      %v1592 = vpow.pop %v1591
      %v1593 = vmul.f32 %v1572, 1.442695
      %v1594 = vpow.pop %v1593
      %v1595 = vmul.f32 %v1573, 1.442695
      %v1596 = vpow.pop %v1595
      %v1597 = vmul.f32 %v1574, 1.442695
      %v1598 = vpow.pop %v1597
      %v1599 = vmul.f32 %v1575, 1.442695
      %v1600 = vpow.pop %v1599
      %v1601 = vmul.f32 %v1576, 1.442695
      %v1602 = vpow.pop %v1601
      %v1603 = vmul.f32 %v1577, 1.442695
      %v1604 = vpow.pop %v1603
      %v1605 = vmul.f32 %v1578, 1.442695
      %v1606 = vpow.pop %v1605
      %v1607 = vmul.f32 %v1579, 1.442695
      %v1608 = vpow.pop %v1607
      %v1609 = vmul.f32 %v1580, 1.442695
      %v1610 = vpow.pop %v1609
      %v1611 = vmul.f32 %v1581, 1.442695
      %v1612 = vpow.pop %v1611
      %v1613 = vmul.f32 %v1582, 1.442695
      %v1614 = vpow.pop %v1613
      %1615 = vadd.xlane.f32.xlu0 %v1584
      %v1616 = vpop.xlane.xlu0 %1615
      %1617 = vadd.xlane.f32.xlu0 %v1586
      %v1618 = vpop.xlane.xlu0 %1617
      %1619 = vadd.xlane.f32.xlu0 %v1588
      %v1620 = vpop.xlane.xlu0 %1619
      %1621 = vadd.xlane.f32.xlu0 %v1590
      %v1622 = vpop.xlane.xlu0 %1621
      %1623 = vadd.xlane.f32.xlu0 %v1592
      %v1624 = vpop.xlane.xlu0 %1623
      %1625 = vadd.xlane.f32.xlu0 %v1594
      %v1626 = vpop.xlane.xlu0 %1625
      %1627 = vadd.xlane.f32.xlu0 %v1596
      %v1628 = vpop.xlane.xlu0 %1627
      %1629 = vadd.xlane.f32.xlu0 %v1598
      %v1630 = vpop.xlane.xlu0 %1629
      %1631 = vadd.xlane.f32.xlu0 %v1600
      %v1632 = vpop.xlane.xlu0 %1631
      %1633 = vadd.xlane.f32.xlu0 %v1602
      %v1634 = vpop.xlane.xlu0 %1633
      %1635 = vadd.xlane.f32.xlu0 %v1604
      %v1636 = vpop.xlane.xlu0 %1635
      %1637 = vadd.xlane.f32.xlu0 %v1606
      %v1638 = vpop.xlane.xlu0 %1637
      %1639 = vadd.xlane.f32.xlu0 %v1608
      %v1640 = vpop.xlane.xlu0 %1639
      %1641 = vadd.xlane.f32.xlu0 %v1610
      %v1642 = vpop.xlane.xlu0 %1641
      %1643 = vadd.xlane.f32.xlu0 %v1612
      %v1644 = vpop.xlane.xlu0 %1643
      %1645 = vadd.xlane.f32.xlu0 %v1614
      %v1646 = vpop.xlane.xlu0 %1645
      %v1647 = vrcp.pop %v1616
      %v1648 = vmul.f32 %v1584, %v1647
      %v1649 = vrcp.pop %v1618
      %v1650 = vmul.f32 %v1586, %v1649
      %v1651 = vrcp.pop %v1620
      %v1652 = vmul.f32 %v1588, %v1651
      %v1653 = vrcp.pop %v1622
      %v1654 = vmul.f32 %v1590, %v1653
      %v1655 = vrcp.pop %v1624
      %v1656 = vmul.f32 %v1592, %v1655
      %v1657 = vrcp.pop %v1626
      %v1658 = vmul.f32 %v1594, %v1657
      %v1659 = vrcp.pop %v1628
      %v1660 = vmul.f32 %v1596, %v1659
      %v1661 = vrcp.pop %v1630
      %v1662 = vmul.f32 %v1598, %v1661
      %v1663 = vrcp.pop %v1632
      %v1664 = vmul.f32 %v1600, %v1663
      %v1665 = vrcp.pop %v1634
      %v1666 = vmul.f32 %v1602, %v1665
      %v1667 = vrcp.pop %v1636
      %v1668 = vmul.f32 %v1604, %v1667
      %v1669 = vrcp.pop %v1638
      %v1670 = vmul.f32 %v1606, %v1669
      %v1671 = vrcp.pop %v1640
      %v1672 = vmul.f32 %v1608, %v1671
      %v1673 = vrcp.pop %v1642
      %v1674 = vmul.f32 %v1610, %v1673
      %v1675 = vrcp.pop %v1644
      %v1676 = vmul.f32 %v1612, %v1675
      %v1677 = vrcp.pop %v1646
      %v1678 = vmul.f32 %v1614, %v1677
      %1679 = vmatprep.subr.mxu0 0.0
      %1680 = vmatpush1.msra.mxu0 %v1022
      %1681 = vmatprep.subr.mxu0 0.0
      %1682 = vmatpush1.msra.mxu0 %v1028
      %1683 = vmatprep.subr.mxu0 0.0
      %1684 = vmatpush1.msra.mxu0 %v1034
      %1685 = vmatprep.subr.mxu0 0.0
      %1686 = vmatpush1.msra.mxu0 %v1040
      %1687 = vmatprep.subr.mxu0 0.0
      %1688 = vmatpush1.msra.mxu0 %v1046
      %1689 = vmatprep.subr.mxu0 0.0
      %1690 = vmatpush1.msra.mxu0 %v1052
      %1691 = vmatprep.subr.mxu0 0.0
      %1692 = vmatpush1.msra.mxu0 %v1058
      %1693 = vmatprep.subr.mxu0 0.0
      %1694 = vmatpush1.msra.mxu0 %v1064
      %1695 = vmatprep.subr.mxu0 0.0
      %1696 = vmatpush1.msra.mxu0 %v1070
      %1697 = vmatprep.subr.mxu0 0.0
      %1698 = vmatpush1.msra.mxu0 %v1076
      %1699 = vmatprep.subr.mxu0 0.0
      %1700 = vmatpush1.msra.mxu0 %v1082
      %1701 = vmatprep.subr.mxu0 0.0
      %1702 = vmatpush1.msra.mxu0 %v1088
      %1703 = vmatprep.subr.mxu0 0.0
      %1704 = vmatpush1.msra.mxu0 %v1094
      %1705 = vmatprep.subr.mxu0 0.0
      %1706 = vmatpush1.msra.mxu0 %v1100
      %1707 = vmatprep.subr.mxu0 0.0
      %1708 = vmatpush1.msra.mxu0 %v1106
      %1709 = vmatprep.subr.mxu0 0.0
      %1710 = vmatpush1.msra.mxu0 %v1112
      %1711 = vmatprep.subr.mxu0 0.0
      %1712 = vmatpush1.msra.mxu0 0.0
      %1713 = vmatprep.subr.mxu0 0.0
      %1714 = vmatpush1.msra.mxu0 0.0
      %1715 = vmatprep.subr.mxu0 0.0
      %1716 = vmatpush1.msra.mxu0 0.0
      %1717 = vmatprep.subr.mxu0 0.0
      %1718 = vmatpush1.msra.mxu0 0.0
      %1719 = vmatprep.subr.mxu0 0.0
      %1720 = vmatpush1.msra.mxu0 0.0
      %1721 = vmatprep.subr.mxu0 0.0
      %1722 = vmatpush1.msra.mxu0 0.0
      %1723 = vmatprep.subr.mxu0 0.0
      %1724 = vmatpush1.msra.mxu0 0.0
      %1725 = vmatprep.subr.mxu0 0.0
      %1726 = vmatpush1.msra.mxu0 0.0
      %1727 = vmatprep.subr.mxu0 0.0
      %1728 = vmatpush1.msra.mxu0 0.0
      %1729 = vmatprep.subr.mxu0 0.0
      %1730 = vmatpush1.msra.mxu0 0.0
      %1731 = vmatprep.subr.mxu0 0.0
      %1732 = vmatpush1.msra.mxu0 0.0
      %1733 = vmatprep.subr.mxu0 0.0
      %1734 = vmatpush1.msra.mxu0 0.0
      %1735 = vmatprep.subr.mxu0 0.0
      %1736 = vmatpush1.msra.mxu0 0.0
      %1737 = vmatprep.subr.mxu0 0.0
      %1738 = vmatpush1.msra.mxu0 0.0
      %1739 = vmatprep.subr.mxu0 0.0
      %1740 = vmatpush1.msra.mxu0 0.0
      %1741 = vmatprep.subr.mxu0 0.0
      %1742 = vmatpush1.msra.mxu0 0.0
      %1743 = vmatprep.mubr.f32.mxu0 0.0
      %1744 = vmatmul.mubr.f32.gmra.mrb[0].mxu0 %v1648
      %v1745 = vpop.f32.mrb[0].mxu0
      %v1746 = vadd.f32 0.0, %v1745
      %v1747 = vpop.f32.mrb[0].mxu0
      %1748 = vmatprep.mubr.f32.mxu0 0.0
      %1749 = vmatmul.mubr.f32.gmra.mrb[0].mxu0 %v1650
      %v1750 = vpop.f32.mrb[0].mxu0
      %v1751 = vadd.f32 0.0, %v1750
      %v1752 = vpop.f32.mrb[0].mxu0
      %1753 = vmatprep.mubr.f32.mxu0 0.0
      %1754 = vmatmul.mubr.f32.gmra.mrb[0].mxu0 %v1652
      %v1755 = vpop.f32.mrb[0].mxu0
      %v1756 = vadd.f32 0.0, %v1755
      %v1757 = vpop.f32.mrb[0].mxu0
      %1758 = vmatprep.mubr.f32.mxu0 0.0
      %1759 = vmatmul.mubr.f32.gmra.mrb[0].mxu0 %v1654
      %v1760 = vpop.f32.mrb[0].mxu0
      %v1761 = vadd.f32 0.0, %v1760
      %v1762 = vpop.f32.mrb[0].mxu0
      %1763 = vmatprep.mubr.f32.mxu0 0.0
      %1764 = vmatmul.mubr.f32.gmra.mrb[0].mxu0 %v1656
      %v1765 = vpop.f32.mrb[0].mxu0
      %v1766 = vadd.f32 0.0, %v1765
      %v1767 = vpop.f32.mrb[0].mxu0
      %1768 = vmatprep.mubr.f32.mxu0 0.0
      %1769 = vmatmul.mubr.f32.gmra.mrb[0].mxu0 %v1658
      %v1770 = vpop.f32.mrb[0].mxu0
      %v1771 = vadd.f32 0.0, %v1770
      %v1772 = vpop.f32.mrb[0].mxu0
      %1773 = vmatprep.mubr.f32.mxu0 0.0
      %1774 = vmatmul.mubr.f32.gmra.mrb[0].mxu0 %v1660
      %v1775 = vpop.f32.mrb[0].mxu0
      %v1776 = vadd.f32 0.0, %v1775
      %v1777 = vpop.f32.mrb[0].mxu0
      %1778 = vmatprep.mubr.f32.mxu0 0.0
      %1779 = vmatmul.mubr.f32.gmra.mrb[0].mxu0 %v1662
      %v1780 = vpop.f32.mrb[0].mxu0
      %v1781 = vadd.f32 0.0, %v1780
      %v1782 = vpop.f32.mrb[0].mxu0
      %1783 = vmatprep.mubr.f32.mxu0 0.0
      %1784 = vmatmul.mubr.f32.gmra.mrb[0].mxu0 %v1664
      %v1785 = vpop.f32.mrb[0].mxu0
      %v1786 = vadd.f32 0.0, %v1785
      %v1787 = vpop.f32.mrb[0].mxu0
      %1788 = vmatprep.mubr.f32.mxu0 0.0
      %1789 = vmatmul.mubr.f32.gmra.mrb[0].mxu0 %v1666
      %v1790 = vpop.f32.mrb[0].mxu0
      %v1791 = vadd.f32 0.0, %v1790
      %v1792 = vpop.f32.mrb[0].mxu0
      %1793 = vmatprep.mubr.f32.mxu0 0.0
      %1794 = vmatmul.mubr.f32.gmra.mrb[0].mxu0 %v1668
      %v1795 = vpop.f32.mrb[0].mxu0
      %v1796 = vadd.f32 0.0, %v1795
      %v1797 = vpop.f32.mrb[0].mxu0
      %1798 = vmatprep.mubr.f32.mxu0 0.0
      %1799 = vmatmul.mubr.f32.gmra.mrb[0].mxu0 %v1670
      %v1800 = vpop.f32.mrb[0].mxu0
      %v1801 = vadd.f32 0.0, %v1800
      %v1802 = vpop.f32.mrb[0].mxu0
      %1803 = vmatprep.mubr.f32.mxu0 0.0
      %1804 = vmatmul.mubr.f32.gmra.mrb[0].mxu0 %v1672
      %v1805 = vpop.f32.mrb[0].mxu0
      %v1806 = vadd.f32 0.0, %v1805
      %v1807 = vpop.f32.mrb[0].mxu0
      %1808 = vmatprep.mubr.f32.mxu0 0.0
      %1809 = vmatmul.mubr.f32.gmra.mrb[0].mxu0 %v1674
      %v1810 = vpop.f32.mrb[0].mxu0
      %v1811 = vadd.f32 0.0, %v1810
      %v1812 = vpop.f32.mrb[0].mxu0
      %1813 = vmatprep.mubr.f32.mxu0 0.0
      %1814 = vmatmul.mubr.f32.gmra.mrb[0].mxu0 %v1676
      %v1815 = vpop.f32.mrb[0].mxu0
      %v1816 = vadd.f32 0.0, %v1815
      %v1817 = vpop.f32.mrb[0].mxu0
      %1818 = vmatprep.mubr.f32.mxu0 0.0
      %1819 = vmatmul.mubr.f32.gmra.mrb[0].mxu0 %v1678
      %v1820 = vpop.f32.mrb[0].mxu0
      %v1821 = vadd.f32 0.0, %v1820
      %v1822 = vpop.f32.mrb[0].mxu0
      %1823 = vdwg.mxu0
      %v1824 = vld [vmem:[%s2] sm:$0xff]
      %v1825 = vld [vmem:[%s2 + $0x8] sm:$0xff]
      %v1826 = vld [vmem:[%s2 + $0x10] sm:$0xff]
      %v1827 = vld [vmem:[%s2 + $0x18] sm:$0xff]
      %v1828 = vld [vmem:[%s2 + $0x20] sm:$0xff]
      %v1829 = vld [vmem:[%s2 + $0x28] sm:$0xff]
      %v1830 = vld [vmem:[%s2 + $0x30] sm:$0xff]
      %v1831 = vld [vmem:[%s2 + $0x38] sm:$0xff]
      %1832 = vrot.lane.b32.xlu0 %v378, 64
      %v1833 = vpop.permute.xlu0 %1832
      %1834 = vrot.lane.b32.xlu0 %v384, 64
      %v1835 = vpop.permute.xlu0 %1834
      %1836 = vrot.lane.b32.xlu0 %v390, 64
      %v1837 = vpop.permute.xlu0 %1836
      %1838 = vrot.lane.b32.xlu0 %v396, 64
      %v1839 = vpop.permute.xlu0 %1838
      %1840 = vrot.lane.b32.xlu0 %v402, 64
      %v1841 = vpop.permute.xlu0 %1840
      %1842 = vrot.lane.b32.xlu0 %v408, 64
      %v1843 = vpop.permute.xlu0 %1842
      %1844 = vrot.lane.b32.xlu0 %v414, 64
      %v1845 = vpop.permute.xlu0 %1844
      %1846 = vrot.lane.b32.xlu0 %v420, 64
      %v1847 = vpop.permute.xlu0 %1846
      %1848 = vrot.lane.b32.xlu0 %v426, 64
      %v1849 = vpop.permute.xlu0 %1848
      %1850 = vrot.lane.b32.xlu0 %v432, 64
      %v1851 = vpop.permute.xlu0 %1850
      %1852 = vrot.lane.b32.xlu0 %v438, 64
      %v1853 = vpop.permute.xlu0 %1852
      %1854 = vrot.lane.b32.xlu0 %v444, 64
      %v1855 = vpop.permute.xlu0 %1854
      %1856 = vrot.lane.b32.xlu0 %v450, 64
      %v1857 = vpop.permute.xlu0 %1856
      %1858 = vrot.lane.b32.xlu0 %v456, 64
      %v1859 = vpop.permute.xlu0 %1858
      %1860 = vrot.lane.b32.xlu0 %v462, 64
      %v1861 = vpop.permute.xlu0 %1860
      %1862 = vrot.lane.b32.xlu0 %v468, 64
      %v1863 = vpop.permute.xlu0 %1862
      %1864 = vrot.lane.b32.xlu0 %v700, 64
      %v1865 = vpop.permute.xlu0 %1864
      %1866 = vrot.lane.b32.xlu0 %v706, 64
      %v1867 = vpop.permute.xlu0 %1866
      %1868 = vrot.lane.b32.xlu0 %v712, 64
      %v1869 = vpop.permute.xlu0 %1868
      %1870 = vrot.lane.b32.xlu0 %v718, 64
      %v1871 = vpop.permute.xlu0 %1870
      %1872 = vrot.lane.b32.xlu0 %v724, 64
      %v1873 = vpop.permute.xlu0 %1872
      %1874 = vrot.lane.b32.xlu0 %v730, 64
      %v1875 = vpop.permute.xlu0 %1874
      %1876 = vrot.lane.b32.xlu0 %v736, 64
      %v1877 = vpop.permute.xlu0 %1876
      %1878 = vrot.lane.b32.xlu0 %v742, 64
      %v1879 = vpop.permute.xlu0 %1878
      %1880 = vrot.lane.b32.xlu0 %v748, 64
      %v1881 = vpop.permute.xlu0 %1880
      %1882 = vrot.lane.b32.xlu0 %v754, 64
      %v1883 = vpop.permute.xlu0 %1882
      %1884 = vrot.lane.b32.xlu0 %v760, 64
      %v1885 = vpop.permute.xlu0 %1884
      %1886 = vrot.lane.b32.xlu0 %v766, 64
      %v1887 = vpop.permute.xlu0 %1886
      %1888 = vrot.lane.b32.xlu0 %v772, 64
      %v1889 = vpop.permute.xlu0 %1888
      %1890 = vrot.lane.b32.xlu0 %v778, 64
      %v1891 = vpop.permute.xlu0 %1890
      %1892 = vrot.lane.b32.xlu0 %v784, 64
      %v1893 = vpop.permute.xlu0 %1892
      %1894 = vrot.lane.b32.xlu0 %v790, 64
      %v1895 = vpop.permute.xlu0 %1894
      %v1896 = vsel %vm1277, %v1833, 0
      %v1898 = vsel %vm1277, %v1835, 0
      %v1900 = vsel %vm1277, %v1837, 0
      %v1902 = vsel %vm1277, %v1839, 0
      %v1904 = vsel %vm1277, %v1841, 0
      %v1906 = vsel %vm1277, %v1843, 0
      %v1908 = vsel %vm1277, %v1845, 0
      %v1910 = vsel %vm1277, %v1847, 0
      %v1912 = vsel %vm1277, %v1849, 0
      %v1914 = vsel %vm1277, %v1851, 0
      %v1916 = vsel %vm1277, %v1853, 0
      %v1918 = vsel %vm1277, %v1855, 0
      %v1920 = vsel %vm1277, %v1857, 0
      %v1922 = vsel %vm1277, %v1859, 0
      %v1924 = vsel %vm1277, %v1861, 0
      %v1926 = vsel %vm1277, %v1863, 0
      %v1928 = vsel %vm1277, %v1865, 0
      %v1930 = vsel %vm1277, %v1867, 0
      %v1932 = vsel %vm1277, %v1869, 0
      %v1934 = vsel %vm1277, %v1871, 0
      %v1936 = vsel %vm1277, %v1873, 0
      %v1938 = vsel %vm1277, %v1875, 0
      %v1940 = vsel %vm1277, %v1877, 0
      %v1942 = vsel %vm1277, %v1879, 0
      %v1944 = vsel %vm1277, %v1881, 0
      %v1946 = vsel %vm1277, %v1883, 0
      %v1948 = vsel %vm1277, %v1885, 0
      %v1950 = vsel %vm1277, %v1887, 0
      %v1952 = vsel %vm1277, %v1889, 0
      %v1954 = vsel %vm1277, %v1891, 0
      %v1956 = vsel %vm1277, %v1893, 0
      %v1958 = vsel %vm1277, %v1895, 0
      %1960 = vmatprep.subr.mxu0 0.0
      %1961 = vmatpush1.xpose.msra.mxu0 %v1928
      %1962 = vmatprep.subr.mxu0 0.0
      %1963 = vmatpush1.xpose.msra.mxu0 %v1930
      %1964 = vmatprep.subr.mxu0 0.0
      %1965 = vmatpush1.xpose.msra.mxu0 %v1932
      %1966 = vmatprep.subr.mxu0 0.0
      %1967 = vmatpush1.xpose.msra.mxu0 %v1934
      %1968 = vmatprep.subr.mxu0 0.0
      %1969 = vmatpush1.xpose.msra.mxu0 %v1936
      %1970 = vmatprep.subr.mxu0 0.0
      %1971 = vmatpush1.xpose.msra.mxu0 %v1938
      %1972 = vmatprep.subr.mxu0 0.0
      %1973 = vmatpush1.xpose.msra.mxu0 %v1940
      %1974 = vmatprep.subr.mxu0 0.0
      %1975 = vmatpush1.xpose.msra.mxu0 %v1942
      %1976 = vmatprep.subr.mxu0 0.0
      %1977 = vmatpush1.xpose.msra.mxu0 %v1944
      %1978 = vmatprep.subr.mxu0 0.0
      %1979 = vmatpush1.xpose.msra.mxu0 %v1946
      %1980 = vmatprep.subr.mxu0 0.0
      %1981 = vmatpush1.xpose.msra.mxu0 %v1948
      %1982 = vmatprep.subr.mxu0 0.0
      %1983 = vmatpush1.xpose.msra.mxu0 %v1950
      %1984 = vmatprep.subr.mxu0 0.0
      %1985 = vmatpush1.xpose.msra.mxu0 %v1952
      %1986 = vmatprep.subr.mxu0 0.0
      %1987 = vmatpush1.xpose.msra.mxu0 %v1954
      %1988 = vmatprep.subr.mxu0 0.0
      %1989 = vmatpush1.xpose.msra.mxu0 %v1956
      %1990 = vmatprep.subr.mxu0 0.0
      %1991 = vmatpush1.xpose.msra.mxu0 %v1958
      %1992 = vmatprep.subr.mxu0 0.0
      %1993 = vmatpush1.xpose.msra.mxu0 0.0
      %1994 = vmatprep.subr.mxu0 0.0
      %1995 = vmatpush1.xpose.msra.mxu0 0.0
      %1996 = vmatprep.subr.mxu0 0.0
      %1997 = vmatpush1.xpose.msra.mxu0 0.0
      %1998 = vmatprep.subr.mxu0 0.0
      %1999 = vmatpush1.xpose.msra.mxu0 0.0
      %2000 = vmatprep.subr.mxu0 0.0
      %2001 = vmatpush1.xpose.msra.mxu0 0.0
      %2002 = vmatprep.subr.mxu0 0.0
      %2003 = vmatpush1.xpose.msra.mxu0 0.0
      %2004 = vmatprep.subr.mxu0 0.0
      %2005 = vmatpush1.xpose.msra.mxu0 0.0
      %2006 = vmatprep.subr.mxu0 0.0
      %2007 = vmatpush1.xpose.msra.mxu0 0.0
      %2008 = vmatprep.subr.mxu0 0.0
      %2009 = vmatpush1.xpose.msra.mxu0 0.0
      %2010 = vmatprep.subr.mxu0 0.0
      %2011 = vmatpush1.xpose.msra.mxu0 0.0
      %2012 = vmatprep.subr.mxu0 0.0
      %2013 = vmatpush1.xpose.msra.mxu0 0.0
      %2014 = vmatprep.subr.mxu0 0.0
      %2015 = vmatpush1.xpose.msra.mxu0 0.0
      %2016 = vmatprep.subr.mxu0 0.0
      %2017 = vmatpush1.xpose.msra.mxu0 0.0
      %2018 = vmatprep.subr.mxu0 0.0
      %2019 = vmatpush1.xpose.msra.mxu0 0.0
      %2020 = vmatprep.subr.mxu0 0.0
      %2021 = vmatpush1.xpose.msra.mxu0 0.0
      %2022 = vmatprep.subr.mxu0 0.0
      %2023 = vmatpush1.xpose.msra.mxu0 0.0
      %2024 = vmatprep.mubr.f32.mxu0 0.0
      %2025 = vmatmul.mubr.f32.gmra.mrb[0].mxu0 %v1896
      %v2026 = vpop.f32.mrb[0].mxu0
      %v2027 = vadd.f32 0.0, %v2026
      %v2028 = vpop.f32.mrb[0].mxu0
      %2029 = vmatprep.mubr.f32.mxu0 0.0
      %2030 = vmatmul.mubr.f32.gmra.mrb[0].mxu0 %v1898
      %v2031 = vpop.f32.mrb[0].mxu0
      %v2032 = vadd.f32 0.0, %v2031
      %v2033 = vpop.f32.mrb[0].mxu0
      %2034 = vmatprep.mubr.f32.mxu0 0.0
      %2035 = vmatmul.mubr.f32.gmra.mrb[0].mxu0 %v1900
      %v2036 = vpop.f32.mrb[0].mxu0
      %v2037 = vadd.f32 0.0, %v2036
      %v2038 = vpop.f32.mrb[0].mxu0
      %2039 = vmatprep.mubr.f32.mxu0 0.0
      %2040 = vmatmul.mubr.f32.gmra.mrb[0].mxu0 %v1902
      %v2041 = vpop.f32.mrb[0].mxu0
      %v2042 = vadd.f32 0.0, %v2041
      %v2043 = vpop.f32.mrb[0].mxu0
      %2044 = vmatprep.mubr.f32.mxu0 0.0
      %2045 = vmatmul.mubr.f32.gmra.mrb[0].mxu0 %v1904
      %v2046 = vpop.f32.mrb[0].mxu0
      %v2047 = vadd.f32 0.0, %v2046
      %v2048 = vpop.f32.mrb[0].mxu0
      %2049 = vmatprep.mubr.f32.mxu0 0.0
      %2050 = vmatmul.mubr.f32.gmra.mrb[0].mxu0 %v1906
      %v2051 = vpop.f32.mrb[0].mxu0
      %v2052 = vadd.f32 0.0, %v2051
      %v2053 = vpop.f32.mrb[0].mxu0
      %2054 = vmatprep.mubr.f32.mxu0 0.0
      %2055 = vmatmul.mubr.f32.gmra.mrb[0].mxu0 %v1908
      %v2056 = vpop.f32.mrb[0].mxu0
      %v2057 = vadd.f32 0.0, %v2056
      %v2058 = vpop.f32.mrb[0].mxu0
      %2059 = vmatprep.mubr.f32.mxu0 0.0
      %2060 = vmatmul.mubr.f32.gmra.mrb[0].mxu0 %v1910
      %v2061 = vpop.f32.mrb[0].mxu0
      %v2062 = vadd.f32 0.0, %v2061
      %v2063 = vpop.f32.mrb[0].mxu0
      %2064 = vmatprep.mubr.f32.mxu0 0.0
      %2065 = vmatmul.mubr.f32.gmra.mrb[0].mxu0 %v1912
      %v2066 = vpop.f32.mrb[0].mxu0
      %v2067 = vadd.f32 0.0, %v2066
      %v2068 = vpop.f32.mrb[0].mxu0
      %2069 = vmatprep.mubr.f32.mxu0 0.0
      %2070 = vmatmul.mubr.f32.gmra.mrb[0].mxu0 %v1914
      %v2071 = vpop.f32.mrb[0].mxu0
      %v2072 = vadd.f32 0.0, %v2071
      %v2073 = vpop.f32.mrb[0].mxu0
      %2074 = vmatprep.mubr.f32.mxu0 0.0
      %2075 = vmatmul.mubr.f32.gmra.mrb[0].mxu0 %v1916
      %v2076 = vpop.f32.mrb[0].mxu0
      %v2077 = vadd.f32 0.0, %v2076
      %v2078 = vpop.f32.mrb[0].mxu0
      %2079 = vmatprep.mubr.f32.mxu0 0.0
      %2080 = vmatmul.mubr.f32.gmra.mrb[0].mxu0 %v1918
      %v2081 = vpop.f32.mrb[0].mxu0
      %v2082 = vadd.f32 0.0, %v2081
      %v2083 = vpop.f32.mrb[0].mxu0
      %2084 = vmatprep.mubr.f32.mxu0 0.0
      %2085 = vmatmul.mubr.f32.gmra.mrb[0].mxu0 %v1920
      %v2086 = vpop.f32.mrb[0].mxu0
      %v2087 = vadd.f32 0.0, %v2086
      %v2088 = vpop.f32.mrb[0].mxu0
      %2089 = vmatprep.mubr.f32.mxu0 0.0
      %2090 = vmatmul.mubr.f32.gmra.mrb[0].mxu0 %v1922
      %v2091 = vpop.f32.mrb[0].mxu0
      %v2092 = vadd.f32 0.0, %v2091
      %v2093 = vpop.f32.mrb[0].mxu0
      %2094 = vmatprep.mubr.f32.mxu0 0.0
      %2095 = vmatmul.mubr.f32.gmra.mrb[0].mxu0 %v1924
      %v2096 = vpop.f32.mrb[0].mxu0
      %v2097 = vadd.f32 0.0, %v2096
      %v2098 = vpop.f32.mrb[0].mxu0
      %2099 = vmatprep.mubr.f32.mxu0 0.0
      %2100 = vmatmul.mubr.f32.gmra.mrb[0].mxu0 %v1926
      %v2101 = vpop.f32.mrb[0].mxu0
      %v2102 = vadd.f32 0.0, %v2101
      %v2103 = vpop.f32.mrb[0].mxu0
      %2104 = vdwg.mxu0
      %v2105 = vmul.f32 %v2027, 0.17677669
      %v2106 = vmul.f32 %v2032, 0.17677669
      %v2107 = vmul.f32 %v2037, 0.17677669
      %v2108 = vmul.f32 %v2042, 0.17677669
      %v2109 = vmul.f32 %v2047, 0.17677669
      %v2110 = vmul.f32 %v2052, 0.17677669
      %v2111 = vmul.f32 %v2057, 0.17677669
      %v2112 = vmul.f32 %v2062, 0.17677669
      %v2113 = vmul.f32 %v2067, 0.17677669
      %v2114 = vmul.f32 %v2072, 0.17677669
      %v2115 = vmul.f32 %v2077, 0.17677669
      %v2116 = vmul.f32 %v2082, 0.17677669
      %v2117 = vmul.f32 %v2087, 0.17677669
      %v2118 = vmul.f32 %v2092, 0.17677669
      %v2119 = vmul.f32 %v2097, 0.17677669
      %v2120 = vmul.f32 %v2102, 0.17677669
      %2121 = vmax.xlane.f32.xlu0 %v2105
      %v2122 = vpop.xlane.xlu0 %2121
      %2123 = vmax.xlane.f32.xlu0 %v2106
      %v2124 = vpop.xlane.xlu0 %2123
      %2125 = vmax.xlane.f32.xlu0 %v2107
      %v2126 = vpop.xlane.xlu0 %2125
      %2127 = vmax.xlane.f32.xlu0 %v2108
      %v2128 = vpop.xlane.xlu0 %2127
      %2129 = vmax.xlane.f32.xlu0 %v2109
      %v2130 = vpop.xlane.xlu0 %2129
      %2131 = vmax.xlane.f32.xlu0 %v2110
      %v2132 = vpop.xlane.xlu0 %2131
      %2133 = vmax.xlane.f32.xlu0 %v2111
      %v2134 = vpop.xlane.xlu0 %2133
      %2135 = vmax.xlane.f32.xlu0 %v2112
      %v2136 = vpop.xlane.xlu0 %2135
      %2137 = vmax.xlane.f32.xlu0 %v2113
      %v2138 = vpop.xlane.xlu0 %2137
      %2139 = vmax.xlane.f32.xlu0 %v2114
      %v2140 = vpop.xlane.xlu0 %2139
      %2141 = vmax.xlane.f32.xlu0 %v2115
      %v2142 = vpop.xlane.xlu0 %2141
      %2143 = vmax.xlane.f32.xlu0 %v2116
      %v2144 = vpop.xlane.xlu0 %2143
      %2145 = vmax.xlane.f32.xlu0 %v2117
      %v2146 = vpop.xlane.xlu0 %2145
      %2147 = vmax.xlane.f32.xlu0 %v2118
      %v2148 = vpop.xlane.xlu0 %2147
      %2149 = vmax.xlane.f32.xlu0 %v2119
      %v2150 = vpop.xlane.xlu0 %2149
      %2151 = vmax.xlane.f32.xlu0 %v2120
      %v2152 = vpop.xlane.xlu0 %2151
      %v2153 = vsub.f32 %v2105, %v2122
      %v2154 = vsub.f32 %v2106, %v2124
      %v2155 = vsub.f32 %v2107, %v2126
      %v2156 = vsub.f32 %v2108, %v2128
      %v2157 = vsub.f32 %v2109, %v2130
      %v2158 = vsub.f32 %v2110, %v2132
      %v2159 = vsub.f32 %v2111, %v2134
      %v2160 = vsub.f32 %v2112, %v2136
      %v2161 = vsub.f32 %v2113, %v2138
      %v2162 = vsub.f32 %v2114, %v2140
      %v2163 = vsub.f32 %v2115, %v2142
      %v2164 = vsub.f32 %v2116, %v2144
      %v2165 = vsub.f32 %v2117, %v2146
      %v2166 = vsub.f32 %v2118, %v2148
      %v2167 = vsub.f32 %v2119, %v2150
      %v2168 = vsub.f32 %v2120, %v2152
      %v2169 = vmul.f32 %v2153, 1.442695
      %v2170 = vpow.pop %v2169
      %v2171 = vmul.f32 %v2154, 1.442695
      %v2172 = vpow.pop %v2171
      %v2173 = vmul.f32 %v2155, 1.442695
      %v2174 = vpow.pop %v2173
      %v2175 = vmul.f32 %v2156, 1.442695
      %v2176 = vpow.pop %v2175
      %v2177 = vmul.f32 %v2157, 1.442695
      %v2178 = vpow.pop %v2177
      %v2179 = vmul.f32 %v2158, 1.442695
      %v2180 = vpow.pop %v2179
      %v2181 = vmul.f32 %v2159, 1.442695
      %v2182 = vpow.pop %v2181
      %v2183 = vmul.f32 %v2160, 1.442695
      %v2184 = vpow.pop %v2183
      %v2185 = vmul.f32 %v2161, 1.442695
      %v2186 = vpow.pop %v2185
      %v2187 = vmul.f32 %v2162, 1.442695
      %v2188 = vpow.pop %v2187
      %v2189 = vmul.f32 %v2163, 1.442695
      %v2190 = vpow.pop %v2189
      %v2191 = vmul.f32 %v2164, 1.442695
      %v2192 = vpow.pop %v2191
      %v2193 = vmul.f32 %v2165, 1.442695
      %v2194 = vpow.pop %v2193
      %v2195 = vmul.f32 %v2166, 1.442695
      %v2196 = vpow.pop %v2195
      %v2197 = vmul.f32 %v2167, 1.442695
      %v2198 = vpow.pop %v2197
      %v2199 = vmul.f32 %v2168, 1.442695
      %v2200 = vpow.pop %v2199
      %2201 = vadd.xlane.f32.xlu0 %v2170
      %v2202 = vpop.xlane.xlu0 %2201
      %2203 = vadd.xlane.f32.xlu0 %v2172
      %v2204 = vpop.xlane.xlu0 %2203
      %2205 = vadd.xlane.f32.xlu0 %v2174
      %v2206 = vpop.xlane.xlu0 %2205
      %2207 = vadd.xlane.f32.xlu0 %v2176
      %v2208 = vpop.xlane.xlu0 %2207
      %2209 = vadd.xlane.f32.xlu0 %v2178
      %v2210 = vpop.xlane.xlu0 %2209
      %2211 = vadd.xlane.f32.xlu0 %v2180
      %v2212 = vpop.xlane.xlu0 %2211
      %2213 = vadd.xlane.f32.xlu0 %v2182
      %v2214 = vpop.xlane.xlu0 %2213
      %2215 = vadd.xlane.f32.xlu0 %v2184
      %v2216 = vpop.xlane.xlu0 %2215
      %2217 = vadd.xlane.f32.xlu0 %v2186
      %v2218 = vpop.xlane.xlu0 %2217
      %2219 = vadd.xlane.f32.xlu0 %v2188
      %v2220 = vpop.xlane.xlu0 %2219
      %2221 = vadd.xlane.f32.xlu0 %v2190
      %v2222 = vpop.xlane.xlu0 %2221
      %2223 = vadd.xlane.f32.xlu0 %v2192
      %v2224 = vpop.xlane.xlu0 %2223
      %2225 = vadd.xlane.f32.xlu0 %v2194
      %v2226 = vpop.xlane.xlu0 %2225
      %2227 = vadd.xlane.f32.xlu0 %v2196
      %v2228 = vpop.xlane.xlu0 %2227
      %2229 = vadd.xlane.f32.xlu0 %v2198
      %v2230 = vpop.xlane.xlu0 %2229
      %2231 = vadd.xlane.f32.xlu0 %v2200
      %v2232 = vpop.xlane.xlu0 %2231
      %v2233 = vrcp.pop %v2202
      %v2234 = vmul.f32 %v2170, %v2233
      %v2235 = vrcp.pop %v2204
      %v2236 = vmul.f32 %v2172, %v2235
      %v2237 = vrcp.pop %v2206
      %v2238 = vmul.f32 %v2174, %v2237
      %v2239 = vrcp.pop %v2208
      %v2240 = vmul.f32 %v2176, %v2239
      %v2241 = vrcp.pop %v2210
      %v2242 = vmul.f32 %v2178, %v2241
      %v2243 = vrcp.pop %v2212
      %v2244 = vmul.f32 %v2180, %v2243
      %v2245 = vrcp.pop %v2214
      %v2246 = vmul.f32 %v2182, %v2245
      %v2247 = vrcp.pop %v2216
      %v2248 = vmul.f32 %v2184, %v2247
      %v2249 = vrcp.pop %v2218
      %v2250 = vmul.f32 %v2186, %v2249
      %v2251 = vrcp.pop %v2220
      %v2252 = vmul.f32 %v2188, %v2251
      %v2253 = vrcp.pop %v2222
      %v2254 = vmul.f32 %v2190, %v2253
      %v2255 = vrcp.pop %v2224
      %v2256 = vmul.f32 %v2192, %v2255
      %v2257 = vrcp.pop %v2226
      %v2258 = vmul.f32 %v2194, %v2257
      %v2259 = vrcp.pop %v2228
      %v2260 = vmul.f32 %v2196, %v2259
      %v2261 = vrcp.pop %v2230
      %v2262 = vmul.f32 %v2198, %v2261
      %v2263 = vrcp.pop %v2232
      %v2264 = vmul.f32 %v2200, %v2263
      %2281 = vrot.lane.b32.xlu0 %v1022, 64
      %v2282 = vpop.permute.xlu0 %2281
      %2283 = vrot.lane.b32.xlu0 %v1028, 64
      %v2284 = vpop.permute.xlu0 %2283
      %2285 = vrot.lane.b32.xlu0 %v1034, 64
      %v2286 = vpop.permute.xlu0 %2285
      %2287 = vrot.lane.b32.xlu0 %v1040, 64
      %v2288 = vpop.permute.xlu0 %2287
      %2289 = vrot.lane.b32.xlu0 %v1046, 64
      %v2290 = vpop.permute.xlu0 %2289
      %2291 = vrot.lane.b32.xlu0 %v1052, 64
      %v2292 = vpop.permute.xlu0 %2291
      %2293 = vrot.lane.b32.xlu0 %v1058, 64
      %v2294 = vpop.permute.xlu0 %2293
      %2295 = vrot.lane.b32.xlu0 %v1064, 64
      %v2296 = vpop.permute.xlu0 %2295
      %2297 = vrot.lane.b32.xlu0 %v1070, 64
      %v2298 = vpop.permute.xlu0 %2297
      %2299 = vrot.lane.b32.xlu0 %v1076, 64
      %v2300 = vpop.permute.xlu0 %2299
      %2301 = vrot.lane.b32.xlu0 %v1082, 64
      %v2302 = vpop.permute.xlu0 %2301
      %2303 = vrot.lane.b32.xlu0 %v1088, 64
      %v2304 = vpop.permute.xlu0 %2303
      %2305 = vrot.lane.b32.xlu0 %v1094, 64
      %v2306 = vpop.permute.xlu0 %2305
      %2307 = vrot.lane.b32.xlu0 %v1100, 64
      %v2308 = vpop.permute.xlu0 %2307
      %2309 = vrot.lane.b32.xlu0 %v1106, 64
      %v2310 = vpop.permute.xlu0 %2309
      %2311 = vrot.lane.b32.xlu0 %v1112, 64
      %v2312 = vpop.permute.xlu0 %2311
      %2329 = vmatprep.subr.mxu0 0.0
      %2330 = vmatpush1.msra.mxu0 %v2282
      %2331 = vmatprep.subr.mxu0 0.0
      %2332 = vmatpush1.msra.mxu0 %v2284
      %2333 = vmatprep.subr.mxu0 0.0
      %2334 = vmatpush1.msra.mxu0 %v2286
      %2335 = vmatprep.subr.mxu0 0.0
      %2336 = vmatpush1.msra.mxu0 %v2288
      %2337 = vmatprep.subr.mxu0 0.0
      %2338 = vmatpush1.msra.mxu0 %v2290
      %2339 = vmatprep.subr.mxu0 0.0
      %2340 = vmatpush1.msra.mxu0 %v2292
      %2341 = vmatprep.subr.mxu0 0.0
      %2342 = vmatpush1.msra.mxu0 %v2294
      %2343 = vmatprep.subr.mxu0 0.0
      %2344 = vmatpush1.msra.mxu0 %v2296
      %2345 = vmatprep.subr.mxu0 0.0
      %2346 = vmatpush1.msra.mxu0 %v2298
      %2347 = vmatprep.subr.mxu0 0.0
      %2348 = vmatpush1.msra.mxu0 %v2300
      %2349 = vmatprep.subr.mxu0 0.0
      %2350 = vmatpush1.msra.mxu0 %v2302
      %2351 = vmatprep.subr.mxu0 0.0
      %2352 = vmatpush1.msra.mxu0 %v2304
      %2353 = vmatprep.subr.mxu0 0.0
      %2354 = vmatpush1.msra.mxu0 %v2306
      %2355 = vmatprep.subr.mxu0 0.0
      %2356 = vmatpush1.msra.mxu0 %v2308
      %2357 = vmatprep.subr.mxu0 0.0
      %2358 = vmatpush1.msra.mxu0 %v2310
      %2359 = vmatprep.subr.mxu0 0.0
      %2360 = vmatpush1.msra.mxu0 %v2312
      %2361 = vmatprep.subr.mxu0 0.0
      %2362 = vmatpush1.msra.mxu0 0.0
      %2363 = vmatprep.subr.mxu0 0.0
      %2364 = vmatpush1.msra.mxu0 0.0
      %2365 = vmatprep.subr.mxu0 0.0
      %2366 = vmatpush1.msra.mxu0 0.0
      %2367 = vmatprep.subr.mxu0 0.0
      %2368 = vmatpush1.msra.mxu0 0.0
      %2369 = vmatprep.subr.mxu0 0.0
      %2370 = vmatpush1.msra.mxu0 0.0
      %2371 = vmatprep.subr.mxu0 0.0
      %2372 = vmatpush1.msra.mxu0 0.0
      %2373 = vmatprep.subr.mxu0 0.0
      %2374 = vmatpush1.msra.mxu0 0.0
      %2375 = vmatprep.subr.mxu0 0.0
      %2376 = vmatpush1.msra.mxu0 0.0
      %2377 = vmatprep.subr.mxu0 0.0
      %2378 = vmatpush1.msra.mxu0 0.0
      %2379 = vmatprep.subr.mxu0 0.0
      %2380 = vmatpush1.msra.mxu0 0.0
      %2381 = vmatprep.subr.mxu0 0.0
      %2382 = vmatpush1.msra.mxu0 0.0
      %2383 = vmatprep.subr.mxu0 0.0
      %2384 = vmatpush1.msra.mxu0 0.0
      %2385 = vmatprep.subr.mxu0 0.0
      %2386 = vmatpush1.msra.mxu0 0.0
      %2387 = vmatprep.subr.mxu0 0.0
      %2388 = vmatpush1.msra.mxu0 0.0
      %2389 = vmatprep.subr.mxu0 0.0
      %2390 = vmatpush1.msra.mxu0 0.0
      %2391 = vmatprep.subr.mxu0 0.0
      %2392 = vmatpush1.msra.mxu0 0.0
      %2393 = vmatprep.mubr.f32.mxu0 0.0
      %2394 = vmatmul.mubr.f32.gmra.mrb[0].mxu0 %v2234
      %v2395 = vpop.f32.mrb[0].mxu0
      %v2396 = vadd.f32 0.0, %v2395
      %v2397 = vpop.f32.mrb[0].mxu0
      %2398 = vmatprep.mubr.f32.mxu0 0.0
      %2399 = vmatmul.mubr.f32.gmra.mrb[0].mxu0 %v2236
      %v2400 = vpop.f32.mrb[0].mxu0
      %v2401 = vadd.f32 0.0, %v2400
      %v2402 = vpop.f32.mrb[0].mxu0
      %2403 = vmatprep.mubr.f32.mxu0 0.0
      %2404 = vmatmul.mubr.f32.gmra.mrb[0].mxu0 %v2238
      %v2405 = vpop.f32.mrb[0].mxu0
      %v2406 = vadd.f32 0.0, %v2405
      %v2407 = vpop.f32.mrb[0].mxu0
      %2408 = vmatprep.mubr.f32.mxu0 0.0
      %2409 = vmatmul.mubr.f32.gmra.mrb[0].mxu0 %v2240
      %v2410 = vpop.f32.mrb[0].mxu0
      %v2411 = vadd.f32 0.0, %v2410
      %v2412 = vpop.f32.mrb[0].mxu0
      %2413 = vmatprep.mubr.f32.mxu0 0.0
      %2414 = vmatmul.mubr.f32.gmra.mrb[0].mxu0 %v2242
      %v2415 = vpop.f32.mrb[0].mxu0
      %v2416 = vadd.f32 0.0, %v2415
      %v2417 = vpop.f32.mrb[0].mxu0
      %2418 = vmatprep.mubr.f32.mxu0 0.0
      %2419 = vmatmul.mubr.f32.gmra.mrb[0].mxu0 %v2244
      %v2420 = vpop.f32.mrb[0].mxu0
      %v2421 = vadd.f32 0.0, %v2420
      %v2422 = vpop.f32.mrb[0].mxu0
      %2423 = vmatprep.mubr.f32.mxu0 0.0
      %2424 = vmatmul.mubr.f32.gmra.mrb[0].mxu0 %v2246
      %v2425 = vpop.f32.mrb[0].mxu0
      %v2426 = vadd.f32 0.0, %v2425
      %v2427 = vpop.f32.mrb[0].mxu0
      %2428 = vmatprep.mubr.f32.mxu0 0.0
      %2429 = vmatmul.mubr.f32.gmra.mrb[0].mxu0 %v2248
      %v2430 = vpop.f32.mrb[0].mxu0
      %v2431 = vadd.f32 0.0, %v2430
      %v2432 = vpop.f32.mrb[0].mxu0
      %2433 = vmatprep.mubr.f32.mxu0 0.0
      %2434 = vmatmul.mubr.f32.gmra.mrb[0].mxu0 %v2250
      %v2435 = vpop.f32.mrb[0].mxu0
      %v2436 = vadd.f32 0.0, %v2435
      %v2437 = vpop.f32.mrb[0].mxu0
      %2438 = vmatprep.mubr.f32.mxu0 0.0
      %2439 = vmatmul.mubr.f32.gmra.mrb[0].mxu0 %v2252
      %v2440 = vpop.f32.mrb[0].mxu0
      %v2441 = vadd.f32 0.0, %v2440
      %v2442 = vpop.f32.mrb[0].mxu0
      %2443 = vmatprep.mubr.f32.mxu0 0.0
      %2444 = vmatmul.mubr.f32.gmra.mrb[0].mxu0 %v2254
      %v2445 = vpop.f32.mrb[0].mxu0
      %v2446 = vadd.f32 0.0, %v2445
      %v2447 = vpop.f32.mrb[0].mxu0
      %2448 = vmatprep.mubr.f32.mxu0 0.0
      %2449 = vmatmul.mubr.f32.gmra.mrb[0].mxu0 %v2256
      %v2450 = vpop.f32.mrb[0].mxu0
      %v2451 = vadd.f32 0.0, %v2450
      %v2452 = vpop.f32.mrb[0].mxu0
      %2453 = vmatprep.mubr.f32.mxu0 0.0
      %2454 = vmatmul.mubr.f32.gmra.mrb[0].mxu0 %v2258
      %v2455 = vpop.f32.mrb[0].mxu0
      %v2456 = vadd.f32 0.0, %v2455
      %v2457 = vpop.f32.mrb[0].mxu0
      %2458 = vmatprep.mubr.f32.mxu0 0.0
      %2459 = vmatmul.mubr.f32.gmra.mrb[0].mxu0 %v2260
      %v2460 = vpop.f32.mrb[0].mxu0
      %v2461 = vadd.f32 0.0, %v2460
      %v2462 = vpop.f32.mrb[0].mxu0
      %2463 = vmatprep.mubr.f32.mxu0 0.0
      %2464 = vmatmul.mubr.f32.gmra.mrb[0].mxu0 %v2262
      %v2465 = vpop.f32.mrb[0].mxu0
      %v2466 = vadd.f32 0.0, %v2465
      %v2467 = vpop.f32.mrb[0].mxu0
      %2468 = vmatprep.mubr.f32.mxu0 0.0
      %2469 = vmatmul.mubr.f32.gmra.mrb[0].mxu0 %v2264
      %v2470 = vpop.f32.mrb[0].mxu0
      %v2471 = vadd.f32 0.0, %v2470
      %v2472 = vpop.f32.mrb[0].mxu0
      %2473 = vdwg.mxu0
      %v2474 = vld [vmem:[%s2 + $0x40] sm:$0xff]
      %v2475 = vld [vmem:[%s2 + $0x48] sm:$0xff]
      %v2476 = vld [vmem:[%s2 + $0x50] sm:$0xff]
      %v2477 = vld [vmem:[%s2 + $0x58] sm:$0xff]
      %v2478 = vld [vmem:[%s2 + $0x60] sm:$0xff]
      %v2479 = vld [vmem:[%s2 + $0x68] sm:$0xff]
      %v2480 = vld [vmem:[%s2 + $0x70] sm:$0xff]
      %v2481 = vld [vmem:[%s2 + $0x78] sm:$0xff]
      %v2483 = vsel %vm1277, %v2396, 0
      %v2486 = vsel %vm1277, %v2401, 0
      %v2489 = vsel %vm1277, %v2406, 0
      %v2492 = vsel %vm1277, %v2411, 0
      %v2495 = vsel %vm1277, %v2416, 0
      %v2498 = vsel %vm1277, %v2421, 0
      %v2501 = vsel %vm1277, %v2426, 0
      %v2504 = vsel %vm1277, %v2431, 0
      %v2507 = vsel %vm1277, %v2436, 0
      %v2510 = vsel %vm1277, %v2441, 0
      %v2513 = vsel %vm1277, %v2446, 0
      %v2516 = vsel %vm1277, %v2451, 0
      %v2519 = vsel %vm1277, %v2456, 0
      %v2522 = vsel %vm1277, %v2461, 0
      %v2525 = vsel %vm1277, %v2466, 0
      %v2528 = vsel %vm1277, %v2471, 0
      %2530 = vmatprep.subr.mxu0 0.0
      %2531 = vmatpush1.msra.mxu0 %v2474
      %2532 = vmatprep.subr.mxu0 0.0
      %2533 = vmatpush1.msra.mxu0 %v2475
      %2534 = vmatprep.subr.mxu0 0.0
      %2535 = vmatpush1.msra.mxu0 %v2476
      %2536 = vmatprep.subr.mxu0 0.0
      %2537 = vmatpush1.msra.mxu0 %v2477
      %2538 = vmatprep.subr.mxu0 0.0
      %2539 = vmatpush1.msra.mxu0 %v2478
      %2540 = vmatprep.subr.mxu0 0.0
      %2541 = vmatpush1.msra.mxu0 %v2479
      %2542 = vmatprep.subr.mxu0 0.0
      %2543 = vmatpush1.msra.mxu0 %v2480
      %2544 = vmatprep.subr.mxu0 0.0
      %2545 = vmatpush1.msra.mxu0 %v2481
      %2546 = vmatprep.subr.mxu0 0.0
      %2547 = vmatpush1.msra.mxu0 0.0
      %2548 = vmatprep.subr.mxu0 0.0
      %2549 = vmatpush1.msra.mxu0 0.0
      %2550 = vmatprep.subr.mxu0 0.0
      %2551 = vmatpush1.msra.mxu0 0.0
      %2552 = vmatprep.subr.mxu0 0.0
      %2553 = vmatpush1.msra.mxu0 0.0
      %2554 = vmatprep.subr.mxu0 0.0
      %2555 = vmatpush1.msra.mxu0 0.0
      %2556 = vmatprep.subr.mxu0 0.0
      %2557 = vmatpush1.msra.mxu0 0.0
      %2558 = vmatprep.subr.mxu0 0.0
      %2559 = vmatpush1.msra.mxu0 0.0
      %2560 = vmatprep.subr.mxu0 0.0
      %2561 = vmatpush1.msra.mxu0 0.0
      %2562 = vmatprep.subr.mxu0 0.0
      %2563 = vmatpush1.msra.mxu0 0.0
      %2564 = vmatprep.subr.mxu0 0.0
      %2565 = vmatpush1.msra.mxu0 0.0
      %2566 = vmatprep.subr.mxu0 0.0
      %2567 = vmatpush1.msra.mxu0 0.0
      %2568 = vmatprep.subr.mxu0 0.0
      %2569 = vmatpush1.msra.mxu0 0.0
      %2570 = vmatprep.subr.mxu0 0.0
      %2571 = vmatpush1.msra.mxu0 0.0
      %2572 = vmatprep.subr.mxu0 0.0
      %2573 = vmatpush1.msra.mxu0 0.0
      %2574 = vmatprep.subr.mxu0 0.0
      %2575 = vmatpush1.msra.mxu0 0.0
      %2576 = vmatprep.subr.mxu0 0.0
      %2577 = vmatpush1.msra.mxu0 0.0
      %2578 = vmatprep.subr.mxu0 0.0
      %2579 = vmatpush1.msra.mxu0 0.0
      %2580 = vmatprep.subr.mxu0 0.0
      %2581 = vmatpush1.msra.mxu0 0.0
      %2582 = vmatprep.subr.mxu0 0.0
      %2583 = vmatpush1.msra.mxu0 0.0
      %2584 = vmatprep.subr.mxu0 0.0
      %2585 = vmatpush1.msra.mxu0 0.0
      %2586 = vmatprep.subr.mxu0 0.0
      %2587 = vmatpush1.msra.mxu0 0.0
      %2588 = vmatprep.subr.mxu0 0.0
      %2589 = vmatpush1.msra.mxu0 0.0
      %2590 = vmatprep.subr.mxu0 0.0
      %2591 = vmatpush1.msra.mxu0 0.0
      %2592 = vmatprep.subr.mxu0 0.0
      %2593 = vmatpush1.msra.mxu0 0.0
      %2594 = vmatprep.mubr.f32.mxu0 0.0
      %2595 = vmatmul.mubr.f32.gmra.mrb[0].mxu0 %v2483
      %v2596 = vpop.f32.mrb[0].mxu0
      %v2597 = vadd.f32 0.0, %v2596
      %v2598 = vpop.f32.mrb[0].mxu0
      %2599 = vmatprep.mubr.f32.mxu0 0.0
      %2600 = vmatmul.mubr.f32.gmra.mrb[0].mxu0 %v2486
      %v2601 = vpop.f32.mrb[0].mxu0
      %v2602 = vadd.f32 0.0, %v2601
      %v2603 = vpop.f32.mrb[0].mxu0
      %2604 = vmatprep.mubr.f32.mxu0 0.0
      %2605 = vmatmul.mubr.f32.gmra.mrb[0].mxu0 %v2489
      %v2606 = vpop.f32.mrb[0].mxu0
      %v2607 = vadd.f32 0.0, %v2606
      %v2608 = vpop.f32.mrb[0].mxu0
      %2609 = vmatprep.mubr.f32.mxu0 0.0
      %2610 = vmatmul.mubr.f32.gmra.mrb[0].mxu0 %v2492
      %v2611 = vpop.f32.mrb[0].mxu0
      %v2612 = vadd.f32 0.0, %v2611
      %v2613 = vpop.f32.mrb[0].mxu0
      %2614 = vmatprep.mubr.f32.mxu0 0.0
      %2615 = vmatmul.mubr.f32.gmra.mrb[0].mxu0 %v2495
      %v2616 = vpop.f32.mrb[0].mxu0
      %v2617 = vadd.f32 0.0, %v2616
      %v2618 = vpop.f32.mrb[0].mxu0
      %2619 = vmatprep.mubr.f32.mxu0 0.0
      %2620 = vmatmul.mubr.f32.gmra.mrb[0].mxu0 %v2498
      %v2621 = vpop.f32.mrb[0].mxu0
      %v2622 = vadd.f32 0.0, %v2621
      %v2623 = vpop.f32.mrb[0].mxu0
      %2624 = vmatprep.mubr.f32.mxu0 0.0
      %2625 = vmatmul.mubr.f32.gmra.mrb[0].mxu0 %v2501
      %v2626 = vpop.f32.mrb[0].mxu0
      %v2627 = vadd.f32 0.0, %v2626
      %v2628 = vpop.f32.mrb[0].mxu0
      %2629 = vmatprep.mubr.f32.mxu0 0.0
      %2630 = vmatmul.mubr.f32.gmra.mrb[0].mxu0 %v2504
      %v2631 = vpop.f32.mrb[0].mxu0
      %v2632 = vadd.f32 0.0, %v2631
      %v2633 = vpop.f32.mrb[0].mxu0
      %2634 = vmatprep.mubr.f32.mxu0 0.0
      %2635 = vmatmul.mubr.f32.gmra.mrb[0].mxu0 %v2507
      %v2636 = vpop.f32.mrb[0].mxu0
      %v2637 = vadd.f32 0.0, %v2636
      %v2638 = vpop.f32.mrb[0].mxu0
      %2639 = vmatprep.mubr.f32.mxu0 0.0
      %2640 = vmatmul.mubr.f32.gmra.mrb[0].mxu0 %v2510
      %v2641 = vpop.f32.mrb[0].mxu0
      %v2642 = vadd.f32 0.0, %v2641
      %v2643 = vpop.f32.mrb[0].mxu0
      %2644 = vmatprep.mubr.f32.mxu0 0.0
      %2645 = vmatmul.mubr.f32.gmra.mrb[0].mxu0 %v2513
      %v2646 = vpop.f32.mrb[0].mxu0
      %v2647 = vadd.f32 0.0, %v2646
      %v2648 = vpop.f32.mrb[0].mxu0
      %2649 = vmatprep.mubr.f32.mxu0 0.0
      %2650 = vmatmul.mubr.f32.gmra.mrb[0].mxu0 %v2516
      %v2651 = vpop.f32.mrb[0].mxu0
      %v2652 = vadd.f32 0.0, %v2651
      %v2653 = vpop.f32.mrb[0].mxu0
      %2654 = vmatprep.mubr.f32.mxu0 0.0
      %2655 = vmatmul.mubr.f32.gmra.mrb[0].mxu0 %v2519
      %v2656 = vpop.f32.mrb[0].mxu0
      %v2657 = vadd.f32 0.0, %v2656
      %v2658 = vpop.f32.mrb[0].mxu0
      %2659 = vmatprep.mubr.f32.mxu0 0.0
      %2660 = vmatmul.mubr.f32.gmra.mrb[0].mxu0 %v2522
      %v2661 = vpop.f32.mrb[0].mxu0
      %v2662 = vadd.f32 0.0, %v2661
      %v2663 = vpop.f32.mrb[0].mxu0
      %2664 = vmatprep.mubr.f32.mxu0 0.0
      %2665 = vmatmul.mubr.f32.gmra.mrb[0].mxu0 %v2525
      %v2666 = vpop.f32.mrb[0].mxu0
      %v2667 = vadd.f32 0.0, %v2666
      %v2668 = vpop.f32.mrb[0].mxu0
      %2669 = vmatprep.mubr.f32.mxu0 0.0
      %2670 = vmatmul.mubr.f32.gmra.mrb[0].mxu0 %v2528
      %v2671 = vpop.f32.mrb[0].mxu0
      %v2672 = vadd.f32 0.0, %v2671
      %v2673 = vpop.f32.mrb[0].mxu0
      %2674 = vdwg.mxu0
      %v2676 = vsel %vm1277, %v1746, 0
      %v2679 = vsel %vm1277, %v1751, 0
      %v2682 = vsel %vm1277, %v1756, 0
      %v2685 = vsel %vm1277, %v1761, 0
      %v2688 = vsel %vm1277, %v1766, 0
      %v2691 = vsel %vm1277, %v1771, 0
      %v2694 = vsel %vm1277, %v1776, 0
      %v2697 = vsel %vm1277, %v1781, 0
      %v2700 = vsel %vm1277, %v1786, 0
      %v2703 = vsel %vm1277, %v1791, 0
      %v2706 = vsel %vm1277, %v1796, 0
      %v2709 = vsel %vm1277, %v1801, 0
      %v2712 = vsel %vm1277, %v1806, 0
      %v2715 = vsel %vm1277, %v1811, 0
      %v2718 = vsel %vm1277, %v1816, 0
      %v2721 = vsel %vm1277, %v1821, 0
      %2723 = vmatprep.subr.mxu0 0.0
      %2724 = vmatpush1.msra.mxu0 %v1824
      %2725 = vmatprep.subr.mxu0 0.0
      %2726 = vmatpush1.msra.mxu0 %v1825
      %2727 = vmatprep.subr.mxu0 0.0
      %2728 = vmatpush1.msra.mxu0 %v1826
      %2729 = vmatprep.subr.mxu0 0.0
      %2730 = vmatpush1.msra.mxu0 %v1827
      %2731 = vmatprep.subr.mxu0 0.0
      %2732 = vmatpush1.msra.mxu0 %v1828
      %2733 = vmatprep.subr.mxu0 0.0
      %2734 = vmatpush1.msra.mxu0 %v1829
      %2735 = vmatprep.subr.mxu0 0.0
      %2736 = vmatpush1.msra.mxu0 %v1830
      %2737 = vmatprep.subr.mxu0 0.0
      %2738 = vmatpush1.msra.mxu0 %v1831
      %2739 = vmatprep.subr.mxu0 0.0
      %2740 = vmatpush1.msra.mxu0 0.0
      %2741 = vmatprep.subr.mxu0 0.0
      %2742 = vmatpush1.msra.mxu0 0.0
      %2743 = vmatprep.subr.mxu0 0.0
      %2744 = vmatpush1.msra.mxu0 0.0
      %2745 = vmatprep.subr.mxu0 0.0
      %2746 = vmatpush1.msra.mxu0 0.0
      %2747 = vmatprep.subr.mxu0 0.0
      %2748 = vmatpush1.msra.mxu0 0.0
      %2749 = vmatprep.subr.mxu0 0.0
      %2750 = vmatpush1.msra.mxu0 0.0
      %2751 = vmatprep.subr.mxu0 0.0
      %2752 = vmatpush1.msra.mxu0 0.0
      %2753 = vmatprep.subr.mxu0 0.0
      %2754 = vmatpush1.msra.mxu0 0.0
      %2755 = vmatprep.subr.mxu0 0.0
      %2756 = vmatpush1.msra.mxu0 0.0
      %2757 = vmatprep.subr.mxu0 0.0
      %2758 = vmatpush1.msra.mxu0 0.0
      %2759 = vmatprep.subr.mxu0 0.0
      %2760 = vmatpush1.msra.mxu0 0.0
      %2761 = vmatprep.subr.mxu0 0.0
      %2762 = vmatpush1.msra.mxu0 0.0
      %2763 = vmatprep.subr.mxu0 0.0
      %2764 = vmatpush1.msra.mxu0 0.0
      %2765 = vmatprep.subr.mxu0 0.0
      %2766 = vmatpush1.msra.mxu0 0.0
      %2767 = vmatprep.subr.mxu0 0.0
      %2768 = vmatpush1.msra.mxu0 0.0
      %2769 = vmatprep.subr.mxu0 0.0
      %2770 = vmatpush1.msra.mxu0 0.0
      %2771 = vmatprep.subr.mxu0 0.0
      %2772 = vmatpush1.msra.mxu0 0.0
      %2773 = vmatprep.subr.mxu0 0.0
      %2774 = vmatpush1.msra.mxu0 0.0
      %2775 = vmatprep.subr.mxu0 0.0
      %2776 = vmatpush1.msra.mxu0 0.0
      %2777 = vmatprep.subr.mxu0 0.0
      %2778 = vmatpush1.msra.mxu0 0.0
      %2779 = vmatprep.subr.mxu0 0.0
      %2780 = vmatpush1.msra.mxu0 0.0
      %2781 = vmatprep.subr.mxu0 0.0
      %2782 = vmatpush1.msra.mxu0 0.0
      %2783 = vmatprep.subr.mxu0 0.0
      %2784 = vmatpush1.msra.mxu0 0.0
      %2785 = vmatprep.subr.mxu0 0.0
      %2786 = vmatpush1.msra.mxu0 0.0
      %2787 = vmatprep.mubr.f32.mxu0 0.0
      %2788 = vmatmul.mubr.f32.gmra.mrb[0].mxu0 %v2676
      %v2789 = vpop.f32.mrb[0].mxu0
      %v2790 = vadd.f32 %v2597, %v2789
      %v2791 = vpop.f32.mrb[0].mxu0
      %2792 = vmatprep.mubr.f32.mxu0 0.0
      %2793 = vmatmul.mubr.f32.gmra.mrb[0].mxu0 %v2679
      %v2794 = vpop.f32.mrb[0].mxu0
      %v2795 = vadd.f32 %v2602, %v2794
      %v2796 = vpop.f32.mrb[0].mxu0
      %2797 = vmatprep.mubr.f32.mxu0 0.0
      %2798 = vmatmul.mubr.f32.gmra.mrb[0].mxu0 %v2682
      %v2799 = vpop.f32.mrb[0].mxu0
      %v2800 = vadd.f32 %v2607, %v2799
      %v2801 = vpop.f32.mrb[0].mxu0
      %2802 = vmatprep.mubr.f32.mxu0 0.0
      %2803 = vmatmul.mubr.f32.gmra.mrb[0].mxu0 %v2685
      %v2804 = vpop.f32.mrb[0].mxu0
      %v2805 = vadd.f32 %v2612, %v2804
      %v2806 = vpop.f32.mrb[0].mxu0
      %2807 = vmatprep.mubr.f32.mxu0 0.0
      %2808 = vmatmul.mubr.f32.gmra.mrb[0].mxu0 %v2688
      %v2809 = vpop.f32.mrb[0].mxu0
      %v2810 = vadd.f32 %v2617, %v2809
      %v2811 = vpop.f32.mrb[0].mxu0
      %2812 = vmatprep.mubr.f32.mxu0 0.0
      %2813 = vmatmul.mubr.f32.gmra.mrb[0].mxu0 %v2691
      %v2814 = vpop.f32.mrb[0].mxu0
      %v2815 = vadd.f32 %v2622, %v2814
      %v2816 = vpop.f32.mrb[0].mxu0
      %2817 = vmatprep.mubr.f32.mxu0 0.0
      %2818 = vmatmul.mubr.f32.gmra.mrb[0].mxu0 %v2694
      %v2819 = vpop.f32.mrb[0].mxu0
      %v2820 = vadd.f32 %v2627, %v2819
      %v2821 = vpop.f32.mrb[0].mxu0
      %2822 = vmatprep.mubr.f32.mxu0 0.0
      %2823 = vmatmul.mubr.f32.gmra.mrb[0].mxu0 %v2697
      %v2824 = vpop.f32.mrb[0].mxu0
      %v2825 = vadd.f32 %v2632, %v2824
      %v2826 = vpop.f32.mrb[0].mxu0
      %2827 = vmatprep.mubr.f32.mxu0 0.0
      %2828 = vmatmul.mubr.f32.gmra.mrb[0].mxu0 %v2700
      %v2829 = vpop.f32.mrb[0].mxu0
      %v2830 = vadd.f32 %v2637, %v2829
      %v2831 = vpop.f32.mrb[0].mxu0
      %2832 = vmatprep.mubr.f32.mxu0 0.0
      %2833 = vmatmul.mubr.f32.gmra.mrb[0].mxu0 %v2703
      %v2834 = vpop.f32.mrb[0].mxu0
      %v2835 = vadd.f32 %v2642, %v2834
      %v2836 = vpop.f32.mrb[0].mxu0
      %2837 = vmatprep.mubr.f32.mxu0 0.0
      %2838 = vmatmul.mubr.f32.gmra.mrb[0].mxu0 %v2706
      %v2839 = vpop.f32.mrb[0].mxu0
      %v2840 = vadd.f32 %v2647, %v2839
      %v2841 = vpop.f32.mrb[0].mxu0
      %2842 = vmatprep.mubr.f32.mxu0 0.0
      %2843 = vmatmul.mubr.f32.gmra.mrb[0].mxu0 %v2709
      %v2844 = vpop.f32.mrb[0].mxu0
      %v2845 = vadd.f32 %v2652, %v2844
      %v2846 = vpop.f32.mrb[0].mxu0
      %2847 = vmatprep.mubr.f32.mxu0 0.0
      %2848 = vmatmul.mubr.f32.gmra.mrb[0].mxu0 %v2712
      %v2849 = vpop.f32.mrb[0].mxu0
      %v2850 = vadd.f32 %v2657, %v2849
      %v2851 = vpop.f32.mrb[0].mxu0
      %2852 = vmatprep.mubr.f32.mxu0 0.0
      %2853 = vmatmul.mubr.f32.gmra.mrb[0].mxu0 %v2715
      %v2854 = vpop.f32.mrb[0].mxu0
      %v2855 = vadd.f32 %v2662, %v2854
      %v2856 = vpop.f32.mrb[0].mxu0
      %2857 = vmatprep.mubr.f32.mxu0 0.0
      %2858 = vmatmul.mubr.f32.gmra.mrb[0].mxu0 %v2718
      %v2859 = vpop.f32.mrb[0].mxu0
      %v2860 = vadd.f32 %v2667, %v2859
      %v2861 = vpop.f32.mrb[0].mxu0
      %2862 = vmatprep.mubr.f32.mxu0 0.0
      %2863 = vmatmul.mubr.f32.gmra.mrb[0].mxu0 %v2721
      %v2864 = vpop.f32.mrb[0].mxu0
      %v2865 = vadd.f32 %v2672, %v2864
      %v2866 = vpop.f32.mrb[0].mxu0
      %2867 = vdwg.mxu0
      %v2869 = vsel %vm1277, %v380, 0
      %v2872 = vsel %vm1277, %v386, 0
      %v2875 = vsel %vm1277, %v392, 0
      %v2878 = vsel %vm1277, %v398, 0
      %v2881 = vsel %vm1277, %v404, 0
      %v2884 = vsel %vm1277, %v410, 0
      %v2887 = vsel %vm1277, %v416, 0
      %v2890 = vsel %vm1277, %v422, 0
      %v2893 = vsel %vm1277, %v428, 0
      %v2896 = vsel %vm1277, %v434, 0
      %v2899 = vsel %vm1277, %v440, 0
      %v2902 = vsel %vm1277, %v446, 0
      %v2905 = vsel %vm1277, %v452, 0
      %v2908 = vsel %vm1277, %v458, 0
      %v2911 = vsel %vm1277, %v464, 0
      %v2914 = vsel %vm1277, %v470, 0
      %v2917 = vsel %vm1277, %v702, 0
      %v2920 = vsel %vm1277, %v708, 0
      %v2923 = vsel %vm1277, %v714, 0
      %v2926 = vsel %vm1277, %v720, 0
      %v2929 = vsel %vm1277, %v726, 0
      %v2932 = vsel %vm1277, %v732, 0
      %v2935 = vsel %vm1277, %v738, 0
      %v2938 = vsel %vm1277, %v744, 0
      %v2941 = vsel %vm1277, %v750, 0
      %v2944 = vsel %vm1277, %v756, 0
      %v2947 = vsel %vm1277, %v762, 0
      %v2950 = vsel %vm1277, %v768, 0
      %v2953 = vsel %vm1277, %v774, 0
      %v2956 = vsel %vm1277, %v780, 0
      %v2959 = vsel %vm1277, %v786, 0
      %v2962 = vsel %vm1277, %v792, 0
      %2964 = vmatprep.subr.mxu0 0.0
      %2965 = vmatpush1.xpose.msra.mxu0 %v2917
      %2966 = vmatprep.subr.mxu0 0.0
      %2967 = vmatpush1.xpose.msra.mxu0 %v2920
      %2968 = vmatprep.subr.mxu0 0.0
      %2969 = vmatpush1.xpose.msra.mxu0 %v2923
      %2970 = vmatprep.subr.mxu0 0.0
      %2971 = vmatpush1.xpose.msra.mxu0 %v2926
      %2972 = vmatprep.subr.mxu0 0.0
      %2973 = vmatpush1.xpose.msra.mxu0 %v2929
      %2974 = vmatprep.subr.mxu0 0.0
      %2975 = vmatpush1.xpose.msra.mxu0 %v2932
      %2976 = vmatprep.subr.mxu0 0.0
      %2977 = vmatpush1.xpose.msra.mxu0 %v2935
      %2978 = vmatprep.subr.mxu0 0.0
      %2979 = vmatpush1.xpose.msra.mxu0 %v2938
      %2980 = vmatprep.subr.mxu0 0.0
      %2981 = vmatpush1.xpose.msra.mxu0 %v2941
      %2982 = vmatprep.subr.mxu0 0.0
      %2983 = vmatpush1.xpose.msra.mxu0 %v2944
      %2984 = vmatprep.subr.mxu0 0.0
      %2985 = vmatpush1.xpose.msra.mxu0 %v2947
      %2986 = vmatprep.subr.mxu0 0.0
      %2987 = vmatpush1.xpose.msra.mxu0 %v2950
      %2988 = vmatprep.subr.mxu0 0.0
      %2989 = vmatpush1.xpose.msra.mxu0 %v2953
      %2990 = vmatprep.subr.mxu0 0.0
      %2991 = vmatpush1.xpose.msra.mxu0 %v2956
      %2992 = vmatprep.subr.mxu0 0.0
      %2993 = vmatpush1.xpose.msra.mxu0 %v2959
      %2994 = vmatprep.subr.mxu0 0.0
      %2995 = vmatpush1.xpose.msra.mxu0 %v2962
      %2996 = vmatprep.subr.mxu0 0.0
      %2997 = vmatpush1.xpose.msra.mxu0 0.0
      %2998 = vmatprep.subr.mxu0 0.0
      %2999 = vmatpush1.xpose.msra.mxu0 0.0
      %3000 = vmatprep.subr.mxu0 0.0
      %3001 = vmatpush1.xpose.msra.mxu0 0.0
      %3002 = vmatprep.subr.mxu0 0.0
      %3003 = vmatpush1.xpose.msra.mxu0 0.0
      %3004 = vmatprep.subr.mxu0 0.0
      %3005 = vmatpush1.xpose.msra.mxu0 0.0
      %3006 = vmatprep.subr.mxu0 0.0
      %3007 = vmatpush1.xpose.msra.mxu0 0.0
      %3008 = vmatprep.subr.mxu0 0.0
      %3009 = vmatpush1.xpose.msra.mxu0 0.0
      %3010 = vmatprep.subr.mxu0 0.0
      %3011 = vmatpush1.xpose.msra.mxu0 0.0
      %3012 = vmatprep.subr.mxu0 0.0
      %3013 = vmatpush1.xpose.msra.mxu0 0.0
      %3014 = vmatprep.subr.mxu0 0.0
      %3015 = vmatpush1.xpose.msra.mxu0 0.0
      %3016 = vmatprep.subr.mxu0 0.0
      %3017 = vmatpush1.xpose.msra.mxu0 0.0
      %3018 = vmatprep.subr.mxu0 0.0
      %3019 = vmatpush1.xpose.msra.mxu0 0.0
      %3020 = vmatprep.subr.mxu0 0.0
      %3021 = vmatpush1.xpose.msra.mxu0 0.0
      %3022 = vmatprep.subr.mxu0 0.0
      %3023 = vmatpush1.xpose.msra.mxu0 0.0
      %3024 = vmatprep.subr.mxu0 0.0
      %3025 = vmatpush1.xpose.msra.mxu0 0.0
      %3026 = vmatprep.subr.mxu0 0.0
      %3027 = vmatpush1.xpose.msra.mxu0 0.0
      %3028 = vmatprep.mubr.f32.mxu0 0.0
      %3029 = vmatmul.mubr.f32.gmra.mrb[0].mxu0 %v2869
      %v3030 = vpop.f32.mrb[0].mxu0
      %v3031 = vadd.f32 0.0, %v3030
      %v3032 = vpop.f32.mrb[0].mxu0
      %3033 = vmatprep.mubr.f32.mxu0 0.0
      %3034 = vmatmul.mubr.f32.gmra.mrb[0].mxu0 %v2872
      %v3035 = vpop.f32.mrb[0].mxu0
      %v3036 = vadd.f32 0.0, %v3035
      %v3037 = vpop.f32.mrb[0].mxu0
      %3038 = vmatprep.mubr.f32.mxu0 0.0
      %3039 = vmatmul.mubr.f32.gmra.mrb[0].mxu0 %v2875
      %v3040 = vpop.f32.mrb[0].mxu0
      %v3041 = vadd.f32 0.0, %v3040
      %v3042 = vpop.f32.mrb[0].mxu0
      %3043 = vmatprep.mubr.f32.mxu0 0.0
      %3044 = vmatmul.mubr.f32.gmra.mrb[0].mxu0 %v2878
      %v3045 = vpop.f32.mrb[0].mxu0
      %v3046 = vadd.f32 0.0, %v3045
      %v3047 = vpop.f32.mrb[0].mxu0
      %3048 = vmatprep.mubr.f32.mxu0 0.0
      %3049 = vmatmul.mubr.f32.gmra.mrb[0].mxu0 %v2881
      %v3050 = vpop.f32.mrb[0].mxu0
      %v3051 = vadd.f32 0.0, %v3050
      %v3052 = vpop.f32.mrb[0].mxu0
      %3053 = vmatprep.mubr.f32.mxu0 0.0
      %3054 = vmatmul.mubr.f32.gmra.mrb[0].mxu0 %v2884
      %v3055 = vpop.f32.mrb[0].mxu0
      %v3056 = vadd.f32 0.0, %v3055
      %v3057 = vpop.f32.mrb[0].mxu0
      %3058 = vmatprep.mubr.f32.mxu0 0.0
      %3059 = vmatmul.mubr.f32.gmra.mrb[0].mxu0 %v2887
      %v3060 = vpop.f32.mrb[0].mxu0
      %v3061 = vadd.f32 0.0, %v3060
      %v3062 = vpop.f32.mrb[0].mxu0
      %3063 = vmatprep.mubr.f32.mxu0 0.0
      %3064 = vmatmul.mubr.f32.gmra.mrb[0].mxu0 %v2890
      %v3065 = vpop.f32.mrb[0].mxu0
      %v3066 = vadd.f32 0.0, %v3065
      %v3067 = vpop.f32.mrb[0].mxu0
      %3068 = vmatprep.mubr.f32.mxu0 0.0
      %3069 = vmatmul.mubr.f32.gmra.mrb[0].mxu0 %v2893
      %v3070 = vpop.f32.mrb[0].mxu0
      %v3071 = vadd.f32 0.0, %v3070
      %v3072 = vpop.f32.mrb[0].mxu0
      %3073 = vmatprep.mubr.f32.mxu0 0.0
      %3074 = vmatmul.mubr.f32.gmra.mrb[0].mxu0 %v2896
      %v3075 = vpop.f32.mrb[0].mxu0
      %v3076 = vadd.f32 0.0, %v3075
      %v3077 = vpop.f32.mrb[0].mxu0
      %3078 = vmatprep.mubr.f32.mxu0 0.0
      %3079 = vmatmul.mubr.f32.gmra.mrb[0].mxu0 %v2899
      %v3080 = vpop.f32.mrb[0].mxu0
      %v3081 = vadd.f32 0.0, %v3080
      %v3082 = vpop.f32.mrb[0].mxu0
      %3083 = vmatprep.mubr.f32.mxu0 0.0
      %3084 = vmatmul.mubr.f32.gmra.mrb[0].mxu0 %v2902
      %v3085 = vpop.f32.mrb[0].mxu0
      %v3086 = vadd.f32 0.0, %v3085
      %v3087 = vpop.f32.mrb[0].mxu0
      %3088 = vmatprep.mubr.f32.mxu0 0.0
      %3089 = vmatmul.mubr.f32.gmra.mrb[0].mxu0 %v2905
      %v3090 = vpop.f32.mrb[0].mxu0
      %v3091 = vadd.f32 0.0, %v3090
      %v3092 = vpop.f32.mrb[0].mxu0
      %3093 = vmatprep.mubr.f32.mxu0 0.0
      %3094 = vmatmul.mubr.f32.gmra.mrb[0].mxu0 %v2908
      %v3095 = vpop.f32.mrb[0].mxu0
      %v3096 = vadd.f32 0.0, %v3095
      %v3097 = vpop.f32.mrb[0].mxu0
      %3098 = vmatprep.mubr.f32.mxu0 0.0
      %3099 = vmatmul.mubr.f32.gmra.mrb[0].mxu0 %v2911
      %v3100 = vpop.f32.mrb[0].mxu0
      %v3101 = vadd.f32 0.0, %v3100
      %v3102 = vpop.f32.mrb[0].mxu0
      %3103 = vmatprep.mubr.f32.mxu0 0.0
      %3104 = vmatmul.mubr.f32.gmra.mrb[0].mxu0 %v2914
      %v3105 = vpop.f32.mrb[0].mxu0
      %v3106 = vadd.f32 0.0, %v3105
      %v3107 = vpop.f32.mrb[0].mxu0
      %3108 = vdwg.mxu0
      %v3109 = vmul.f32 %v3031, 0.17677669
      %v3110 = vmul.f32 %v3036, 0.17677669
      %v3111 = vmul.f32 %v3041, 0.17677669
      %v3112 = vmul.f32 %v3046, 0.17677669
      %v3113 = vmul.f32 %v3051, 0.17677669
      %v3114 = vmul.f32 %v3056, 0.17677669
      %v3115 = vmul.f32 %v3061, 0.17677669
      %v3116 = vmul.f32 %v3066, 0.17677669
      %v3117 = vmul.f32 %v3071, 0.17677669
      %v3118 = vmul.f32 %v3076, 0.17677669
      %v3119 = vmul.f32 %v3081, 0.17677669
      %v3120 = vmul.f32 %v3086, 0.17677669
      %v3121 = vmul.f32 %v3091, 0.17677669
      %v3122 = vmul.f32 %v3096, 0.17677669
      %v3123 = vmul.f32 %v3101, 0.17677669
      %v3124 = vmul.f32 %v3106, 0.17677669
      %3125 = vmax.xlane.f32.xlu0 %v3109
      %v3126 = vpop.xlane.xlu0 %3125
      %3127 = vmax.xlane.f32.xlu0 %v3110
      %v3128 = vpop.xlane.xlu0 %3127
      %3129 = vmax.xlane.f32.xlu0 %v3111
      %v3130 = vpop.xlane.xlu0 %3129
      %3131 = vmax.xlane.f32.xlu0 %v3112
      %v3132 = vpop.xlane.xlu0 %3131
      %3133 = vmax.xlane.f32.xlu0 %v3113
      %v3134 = vpop.xlane.xlu0 %3133
      %3135 = vmax.xlane.f32.xlu0 %v3114
      %v3136 = vpop.xlane.xlu0 %3135
      %3137 = vmax.xlane.f32.xlu0 %v3115
      %v3138 = vpop.xlane.xlu0 %3137
      %3139 = vmax.xlane.f32.xlu0 %v3116
      %v3140 = vpop.xlane.xlu0 %3139
      %3141 = vmax.xlane.f32.xlu0 %v3117
      %v3142 = vpop.xlane.xlu0 %3141
      %3143 = vmax.xlane.f32.xlu0 %v3118
      %v3144 = vpop.xlane.xlu0 %3143
      %3145 = vmax.xlane.f32.xlu0 %v3119
      %v3146 = vpop.xlane.xlu0 %3145
      %3147 = vmax.xlane.f32.xlu0 %v3120
      %v3148 = vpop.xlane.xlu0 %3147
      %3149 = vmax.xlane.f32.xlu0 %v3121
      %v3150 = vpop.xlane.xlu0 %3149
      %3151 = vmax.xlane.f32.xlu0 %v3122
      %v3152 = vpop.xlane.xlu0 %3151
      %3153 = vmax.xlane.f32.xlu0 %v3123
      %v3154 = vpop.xlane.xlu0 %3153
      %3155 = vmax.xlane.f32.xlu0 %v3124
      %v3156 = vpop.xlane.xlu0 %3155
      %v3157 = vsub.f32 %v3109, %v3126
      %v3158 = vsub.f32 %v3110, %v3128
      %v3159 = vsub.f32 %v3111, %v3130
      %v3160 = vsub.f32 %v3112, %v3132
      %v3161 = vsub.f32 %v3113, %v3134
      %v3162 = vsub.f32 %v3114, %v3136
      %v3163 = vsub.f32 %v3115, %v3138
      %v3164 = vsub.f32 %v3116, %v3140
      %v3165 = vsub.f32 %v3117, %v3142
      %v3166 = vsub.f32 %v3118, %v3144
      %v3167 = vsub.f32 %v3119, %v3146
      %v3168 = vsub.f32 %v3120, %v3148
      %v3169 = vsub.f32 %v3121, %v3150
      %v3170 = vsub.f32 %v3122, %v3152
      %v3171 = vsub.f32 %v3123, %v3154
      %v3172 = vsub.f32 %v3124, %v3156
      %v3173 = vmul.f32 %v3157, 1.442695
      %v3174 = vpow.pop %v3173
      %v3175 = vmul.f32 %v3158, 1.442695
      %v3176 = vpow.pop %v3175
      %v3177 = vmul.f32 %v3159, 1.442695
      %v3178 = vpow.pop %v3177
      %v3179 = vmul.f32 %v3160, 1.442695
      %v3180 = vpow.pop %v3179
      %v3181 = vmul.f32 %v3161, 1.442695
      %v3182 = vpow.pop %v3181
      %v3183 = vmul.f32 %v3162, 1.442695
      %v3184 = vpow.pop %v3183
      %v3185 = vmul.f32 %v3163, 1.442695
      %v3186 = vpow.pop %v3185
      %v3187 = vmul.f32 %v3164, 1.442695
      %v3188 = vpow.pop %v3187
      %v3189 = vmul.f32 %v3165, 1.442695
      %v3190 = vpow.pop %v3189
      %v3191 = vmul.f32 %v3166, 1.442695
      %v3192 = vpow.pop %v3191
      %v3193 = vmul.f32 %v3167, 1.442695
      %v3194 = vpow.pop %v3193
      %v3195 = vmul.f32 %v3168, 1.442695
      %v3196 = vpow.pop %v3195
      %v3197 = vmul.f32 %v3169, 1.442695
      %v3198 = vpow.pop %v3197
      %v3199 = vmul.f32 %v3170, 1.442695
      %v3200 = vpow.pop %v3199
      %v3201 = vmul.f32 %v3171, 1.442695
      %v3202 = vpow.pop %v3201
      %v3203 = vmul.f32 %v3172, 1.442695
      %v3204 = vpow.pop %v3203
      %3205 = vadd.xlane.f32.xlu0 %v3174
      %v3206 = vpop.xlane.xlu0 %3205
      %3207 = vadd.xlane.f32.xlu0 %v3176
      %v3208 = vpop.xlane.xlu0 %3207
      %3209 = vadd.xlane.f32.xlu0 %v3178
      %v3210 = vpop.xlane.xlu0 %3209
      %3211 = vadd.xlane.f32.xlu0 %v3180
      %v3212 = vpop.xlane.xlu0 %3211
      %3213 = vadd.xlane.f32.xlu0 %v3182
      %v3214 = vpop.xlane.xlu0 %3213
      %3215 = vadd.xlane.f32.xlu0 %v3184
      %v3216 = vpop.xlane.xlu0 %3215
      %3217 = vadd.xlane.f32.xlu0 %v3186
      %v3218 = vpop.xlane.xlu0 %3217
      %3219 = vadd.xlane.f32.xlu0 %v3188
      %v3220 = vpop.xlane.xlu0 %3219
      %3221 = vadd.xlane.f32.xlu0 %v3190
      %v3222 = vpop.xlane.xlu0 %3221
      %3223 = vadd.xlane.f32.xlu0 %v3192
      %v3224 = vpop.xlane.xlu0 %3223
      %3225 = vadd.xlane.f32.xlu0 %v3194
      %v3226 = vpop.xlane.xlu0 %3225
      %3227 = vadd.xlane.f32.xlu0 %v3196
      %v3228 = vpop.xlane.xlu0 %3227
      %3229 = vadd.xlane.f32.xlu0 %v3198
      %v3230 = vpop.xlane.xlu0 %3229
      %3231 = vadd.xlane.f32.xlu0 %v3200
      %v3232 = vpop.xlane.xlu0 %3231
      %3233 = vadd.xlane.f32.xlu0 %v3202
      %v3234 = vpop.xlane.xlu0 %3233
      %3235 = vadd.xlane.f32.xlu0 %v3204
      %v3236 = vpop.xlane.xlu0 %3235
      %v3237 = vrcp.pop %v3206
      %v3238 = vmul.f32 %v3174, %v3237
      %v3239 = vrcp.pop %v3208
      %v3240 = vmul.f32 %v3176, %v3239
      %v3241 = vrcp.pop %v3210
      %v3242 = vmul.f32 %v3178, %v3241
      %v3243 = vrcp.pop %v3212
      %v3244 = vmul.f32 %v3180, %v3243
      %v3245 = vrcp.pop %v3214
      %v3246 = vmul.f32 %v3182, %v3245
      %v3247 = vrcp.pop %v3216
      %v3248 = vmul.f32 %v3184, %v3247
      %v3249 = vrcp.pop %v3218
      %v3250 = vmul.f32 %v3186, %v3249
      %v3251 = vrcp.pop %v3220
      %v3252 = vmul.f32 %v3188, %v3251
      %v3253 = vrcp.pop %v3222
      %v3254 = vmul.f32 %v3190, %v3253
      %v3255 = vrcp.pop %v3224
      %v3256 = vmul.f32 %v3192, %v3255
      %v3257 = vrcp.pop %v3226
      %v3258 = vmul.f32 %v3194, %v3257
      %v3259 = vrcp.pop %v3228
      %v3260 = vmul.f32 %v3196, %v3259
      %v3261 = vrcp.pop %v3230
      %v3262 = vmul.f32 %v3198, %v3261
      %v3263 = vrcp.pop %v3232
      %v3264 = vmul.f32 %v3200, %v3263
      %v3265 = vrcp.pop %v3234
      %v3266 = vmul.f32 %v3202, %v3265
      %v3267 = vrcp.pop %v3236
      %v3268 = vmul.f32 %v3204, %v3267
      %3269 = vmatprep.subr.mxu0 0.0
      %3270 = vmatpush1.msra.mxu0 %v1024
      %3271 = vmatprep.subr.mxu0 0.0
      %3272 = vmatpush1.msra.mxu0 %v1030
      %3273 = vmatprep.subr.mxu0 0.0
      %3274 = vmatpush1.msra.mxu0 %v1036
      %3275 = vmatprep.subr.mxu0 0.0
      %3276 = vmatpush1.msra.mxu0 %v1042
      %3277 = vmatprep.subr.mxu0 0.0
      %3278 = vmatpush1.msra.mxu0 %v1048
      %3279 = vmatprep.subr.mxu0 0.0
      %3280 = vmatpush1.msra.mxu0 %v1054
      %3281 = vmatprep.subr.mxu0 0.0
      %3282 = vmatpush1.msra.mxu0 %v1060
      %3283 = vmatprep.subr.mxu0 0.0
      %3284 = vmatpush1.msra.mxu0 %v1066
      %3285 = vmatprep.subr.mxu0 0.0
      %3286 = vmatpush1.msra.mxu0 %v1072
      %3287 = vmatprep.subr.mxu0 0.0
      %3288 = vmatpush1.msra.mxu0 %v1078
      %3289 = vmatprep.subr.mxu0 0.0
      %3290 = vmatpush1.msra.mxu0 %v1084
      %3291 = vmatprep.subr.mxu0 0.0
      %3292 = vmatpush1.msra.mxu0 %v1090
      %3293 = vmatprep.subr.mxu0 0.0
      %3294 = vmatpush1.msra.mxu0 %v1096
      %3295 = vmatprep.subr.mxu0 0.0
      %3296 = vmatpush1.msra.mxu0 %v1102
      %3297 = vmatprep.subr.mxu0 0.0
      %3298 = vmatpush1.msra.mxu0 %v1108
      %3299 = vmatprep.subr.mxu0 0.0
      %3300 = vmatpush1.msra.mxu0 %v1114
      %3301 = vmatprep.subr.mxu0 0.0
      %3302 = vmatpush1.msra.mxu0 0.0
      %3303 = vmatprep.subr.mxu0 0.0
      %3304 = vmatpush1.msra.mxu0 0.0
      %3305 = vmatprep.subr.mxu0 0.0
      %3306 = vmatpush1.msra.mxu0 0.0
      %3307 = vmatprep.subr.mxu0 0.0
      %3308 = vmatpush1.msra.mxu0 0.0
      %3309 = vmatprep.subr.mxu0 0.0
      %3310 = vmatpush1.msra.mxu0 0.0
      %3311 = vmatprep.subr.mxu0 0.0
      %3312 = vmatpush1.msra.mxu0 0.0
      %3313 = vmatprep.subr.mxu0 0.0
      %3314 = vmatpush1.msra.mxu0 0.0
      %3315 = vmatprep.subr.mxu0 0.0
      %3316 = vmatpush1.msra.mxu0 0.0
      %3317 = vmatprep.subr.mxu0 0.0
      %3318 = vmatpush1.msra.mxu0 0.0
      %3319 = vmatprep.subr.mxu0 0.0
      %3320 = vmatpush1.msra.mxu0 0.0
      %3321 = vmatprep.subr.mxu0 0.0
      %3322 = vmatpush1.msra.mxu0 0.0
      %3323 = vmatprep.subr.mxu0 0.0
      %3324 = vmatpush1.msra.mxu0 0.0
      %3325 = vmatprep.subr.mxu0 0.0
      %3326 = vmatpush1.msra.mxu0 0.0
      %3327 = vmatprep.subr.mxu0 0.0
      %3328 = vmatpush1.msra.mxu0 0.0
      %3329 = vmatprep.subr.mxu0 0.0
      %3330 = vmatpush1.msra.mxu0 0.0
      %3331 = vmatprep.subr.mxu0 0.0
      %3332 = vmatpush1.msra.mxu0 0.0
      %3333 = vmatprep.mubr.f32.mxu0 0.0
      %3334 = vmatmul.mubr.f32.gmra.mrb[0].mxu0 %v3238
      %v3335 = vpop.f32.mrb[0].mxu0
      %v3336 = vadd.f32 0.0, %v3335
      %v3337 = vpop.f32.mrb[0].mxu0
      %3338 = vmatprep.mubr.f32.mxu0 0.0
      %3339 = vmatmul.mubr.f32.gmra.mrb[0].mxu0 %v3240
      %v3340 = vpop.f32.mrb[0].mxu0
      %v3341 = vadd.f32 0.0, %v3340
      %v3342 = vpop.f32.mrb[0].mxu0
      %3343 = vmatprep.mubr.f32.mxu0 0.0
      %3344 = vmatmul.mubr.f32.gmra.mrb[0].mxu0 %v3242
      %v3345 = vpop.f32.mrb[0].mxu0
      %v3346 = vadd.f32 0.0, %v3345
      %v3347 = vpop.f32.mrb[0].mxu0
      %3348 = vmatprep.mubr.f32.mxu0 0.0
      %3349 = vmatmul.mubr.f32.gmra.mrb[0].mxu0 %v3244
      %v3350 = vpop.f32.mrb[0].mxu0
      %v3351 = vadd.f32 0.0, %v3350
      %v3352 = vpop.f32.mrb[0].mxu0
      %3353 = vmatprep.mubr.f32.mxu0 0.0
      %3354 = vmatmul.mubr.f32.gmra.mrb[0].mxu0 %v3246
      %v3355 = vpop.f32.mrb[0].mxu0
      %v3356 = vadd.f32 0.0, %v3355
      %v3357 = vpop.f32.mrb[0].mxu0
      %3358 = vmatprep.mubr.f32.mxu0 0.0
      %3359 = vmatmul.mubr.f32.gmra.mrb[0].mxu0 %v3248
      %v3360 = vpop.f32.mrb[0].mxu0
      %v3361 = vadd.f32 0.0, %v3360
      %v3362 = vpop.f32.mrb[0].mxu0
      %3363 = vmatprep.mubr.f32.mxu0 0.0
      %3364 = vmatmul.mubr.f32.gmra.mrb[0].mxu0 %v3250
      %v3365 = vpop.f32.mrb[0].mxu0
      %v3366 = vadd.f32 0.0, %v3365
      %v3367 = vpop.f32.mrb[0].mxu0
      %3368 = vmatprep.mubr.f32.mxu0 0.0
      %3369 = vmatmul.mubr.f32.gmra.mrb[0].mxu0 %v3252
      %v3370 = vpop.f32.mrb[0].mxu0
      %v3371 = vadd.f32 0.0, %v3370
      %v3372 = vpop.f32.mrb[0].mxu0
      %3373 = vmatprep.mubr.f32.mxu0 0.0
      %3374 = vmatmul.mubr.f32.gmra.mrb[0].mxu0 %v3254
      %v3375 = vpop.f32.mrb[0].mxu0
      %v3376 = vadd.f32 0.0, %v3375
      %v3377 = vpop.f32.mrb[0].mxu0
      %3378 = vmatprep.mubr.f32.mxu0 0.0
      %3379 = vmatmul.mubr.f32.gmra.mrb[0].mxu0 %v3256
      %v3380 = vpop.f32.mrb[0].mxu0
      %v3381 = vadd.f32 0.0, %v3380
      %v3382 = vpop.f32.mrb[0].mxu0
      %3383 = vmatprep.mubr.f32.mxu0 0.0
      %3384 = vmatmul.mubr.f32.gmra.mrb[0].mxu0 %v3258
      %v3385 = vpop.f32.mrb[0].mxu0
      %v3386 = vadd.f32 0.0, %v3385
      %v3387 = vpop.f32.mrb[0].mxu0
      %3388 = vmatprep.mubr.f32.mxu0 0.0
      %3389 = vmatmul.mubr.f32.gmra.mrb[0].mxu0 %v3260
      %v3390 = vpop.f32.mrb[0].mxu0
      %v3391 = vadd.f32 0.0, %v3390
      %v3392 = vpop.f32.mrb[0].mxu0
      %3393 = vmatprep.mubr.f32.mxu0 0.0
      %3394 = vmatmul.mubr.f32.gmra.mrb[0].mxu0 %v3262
      %v3395 = vpop.f32.mrb[0].mxu0
      %v3396 = vadd.f32 0.0, %v3395
      %v3397 = vpop.f32.mrb[0].mxu0
      %3398 = vmatprep.mubr.f32.mxu0 0.0
      %3399 = vmatmul.mubr.f32.gmra.mrb[0].mxu0 %v3264
      %v3400 = vpop.f32.mrb[0].mxu0
      %v3401 = vadd.f32 0.0, %v3400
      %v3402 = vpop.f32.mrb[0].mxu0
      %3403 = vmatprep.mubr.f32.mxu0 0.0
      %3404 = vmatmul.mubr.f32.gmra.mrb[0].mxu0 %v3266
      %v3405 = vpop.f32.mrb[0].mxu0
      %v3406 = vadd.f32 0.0, %v3405
      %v3407 = vpop.f32.mrb[0].mxu0
      %3408 = vmatprep.mubr.f32.mxu0 0.0
      %3409 = vmatmul.mubr.f32.gmra.mrb[0].mxu0 %v3268
      %v3410 = vpop.f32.mrb[0].mxu0
      %v3411 = vadd.f32 0.0, %v3410
      %v3412 = vpop.f32.mrb[0].mxu0
      %3413 = vdwg.mxu0
      %v3414 = vld [vmem:[%s2 + $0x80] sm:$0xff]
      %v3415 = vld [vmem:[%s2 + $0x88] sm:$0xff]
      %v3416 = vld [vmem:[%s2 + $0x90] sm:$0xff]
      %v3417 = vld [vmem:[%s2 + $0x98] sm:$0xff]
      %v3418 = vld [vmem:[%s2 + $0xa0] sm:$0xff]
      %v3419 = vld [vmem:[%s2 + $0xa8] sm:$0xff]
      %v3420 = vld [vmem:[%s2 + $0xb0] sm:$0xff]
      %v3421 = vld [vmem:[%s2 + $0xb8] sm:$0xff]
      %v3423 = vsel %vm1277, %v3336, 0
      %v3426 = vsel %vm1277, %v3341, 0
      %v3429 = vsel %vm1277, %v3346, 0
      %v3432 = vsel %vm1277, %v3351, 0
      %v3435 = vsel %vm1277, %v3356, 0
      %v3438 = vsel %vm1277, %v3361, 0
      %v3441 = vsel %vm1277, %v3366, 0
      %v3444 = vsel %vm1277, %v3371, 0
      %v3447 = vsel %vm1277, %v3376, 0
      %v3450 = vsel %vm1277, %v3381, 0
      %v3453 = vsel %vm1277, %v3386, 0
      %v3456 = vsel %vm1277, %v3391, 0
      %v3459 = vsel %vm1277, %v3396, 0
      %v3462 = vsel %vm1277, %v3401, 0
      %v3465 = vsel %vm1277, %v3406, 0
      %v3468 = vsel %vm1277, %v3411, 0
      %3470 = vmatprep.subr.mxu0 0.0
      %3471 = vmatpush1.msra.mxu0 %v3414
      %3472 = vmatprep.subr.mxu0 0.0
      %3473 = vmatpush1.msra.mxu0 %v3415
      %3474 = vmatprep.subr.mxu0 0.0
      %3475 = vmatpush1.msra.mxu0 %v3416
      %3476 = vmatprep.subr.mxu0 0.0
      %3477 = vmatpush1.msra.mxu0 %v3417
      %3478 = vmatprep.subr.mxu0 0.0
      %3479 = vmatpush1.msra.mxu0 %v3418
      %3480 = vmatprep.subr.mxu0 0.0
      %3481 = vmatpush1.msra.mxu0 %v3419
      %3482 = vmatprep.subr.mxu0 0.0
      %3483 = vmatpush1.msra.mxu0 %v3420
      %3484 = vmatprep.subr.mxu0 0.0
      %3485 = vmatpush1.msra.mxu0 %v3421
      %3486 = vmatprep.subr.mxu0 0.0
      %3487 = vmatpush1.msra.mxu0 0.0
      %3488 = vmatprep.subr.mxu0 0.0
      %3489 = vmatpush1.msra.mxu0 0.0
      %3490 = vmatprep.subr.mxu0 0.0
      %3491 = vmatpush1.msra.mxu0 0.0
      %3492 = vmatprep.subr.mxu0 0.0
      %3493 = vmatpush1.msra.mxu0 0.0
      %3494 = vmatprep.subr.mxu0 0.0
      %3495 = vmatpush1.msra.mxu0 0.0
      %3496 = vmatprep.subr.mxu0 0.0
      %3497 = vmatpush1.msra.mxu0 0.0
      %3498 = vmatprep.subr.mxu0 0.0
      %3499 = vmatpush1.msra.mxu0 0.0
      %3500 = vmatprep.subr.mxu0 0.0
      %3501 = vmatpush1.msra.mxu0 0.0
      %3502 = vmatprep.subr.mxu0 0.0
      %3503 = vmatpush1.msra.mxu0 0.0
      %3504 = vmatprep.subr.mxu0 0.0
      %3505 = vmatpush1.msra.mxu0 0.0
      %3506 = vmatprep.subr.mxu0 0.0
      %3507 = vmatpush1.msra.mxu0 0.0
      %3508 = vmatprep.subr.mxu0 0.0
      %3509 = vmatpush1.msra.mxu0 0.0
      %3510 = vmatprep.subr.mxu0 0.0
      %3511 = vmatpush1.msra.mxu0 0.0
      %3512 = vmatprep.subr.mxu0 0.0
      %3513 = vmatpush1.msra.mxu0 0.0
      %3514 = vmatprep.subr.mxu0 0.0
      %3515 = vmatpush1.msra.mxu0 0.0
      %3516 = vmatprep.subr.mxu0 0.0
      %3517 = vmatpush1.msra.mxu0 0.0
      %3518 = vmatprep.subr.mxu0 0.0
      %3519 = vmatpush1.msra.mxu0 0.0
      %3520 = vmatprep.subr.mxu0 0.0
      %3521 = vmatpush1.msra.mxu0 0.0
      %3522 = vmatprep.subr.mxu0 0.0
      %3523 = vmatpush1.msra.mxu0 0.0
      %3524 = vmatprep.subr.mxu0 0.0
      %3525 = vmatpush1.msra.mxu0 0.0
      %3526 = vmatprep.subr.mxu0 0.0
      %3527 = vmatpush1.msra.mxu0 0.0
      %3528 = vmatprep.subr.mxu0 0.0
      %3529 = vmatpush1.msra.mxu0 0.0
      %3530 = vmatprep.subr.mxu0 0.0
      %3531 = vmatpush1.msra.mxu0 0.0
      %3532 = vmatprep.subr.mxu0 0.0
      %3533 = vmatpush1.msra.mxu0 0.0
      %3534 = vmatprep.mubr.f32.mxu0 0.0
      %3535 = vmatmul.mubr.f32.gmra.mrb[0].mxu0 %v3423
      %v3536 = vpop.f32.mrb[0].mxu0
      %v3537 = vadd.f32 0.0, %v3536
      %v3538 = vpop.f32.mrb[0].mxu0
      %3539 = vmatprep.mubr.f32.mxu0 0.0
      %3540 = vmatmul.mubr.f32.gmra.mrb[0].mxu0 %v3426
      %v3541 = vpop.f32.mrb[0].mxu0
      %v3542 = vadd.f32 0.0, %v3541
      %v3543 = vpop.f32.mrb[0].mxu0
      %3544 = vmatprep.mubr.f32.mxu0 0.0
      %3545 = vmatmul.mubr.f32.gmra.mrb[0].mxu0 %v3429
      %v3546 = vpop.f32.mrb[0].mxu0
      %v3547 = vadd.f32 0.0, %v3546
      %v3548 = vpop.f32.mrb[0].mxu0
      %3549 = vmatprep.mubr.f32.mxu0 0.0
      %3550 = vmatmul.mubr.f32.gmra.mrb[0].mxu0 %v3432
      %v3551 = vpop.f32.mrb[0].mxu0
      %v3552 = vadd.f32 0.0, %v3551
      %v3553 = vpop.f32.mrb[0].mxu0
      %3554 = vmatprep.mubr.f32.mxu0 0.0
      %3555 = vmatmul.mubr.f32.gmra.mrb[0].mxu0 %v3435
      %v3556 = vpop.f32.mrb[0].mxu0
      %v3557 = vadd.f32 0.0, %v3556
      %v3558 = vpop.f32.mrb[0].mxu0
      %3559 = vmatprep.mubr.f32.mxu0 0.0
      %3560 = vmatmul.mubr.f32.gmra.mrb[0].mxu0 %v3438
      %v3561 = vpop.f32.mrb[0].mxu0
      %v3562 = vadd.f32 0.0, %v3561
      %v3563 = vpop.f32.mrb[0].mxu0
      %3564 = vmatprep.mubr.f32.mxu0 0.0
      %3565 = vmatmul.mubr.f32.gmra.mrb[0].mxu0 %v3441
      %v3566 = vpop.f32.mrb[0].mxu0
      %v3567 = vadd.f32 0.0, %v3566
      %v3568 = vpop.f32.mrb[0].mxu0
      %3569 = vmatprep.mubr.f32.mxu0 0.0
      %3570 = vmatmul.mubr.f32.gmra.mrb[0].mxu0 %v3444
      %v3571 = vpop.f32.mrb[0].mxu0
      %v3572 = vadd.f32 0.0, %v3571
      %v3573 = vpop.f32.mrb[0].mxu0
      %3574 = vmatprep.mubr.f32.mxu0 0.0
      %3575 = vmatmul.mubr.f32.gmra.mrb[0].mxu0 %v3447
      %v3576 = vpop.f32.mrb[0].mxu0
      %v3577 = vadd.f32 0.0, %v3576
      %v3578 = vpop.f32.mrb[0].mxu0
      %3579 = vmatprep.mubr.f32.mxu0 0.0
      %3580 = vmatmul.mubr.f32.gmra.mrb[0].mxu0 %v3450
      %v3581 = vpop.f32.mrb[0].mxu0
      %v3582 = vadd.f32 0.0, %v3581
      %v3583 = vpop.f32.mrb[0].mxu0
      %3584 = vmatprep.mubr.f32.mxu0 0.0
      %3585 = vmatmul.mubr.f32.gmra.mrb[0].mxu0 %v3453
      %v3586 = vpop.f32.mrb[0].mxu0
      %v3587 = vadd.f32 0.0, %v3586
      %v3588 = vpop.f32.mrb[0].mxu0
      %3589 = vmatprep.mubr.f32.mxu0 0.0
      %3590 = vmatmul.mubr.f32.gmra.mrb[0].mxu0 %v3456
      %v3591 = vpop.f32.mrb[0].mxu0
      %v3592 = vadd.f32 0.0, %v3591
      %v3593 = vpop.f32.mrb[0].mxu0
      %3594 = vmatprep.mubr.f32.mxu0 0.0
      %3595 = vmatmul.mubr.f32.gmra.mrb[0].mxu0 %v3459
      %v3596 = vpop.f32.mrb[0].mxu0
      %v3597 = vadd.f32 0.0, %v3596
      %v3598 = vpop.f32.mrb[0].mxu0
      %3599 = vmatprep.mubr.f32.mxu0 0.0
      %3600 = vmatmul.mubr.f32.gmra.mrb[0].mxu0 %v3462
      %v3601 = vpop.f32.mrb[0].mxu0
      %v3602 = vadd.f32 0.0, %v3601
      %v3603 = vpop.f32.mrb[0].mxu0
      %3604 = vmatprep.mubr.f32.mxu0 0.0
      %3605 = vmatmul.mubr.f32.gmra.mrb[0].mxu0 %v3465
      %v3606 = vpop.f32.mrb[0].mxu0
      %v3607 = vadd.f32 0.0, %v3606
      %v3608 = vpop.f32.mrb[0].mxu0
      %3609 = vmatprep.mubr.f32.mxu0 0.0
      %3610 = vmatmul.mubr.f32.gmra.mrb[0].mxu0 %v3468
      %v3611 = vpop.f32.mrb[0].mxu0
      %v3612 = vadd.f32 0.0, %v3611
      %v3613 = vpop.f32.mrb[0].mxu0
      %3614 = vdwg.mxu0
      %v3615 = vadd.f32 %v2790, %v3537
      %v3616 = vadd.f32 %v2795, %v3542
      %v3617 = vadd.f32 %v2800, %v3547
      %v3618 = vadd.f32 %v2805, %v3552
      %v3619 = vadd.f32 %v2810, %v3557
      %v3620 = vadd.f32 %v2815, %v3562
      %v3621 = vadd.f32 %v2820, %v3567
      %v3622 = vadd.f32 %v2825, %v3572
      %v3623 = vadd.f32 %v2830, %v3577
      %v3624 = vadd.f32 %v2835, %v3582
      %v3625 = vadd.f32 %v2840, %v3587
      %v3626 = vadd.f32 %v2845, %v3592
      %v3627 = vadd.f32 %v2850, %v3597
      %v3628 = vadd.f32 %v2855, %v3602
      %v3629 = vadd.f32 %v2860, %v3607
      %v3630 = vadd.f32 %v2865, %v3612
      %3631 = vrot.lane.b32.xlu0 %v380, 64
      %v3632 = vpop.permute.xlu0 %3631
      %3633 = vrot.lane.b32.xlu0 %v386, 64
      %v3634 = vpop.permute.xlu0 %3633
      %3635 = vrot.lane.b32.xlu0 %v392, 64
      %v3636 = vpop.permute.xlu0 %3635
      %3637 = vrot.lane.b32.xlu0 %v398, 64
      %v3638 = vpop.permute.xlu0 %3637
      %3639 = vrot.lane.b32.xlu0 %v404, 64
      %v3640 = vpop.permute.xlu0 %3639
      %3641 = vrot.lane.b32.xlu0 %v410, 64
      %v3642 = vpop.permute.xlu0 %3641
      %3643 = vrot.lane.b32.xlu0 %v416, 64
      %v3644 = vpop.permute.xlu0 %3643
      %3645 = vrot.lane.b32.xlu0 %v422, 64
      %v3646 = vpop.permute.xlu0 %3645
      %3647 = vrot.lane.b32.xlu0 %v428, 64
      %v3648 = vpop.permute.xlu0 %3647
      %3649 = vrot.lane.b32.xlu0 %v434, 64
      %v3650 = vpop.permute.xlu0 %3649
      %3651 = vrot.lane.b32.xlu0 %v440, 64
      %v3652 = vpop.permute.xlu0 %3651
      %3653 = vrot.lane.b32.xlu0 %v446, 64
      %v3654 = vpop.permute.xlu0 %3653
      %3655 = vrot.lane.b32.xlu0 %v452, 64
      %v3656 = vpop.permute.xlu0 %3655
      %3657 = vrot.lane.b32.xlu0 %v458, 64
      %v3658 = vpop.permute.xlu0 %3657
      %3659 = vrot.lane.b32.xlu0 %v464, 64
      %v3660 = vpop.permute.xlu0 %3659
      %3661 = vrot.lane.b32.xlu0 %v470, 64
      %v3662 = vpop.permute.xlu0 %3661
      %3663 = vrot.lane.b32.xlu0 %v702, 64
      %v3664 = vpop.permute.xlu0 %3663
      %3665 = vrot.lane.b32.xlu0 %v708, 64
      %v3666 = vpop.permute.xlu0 %3665
      %3667 = vrot.lane.b32.xlu0 %v714, 64
      %v3668 = vpop.permute.xlu0 %3667
      %3669 = vrot.lane.b32.xlu0 %v720, 64
      %v3670 = vpop.permute.xlu0 %3669
      %3671 = vrot.lane.b32.xlu0 %v726, 64
      %v3672 = vpop.permute.xlu0 %3671
      %3673 = vrot.lane.b32.xlu0 %v732, 64
      %v3674 = vpop.permute.xlu0 %3673
      %3675 = vrot.lane.b32.xlu0 %v738, 64
      %v3676 = vpop.permute.xlu0 %3675
      %3677 = vrot.lane.b32.xlu0 %v744, 64
      %v3678 = vpop.permute.xlu0 %3677
      %3679 = vrot.lane.b32.xlu0 %v750, 64
      %v3680 = vpop.permute.xlu0 %3679
      %3681 = vrot.lane.b32.xlu0 %v756, 64
      %v3682 = vpop.permute.xlu0 %3681
      %3683 = vrot.lane.b32.xlu0 %v762, 64
      %v3684 = vpop.permute.xlu0 %3683
      %3685 = vrot.lane.b32.xlu0 %v768, 64
      %v3686 = vpop.permute.xlu0 %3685
      %3687 = vrot.lane.b32.xlu0 %v774, 64
      %v3688 = vpop.permute.xlu0 %3687
      %3689 = vrot.lane.b32.xlu0 %v780, 64
      %v3690 = vpop.permute.xlu0 %3689
      %3691 = vrot.lane.b32.xlu0 %v786, 64
      %v3692 = vpop.permute.xlu0 %3691
      %3693 = vrot.lane.b32.xlu0 %v792, 64
      %v3694 = vpop.permute.xlu0 %3693
      %v3695 = vsel %vm1277, %v3632, 0
      %v3697 = vsel %vm1277, %v3634, 0
      %v3699 = vsel %vm1277, %v3636, 0
      %v3701 = vsel %vm1277, %v3638, 0
      %v3703 = vsel %vm1277, %v3640, 0
      %v3705 = vsel %vm1277, %v3642, 0
      %v3707 = vsel %vm1277, %v3644, 0
      %v3709 = vsel %vm1277, %v3646, 0
      %v3711 = vsel %vm1277, %v3648, 0
      %v3713 = vsel %vm1277, %v3650, 0
      %v3715 = vsel %vm1277, %v3652, 0
      %v3717 = vsel %vm1277, %v3654, 0
      %v3719 = vsel %vm1277, %v3656, 0
      %v3721 = vsel %vm1277, %v3658, 0
      %v3723 = vsel %vm1277, %v3660, 0
      %v3725 = vsel %vm1277, %v3662, 0
      %v3727 = vsel %vm1277, %v3664, 0
      %v3729 = vsel %vm1277, %v3666, 0
      %v3731 = vsel %vm1277, %v3668, 0
      %v3733 = vsel %vm1277, %v3670, 0
      %v3735 = vsel %vm1277, %v3672, 0
      %v3737 = vsel %vm1277, %v3674, 0
      %v3739 = vsel %vm1277, %v3676, 0
      %v3741 = vsel %vm1277, %v3678, 0
      %v3743 = vsel %vm1277, %v3680, 0
      %v3745 = vsel %vm1277, %v3682, 0
      %v3747 = vsel %vm1277, %v3684, 0
      %v3749 = vsel %vm1277, %v3686, 0
      %v3751 = vsel %vm1277, %v3688, 0
      %v3753 = vsel %vm1277, %v3690, 0
      %v3755 = vsel %vm1277, %v3692, 0
      %v3757 = vsel %vm1277, %v3694, 0
      %3759 = vmatprep.subr.mxu0 0.0
      %3760 = vmatpush1.xpose.msra.mxu0 %v3727
      %3761 = vmatprep.subr.mxu0 0.0
      %3762 = vmatpush1.xpose.msra.mxu0 %v3729
      %3763 = vmatprep.subr.mxu0 0.0
      %3764 = vmatpush1.xpose.msra.mxu0 %v3731
      %3765 = vmatprep.subr.mxu0 0.0
      %3766 = vmatpush1.xpose.msra.mxu0 %v3733
      %3767 = vmatprep.subr.mxu0 0.0
      %3768 = vmatpush1.xpose.msra.mxu0 %v3735
      %3769 = vmatprep.subr.mxu0 0.0
      %3770 = vmatpush1.xpose.msra.mxu0 %v3737
      %3771 = vmatprep.subr.mxu0 0.0
      %3772 = vmatpush1.xpose.msra.mxu0 %v3739
      %3773 = vmatprep.subr.mxu0 0.0
      %3774 = vmatpush1.xpose.msra.mxu0 %v3741
      %3775 = vmatprep.subr.mxu0 0.0
      %3776 = vmatpush1.xpose.msra.mxu0 %v3743
      %3777 = vmatprep.subr.mxu0 0.0
      %3778 = vmatpush1.xpose.msra.mxu0 %v3745
      %3779 = vmatprep.subr.mxu0 0.0
      %3780 = vmatpush1.xpose.msra.mxu0 %v3747
      %3781 = vmatprep.subr.mxu0 0.0
      %3782 = vmatpush1.xpose.msra.mxu0 %v3749
      %3783 = vmatprep.subr.mxu0 0.0
      %3784 = vmatpush1.xpose.msra.mxu0 %v3751
      %3785 = vmatprep.subr.mxu0 0.0
      %3786 = vmatpush1.xpose.msra.mxu0 %v3753
      %3787 = vmatprep.subr.mxu0 0.0
      %3788 = vmatpush1.xpose.msra.mxu0 %v3755
      %3789 = vmatprep.subr.mxu0 0.0
      %3790 = vmatpush1.xpose.msra.mxu0 %v3757
      %3791 = vmatprep.subr.mxu0 0.0
      %3792 = vmatpush1.xpose.msra.mxu0 0.0
      %3793 = vmatprep.subr.mxu0 0.0
      %3794 = vmatpush1.xpose.msra.mxu0 0.0
      %3795 = vmatprep.subr.mxu0 0.0
      %3796 = vmatpush1.xpose.msra.mxu0 0.0
      %3797 = vmatprep.subr.mxu0 0.0
      %3798 = vmatpush1.xpose.msra.mxu0 0.0
      %3799 = vmatprep.subr.mxu0 0.0
      %3800 = vmatpush1.xpose.msra.mxu0 0.0
      %3801 = vmatprep.subr.mxu0 0.0
      %3802 = vmatpush1.xpose.msra.mxu0 0.0
      %3803 = vmatprep.subr.mxu0 0.0
      %3804 = vmatpush1.xpose.msra.mxu0 0.0
      %3805 = vmatprep.subr.mxu0 0.0
      %3806 = vmatpush1.xpose.msra.mxu0 0.0
      %3807 = vmatprep.subr.mxu0 0.0
      %3808 = vmatpush1.xpose.msra.mxu0 0.0
      %3809 = vmatprep.subr.mxu0 0.0
      %3810 = vmatpush1.xpose.msra.mxu0 0.0
      %3811 = vmatprep.subr.mxu0 0.0
      %3812 = vmatpush1.xpose.msra.mxu0 0.0
      %3813 = vmatprep.subr.mxu0 0.0
      %3814 = vmatpush1.xpose.msra.mxu0 0.0
      %3815 = vmatprep.subr.mxu0 0.0
      %3816 = vmatpush1.xpose.msra.mxu0 0.0
      %3817 = vmatprep.subr.mxu0 0.0
      %3818 = vmatpush1.xpose.msra.mxu0 0.0
      %3819 = vmatprep.subr.mxu0 0.0
      %3820 = vmatpush1.xpose.msra.mxu0 0.0
      %3821 = vmatprep.subr.mxu0 0.0
      %3822 = vmatpush1.xpose.msra.mxu0 0.0
      %3823 = vmatprep.mubr.f32.mxu0 0.0
      %3824 = vmatmul.mubr.f32.gmra.mrb[0].mxu0 %v3695
      %v3825 = vpop.f32.mrb[0].mxu0
      %v3826 = vadd.f32 0.0, %v3825
      %v3827 = vpop.f32.mrb[0].mxu0
      %3828 = vmatprep.mubr.f32.mxu0 0.0
      %3829 = vmatmul.mubr.f32.gmra.mrb[0].mxu0 %v3697
      %v3830 = vpop.f32.mrb[0].mxu0
      %v3831 = vadd.f32 0.0, %v3830
      %v3832 = vpop.f32.mrb[0].mxu0
      %3833 = vmatprep.mubr.f32.mxu0 0.0
      %3834 = vmatmul.mubr.f32.gmra.mrb[0].mxu0 %v3699
      %v3835 = vpop.f32.mrb[0].mxu0
      %v3836 = vadd.f32 0.0, %v3835
      %v3837 = vpop.f32.mrb[0].mxu0
      %3838 = vmatprep.mubr.f32.mxu0 0.0
      %3839 = vmatmul.mubr.f32.gmra.mrb[0].mxu0 %v3701
      %v3840 = vpop.f32.mrb[0].mxu0
      %v3841 = vadd.f32 0.0, %v3840
      %v3842 = vpop.f32.mrb[0].mxu0
      %3843 = vmatprep.mubr.f32.mxu0 0.0
      %3844 = vmatmul.mubr.f32.gmra.mrb[0].mxu0 %v3703
      %v3845 = vpop.f32.mrb[0].mxu0
      %v3846 = vadd.f32 0.0, %v3845
      %v3847 = vpop.f32.mrb[0].mxu0
      %3848 = vmatprep.mubr.f32.mxu0 0.0
      %3849 = vmatmul.mubr.f32.gmra.mrb[0].mxu0 %v3705
      %v3850 = vpop.f32.mrb[0].mxu0
      %v3851 = vadd.f32 0.0, %v3850
      %v3852 = vpop.f32.mrb[0].mxu0
      %3853 = vmatprep.mubr.f32.mxu0 0.0
      %3854 = vmatmul.mubr.f32.gmra.mrb[0].mxu0 %v3707
      %v3855 = vpop.f32.mrb[0].mxu0
      %v3856 = vadd.f32 0.0, %v3855
      %v3857 = vpop.f32.mrb[0].mxu0
      %3858 = vmatprep.mubr.f32.mxu0 0.0
      %3859 = vmatmul.mubr.f32.gmra.mrb[0].mxu0 %v3709
      %v3860 = vpop.f32.mrb[0].mxu0
      %v3861 = vadd.f32 0.0, %v3860
      %v3862 = vpop.f32.mrb[0].mxu0
      %3863 = vmatprep.mubr.f32.mxu0 0.0
      %3864 = vmatmul.mubr.f32.gmra.mrb[0].mxu0 %v3711
      %v3865 = vpop.f32.mrb[0].mxu0
      %v3866 = vadd.f32 0.0, %v3865
      %v3867 = vpop.f32.mrb[0].mxu0
      %3868 = vmatprep.mubr.f32.mxu0 0.0
      %3869 = vmatmul.mubr.f32.gmra.mrb[0].mxu0 %v3713
      %v3870 = vpop.f32.mrb[0].mxu0
      %v3871 = vadd.f32 0.0, %v3870
      %v3872 = vpop.f32.mrb[0].mxu0
      %3873 = vmatprep.mubr.f32.mxu0 0.0
      %3874 = vmatmul.mubr.f32.gmra.mrb[0].mxu0 %v3715
      %v3875 = vpop.f32.mrb[0].mxu0
      %v3876 = vadd.f32 0.0, %v3875
      %v3877 = vpop.f32.mrb[0].mxu0
      %3878 = vmatprep.mubr.f32.mxu0 0.0
      %3879 = vmatmul.mubr.f32.gmra.mrb[0].mxu0 %v3717
      %v3880 = vpop.f32.mrb[0].mxu0
      %v3881 = vadd.f32 0.0, %v3880
      %v3882 = vpop.f32.mrb[0].mxu0
      %3883 = vmatprep.mubr.f32.mxu0 0.0
      %3884 = vmatmul.mubr.f32.gmra.mrb[0].mxu0 %v3719
      %v3885 = vpop.f32.mrb[0].mxu0
      %v3886 = vadd.f32 0.0, %v3885
      %v3887 = vpop.f32.mrb[0].mxu0
      %3888 = vmatprep.mubr.f32.mxu0 0.0
      %3889 = vmatmul.mubr.f32.gmra.mrb[0].mxu0 %v3721
      %v3890 = vpop.f32.mrb[0].mxu0
      %v3891 = vadd.f32 0.0, %v3890
      %v3892 = vpop.f32.mrb[0].mxu0
      %3893 = vmatprep.mubr.f32.mxu0 0.0
      %3894 = vmatmul.mubr.f32.gmra.mrb[0].mxu0 %v3723
      %v3895 = vpop.f32.mrb[0].mxu0
      %v3896 = vadd.f32 0.0, %v3895
      %v3897 = vpop.f32.mrb[0].mxu0
      %3898 = vmatprep.mubr.f32.mxu0 0.0
      %3899 = vmatmul.mubr.f32.gmra.mrb[0].mxu0 %v3725
      %v3900 = vpop.f32.mrb[0].mxu0
      %v3901 = vadd.f32 0.0, %v3900
      %v3902 = vpop.f32.mrb[0].mxu0
      %3903 = vdwg.mxu0
      %v3904 = vmul.f32 %v3826, 0.17677669
      %v3905 = vmul.f32 %v3831, 0.17677669
      %v3906 = vmul.f32 %v3836, 0.17677669
      %v3907 = vmul.f32 %v3841, 0.17677669
      %v3908 = vmul.f32 %v3846, 0.17677669
      %v3909 = vmul.f32 %v3851, 0.17677669
      %v3910 = vmul.f32 %v3856, 0.17677669
      %v3911 = vmul.f32 %v3861, 0.17677669
      %v3912 = vmul.f32 %v3866, 0.17677669
      %v3913 = vmul.f32 %v3871, 0.17677669
      %v3914 = vmul.f32 %v3876, 0.17677669
      %v3915 = vmul.f32 %v3881, 0.17677669
      %v3916 = vmul.f32 %v3886, 0.17677669
      %v3917 = vmul.f32 %v3891, 0.17677669
      %v3918 = vmul.f32 %v3896, 0.17677669
      %v3919 = vmul.f32 %v3901, 0.17677669
      %3920 = vmax.xlane.f32.xlu0 %v3904
      %v3921 = vpop.xlane.xlu0 %3920
      %3922 = vmax.xlane.f32.xlu0 %v3905
      %v3923 = vpop.xlane.xlu0 %3922
      %3924 = vmax.xlane.f32.xlu0 %v3906
      %v3925 = vpop.xlane.xlu0 %3924
      %3926 = vmax.xlane.f32.xlu0 %v3907
      %v3927 = vpop.xlane.xlu0 %3926
      %3928 = vmax.xlane.f32.xlu0 %v3908
      %v3929 = vpop.xlane.xlu0 %3928
      %3930 = vmax.xlane.f32.xlu0 %v3909
      %v3931 = vpop.xlane.xlu0 %3930
      %3932 = vmax.xlane.f32.xlu0 %v3910
      %v3933 = vpop.xlane.xlu0 %3932
      %3934 = vmax.xlane.f32.xlu0 %v3911
      %v3935 = vpop.xlane.xlu0 %3934
      %3936 = vmax.xlane.f32.xlu0 %v3912
      %v3937 = vpop.xlane.xlu0 %3936
      %3938 = vmax.xlane.f32.xlu0 %v3913
      %v3939 = vpop.xlane.xlu0 %3938
      %3940 = vmax.xlane.f32.xlu0 %v3914
      %v3941 = vpop.xlane.xlu0 %3940
      %3942 = vmax.xlane.f32.xlu0 %v3915
      %v3943 = vpop.xlane.xlu0 %3942
      %3944 = vmax.xlane.f32.xlu0 %v3916
      %v3945 = vpop.xlane.xlu0 %3944
      %3946 = vmax.xlane.f32.xlu0 %v3917
      %v3947 = vpop.xlane.xlu0 %3946
      %3948 = vmax.xlane.f32.xlu0 %v3918
      %v3949 = vpop.xlane.xlu0 %3948
      %3950 = vmax.xlane.f32.xlu0 %v3919
      %v3951 = vpop.xlane.xlu0 %3950
      %v3952 = vsub.f32 %v3904, %v3921
      %v3953 = vsub.f32 %v3905, %v3923
      %v3954 = vsub.f32 %v3906, %v3925
      %v3955 = vsub.f32 %v3907, %v3927
      %v3956 = vsub.f32 %v3908, %v3929
      %v3957 = vsub.f32 %v3909, %v3931
      %v3958 = vsub.f32 %v3910, %v3933
      %v3959 = vsub.f32 %v3911, %v3935
      %v3960 = vsub.f32 %v3912, %v3937
      %v3961 = vsub.f32 %v3913, %v3939
      %v3962 = vsub.f32 %v3914, %v3941
      %v3963 = vsub.f32 %v3915, %v3943
      %v3964 = vsub.f32 %v3916, %v3945
      %v3965 = vsub.f32 %v3917, %v3947
      %v3966 = vsub.f32 %v3918, %v3949
      %v3967 = vsub.f32 %v3919, %v3951
      %v3968 = vmul.f32 %v3952, 1.442695
      %v3969 = vpow.pop %v3968
      %v3970 = vmul.f32 %v3953, 1.442695
      %v3971 = vpow.pop %v3970
      %v3972 = vmul.f32 %v3954, 1.442695
      %v3973 = vpow.pop %v3972
      %v3974 = vmul.f32 %v3955, 1.442695
      %v3975 = vpow.pop %v3974
      %v3976 = vmul.f32 %v3956, 1.442695
      %v3977 = vpow.pop %v3976
      %v3978 = vmul.f32 %v3957, 1.442695
      %v3979 = vpow.pop %v3978
      %v3980 = vmul.f32 %v3958, 1.442695
      %v3981 = vpow.pop %v3980
      %v3982 = vmul.f32 %v3959, 1.442695
      %v3983 = vpow.pop %v3982
      %v3984 = vmul.f32 %v3960, 1.442695
      %v3985 = vpow.pop %v3984
      %v3986 = vmul.f32 %v3961, 1.442695
      %v3987 = vpow.pop %v3986
      %v3988 = vmul.f32 %v3962, 1.442695
      %v3989 = vpow.pop %v3988
      %v3990 = vmul.f32 %v3963, 1.442695
      %v3991 = vpow.pop %v3990
      %v3992 = vmul.f32 %v3964, 1.442695
      %v3993 = vpow.pop %v3992
      %v3994 = vmul.f32 %v3965, 1.442695
      %v3995 = vpow.pop %v3994
      %v3996 = vmul.f32 %v3966, 1.442695
      %v3997 = vpow.pop %v3996
      %v3998 = vmul.f32 %v3967, 1.442695
      %v3999 = vpow.pop %v3998
      %4000 = vadd.xlane.f32.xlu0 %v3969
      %v4001 = vpop.xlane.xlu0 %4000
      %4002 = vadd.xlane.f32.xlu0 %v3971
      %v4003 = vpop.xlane.xlu0 %4002
      %4004 = vadd.xlane.f32.xlu0 %v3973
      %v4005 = vpop.xlane.xlu0 %4004
      %4006 = vadd.xlane.f32.xlu0 %v3975
      %v4007 = vpop.xlane.xlu0 %4006
      %4008 = vadd.xlane.f32.xlu0 %v3977
      %v4009 = vpop.xlane.xlu0 %4008
      %4010 = vadd.xlane.f32.xlu0 %v3979
      %v4011 = vpop.xlane.xlu0 %4010
      %4012 = vadd.xlane.f32.xlu0 %v3981
      %v4013 = vpop.xlane.xlu0 %4012
      %4014 = vadd.xlane.f32.xlu0 %v3983
      %v4015 = vpop.xlane.xlu0 %4014
      %4016 = vadd.xlane.f32.xlu0 %v3985
      %v4017 = vpop.xlane.xlu0 %4016
      %4018 = vadd.xlane.f32.xlu0 %v3987
      %v4019 = vpop.xlane.xlu0 %4018
      %4020 = vadd.xlane.f32.xlu0 %v3989
      %v4021 = vpop.xlane.xlu0 %4020
      %4022 = vadd.xlane.f32.xlu0 %v3991
      %v4023 = vpop.xlane.xlu0 %4022
      %4024 = vadd.xlane.f32.xlu0 %v3993
      %v4025 = vpop.xlane.xlu0 %4024
      %4026 = vadd.xlane.f32.xlu0 %v3995
      %v4027 = vpop.xlane.xlu0 %4026
      %4028 = vadd.xlane.f32.xlu0 %v3997
      %v4029 = vpop.xlane.xlu0 %4028
      %4030 = vadd.xlane.f32.xlu0 %v3999
      %v4031 = vpop.xlane.xlu0 %4030
      %v4032 = vrcp.pop %v4001
      %v4033 = vmul.f32 %v3969, %v4032
      %v4034 = vrcp.pop %v4003
      %v4035 = vmul.f32 %v3971, %v4034
      %v4036 = vrcp.pop %v4005
      %v4037 = vmul.f32 %v3973, %v4036
      %v4038 = vrcp.pop %v4007
      %v4039 = vmul.f32 %v3975, %v4038
      %v4040 = vrcp.pop %v4009
      %v4041 = vmul.f32 %v3977, %v4040
      %v4042 = vrcp.pop %v4011
      %v4043 = vmul.f32 %v3979, %v4042
      %v4044 = vrcp.pop %v4013
      %v4045 = vmul.f32 %v3981, %v4044
      %v4046 = vrcp.pop %v4015
      %v4047 = vmul.f32 %v3983, %v4046
      %v4048 = vrcp.pop %v4017
      %v4049 = vmul.f32 %v3985, %v4048
      %v4050 = vrcp.pop %v4019
      %v4051 = vmul.f32 %v3987, %v4050
      %v4052 = vrcp.pop %v4021
      %v4053 = vmul.f32 %v3989, %v4052
      %v4054 = vrcp.pop %v4023
      %v4055 = vmul.f32 %v3991, %v4054
      %v4056 = vrcp.pop %v4025
      %v4057 = vmul.f32 %v3993, %v4056
      %v4058 = vrcp.pop %v4027
      %v4059 = vmul.f32 %v3995, %v4058
      %v4060 = vrcp.pop %v4029
      %v4061 = vmul.f32 %v3997, %v4060
      %v4062 = vrcp.pop %v4031
      %v4063 = vmul.f32 %v3999, %v4062
      %4080 = vrot.lane.b32.xlu0 %v1024, 64
      %v4081 = vpop.permute.xlu0 %4080
      %4082 = vrot.lane.b32.xlu0 %v1030, 64
      %v4083 = vpop.permute.xlu0 %4082
      %4084 = vrot.lane.b32.xlu0 %v1036, 64
      %v4085 = vpop.permute.xlu0 %4084
      %4086 = vrot.lane.b32.xlu0 %v1042, 64
      %v4087 = vpop.permute.xlu0 %4086
      %4088 = vrot.lane.b32.xlu0 %v1048, 64
      %v4089 = vpop.permute.xlu0 %4088
      %4090 = vrot.lane.b32.xlu0 %v1054, 64
      %v4091 = vpop.permute.xlu0 %4090
      %4092 = vrot.lane.b32.xlu0 %v1060, 64
      %v4093 = vpop.permute.xlu0 %4092
      %4094 = vrot.lane.b32.xlu0 %v1066, 64
      %v4095 = vpop.permute.xlu0 %4094
      %4096 = vrot.lane.b32.xlu0 %v1072, 64
      %v4097 = vpop.permute.xlu0 %4096
      %4098 = vrot.lane.b32.xlu0 %v1078, 64
      %v4099 = vpop.permute.xlu0 %4098
      %4100 = vrot.lane.b32.xlu0 %v1084, 64
      %v4101 = vpop.permute.xlu0 %4100
      %4102 = vrot.lane.b32.xlu0 %v1090, 64
      %v4103 = vpop.permute.xlu0 %4102
      %4104 = vrot.lane.b32.xlu0 %v1096, 64
      %v4105 = vpop.permute.xlu0 %4104
      %4106 = vrot.lane.b32.xlu0 %v1102, 64
      %v4107 = vpop.permute.xlu0 %4106
      %4108 = vrot.lane.b32.xlu0 %v1108, 64
      %v4109 = vpop.permute.xlu0 %4108
      %4110 = vrot.lane.b32.xlu0 %v1114, 64
      %v4111 = vpop.permute.xlu0 %4110
      %4128 = vmatprep.subr.mxu0 0.0
      %4129 = vmatpush1.msra.mxu0 %v4081
      %4130 = vmatprep.subr.mxu0 0.0
      %4131 = vmatpush1.msra.mxu0 %v4083
      %4132 = vmatprep.subr.mxu0 0.0
      %4133 = vmatpush1.msra.mxu0 %v4085
      %4134 = vmatprep.subr.mxu0 0.0
      %4135 = vmatpush1.msra.mxu0 %v4087
      %4136 = vmatprep.subr.mxu0 0.0
      %4137 = vmatpush1.msra.mxu0 %v4089
      %4138 = vmatprep.subr.mxu0 0.0
      %4139 = vmatpush1.msra.mxu0 %v4091
      %4140 = vmatprep.subr.mxu0 0.0
      %4141 = vmatpush1.msra.mxu0 %v4093
      %4142 = vmatprep.subr.mxu0 0.0
      %4143 = vmatpush1.msra.mxu0 %v4095
      %4144 = vmatprep.subr.mxu0 0.0
      %4145 = vmatpush1.msra.mxu0 %v4097
      %4146 = vmatprep.subr.mxu0 0.0
      %4147 = vmatpush1.msra.mxu0 %v4099
      %4148 = vmatprep.subr.mxu0 0.0
      %4149 = vmatpush1.msra.mxu0 %v4101
      %4150 = vmatprep.subr.mxu0 0.0
      %4151 = vmatpush1.msra.mxu0 %v4103
      %4152 = vmatprep.subr.mxu0 0.0
      %4153 = vmatpush1.msra.mxu0 %v4105
      %4154 = vmatprep.subr.mxu0 0.0
      %4155 = vmatpush1.msra.mxu0 %v4107
      %4156 = vmatprep.subr.mxu0 0.0
      %4157 = vmatpush1.msra.mxu0 %v4109
      %4158 = vmatprep.subr.mxu0 0.0
      %4159 = vmatpush1.msra.mxu0 %v4111
      %4160 = vmatprep.subr.mxu0 0.0
      %4161 = vmatpush1.msra.mxu0 0.0
      %4162 = vmatprep.subr.mxu0 0.0
      %4163 = vmatpush1.msra.mxu0 0.0
      %4164 = vmatprep.subr.mxu0 0.0
      %4165 = vmatpush1.msra.mxu0 0.0
      %4166 = vmatprep.subr.mxu0 0.0
      %4167 = vmatpush1.msra.mxu0 0.0
      %4168 = vmatprep.subr.mxu0 0.0
      %4169 = vmatpush1.msra.mxu0 0.0
      %4170 = vmatprep.subr.mxu0 0.0
      %4171 = vmatpush1.msra.mxu0 0.0
      %4172 = vmatprep.subr.mxu0 0.0
      %4173 = vmatpush1.msra.mxu0 0.0
      %4174 = vmatprep.subr.mxu0 0.0
      %4175 = vmatpush1.msra.mxu0 0.0
      %4176 = vmatprep.subr.mxu0 0.0
      %4177 = vmatpush1.msra.mxu0 0.0
      %4178 = vmatprep.subr.mxu0 0.0
      %4179 = vmatpush1.msra.mxu0 0.0
      %4180 = vmatprep.subr.mxu0 0.0
      %4181 = vmatpush1.msra.mxu0 0.0
      %4182 = vmatprep.subr.mxu0 0.0
      %4183 = vmatpush1.msra.mxu0 0.0
      %4184 = vmatprep.subr.mxu0 0.0
      %4185 = vmatpush1.msra.mxu0 0.0
      %4186 = vmatprep.subr.mxu0 0.0
      %4187 = vmatpush1.msra.mxu0 0.0
      %4188 = vmatprep.subr.mxu0 0.0
      %4189 = vmatpush1.msra.mxu0 0.0
      %4190 = vmatprep.subr.mxu0 0.0
      %4191 = vmatpush1.msra.mxu0 0.0
      %4192 = vmatprep.mubr.f32.mxu0 0.0
      %4193 = vmatmul.mubr.f32.gmra.mrb[0].mxu0 %v4033
      %v4194 = vpop.f32.mrb[0].mxu0
      %v4195 = vadd.f32 0.0, %v4194
      %v4196 = vpop.f32.mrb[0].mxu0
      %4197 = vmatprep.mubr.f32.mxu0 0.0
      %4198 = vmatmul.mubr.f32.gmra.mrb[0].mxu0 %v4035
      %v4199 = vpop.f32.mrb[0].mxu0
      %v4200 = vadd.f32 0.0, %v4199
      %v4201 = vpop.f32.mrb[0].mxu0
      %4202 = vmatprep.mubr.f32.mxu0 0.0
      %4203 = vmatmul.mubr.f32.gmra.mrb[0].mxu0 %v4037
      %v4204 = vpop.f32.mrb[0].mxu0
      %v4205 = vadd.f32 0.0, %v4204
      %v4206 = vpop.f32.mrb[0].mxu0
      %4207 = vmatprep.mubr.f32.mxu0 0.0
      %4208 = vmatmul.mubr.f32.gmra.mrb[0].mxu0 %v4039
      %v4209 = vpop.f32.mrb[0].mxu0
      %v4210 = vadd.f32 0.0, %v4209
      %v4211 = vpop.f32.mrb[0].mxu0
      %4212 = vmatprep.mubr.f32.mxu0 0.0
      %4213 = vmatmul.mubr.f32.gmra.mrb[0].mxu0 %v4041
      %v4214 = vpop.f32.mrb[0].mxu0
      %v4215 = vadd.f32 0.0, %v4214
      %v4216 = vpop.f32.mrb[0].mxu0
      %4217 = vmatprep.mubr.f32.mxu0 0.0
      %4218 = vmatmul.mubr.f32.gmra.mrb[0].mxu0 %v4043
      %v4219 = vpop.f32.mrb[0].mxu0
      %v4220 = vadd.f32 0.0, %v4219
      %v4221 = vpop.f32.mrb[0].mxu0
      %4222 = vmatprep.mubr.f32.mxu0 0.0
      %4223 = vmatmul.mubr.f32.gmra.mrb[0].mxu0 %v4045
      %v4224 = vpop.f32.mrb[0].mxu0
      %v4225 = vadd.f32 0.0, %v4224
      %v4226 = vpop.f32.mrb[0].mxu0
      %4227 = vmatprep.mubr.f32.mxu0 0.0
      %4228 = vmatmul.mubr.f32.gmra.mrb[0].mxu0 %v4047
      %v4229 = vpop.f32.mrb[0].mxu0
      %v4230 = vadd.f32 0.0, %v4229
      %v4231 = vpop.f32.mrb[0].mxu0
      %4232 = vmatprep.mubr.f32.mxu0 0.0
      %4233 = vmatmul.mubr.f32.gmra.mrb[0].mxu0 %v4049
      %v4234 = vpop.f32.mrb[0].mxu0
      %v4235 = vadd.f32 0.0, %v4234
      %v4236 = vpop.f32.mrb[0].mxu0
      %4237 = vmatprep.mubr.f32.mxu0 0.0
      %4238 = vmatmul.mubr.f32.gmra.mrb[0].mxu0 %v4051
      %v4239 = vpop.f32.mrb[0].mxu0
      %v4240 = vadd.f32 0.0, %v4239
      %v4241 = vpop.f32.mrb[0].mxu0
      %4242 = vmatprep.mubr.f32.mxu0 0.0
      %4243 = vmatmul.mubr.f32.gmra.mrb[0].mxu0 %v4053
      %v4244 = vpop.f32.mrb[0].mxu0
      %v4245 = vadd.f32 0.0, %v4244
      %v4246 = vpop.f32.mrb[0].mxu0
      %4247 = vmatprep.mubr.f32.mxu0 0.0
      %4248 = vmatmul.mubr.f32.gmra.mrb[0].mxu0 %v4055
      %v4249 = vpop.f32.mrb[0].mxu0
      %v4250 = vadd.f32 0.0, %v4249
      %v4251 = vpop.f32.mrb[0].mxu0
      %4252 = vmatprep.mubr.f32.mxu0 0.0
      %4253 = vmatmul.mubr.f32.gmra.mrb[0].mxu0 %v4057
      %v4254 = vpop.f32.mrb[0].mxu0
      %v4255 = vadd.f32 0.0, %v4254
      %v4256 = vpop.f32.mrb[0].mxu0
      %4257 = vmatprep.mubr.f32.mxu0 0.0
      %4258 = vmatmul.mubr.f32.gmra.mrb[0].mxu0 %v4059
      %v4259 = vpop.f32.mrb[0].mxu0
      %v4260 = vadd.f32 0.0, %v4259
      %v4261 = vpop.f32.mrb[0].mxu0
      %4262 = vmatprep.mubr.f32.mxu0 0.0
      %4263 = vmatmul.mubr.f32.gmra.mrb[0].mxu0 %v4061
      %v4264 = vpop.f32.mrb[0].mxu0
      %v4265 = vadd.f32 0.0, %v4264
      %v4266 = vpop.f32.mrb[0].mxu0
      %4267 = vmatprep.mubr.f32.mxu0 0.0
      %4268 = vmatmul.mubr.f32.gmra.mrb[0].mxu0 %v4063
      %v4269 = vpop.f32.mrb[0].mxu0
      %v4270 = vadd.f32 0.0, %v4269
      %v4271 = vpop.f32.mrb[0].mxu0
      %4272 = vdwg.mxu0
      %v4273 = vld [vmem:[%s2 + $0xc0] sm:$0xff]
      %v4274 = vld [vmem:[%s2 + $0xc8] sm:$0xff]
      %v4275 = vld [vmem:[%s2 + $0xd0] sm:$0xff]
      %v4276 = vld [vmem:[%s2 + $0xd8] sm:$0xff]
      %v4277 = vld [vmem:[%s2 + $0xe0] sm:$0xff]
      %v4278 = vld [vmem:[%s2 + $0xe8] sm:$0xff]
      %v4279 = vld [vmem:[%s2 + $0xf0] sm:$0xff]
      %v4280 = vld [vmem:[%s2 + $0xf8] sm:$0xff]
      %v4282 = vsel %vm1277, %v4195, 0
      %v4285 = vsel %vm1277, %v4200, 0
      %v4288 = vsel %vm1277, %v4205, 0
      %v4291 = vsel %vm1277, %v4210, 0
      %v4294 = vsel %vm1277, %v4215, 0
      %v4297 = vsel %vm1277, %v4220, 0
      %v4300 = vsel %vm1277, %v4225, 0
      %v4303 = vsel %vm1277, %v4230, 0
      %v4306 = vsel %vm1277, %v4235, 0
      %v4309 = vsel %vm1277, %v4240, 0
      %v4312 = vsel %vm1277, %v4245, 0
      %v4315 = vsel %vm1277, %v4250, 0
      %v4318 = vsel %vm1277, %v4255, 0
      %v4321 = vsel %vm1277, %v4260, 0
      %v4324 = vsel %vm1277, %v4265, 0
      %v4327 = vsel %vm1277, %v4270, 0
      %4329 = vmatprep.subr.mxu0 0.0
      %4330 = vmatpush1.msra.mxu0 %v4273
      %4331 = vmatprep.subr.mxu0 0.0
      %4332 = vmatpush1.msra.mxu0 %v4274
      %4333 = vmatprep.subr.mxu0 0.0
      %4334 = vmatpush1.msra.mxu0 %v4275
      %4335 = vmatprep.subr.mxu0 0.0
      %4336 = vmatpush1.msra.mxu0 %v4276
      %4337 = vmatprep.subr.mxu0 0.0
      %4338 = vmatpush1.msra.mxu0 %v4277
      %4339 = vmatprep.subr.mxu0 0.0
      %4340 = vmatpush1.msra.mxu0 %v4278
      %4341 = vmatprep.subr.mxu0 0.0
      %4342 = vmatpush1.msra.mxu0 %v4279
      %4343 = vmatprep.subr.mxu0 0.0
      %4344 = vmatpush1.msra.mxu0 %v4280
      %4345 = vmatprep.subr.mxu0 0.0
      %4346 = vmatpush1.msra.mxu0 0.0
      %4347 = vmatprep.subr.mxu0 0.0
      %4348 = vmatpush1.msra.mxu0 0.0
      %4349 = vmatprep.subr.mxu0 0.0
      %4350 = vmatpush1.msra.mxu0 0.0
      %4351 = vmatprep.subr.mxu0 0.0
      %4352 = vmatpush1.msra.mxu0 0.0
      %4353 = vmatprep.subr.mxu0 0.0
      %4354 = vmatpush1.msra.mxu0 0.0
      %4355 = vmatprep.subr.mxu0 0.0
      %4356 = vmatpush1.msra.mxu0 0.0
      %4357 = vmatprep.subr.mxu0 0.0
      %4358 = vmatpush1.msra.mxu0 0.0
      %4359 = vmatprep.subr.mxu0 0.0
      %4360 = vmatpush1.msra.mxu0 0.0
      %4361 = vmatprep.subr.mxu0 0.0
      %4362 = vmatpush1.msra.mxu0 0.0
      %4363 = vmatprep.subr.mxu0 0.0
      %4364 = vmatpush1.msra.mxu0 0.0
      %4365 = vmatprep.subr.mxu0 0.0
      %4366 = vmatpush1.msra.mxu0 0.0
      %4367 = vmatprep.subr.mxu0 0.0
      %4368 = vmatpush1.msra.mxu0 0.0
      %4369 = vmatprep.subr.mxu0 0.0
      %4370 = vmatpush1.msra.mxu0 0.0
      %4371 = vmatprep.subr.mxu0 0.0
      %4372 = vmatpush1.msra.mxu0 0.0
      %4373 = vmatprep.subr.mxu0 0.0
      %4374 = vmatpush1.msra.mxu0 0.0
      %4375 = vmatprep.subr.mxu0 0.0
      %4376 = vmatpush1.msra.mxu0 0.0
      %4377 = vmatprep.subr.mxu0 0.0
      %4378 = vmatpush1.msra.mxu0 0.0
      %4379 = vmatprep.subr.mxu0 0.0
      %4380 = vmatpush1.msra.mxu0 0.0
      %4381 = vmatprep.subr.mxu0 0.0
      %4382 = vmatpush1.msra.mxu0 0.0
      %4383 = vmatprep.subr.mxu0 0.0
      %4384 = vmatpush1.msra.mxu0 0.0
      %4385 = vmatprep.subr.mxu0 0.0
      %4386 = vmatpush1.msra.mxu0 0.0
      %4387 = vmatprep.subr.mxu0 0.0
      %4388 = vmatpush1.msra.mxu0 0.0
      %4389 = vmatprep.subr.mxu0 0.0
      %4390 = vmatpush1.msra.mxu0 0.0
      %4391 = vmatprep.subr.mxu0 0.0
      %4392 = vmatpush1.msra.mxu0 0.0
      %4393 = vmatprep.mubr.f32.mxu0 0.0
      %4394 = vmatmul.mubr.f32.gmra.mrb[0].mxu0 %v4282
      %v4395 = vpop.f32.mrb[0].mxu0
      %v4396 = vadd.f32 0.0, %v4395
      %v4397 = vpop.f32.mrb[0].mxu0
      %4398 = vmatprep.mubr.f32.mxu0 0.0
      %4399 = vmatmul.mubr.f32.gmra.mrb[0].mxu0 %v4285
      %v4400 = vpop.f32.mrb[0].mxu0
      %v4401 = vadd.f32 0.0, %v4400
      %v4402 = vpop.f32.mrb[0].mxu0
      %4403 = vmatprep.mubr.f32.mxu0 0.0
      %4404 = vmatmul.mubr.f32.gmra.mrb[0].mxu0 %v4288
      %v4405 = vpop.f32.mrb[0].mxu0
      %v4406 = vadd.f32 0.0, %v4405
      %v4407 = vpop.f32.mrb[0].mxu0
      %4408 = vmatprep.mubr.f32.mxu0 0.0
      %4409 = vmatmul.mubr.f32.gmra.mrb[0].mxu0 %v4291
      %v4410 = vpop.f32.mrb[0].mxu0
      %v4411 = vadd.f32 0.0, %v4410
      %v4412 = vpop.f32.mrb[0].mxu0
      %4413 = vmatprep.mubr.f32.mxu0 0.0
      %4414 = vmatmul.mubr.f32.gmra.mrb[0].mxu0 %v4294
      %v4415 = vpop.f32.mrb[0].mxu0
      %v4416 = vadd.f32 0.0, %v4415
      %v4417 = vpop.f32.mrb[0].mxu0
      %4418 = vmatprep.mubr.f32.mxu0 0.0
      %4419 = vmatmul.mubr.f32.gmra.mrb[0].mxu0 %v4297
      %v4420 = vpop.f32.mrb[0].mxu0
      %v4421 = vadd.f32 0.0, %v4420
      %v4422 = vpop.f32.mrb[0].mxu0
      %4423 = vmatprep.mubr.f32.mxu0 0.0
      %4424 = vmatmul.mubr.f32.gmra.mrb[0].mxu0 %v4300
      %v4425 = vpop.f32.mrb[0].mxu0
      %v4426 = vadd.f32 0.0, %v4425
      %v4427 = vpop.f32.mrb[0].mxu0
      %4428 = vmatprep.mubr.f32.mxu0 0.0
      %4429 = vmatmul.mubr.f32.gmra.mrb[0].mxu0 %v4303
      %v4430 = vpop.f32.mrb[0].mxu0
      %v4431 = vadd.f32 0.0, %v4430
      %v4432 = vpop.f32.mrb[0].mxu0
      %4433 = vmatprep.mubr.f32.mxu0 0.0
      %4434 = vmatmul.mubr.f32.gmra.mrb[0].mxu0 %v4306
      %v4435 = vpop.f32.mrb[0].mxu0
      %v4436 = vadd.f32 0.0, %v4435
      %v4437 = vpop.f32.mrb[0].mxu0
      %4438 = vmatprep.mubr.f32.mxu0 0.0
      %4439 = vmatmul.mubr.f32.gmra.mrb[0].mxu0 %v4309
      %v4440 = vpop.f32.mrb[0].mxu0
      %v4441 = vadd.f32 0.0, %v4440
      %v4442 = vpop.f32.mrb[0].mxu0
      %4443 = vmatprep.mubr.f32.mxu0 0.0
      %4444 = vmatmul.mubr.f32.gmra.mrb[0].mxu0 %v4312
      %v4445 = vpop.f32.mrb[0].mxu0
      %v4446 = vadd.f32 0.0, %v4445
      %v4447 = vpop.f32.mrb[0].mxu0
      %4448 = vmatprep.mubr.f32.mxu0 0.0
      %4449 = vmatmul.mubr.f32.gmra.mrb[0].mxu0 %v4315
      %v4450 = vpop.f32.mrb[0].mxu0
      %v4451 = vadd.f32 0.0, %v4450
      %v4452 = vpop.f32.mrb[0].mxu0
      %4453 = vmatprep.mubr.f32.mxu0 0.0
      %4454 = vmatmul.mubr.f32.gmra.mrb[0].mxu0 %v4318
      %v4455 = vpop.f32.mrb[0].mxu0
      %v4456 = vadd.f32 0.0, %v4455
      %v4457 = vpop.f32.mrb[0].mxu0
      %4458 = vmatprep.mubr.f32.mxu0 0.0
      %4459 = vmatmul.mubr.f32.gmra.mrb[0].mxu0 %v4321
      %v4460 = vpop.f32.mrb[0].mxu0
      %v4461 = vadd.f32 0.0, %v4460
      %v4462 = vpop.f32.mrb[0].mxu0
      %4463 = vmatprep.mubr.f32.mxu0 0.0
      %4464 = vmatmul.mubr.f32.gmra.mrb[0].mxu0 %v4324
      %v4465 = vpop.f32.mrb[0].mxu0
      %v4466 = vadd.f32 0.0, %v4465
      %v4467 = vpop.f32.mrb[0].mxu0
      %4468 = vmatprep.mubr.f32.mxu0 0.0
      %4469 = vmatmul.mubr.f32.gmra.mrb[0].mxu0 %v4327
      %v4470 = vpop.f32.mrb[0].mxu0
      %v4471 = vadd.f32 0.0, %v4470
      %v4472 = vpop.f32.mrb[0].mxu0
      %4473 = vdwg.mxu0
      %v4474 = vadd.f32 %v3615, %v4396
      %v4475 = vadd.f32 %v3616, %v4401
      %v4476 = vadd.f32 %v3617, %v4406
      %v4477 = vadd.f32 %v3618, %v4411
      %v4478 = vadd.f32 %v3619, %v4416
      %v4479 = vadd.f32 %v3620, %v4421
      %v4480 = vadd.f32 %v3621, %v4426
      %v4481 = vadd.f32 %v3622, %v4431
      %v4482 = vadd.f32 %v3623, %v4436
      %v4483 = vadd.f32 %v3624, %v4441
      %v4484 = vadd.f32 %v3625, %v4446
      %v4485 = vadd.f32 %v3626, %v4451
      %v4486 = vadd.f32 %v3627, %v4456
      %v4487 = vadd.f32 %v3628, %v4461
      %v4488 = vadd.f32 %v3629, %v4466
      %v4489 = vadd.f32 %v3630, %v4471
      %v4491 = vsel %vm1277, %v539, 0
      %v4494 = vsel %vm1277, %v545, 0
      %v4497 = vsel %vm1277, %v551, 0
      %v4500 = vsel %vm1277, %v557, 0
      %v4503 = vsel %vm1277, %v563, 0
      %v4506 = vsel %vm1277, %v569, 0
      %v4509 = vsel %vm1277, %v575, 0
      %v4512 = vsel %vm1277, %v581, 0
      %v4515 = vsel %vm1277, %v587, 0
      %v4518 = vsel %vm1277, %v593, 0
      %v4521 = vsel %vm1277, %v599, 0
      %v4524 = vsel %vm1277, %v605, 0
      %v4527 = vsel %vm1277, %v611, 0
      %v4530 = vsel %vm1277, %v617, 0
      %v4533 = vsel %vm1277, %v623, 0
      %v4536 = vsel %vm1277, %v629, 0
      %v4539 = vsel %vm1277, %v861, 0
      %v4542 = vsel %vm1277, %v867, 0
      %v4545 = vsel %vm1277, %v873, 0
      %v4548 = vsel %vm1277, %v879, 0
      %v4551 = vsel %vm1277, %v885, 0
      %v4554 = vsel %vm1277, %v891, 0
      %v4557 = vsel %vm1277, %v897, 0
      %v4560 = vsel %vm1277, %v903, 0
      %v4563 = vsel %vm1277, %v909, 0
      %v4566 = vsel %vm1277, %v915, 0
      %v4569 = vsel %vm1277, %v921, 0
      %v4572 = vsel %vm1277, %v927, 0
      %v4575 = vsel %vm1277, %v933, 0
      %v4578 = vsel %vm1277, %v939, 0
      %v4581 = vsel %vm1277, %v945, 0
      %v4584 = vsel %vm1277, %v951, 0
      %4586 = vmatprep.subr.mxu0 0.0
      %4587 = vmatpush1.xpose.msra.mxu0 %v4539
      %4588 = vmatprep.subr.mxu0 0.0
      %4589 = vmatpush1.xpose.msra.mxu0 %v4542
      %4590 = vmatprep.subr.mxu0 0.0
      %4591 = vmatpush1.xpose.msra.mxu0 %v4545
      %4592 = vmatprep.subr.mxu0 0.0
      %4593 = vmatpush1.xpose.msra.mxu0 %v4548
      %4594 = vmatprep.subr.mxu0 0.0
      %4595 = vmatpush1.xpose.msra.mxu0 %v4551
      %4596 = vmatprep.subr.mxu0 0.0
      %4597 = vmatpush1.xpose.msra.mxu0 %v4554
      %4598 = vmatprep.subr.mxu0 0.0
      %4599 = vmatpush1.xpose.msra.mxu0 %v4557
      %4600 = vmatprep.subr.mxu0 0.0
      %4601 = vmatpush1.xpose.msra.mxu0 %v4560
      %4602 = vmatprep.subr.mxu0 0.0
      %4603 = vmatpush1.xpose.msra.mxu0 %v4563
      %4604 = vmatprep.subr.mxu0 0.0
      %4605 = vmatpush1.xpose.msra.mxu0 %v4566
      %4606 = vmatprep.subr.mxu0 0.0
      %4607 = vmatpush1.xpose.msra.mxu0 %v4569
      %4608 = vmatprep.subr.mxu0 0.0
      %4609 = vmatpush1.xpose.msra.mxu0 %v4572
      %4610 = vmatprep.subr.mxu0 0.0
      %4611 = vmatpush1.xpose.msra.mxu0 %v4575
      %4612 = vmatprep.subr.mxu0 0.0
      %4613 = vmatpush1.xpose.msra.mxu0 %v4578
      %4614 = vmatprep.subr.mxu0 0.0
      %4615 = vmatpush1.xpose.msra.mxu0 %v4581
      %4616 = vmatprep.subr.mxu0 0.0
      %4617 = vmatpush1.xpose.msra.mxu0 %v4584
      %4618 = vmatprep.subr.mxu0 0.0
      %4619 = vmatpush1.xpose.msra.mxu0 0.0
      %4620 = vmatprep.subr.mxu0 0.0
      %4621 = vmatpush1.xpose.msra.mxu0 0.0
      %4622 = vmatprep.subr.mxu0 0.0
      %4623 = vmatpush1.xpose.msra.mxu0 0.0
      %4624 = vmatprep.subr.mxu0 0.0
      %4625 = vmatpush1.xpose.msra.mxu0 0.0
      %4626 = vmatprep.subr.mxu0 0.0
      %4627 = vmatpush1.xpose.msra.mxu0 0.0
      %4628 = vmatprep.subr.mxu0 0.0
      %4629 = vmatpush1.xpose.msra.mxu0 0.0
      %4630 = vmatprep.subr.mxu0 0.0
      %4631 = vmatpush1.xpose.msra.mxu0 0.0
      %4632 = vmatprep.subr.mxu0 0.0
      %4633 = vmatpush1.xpose.msra.mxu0 0.0
      %4634 = vmatprep.subr.mxu0 0.0
      %4635 = vmatpush1.xpose.msra.mxu0 0.0
      %4636 = vmatprep.subr.mxu0 0.0
      %4637 = vmatpush1.xpose.msra.mxu0 0.0
      %4638 = vmatprep.subr.mxu0 0.0
      %4639 = vmatpush1.xpose.msra.mxu0 0.0
      %4640 = vmatprep.subr.mxu0 0.0
      %4641 = vmatpush1.xpose.msra.mxu0 0.0
      %4642 = vmatprep.subr.mxu0 0.0
      %4643 = vmatpush1.xpose.msra.mxu0 0.0
      %4644 = vmatprep.subr.mxu0 0.0
      %4645 = vmatpush1.xpose.msra.mxu0 0.0
      %4646 = vmatprep.subr.mxu0 0.0
      %4647 = vmatpush1.xpose.msra.mxu0 0.0
      %4648 = vmatprep.subr.mxu0 0.0
      %4649 = vmatpush1.xpose.msra.mxu0 0.0
      %4650 = vmatprep.mubr.f32.mxu0 0.0
      %4651 = vmatmul.mubr.f32.gmra.mrb[0].mxu0 %v4491
      %v4652 = vpop.f32.mrb[0].mxu0
      %v4653 = vadd.f32 0.0, %v4652
      %v4654 = vpop.f32.mrb[0].mxu0
      %4655 = vmatprep.mubr.f32.mxu0 0.0
      %4656 = vmatmul.mubr.f32.gmra.mrb[0].mxu0 %v4494
      %v4657 = vpop.f32.mrb[0].mxu0
      %v4658 = vadd.f32 0.0, %v4657
      %v4659 = vpop.f32.mrb[0].mxu0
      %4660 = vmatprep.mubr.f32.mxu0 0.0
      %4661 = vmatmul.mubr.f32.gmra.mrb[0].mxu0 %v4497
      %v4662 = vpop.f32.mrb[0].mxu0
      %v4663 = vadd.f32 0.0, %v4662
      %v4664 = vpop.f32.mrb[0].mxu0
      %4665 = vmatprep.mubr.f32.mxu0 0.0
      %4666 = vmatmul.mubr.f32.gmra.mrb[0].mxu0 %v4500
      %v4667 = vpop.f32.mrb[0].mxu0
      %v4668 = vadd.f32 0.0, %v4667
      %v4669 = vpop.f32.mrb[0].mxu0
      %4670 = vmatprep.mubr.f32.mxu0 0.0
      %4671 = vmatmul.mubr.f32.gmra.mrb[0].mxu0 %v4503
      %v4672 = vpop.f32.mrb[0].mxu0
      %v4673 = vadd.f32 0.0, %v4672
      %v4674 = vpop.f32.mrb[0].mxu0
      %4675 = vmatprep.mubr.f32.mxu0 0.0
      %4676 = vmatmul.mubr.f32.gmra.mrb[0].mxu0 %v4506
      %v4677 = vpop.f32.mrb[0].mxu0
      %v4678 = vadd.f32 0.0, %v4677
      %v4679 = vpop.f32.mrb[0].mxu0
      %4680 = vmatprep.mubr.f32.mxu0 0.0
      %4681 = vmatmul.mubr.f32.gmra.mrb[0].mxu0 %v4509
      %v4682 = vpop.f32.mrb[0].mxu0
      %v4683 = vadd.f32 0.0, %v4682
      %v4684 = vpop.f32.mrb[0].mxu0
      %4685 = vmatprep.mubr.f32.mxu0 0.0
      %4686 = vmatmul.mubr.f32.gmra.mrb[0].mxu0 %v4512
      %v4687 = vpop.f32.mrb[0].mxu0
      %v4688 = vadd.f32 0.0, %v4687
      %v4689 = vpop.f32.mrb[0].mxu0
      %4690 = vmatprep.mubr.f32.mxu0 0.0
      %4691 = vmatmul.mubr.f32.gmra.mrb[0].mxu0 %v4515
      %v4692 = vpop.f32.mrb[0].mxu0
      %v4693 = vadd.f32 0.0, %v4692
      %v4694 = vpop.f32.mrb[0].mxu0
      %4695 = vmatprep.mubr.f32.mxu0 0.0
      %4696 = vmatmul.mubr.f32.gmra.mrb[0].mxu0 %v4518
      %v4697 = vpop.f32.mrb[0].mxu0
      %v4698 = vadd.f32 0.0, %v4697
      %v4699 = vpop.f32.mrb[0].mxu0
      %4700 = vmatprep.mubr.f32.mxu0 0.0
      %4701 = vmatmul.mubr.f32.gmra.mrb[0].mxu0 %v4521
      %v4702 = vpop.f32.mrb[0].mxu0
      %v4703 = vadd.f32 0.0, %v4702
      %v4704 = vpop.f32.mrb[0].mxu0
      %4705 = vmatprep.mubr.f32.mxu0 0.0
      %4706 = vmatmul.mubr.f32.gmra.mrb[0].mxu0 %v4524
      %v4707 = vpop.f32.mrb[0].mxu0
      %v4708 = vadd.f32 0.0, %v4707
      %v4709 = vpop.f32.mrb[0].mxu0
      %4710 = vmatprep.mubr.f32.mxu0 0.0
      %4711 = vmatmul.mubr.f32.gmra.mrb[0].mxu0 %v4527
      %v4712 = vpop.f32.mrb[0].mxu0
      %v4713 = vadd.f32 0.0, %v4712
      %v4714 = vpop.f32.mrb[0].mxu0
      %4715 = vmatprep.mubr.f32.mxu0 0.0
      %4716 = vmatmul.mubr.f32.gmra.mrb[0].mxu0 %v4530
      %v4717 = vpop.f32.mrb[0].mxu0
      %v4718 = vadd.f32 0.0, %v4717
      %v4719 = vpop.f32.mrb[0].mxu0
      %4720 = vmatprep.mubr.f32.mxu0 0.0
      %4721 = vmatmul.mubr.f32.gmra.mrb[0].mxu0 %v4533
      %v4722 = vpop.f32.mrb[0].mxu0
      %v4723 = vadd.f32 0.0, %v4722
      %v4724 = vpop.f32.mrb[0].mxu0
      %4725 = vmatprep.mubr.f32.mxu0 0.0
      %4726 = vmatmul.mubr.f32.gmra.mrb[0].mxu0 %v4536
      %v4727 = vpop.f32.mrb[0].mxu0
      %v4728 = vadd.f32 0.0, %v4727
      %v4729 = vpop.f32.mrb[0].mxu0
      %4730 = vdwg.mxu0
      %v4731 = vmul.f32 %v4653, 0.17677669
      %v4732 = vmul.f32 %v4658, 0.17677669
      %v4733 = vmul.f32 %v4663, 0.17677669
      %v4734 = vmul.f32 %v4668, 0.17677669
      %v4735 = vmul.f32 %v4673, 0.17677669
      %v4736 = vmul.f32 %v4678, 0.17677669
      %v4737 = vmul.f32 %v4683, 0.17677669
      %v4738 = vmul.f32 %v4688, 0.17677669
      %v4739 = vmul.f32 %v4693, 0.17677669
      %v4740 = vmul.f32 %v4698, 0.17677669
      %v4741 = vmul.f32 %v4703, 0.17677669
      %v4742 = vmul.f32 %v4708, 0.17677669
      %v4743 = vmul.f32 %v4713, 0.17677669
      %v4744 = vmul.f32 %v4718, 0.17677669
      %v4745 = vmul.f32 %v4723, 0.17677669
      %v4746 = vmul.f32 %v4728, 0.17677669
      %4747 = vmax.xlane.f32.xlu0 %v4731
      %v4748 = vpop.xlane.xlu0 %4747
      %4749 = vmax.xlane.f32.xlu0 %v4732
      %v4750 = vpop.xlane.xlu0 %4749
      %4751 = vmax.xlane.f32.xlu0 %v4733
      %v4752 = vpop.xlane.xlu0 %4751
      %4753 = vmax.xlane.f32.xlu0 %v4734
      %v4754 = vpop.xlane.xlu0 %4753
      %4755 = vmax.xlane.f32.xlu0 %v4735
      %v4756 = vpop.xlane.xlu0 %4755
      %4757 = vmax.xlane.f32.xlu0 %v4736
      %v4758 = vpop.xlane.xlu0 %4757
      %4759 = vmax.xlane.f32.xlu0 %v4737
      %v4760 = vpop.xlane.xlu0 %4759
      %4761 = vmax.xlane.f32.xlu0 %v4738
      %v4762 = vpop.xlane.xlu0 %4761
      %4763 = vmax.xlane.f32.xlu0 %v4739
      %v4764 = vpop.xlane.xlu0 %4763
      %4765 = vmax.xlane.f32.xlu0 %v4740
      %v4766 = vpop.xlane.xlu0 %4765
      %4767 = vmax.xlane.f32.xlu0 %v4741
      %v4768 = vpop.xlane.xlu0 %4767
      %4769 = vmax.xlane.f32.xlu0 %v4742
      %v4770 = vpop.xlane.xlu0 %4769
      %4771 = vmax.xlane.f32.xlu0 %v4743
      %v4772 = vpop.xlane.xlu0 %4771
      %4773 = vmax.xlane.f32.xlu0 %v4744
      %v4774 = vpop.xlane.xlu0 %4773
      %4775 = vmax.xlane.f32.xlu0 %v4745
      %v4776 = vpop.xlane.xlu0 %4775
      %4777 = vmax.xlane.f32.xlu0 %v4746
      %v4778 = vpop.xlane.xlu0 %4777
      %v4779 = vsub.f32 %v4731, %v4748
      %v4780 = vsub.f32 %v4732, %v4750
      %v4781 = vsub.f32 %v4733, %v4752
      %v4782 = vsub.f32 %v4734, %v4754
      %v4783 = vsub.f32 %v4735, %v4756
      %v4784 = vsub.f32 %v4736, %v4758
      %v4785 = vsub.f32 %v4737, %v4760
      %v4786 = vsub.f32 %v4738, %v4762
      %v4787 = vsub.f32 %v4739, %v4764
      %v4788 = vsub.f32 %v4740, %v4766
      %v4789 = vsub.f32 %v4741, %v4768
      %v4790 = vsub.f32 %v4742, %v4770
      %v4791 = vsub.f32 %v4743, %v4772
      %v4792 = vsub.f32 %v4744, %v4774
      %v4793 = vsub.f32 %v4745, %v4776
      %v4794 = vsub.f32 %v4746, %v4778
      %v4795 = vmul.f32 %v4779, 1.442695
      %v4796 = vpow.pop %v4795
      %v4797 = vmul.f32 %v4780, 1.442695
      %v4798 = vpow.pop %v4797
      %v4799 = vmul.f32 %v4781, 1.442695
      %v4800 = vpow.pop %v4799
      %v4801 = vmul.f32 %v4782, 1.442695
      %v4802 = vpow.pop %v4801
      %v4803 = vmul.f32 %v4783, 1.442695
      %v4804 = vpow.pop %v4803
      %v4805 = vmul.f32 %v4784, 1.442695
      %v4806 = vpow.pop %v4805
      %v4807 = vmul.f32 %v4785, 1.442695
      %v4808 = vpow.pop %v4807
      %v4809 = vmul.f32 %v4786, 1.442695
      %v4810 = vpow.pop %v4809
      %v4811 = vmul.f32 %v4787, 1.442695
      %v4812 = vpow.pop %v4811
      %v4813 = vmul.f32 %v4788, 1.442695
      %v4814 = vpow.pop %v4813
      %v4815 = vmul.f32 %v4789, 1.442695
      %v4816 = vpow.pop %v4815
      %v4817 = vmul.f32 %v4790, 1.442695
      %v4818 = vpow.pop %v4817
      %v4819 = vmul.f32 %v4791, 1.442695
      %v4820 = vpow.pop %v4819
      %v4821 = vmul.f32 %v4792, 1.442695
      %v4822 = vpow.pop %v4821
      %v4823 = vmul.f32 %v4793, 1.442695
      %v4824 = vpow.pop %v4823
      %v4825 = vmul.f32 %v4794, 1.442695
      %v4826 = vpow.pop %v4825
      %4827 = vadd.xlane.f32.xlu0 %v4796
      %v4828 = vpop.xlane.xlu0 %4827
      %4829 = vadd.xlane.f32.xlu0 %v4798
      %v4830 = vpop.xlane.xlu0 %4829
      %4831 = vadd.xlane.f32.xlu0 %v4800
      %v4832 = vpop.xlane.xlu0 %4831
      %4833 = vadd.xlane.f32.xlu0 %v4802
      %v4834 = vpop.xlane.xlu0 %4833
      %4835 = vadd.xlane.f32.xlu0 %v4804
      %v4836 = vpop.xlane.xlu0 %4835
      %4837 = vadd.xlane.f32.xlu0 %v4806
      %v4838 = vpop.xlane.xlu0 %4837
      %4839 = vadd.xlane.f32.xlu0 %v4808
      %v4840 = vpop.xlane.xlu0 %4839
      %4841 = vadd.xlane.f32.xlu0 %v4810
      %v4842 = vpop.xlane.xlu0 %4841
      %4843 = vadd.xlane.f32.xlu0 %v4812
      %v4844 = vpop.xlane.xlu0 %4843
      %4845 = vadd.xlane.f32.xlu0 %v4814
      %v4846 = vpop.xlane.xlu0 %4845
      %4847 = vadd.xlane.f32.xlu0 %v4816
      %v4848 = vpop.xlane.xlu0 %4847
      %4849 = vadd.xlane.f32.xlu0 %v4818
      %v4850 = vpop.xlane.xlu0 %4849
      %4851 = vadd.xlane.f32.xlu0 %v4820
      %v4852 = vpop.xlane.xlu0 %4851
      %4853 = vadd.xlane.f32.xlu0 %v4822
      %v4854 = vpop.xlane.xlu0 %4853
      %4855 = vadd.xlane.f32.xlu0 %v4824
      %v4856 = vpop.xlane.xlu0 %4855
      %4857 = vadd.xlane.f32.xlu0 %v4826
      %v4858 = vpop.xlane.xlu0 %4857
      %v4859 = vrcp.pop %v4828
      %v4860 = vmul.f32 %v4796, %v4859
      %v4861 = vrcp.pop %v4830
      %v4862 = vmul.f32 %v4798, %v4861
      %v4863 = vrcp.pop %v4832
      %v4864 = vmul.f32 %v4800, %v4863
      %v4865 = vrcp.pop %v4834
      %v4866 = vmul.f32 %v4802, %v4865
      %v4867 = vrcp.pop %v4836
      %v4868 = vmul.f32 %v4804, %v4867
      %v4869 = vrcp.pop %v4838
      %v4870 = vmul.f32 %v4806, %v4869
      %v4871 = vrcp.pop %v4840
      %v4872 = vmul.f32 %v4808, %v4871
      %v4873 = vrcp.pop %v4842
      %v4874 = vmul.f32 %v4810, %v4873
      %v4875 = vrcp.pop %v4844
      %v4876 = vmul.f32 %v4812, %v4875
      %v4877 = vrcp.pop %v4846
      %v4878 = vmul.f32 %v4814, %v4877
      %v4879 = vrcp.pop %v4848
      %v4880 = vmul.f32 %v4816, %v4879
      %v4881 = vrcp.pop %v4850
      %v4882 = vmul.f32 %v4818, %v4881
      %v4883 = vrcp.pop %v4852
      %v4884 = vmul.f32 %v4820, %v4883
      %v4885 = vrcp.pop %v4854
      %v4886 = vmul.f32 %v4822, %v4885
      %v4887 = vrcp.pop %v4856
      %v4888 = vmul.f32 %v4824, %v4887
      %v4889 = vrcp.pop %v4858
      %v4890 = vmul.f32 %v4826, %v4889
      %4891 = vmatprep.subr.mxu0 0.0
      %4892 = vmatpush1.msra.mxu0 %v1183
      %4893 = vmatprep.subr.mxu0 0.0
      %4894 = vmatpush1.msra.mxu0 %v1189
      %4895 = vmatprep.subr.mxu0 0.0
      %4896 = vmatpush1.msra.mxu0 %v1195
      %4897 = vmatprep.subr.mxu0 0.0
      %4898 = vmatpush1.msra.mxu0 %v1201
      %4899 = vmatprep.subr.mxu0 0.0
      %4900 = vmatpush1.msra.mxu0 %v1207
      %4901 = vmatprep.subr.mxu0 0.0
      %4902 = vmatpush1.msra.mxu0 %v1213
      %4903 = vmatprep.subr.mxu0 0.0
      %4904 = vmatpush1.msra.mxu0 %v1219
      %4905 = vmatprep.subr.mxu0 0.0
      %4906 = vmatpush1.msra.mxu0 %v1225
      %4907 = vmatprep.subr.mxu0 0.0
      %4908 = vmatpush1.msra.mxu0 %v1231
      %4909 = vmatprep.subr.mxu0 0.0
      %4910 = vmatpush1.msra.mxu0 %v1237
      %4911 = vmatprep.subr.mxu0 0.0
      %4912 = vmatpush1.msra.mxu0 %v1243
      %4913 = vmatprep.subr.mxu0 0.0
      %4914 = vmatpush1.msra.mxu0 %v1249
      %4915 = vmatprep.subr.mxu0 0.0
      %4916 = vmatpush1.msra.mxu0 %v1255
      %4917 = vmatprep.subr.mxu0 0.0
      %4918 = vmatpush1.msra.mxu0 %v1261
      %4919 = vmatprep.subr.mxu0 0.0
      %4920 = vmatpush1.msra.mxu0 %v1267
      %4921 = vmatprep.subr.mxu0 0.0
      %4922 = vmatpush1.msra.mxu0 %v1273
      %4923 = vmatprep.subr.mxu0 0.0
      %4924 = vmatpush1.msra.mxu0 0.0
      %4925 = vmatprep.subr.mxu0 0.0
      %4926 = vmatpush1.msra.mxu0 0.0
      %4927 = vmatprep.subr.mxu0 0.0
      %4928 = vmatpush1.msra.mxu0 0.0
      %4929 = vmatprep.subr.mxu0 0.0
      %4930 = vmatpush1.msra.mxu0 0.0
      %4931 = vmatprep.subr.mxu0 0.0
      %4932 = vmatpush1.msra.mxu0 0.0
      %4933 = vmatprep.subr.mxu0 0.0
      %4934 = vmatpush1.msra.mxu0 0.0
      %4935 = vmatprep.subr.mxu0 0.0
      %4936 = vmatpush1.msra.mxu0 0.0
      %4937 = vmatprep.subr.mxu0 0.0
      %4938 = vmatpush1.msra.mxu0 0.0
      %4939 = vmatprep.subr.mxu0 0.0
      %4940 = vmatpush1.msra.mxu0 0.0
      %4941 = vmatprep.subr.mxu0 0.0
      %4942 = vmatpush1.msra.mxu0 0.0
      %4943 = vmatprep.subr.mxu0 0.0
      %4944 = vmatpush1.msra.mxu0 0.0
      %4945 = vmatprep.subr.mxu0 0.0
      %4946 = vmatpush1.msra.mxu0 0.0
      %4947 = vmatprep.subr.mxu0 0.0
      %4948 = vmatpush1.msra.mxu0 0.0
      %4949 = vmatprep.subr.mxu0 0.0
      %4950 = vmatpush1.msra.mxu0 0.0
      %4951 = vmatprep.subr.mxu0 0.0
      %4952 = vmatpush1.msra.mxu0 0.0
      %4953 = vmatprep.subr.mxu0 0.0
      %4954 = vmatpush1.msra.mxu0 0.0
      %4955 = vmatprep.mubr.f32.mxu0 0.0
      %4956 = vmatmul.mubr.f32.gmra.mrb[0].mxu0 %v4860
      %v4957 = vpop.f32.mrb[0].mxu0
      %v4958 = vadd.f32 0.0, %v4957
      %v4959 = vpop.f32.mrb[0].mxu0
      %4960 = vmatprep.mubr.f32.mxu0 0.0
      %4961 = vmatmul.mubr.f32.gmra.mrb[0].mxu0 %v4862
      %v4962 = vpop.f32.mrb[0].mxu0
      %v4963 = vadd.f32 0.0, %v4962
      %v4964 = vpop.f32.mrb[0].mxu0
      %4965 = vmatprep.mubr.f32.mxu0 0.0
      %4966 = vmatmul.mubr.f32.gmra.mrb[0].mxu0 %v4864
      %v4967 = vpop.f32.mrb[0].mxu0
      %v4968 = vadd.f32 0.0, %v4967
      %v4969 = vpop.f32.mrb[0].mxu0
      %4970 = vmatprep.mubr.f32.mxu0 0.0
      %4971 = vmatmul.mubr.f32.gmra.mrb[0].mxu0 %v4866
      %v4972 = vpop.f32.mrb[0].mxu0
      %v4973 = vadd.f32 0.0, %v4972
      %v4974 = vpop.f32.mrb[0].mxu0
      %4975 = vmatprep.mubr.f32.mxu0 0.0
      %4976 = vmatmul.mubr.f32.gmra.mrb[0].mxu0 %v4868
      %v4977 = vpop.f32.mrb[0].mxu0
      %v4978 = vadd.f32 0.0, %v4977
      %v4979 = vpop.f32.mrb[0].mxu0
      %4980 = vmatprep.mubr.f32.mxu0 0.0
      %4981 = vmatmul.mubr.f32.gmra.mrb[0].mxu0 %v4870
      %v4982 = vpop.f32.mrb[0].mxu0
      %v4983 = vadd.f32 0.0, %v4982
      %v4984 = vpop.f32.mrb[0].mxu0
      %4985 = vmatprep.mubr.f32.mxu0 0.0
      %4986 = vmatmul.mubr.f32.gmra.mrb[0].mxu0 %v4872
      %v4987 = vpop.f32.mrb[0].mxu0
      %v4988 = vadd.f32 0.0, %v4987
      %v4989 = vpop.f32.mrb[0].mxu0
      %4990 = vmatprep.mubr.f32.mxu0 0.0
      %4991 = vmatmul.mubr.f32.gmra.mrb[0].mxu0 %v4874
      %v4992 = vpop.f32.mrb[0].mxu0
      %v4993 = vadd.f32 0.0, %v4992
      %v4994 = vpop.f32.mrb[0].mxu0
      %4995 = vmatprep.mubr.f32.mxu0 0.0
      %4996 = vmatmul.mubr.f32.gmra.mrb[0].mxu0 %v4876
      %v4997 = vpop.f32.mrb[0].mxu0
      %v4998 = vadd.f32 0.0, %v4997
      %v4999 = vpop.f32.mrb[0].mxu0
      %5000 = vmatprep.mubr.f32.mxu0 0.0
      %5001 = vmatmul.mubr.f32.gmra.mrb[0].mxu0 %v4878
      %v5002 = vpop.f32.mrb[0].mxu0
      %v5003 = vadd.f32 0.0, %v5002
      %v5004 = vpop.f32.mrb[0].mxu0
      %5005 = vmatprep.mubr.f32.mxu0 0.0
      %5006 = vmatmul.mubr.f32.gmra.mrb[0].mxu0 %v4880
      %v5007 = vpop.f32.mrb[0].mxu0
      %v5008 = vadd.f32 0.0, %v5007
      %v5009 = vpop.f32.mrb[0].mxu0
      %5010 = vmatprep.mubr.f32.mxu0 0.0
      %5011 = vmatmul.mubr.f32.gmra.mrb[0].mxu0 %v4882
      %v5012 = vpop.f32.mrb[0].mxu0
      %v5013 = vadd.f32 0.0, %v5012
      %v5014 = vpop.f32.mrb[0].mxu0
      %5015 = vmatprep.mubr.f32.mxu0 0.0
      %5016 = vmatmul.mubr.f32.gmra.mrb[0].mxu0 %v4884
      %v5017 = vpop.f32.mrb[0].mxu0
      %v5018 = vadd.f32 0.0, %v5017
      %v5019 = vpop.f32.mrb[0].mxu0
      %5020 = vmatprep.mubr.f32.mxu0 0.0
      %5021 = vmatmul.mubr.f32.gmra.mrb[0].mxu0 %v4886
      %v5022 = vpop.f32.mrb[0].mxu0
      %v5023 = vadd.f32 0.0, %v5022
      %v5024 = vpop.f32.mrb[0].mxu0
      %5025 = vmatprep.mubr.f32.mxu0 0.0
      %5026 = vmatmul.mubr.f32.gmra.mrb[0].mxu0 %v4888
      %v5027 = vpop.f32.mrb[0].mxu0
      %v5028 = vadd.f32 0.0, %v5027
      %v5029 = vpop.f32.mrb[0].mxu0
      %5030 = vmatprep.mubr.f32.mxu0 0.0
      %5031 = vmatmul.mubr.f32.gmra.mrb[0].mxu0 %v4890
      %v5032 = vpop.f32.mrb[0].mxu0
      %v5033 = vadd.f32 0.0, %v5032
      %v5034 = vpop.f32.mrb[0].mxu0
      %5035 = vdwg.mxu0
      %v5036 = vld [vmem:[%s2 + $0x100] sm:$0xff]
      %v5037 = vld [vmem:[%s2 + $0x108] sm:$0xff]
      %v5038 = vld [vmem:[%s2 + $0x110] sm:$0xff]
      %v5039 = vld [vmem:[%s2 + $0x118] sm:$0xff]
      %v5040 = vld [vmem:[%s2 + $0x120] sm:$0xff]
      %v5041 = vld [vmem:[%s2 + $0x128] sm:$0xff]
      %v5042 = vld [vmem:[%s2 + $0x130] sm:$0xff]
      %v5043 = vld [vmem:[%s2 + $0x138] sm:$0xff]
      %v5045 = vsel %vm1277, %v4958, 0
      %v5048 = vsel %vm1277, %v4963, 0
      %v5051 = vsel %vm1277, %v4968, 0
      %v5054 = vsel %vm1277, %v4973, 0
      %v5057 = vsel %vm1277, %v4978, 0
      %v5060 = vsel %vm1277, %v4983, 0
      %v5063 = vsel %vm1277, %v4988, 0
      %v5066 = vsel %vm1277, %v4993, 0
      %v5069 = vsel %vm1277, %v4998, 0
      %v5072 = vsel %vm1277, %v5003, 0
      %v5075 = vsel %vm1277, %v5008, 0
      %v5078 = vsel %vm1277, %v5013, 0
      %v5081 = vsel %vm1277, %v5018, 0
      %v5084 = vsel %vm1277, %v5023, 0
      %v5087 = vsel %vm1277, %v5028, 0
      %v5090 = vsel %vm1277, %v5033, 0
      %5092 = vmatprep.subr.mxu0 0.0
      %5093 = vmatpush1.msra.mxu0 %v5036
      %5094 = vmatprep.subr.mxu0 0.0
      %5095 = vmatpush1.msra.mxu0 %v5037
      %5096 = vmatprep.subr.mxu0 0.0
      %5097 = vmatpush1.msra.mxu0 %v5038
      %5098 = vmatprep.subr.mxu0 0.0
      %5099 = vmatpush1.msra.mxu0 %v5039
      %5100 = vmatprep.subr.mxu0 0.0
      %5101 = vmatpush1.msra.mxu0 %v5040
      %5102 = vmatprep.subr.mxu0 0.0
      %5103 = vmatpush1.msra.mxu0 %v5041
      %5104 = vmatprep.subr.mxu0 0.0
      %5105 = vmatpush1.msra.mxu0 %v5042
      %5106 = vmatprep.subr.mxu0 0.0
      %5107 = vmatpush1.msra.mxu0 %v5043
      %5108 = vmatprep.subr.mxu0 0.0
      %5109 = vmatpush1.msra.mxu0 0.0
      %5110 = vmatprep.subr.mxu0 0.0
      %5111 = vmatpush1.msra.mxu0 0.0
      %5112 = vmatprep.subr.mxu0 0.0
      %5113 = vmatpush1.msra.mxu0 0.0
      %5114 = vmatprep.subr.mxu0 0.0
      %5115 = vmatpush1.msra.mxu0 0.0
      %5116 = vmatprep.subr.mxu0 0.0
      %5117 = vmatpush1.msra.mxu0 0.0
      %5118 = vmatprep.subr.mxu0 0.0
      %5119 = vmatpush1.msra.mxu0 0.0
      %5120 = vmatprep.subr.mxu0 0.0
      %5121 = vmatpush1.msra.mxu0 0.0
      %5122 = vmatprep.subr.mxu0 0.0
      %5123 = vmatpush1.msra.mxu0 0.0
      %5124 = vmatprep.subr.mxu0 0.0
      %5125 = vmatpush1.msra.mxu0 0.0
      %5126 = vmatprep.subr.mxu0 0.0
      %5127 = vmatpush1.msra.mxu0 0.0
      %5128 = vmatprep.subr.mxu0 0.0
      %5129 = vmatpush1.msra.mxu0 0.0
      %5130 = vmatprep.subr.mxu0 0.0
      %5131 = vmatpush1.msra.mxu0 0.0
      %5132 = vmatprep.subr.mxu0 0.0
      %5133 = vmatpush1.msra.mxu0 0.0
      %5134 = vmatprep.subr.mxu0 0.0
      %5135 = vmatpush1.msra.mxu0 0.0
      %5136 = vmatprep.subr.mxu0 0.0
      %5137 = vmatpush1.msra.mxu0 0.0
      %5138 = vmatprep.subr.mxu0 0.0
      %5139 = vmatpush1.msra.mxu0 0.0
      %5140 = vmatprep.subr.mxu0 0.0
      %5141 = vmatpush1.msra.mxu0 0.0
      %5142 = vmatprep.subr.mxu0 0.0
      %5143 = vmatpush1.msra.mxu0 0.0
      %5144 = vmatprep.subr.mxu0 0.0
      %5145 = vmatpush1.msra.mxu0 0.0
      %5146 = vmatprep.subr.mxu0 0.0
      %5147 = vmatpush1.msra.mxu0 0.0
      %5148 = vmatprep.subr.mxu0 0.0
      %5149 = vmatpush1.msra.mxu0 0.0
      %5150 = vmatprep.subr.mxu0 0.0
      %5151 = vmatpush1.msra.mxu0 0.0
      %5152 = vmatprep.subr.mxu0 0.0
      %5153 = vmatpush1.msra.mxu0 0.0
      %5154 = vmatprep.subr.mxu0 0.0
      %5155 = vmatpush1.msra.mxu0 0.0
      %5156 = vmatprep.mubr.f32.mxu0 0.0
      %5157 = vmatmul.mubr.f32.gmra.mrb[0].mxu0 %v5045
      %v5158 = vpop.f32.mrb[0].mxu0
      %v5159 = vadd.f32 0.0, %v5158
      %v5160 = vpop.f32.mrb[0].mxu0
      %5161 = vmatprep.mubr.f32.mxu0 0.0
      %5162 = vmatmul.mubr.f32.gmra.mrb[0].mxu0 %v5048
      %v5163 = vpop.f32.mrb[0].mxu0
      %v5164 = vadd.f32 0.0, %v5163
      %v5165 = vpop.f32.mrb[0].mxu0
      %5166 = vmatprep.mubr.f32.mxu0 0.0
      %5167 = vmatmul.mubr.f32.gmra.mrb[0].mxu0 %v5051
      %v5168 = vpop.f32.mrb[0].mxu0
      %v5169 = vadd.f32 0.0, %v5168
      %v5170 = vpop.f32.mrb[0].mxu0
      %5171 = vmatprep.mubr.f32.mxu0 0.0
      %5172 = vmatmul.mubr.f32.gmra.mrb[0].mxu0 %v5054
      %v5173 = vpop.f32.mrb[0].mxu0
      %v5174 = vadd.f32 0.0, %v5173
      %v5175 = vpop.f32.mrb[0].mxu0
      %5176 = vmatprep.mubr.f32.mxu0 0.0
      %5177 = vmatmul.mubr.f32.gmra.mrb[0].mxu0 %v5057
      %v5178 = vpop.f32.mrb[0].mxu0
      %v5179 = vadd.f32 0.0, %v5178
      %v5180 = vpop.f32.mrb[0].mxu0
      %5181 = vmatprep.mubr.f32.mxu0 0.0
      %5182 = vmatmul.mubr.f32.gmra.mrb[0].mxu0 %v5060
      %v5183 = vpop.f32.mrb[0].mxu0
      %v5184 = vadd.f32 0.0, %v5183
      %v5185 = vpop.f32.mrb[0].mxu0
      %5186 = vmatprep.mubr.f32.mxu0 0.0
      %5187 = vmatmul.mubr.f32.gmra.mrb[0].mxu0 %v5063
      %v5188 = vpop.f32.mrb[0].mxu0
      %v5189 = vadd.f32 0.0, %v5188
      %v5190 = vpop.f32.mrb[0].mxu0
      %5191 = vmatprep.mubr.f32.mxu0 0.0
      %5192 = vmatmul.mubr.f32.gmra.mrb[0].mxu0 %v5066
      %v5193 = vpop.f32.mrb[0].mxu0
      %v5194 = vadd.f32 0.0, %v5193
      %v5195 = vpop.f32.mrb[0].mxu0
      %5196 = vmatprep.mubr.f32.mxu0 0.0
      %5197 = vmatmul.mubr.f32.gmra.mrb[0].mxu0 %v5069
      %v5198 = vpop.f32.mrb[0].mxu0
      %v5199 = vadd.f32 0.0, %v5198
      %v5200 = vpop.f32.mrb[0].mxu0
      %5201 = vmatprep.mubr.f32.mxu0 0.0
      %5202 = vmatmul.mubr.f32.gmra.mrb[0].mxu0 %v5072
      %v5203 = vpop.f32.mrb[0].mxu0
      %v5204 = vadd.f32 0.0, %v5203
      %v5205 = vpop.f32.mrb[0].mxu0
      %5206 = vmatprep.mubr.f32.mxu0 0.0
      %5207 = vmatmul.mubr.f32.gmra.mrb[0].mxu0 %v5075
      %v5208 = vpop.f32.mrb[0].mxu0
      %v5209 = vadd.f32 0.0, %v5208
      %v5210 = vpop.f32.mrb[0].mxu0
      %5211 = vmatprep.mubr.f32.mxu0 0.0
      %5212 = vmatmul.mubr.f32.gmra.mrb[0].mxu0 %v5078
      %v5213 = vpop.f32.mrb[0].mxu0
      %v5214 = vadd.f32 0.0, %v5213
      %v5215 = vpop.f32.mrb[0].mxu0
      %5216 = vmatprep.mubr.f32.mxu0 0.0
      %5217 = vmatmul.mubr.f32.gmra.mrb[0].mxu0 %v5081
      %v5218 = vpop.f32.mrb[0].mxu0
      %v5219 = vadd.f32 0.0, %v5218
      %v5220 = vpop.f32.mrb[0].mxu0
      %5221 = vmatprep.mubr.f32.mxu0 0.0
      %5222 = vmatmul.mubr.f32.gmra.mrb[0].mxu0 %v5084
      %v5223 = vpop.f32.mrb[0].mxu0
      %v5224 = vadd.f32 0.0, %v5223
      %v5225 = vpop.f32.mrb[0].mxu0
      %5226 = vmatprep.mubr.f32.mxu0 0.0
      %5227 = vmatmul.mubr.f32.gmra.mrb[0].mxu0 %v5087
      %v5228 = vpop.f32.mrb[0].mxu0
      %v5229 = vadd.f32 0.0, %v5228
      %v5230 = vpop.f32.mrb[0].mxu0
      %5231 = vmatprep.mubr.f32.mxu0 0.0
      %5232 = vmatmul.mubr.f32.gmra.mrb[0].mxu0 %v5090
      %v5233 = vpop.f32.mrb[0].mxu0
      %v5234 = vadd.f32 0.0, %v5233
      %v5235 = vpop.f32.mrb[0].mxu0
      %5236 = vdwg.mxu0
      %v5237 = vadd.f32 %v4474, %v5159
      %v5238 = vadd.f32 %v4475, %v5164
      %v5239 = vadd.f32 %v4476, %v5169
      %v5240 = vadd.f32 %v4477, %v5174
      %v5241 = vadd.f32 %v4478, %v5179
      %v5242 = vadd.f32 %v4479, %v5184
      %v5243 = vadd.f32 %v4480, %v5189
      %v5244 = vadd.f32 %v4481, %v5194
      %v5245 = vadd.f32 %v4482, %v5199
      %v5246 = vadd.f32 %v4483, %v5204
      %v5247 = vadd.f32 %v4484, %v5209
      %v5248 = vadd.f32 %v4485, %v5214
      %v5249 = vadd.f32 %v4486, %v5219
      %v5250 = vadd.f32 %v4487, %v5224
      %v5251 = vadd.f32 %v4488, %v5229
      %v5252 = vadd.f32 %v4489, %v5234
      %5253 = vrot.lane.b32.xlu0 %v539, 64
      %v5254 = vpop.permute.xlu0 %5253
      %5255 = vrot.lane.b32.xlu0 %v545, 64
      %v5256 = vpop.permute.xlu0 %5255
      %5257 = vrot.lane.b32.xlu0 %v551, 64
      %v5258 = vpop.permute.xlu0 %5257
      %5259 = vrot.lane.b32.xlu0 %v557, 64
      %v5260 = vpop.permute.xlu0 %5259
      %5261 = vrot.lane.b32.xlu0 %v563, 64
      %v5262 = vpop.permute.xlu0 %5261
      %5263 = vrot.lane.b32.xlu0 %v569, 64
      %v5264 = vpop.permute.xlu0 %5263
      %5265 = vrot.lane.b32.xlu0 %v575, 64
      %v5266 = vpop.permute.xlu0 %5265
      %5267 = vrot.lane.b32.xlu0 %v581, 64
      %v5268 = vpop.permute.xlu0 %5267
      %5269 = vrot.lane.b32.xlu0 %v587, 64
      %v5270 = vpop.permute.xlu0 %5269
      %5271 = vrot.lane.b32.xlu0 %v593, 64
      %v5272 = vpop.permute.xlu0 %5271
      %5273 = vrot.lane.b32.xlu0 %v599, 64
      %v5274 = vpop.permute.xlu0 %5273
      %5275 = vrot.lane.b32.xlu0 %v605, 64
      %v5276 = vpop.permute.xlu0 %5275
      %5277 = vrot.lane.b32.xlu0 %v611, 64
      %v5278 = vpop.permute.xlu0 %5277
      %5279 = vrot.lane.b32.xlu0 %v617, 64
      %v5280 = vpop.permute.xlu0 %5279
      %5281 = vrot.lane.b32.xlu0 %v623, 64
      %v5282 = vpop.permute.xlu0 %5281
      %5283 = vrot.lane.b32.xlu0 %v629, 64
      %v5284 = vpop.permute.xlu0 %5283
      %5285 = vrot.lane.b32.xlu0 %v861, 64
      %v5286 = vpop.permute.xlu0 %5285
      %5287 = vrot.lane.b32.xlu0 %v867, 64
      %v5288 = vpop.permute.xlu0 %5287
      %5289 = vrot.lane.b32.xlu0 %v873, 64
      %v5290 = vpop.permute.xlu0 %5289
      %5291 = vrot.lane.b32.xlu0 %v879, 64
      %v5292 = vpop.permute.xlu0 %5291
      %5293 = vrot.lane.b32.xlu0 %v885, 64
      %v5294 = vpop.permute.xlu0 %5293
      %5295 = vrot.lane.b32.xlu0 %v891, 64
      %v5296 = vpop.permute.xlu0 %5295
      %5297 = vrot.lane.b32.xlu0 %v897, 64
      %v5298 = vpop.permute.xlu0 %5297
      %5299 = vrot.lane.b32.xlu0 %v903, 64
      %v5300 = vpop.permute.xlu0 %5299
      %5301 = vrot.lane.b32.xlu0 %v909, 64
      %v5302 = vpop.permute.xlu0 %5301
      %5303 = vrot.lane.b32.xlu0 %v915, 64
      %v5304 = vpop.permute.xlu0 %5303
      %5305 = vrot.lane.b32.xlu0 %v921, 64
      %v5306 = vpop.permute.xlu0 %5305
      %5307 = vrot.lane.b32.xlu0 %v927, 64
      %v5308 = vpop.permute.xlu0 %5307
      %5309 = vrot.lane.b32.xlu0 %v933, 64
      %v5310 = vpop.permute.xlu0 %5309
      %5311 = vrot.lane.b32.xlu0 %v939, 64
      %v5312 = vpop.permute.xlu0 %5311
      %5313 = vrot.lane.b32.xlu0 %v945, 64
      %v5314 = vpop.permute.xlu0 %5313
      %5315 = vrot.lane.b32.xlu0 %v951, 64
      %v5316 = vpop.permute.xlu0 %5315
      %v5317 = vsel %vm1277, %v5254, 0
      %v5319 = vsel %vm1277, %v5256, 0
      %v5321 = vsel %vm1277, %v5258, 0
      %v5323 = vsel %vm1277, %v5260, 0
      %v5325 = vsel %vm1277, %v5262, 0
      %v5327 = vsel %vm1277, %v5264, 0
      %v5329 = vsel %vm1277, %v5266, 0
      %v5331 = vsel %vm1277, %v5268, 0
      %v5333 = vsel %vm1277, %v5270, 0
      %v5335 = vsel %vm1277, %v5272, 0
      %v5337 = vsel %vm1277, %v5274, 0
      %v5339 = vsel %vm1277, %v5276, 0
      %v5341 = vsel %vm1277, %v5278, 0
      %v5343 = vsel %vm1277, %v5280, 0
      %v5345 = vsel %vm1277, %v5282, 0
      %v5347 = vsel %vm1277, %v5284, 0
      %v5349 = vsel %vm1277, %v5286, 0
      %v5351 = vsel %vm1277, %v5288, 0
      %v5353 = vsel %vm1277, %v5290, 0
      %v5355 = vsel %vm1277, %v5292, 0
      %v5357 = vsel %vm1277, %v5294, 0
      %v5359 = vsel %vm1277, %v5296, 0
      %v5361 = vsel %vm1277, %v5298, 0
      %v5363 = vsel %vm1277, %v5300, 0
      %v5365 = vsel %vm1277, %v5302, 0
      %v5367 = vsel %vm1277, %v5304, 0
      %v5369 = vsel %vm1277, %v5306, 0
      %v5371 = vsel %vm1277, %v5308, 0
      %v5373 = vsel %vm1277, %v5310, 0
      %v5375 = vsel %vm1277, %v5312, 0
      %v5377 = vsel %vm1277, %v5314, 0
      %v5379 = vsel %vm1277, %v5316, 0
      %5381 = vmatprep.subr.mxu0 0.0
      %5382 = vmatpush1.xpose.msra.mxu0 %v5349
      %5383 = vmatprep.subr.mxu0 0.0
      %5384 = vmatpush1.xpose.msra.mxu0 %v5351
      %5385 = vmatprep.subr.mxu0 0.0
      %5386 = vmatpush1.xpose.msra.mxu0 %v5353
      %5387 = vmatprep.subr.mxu0 0.0
      %5388 = vmatpush1.xpose.msra.mxu0 %v5355
      %5389 = vmatprep.subr.mxu0 0.0
      %5390 = vmatpush1.xpose.msra.mxu0 %v5357
      %5391 = vmatprep.subr.mxu0 0.0
      %5392 = vmatpush1.xpose.msra.mxu0 %v5359
      %5393 = vmatprep.subr.mxu0 0.0
      %5394 = vmatpush1.xpose.msra.mxu0 %v5361
      %5395 = vmatprep.subr.mxu0 0.0
      %5396 = vmatpush1.xpose.msra.mxu0 %v5363
      %5397 = vmatprep.subr.mxu0 0.0
      %5398 = vmatpush1.xpose.msra.mxu0 %v5365
      %5399 = vmatprep.subr.mxu0 0.0
      %5400 = vmatpush1.xpose.msra.mxu0 %v5367
      %5401 = vmatprep.subr.mxu0 0.0
      %5402 = vmatpush1.xpose.msra.mxu0 %v5369
      %5403 = vmatprep.subr.mxu0 0.0
      %5404 = vmatpush1.xpose.msra.mxu0 %v5371
      %5405 = vmatprep.subr.mxu0 0.0
      %5406 = vmatpush1.xpose.msra.mxu0 %v5373
      %5407 = vmatprep.subr.mxu0 0.0
      %5408 = vmatpush1.xpose.msra.mxu0 %v5375
      %5409 = vmatprep.subr.mxu0 0.0
      %5410 = vmatpush1.xpose.msra.mxu0 %v5377
      %5411 = vmatprep.subr.mxu0 0.0
      %5412 = vmatpush1.xpose.msra.mxu0 %v5379
      %5413 = vmatprep.subr.mxu0 0.0
      %5414 = vmatpush1.xpose.msra.mxu0 0.0
      %5415 = vmatprep.subr.mxu0 0.0
      %5416 = vmatpush1.xpose.msra.mxu0 0.0
      %5417 = vmatprep.subr.mxu0 0.0
      %5418 = vmatpush1.xpose.msra.mxu0 0.0
      %5419 = vmatprep.subr.mxu0 0.0
      %5420 = vmatpush1.xpose.msra.mxu0 0.0
      %5421 = vmatprep.subr.mxu0 0.0
      %5422 = vmatpush1.xpose.msra.mxu0 0.0
      %5423 = vmatprep.subr.mxu0 0.0
      %5424 = vmatpush1.xpose.msra.mxu0 0.0
      %5425 = vmatprep.subr.mxu0 0.0
      %5426 = vmatpush1.xpose.msra.mxu0 0.0
      %5427 = vmatprep.subr.mxu0 0.0
      %5428 = vmatpush1.xpose.msra.mxu0 0.0
      %5429 = vmatprep.subr.mxu0 0.0
      %5430 = vmatpush1.xpose.msra.mxu0 0.0
      %5431 = vmatprep.subr.mxu0 0.0
      %5432 = vmatpush1.xpose.msra.mxu0 0.0
      %5433 = vmatprep.subr.mxu0 0.0
      %5434 = vmatpush1.xpose.msra.mxu0 0.0
      %5435 = vmatprep.subr.mxu0 0.0
      %5436 = vmatpush1.xpose.msra.mxu0 0.0
      %5437 = vmatprep.subr.mxu0 0.0
      %5438 = vmatpush1.xpose.msra.mxu0 0.0
      %5439 = vmatprep.subr.mxu0 0.0
      %5440 = vmatpush1.xpose.msra.mxu0 0.0
      %5441 = vmatprep.subr.mxu0 0.0
      %5442 = vmatpush1.xpose.msra.mxu0 0.0
      %5443 = vmatprep.subr.mxu0 0.0
      %5444 = vmatpush1.xpose.msra.mxu0 0.0
      %5445 = vmatprep.mubr.f32.mxu0 0.0
      %5446 = vmatmul.mubr.f32.gmra.mrb[0].mxu0 %v5317
      %v5447 = vpop.f32.mrb[0].mxu0
      %v5448 = vadd.f32 0.0, %v5447
      %v5449 = vpop.f32.mrb[0].mxu0
      %5450 = vmatprep.mubr.f32.mxu0 0.0
      %5451 = vmatmul.mubr.f32.gmra.mrb[0].mxu0 %v5319
      %v5452 = vpop.f32.mrb[0].mxu0
      %v5453 = vadd.f32 0.0, %v5452
      %v5454 = vpop.f32.mrb[0].mxu0
      %5455 = vmatprep.mubr.f32.mxu0 0.0
      %5456 = vmatmul.mubr.f32.gmra.mrb[0].mxu0 %v5321
      %v5457 = vpop.f32.mrb[0].mxu0
      %v5458 = vadd.f32 0.0, %v5457
      %v5459 = vpop.f32.mrb[0].mxu0
      %5460 = vmatprep.mubr.f32.mxu0 0.0
      %5461 = vmatmul.mubr.f32.gmra.mrb[0].mxu0 %v5323
      %v5462 = vpop.f32.mrb[0].mxu0
      %v5463 = vadd.f32 0.0, %v5462
      %v5464 = vpop.f32.mrb[0].mxu0
      %5465 = vmatprep.mubr.f32.mxu0 0.0
      %5466 = vmatmul.mubr.f32.gmra.mrb[0].mxu0 %v5325
      %v5467 = vpop.f32.mrb[0].mxu0
      %v5468 = vadd.f32 0.0, %v5467
      %v5469 = vpop.f32.mrb[0].mxu0
      %5470 = vmatprep.mubr.f32.mxu0 0.0
      %5471 = vmatmul.mubr.f32.gmra.mrb[0].mxu0 %v5327
      %v5472 = vpop.f32.mrb[0].mxu0
      %v5473 = vadd.f32 0.0, %v5472
      %v5474 = vpop.f32.mrb[0].mxu0
      %5475 = vmatprep.mubr.f32.mxu0 0.0
      %5476 = vmatmul.mubr.f32.gmra.mrb[0].mxu0 %v5329
      %v5477 = vpop.f32.mrb[0].mxu0
      %v5478 = vadd.f32 0.0, %v5477
      %v5479 = vpop.f32.mrb[0].mxu0
      %5480 = vmatprep.mubr.f32.mxu0 0.0
      %5481 = vmatmul.mubr.f32.gmra.mrb[0].mxu0 %v5331
      %v5482 = vpop.f32.mrb[0].mxu0
      %v5483 = vadd.f32 0.0, %v5482
      %v5484 = vpop.f32.mrb[0].mxu0
      %5485 = vmatprep.mubr.f32.mxu0 0.0
      %5486 = vmatmul.mubr.f32.gmra.mrb[0].mxu0 %v5333
      %v5487 = vpop.f32.mrb[0].mxu0
      %v5488 = vadd.f32 0.0, %v5487
      %v5489 = vpop.f32.mrb[0].mxu0
      %5490 = vmatprep.mubr.f32.mxu0 0.0
      %5491 = vmatmul.mubr.f32.gmra.mrb[0].mxu0 %v5335
      %v5492 = vpop.f32.mrb[0].mxu0
      %v5493 = vadd.f32 0.0, %v5492
      %v5494 = vpop.f32.mrb[0].mxu0
      %5495 = vmatprep.mubr.f32.mxu0 0.0
      %5496 = vmatmul.mubr.f32.gmra.mrb[0].mxu0 %v5337
      %v5497 = vpop.f32.mrb[0].mxu0
      %v5498 = vadd.f32 0.0, %v5497
      %v5499 = vpop.f32.mrb[0].mxu0
      %5500 = vmatprep.mubr.f32.mxu0 0.0
      %5501 = vmatmul.mubr.f32.gmra.mrb[0].mxu0 %v5339
      %v5502 = vpop.f32.mrb[0].mxu0
      %v5503 = vadd.f32 0.0, %v5502
      %v5504 = vpop.f32.mrb[0].mxu0
      %5505 = vmatprep.mubr.f32.mxu0 0.0
      %5506 = vmatmul.mubr.f32.gmra.mrb[0].mxu0 %v5341
      %v5507 = vpop.f32.mrb[0].mxu0
      %v5508 = vadd.f32 0.0, %v5507
      %v5509 = vpop.f32.mrb[0].mxu0
      %5510 = vmatprep.mubr.f32.mxu0 0.0
      %5511 = vmatmul.mubr.f32.gmra.mrb[0].mxu0 %v5343
      %v5512 = vpop.f32.mrb[0].mxu0
      %v5513 = vadd.f32 0.0, %v5512
      %v5514 = vpop.f32.mrb[0].mxu0
      %5515 = vmatprep.mubr.f32.mxu0 0.0
      %5516 = vmatmul.mubr.f32.gmra.mrb[0].mxu0 %v5345
      %v5517 = vpop.f32.mrb[0].mxu0
      %v5518 = vadd.f32 0.0, %v5517
      %v5519 = vpop.f32.mrb[0].mxu0
      %5520 = vmatprep.mubr.f32.mxu0 0.0
      %5521 = vmatmul.mubr.f32.gmra.mrb[0].mxu0 %v5347
      %v5522 = vpop.f32.mrb[0].mxu0
      %v5523 = vadd.f32 0.0, %v5522
      %v5524 = vpop.f32.mrb[0].mxu0
      %5525 = vdwg.mxu0
      %v5526 = vmul.f32 %v5448, 0.17677669
      %v5527 = vmul.f32 %v5453, 0.17677669
      %v5528 = vmul.f32 %v5458, 0.17677669
      %v5529 = vmul.f32 %v5463, 0.17677669
      %v5530 = vmul.f32 %v5468, 0.17677669
      %v5531 = vmul.f32 %v5473, 0.17677669
      %v5532 = vmul.f32 %v5478, 0.17677669
      %v5533 = vmul.f32 %v5483, 0.17677669
      %v5534 = vmul.f32 %v5488, 0.17677669
      %v5535 = vmul.f32 %v5493, 0.17677669
      %v5536 = vmul.f32 %v5498, 0.17677669
      %v5537 = vmul.f32 %v5503, 0.17677669
      %v5538 = vmul.f32 %v5508, 0.17677669
      %v5539 = vmul.f32 %v5513, 0.17677669
      %v5540 = vmul.f32 %v5518, 0.17677669
      %v5541 = vmul.f32 %v5523, 0.17677669
      %5542 = vmax.xlane.f32.xlu0 %v5526
      %v5543 = vpop.xlane.xlu0 %5542
      %5544 = vmax.xlane.f32.xlu0 %v5527
      %v5545 = vpop.xlane.xlu0 %5544
      %5546 = vmax.xlane.f32.xlu0 %v5528
      %v5547 = vpop.xlane.xlu0 %5546
      %5548 = vmax.xlane.f32.xlu0 %v5529
      %v5549 = vpop.xlane.xlu0 %5548
      %5550 = vmax.xlane.f32.xlu0 %v5530
      %v5551 = vpop.xlane.xlu0 %5550
      %5552 = vmax.xlane.f32.xlu0 %v5531
      %v5553 = vpop.xlane.xlu0 %5552
      %5554 = vmax.xlane.f32.xlu0 %v5532
      %v5555 = vpop.xlane.xlu0 %5554
      %5556 = vmax.xlane.f32.xlu0 %v5533
      %v5557 = vpop.xlane.xlu0 %5556
      %5558 = vmax.xlane.f32.xlu0 %v5534
      %v5559 = vpop.xlane.xlu0 %5558
      %5560 = vmax.xlane.f32.xlu0 %v5535
      %v5561 = vpop.xlane.xlu0 %5560
      %5562 = vmax.xlane.f32.xlu0 %v5536
      %v5563 = vpop.xlane.xlu0 %5562
      %5564 = vmax.xlane.f32.xlu0 %v5537
      %v5565 = vpop.xlane.xlu0 %5564
      %5566 = vmax.xlane.f32.xlu0 %v5538
      %v5567 = vpop.xlane.xlu0 %5566
      %5568 = vmax.xlane.f32.xlu0 %v5539
      %v5569 = vpop.xlane.xlu0 %5568
      %5570 = vmax.xlane.f32.xlu0 %v5540
      %v5571 = vpop.xlane.xlu0 %5570
      %5572 = vmax.xlane.f32.xlu0 %v5541
      %v5573 = vpop.xlane.xlu0 %5572
      %v5574 = vsub.f32 %v5526, %v5543
      %v5575 = vsub.f32 %v5527, %v5545
      %v5576 = vsub.f32 %v5528, %v5547
      %v5577 = vsub.f32 %v5529, %v5549
      %v5578 = vsub.f32 %v5530, %v5551
      %v5579 = vsub.f32 %v5531, %v5553
      %v5580 = vsub.f32 %v5532, %v5555
      %v5581 = vsub.f32 %v5533, %v5557
      %v5582 = vsub.f32 %v5534, %v5559
      %v5583 = vsub.f32 %v5535, %v5561
      %v5584 = vsub.f32 %v5536, %v5563
      %v5585 = vsub.f32 %v5537, %v5565
      %v5586 = vsub.f32 %v5538, %v5567
      %v5587 = vsub.f32 %v5539, %v5569
      %v5588 = vsub.f32 %v5540, %v5571
      %v5589 = vsub.f32 %v5541, %v5573
      %v5590 = vmul.f32 %v5574, 1.442695
      %v5591 = vpow.pop %v5590
      %v5592 = vmul.f32 %v5575, 1.442695
      %v5593 = vpow.pop %v5592
      %v5594 = vmul.f32 %v5576, 1.442695
      %v5595 = vpow.pop %v5594
      %v5596 = vmul.f32 %v5577, 1.442695
      %v5597 = vpow.pop %v5596
      %v5598 = vmul.f32 %v5578, 1.442695
      %v5599 = vpow.pop %v5598
      %v5600 = vmul.f32 %v5579, 1.442695
      %v5601 = vpow.pop %v5600
      %v5602 = vmul.f32 %v5580, 1.442695
      %v5603 = vpow.pop %v5602
      %v5604 = vmul.f32 %v5581, 1.442695
      %v5605 = vpow.pop %v5604
      %v5606 = vmul.f32 %v5582, 1.442695
      %v5607 = vpow.pop %v5606
      %v5608 = vmul.f32 %v5583, 1.442695
      %v5609 = vpow.pop %v5608
      %v5610 = vmul.f32 %v5584, 1.442695
      %v5611 = vpow.pop %v5610
      %v5612 = vmul.f32 %v5585, 1.442695
      %v5613 = vpow.pop %v5612
      %v5614 = vmul.f32 %v5586, 1.442695
      %v5615 = vpow.pop %v5614
      %v5616 = vmul.f32 %v5587, 1.442695
      %v5617 = vpow.pop %v5616
      %v5618 = vmul.f32 %v5588, 1.442695
      %v5619 = vpow.pop %v5618
      %v5620 = vmul.f32 %v5589, 1.442695
      %v5621 = vpow.pop %v5620
      %5622 = vadd.xlane.f32.xlu0 %v5591
      %v5623 = vpop.xlane.xlu0 %5622
      %5624 = vadd.xlane.f32.xlu0 %v5593
      %v5625 = vpop.xlane.xlu0 %5624
      %5626 = vadd.xlane.f32.xlu0 %v5595
      %v5627 = vpop.xlane.xlu0 %5626
      %5628 = vadd.xlane.f32.xlu0 %v5597
      %v5629 = vpop.xlane.xlu0 %5628
      %5630 = vadd.xlane.f32.xlu0 %v5599
      %v5631 = vpop.xlane.xlu0 %5630
      %5632 = vadd.xlane.f32.xlu0 %v5601
      %v5633 = vpop.xlane.xlu0 %5632
      %5634 = vadd.xlane.f32.xlu0 %v5603
      %v5635 = vpop.xlane.xlu0 %5634
      %5636 = vadd.xlane.f32.xlu0 %v5605
      %v5637 = vpop.xlane.xlu0 %5636
      %5638 = vadd.xlane.f32.xlu0 %v5607
      %v5639 = vpop.xlane.xlu0 %5638
      %5640 = vadd.xlane.f32.xlu0 %v5609
      %v5641 = vpop.xlane.xlu0 %5640
      %5642 = vadd.xlane.f32.xlu0 %v5611
      %v5643 = vpop.xlane.xlu0 %5642
      %5644 = vadd.xlane.f32.xlu0 %v5613
      %v5645 = vpop.xlane.xlu0 %5644
      %5646 = vadd.xlane.f32.xlu0 %v5615
      %v5647 = vpop.xlane.xlu0 %5646
      %5648 = vadd.xlane.f32.xlu0 %v5617
      %v5649 = vpop.xlane.xlu0 %5648
      %5650 = vadd.xlane.f32.xlu0 %v5619
      %v5651 = vpop.xlane.xlu0 %5650
      %5652 = vadd.xlane.f32.xlu0 %v5621
      %v5653 = vpop.xlane.xlu0 %5652
      %v5654 = vrcp.pop %v5623
      %v5655 = vmul.f32 %v5591, %v5654
      %v5656 = vrcp.pop %v5625
      %v5657 = vmul.f32 %v5593, %v5656
      %v5658 = vrcp.pop %v5627
      %v5659 = vmul.f32 %v5595, %v5658
      %v5660 = vrcp.pop %v5629
      %v5661 = vmul.f32 %v5597, %v5660
      %v5662 = vrcp.pop %v5631
      %v5663 = vmul.f32 %v5599, %v5662
      %v5664 = vrcp.pop %v5633
      %v5665 = vmul.f32 %v5601, %v5664
      %v5666 = vrcp.pop %v5635
      %v5667 = vmul.f32 %v5603, %v5666
      %v5668 = vrcp.pop %v5637
      %v5669 = vmul.f32 %v5605, %v5668
      %v5670 = vrcp.pop %v5639
      %v5671 = vmul.f32 %v5607, %v5670
      %v5672 = vrcp.pop %v5641
      %v5673 = vmul.f32 %v5609, %v5672
      %v5674 = vrcp.pop %v5643
      %v5675 = vmul.f32 %v5611, %v5674
      %v5676 = vrcp.pop %v5645
      %v5677 = vmul.f32 %v5613, %v5676
      %v5678 = vrcp.pop %v5647
      %v5679 = vmul.f32 %v5615, %v5678
      %v5680 = vrcp.pop %v5649
      %v5681 = vmul.f32 %v5617, %v5680
      %v5682 = vrcp.pop %v5651
      %v5683 = vmul.f32 %v5619, %v5682
      %v5684 = vrcp.pop %v5653
      %v5685 = vmul.f32 %v5621, %v5684
      %5702 = vrot.lane.b32.xlu0 %v1183, 64
      %v5703 = vpop.permute.xlu0 %5702
      %5704 = vrot.lane.b32.xlu0 %v1189, 64
      %v5705 = vpop.permute.xlu0 %5704
      %5706 = vrot.lane.b32.xlu0 %v1195, 64
      %v5707 = vpop.permute.xlu0 %5706
      %5708 = vrot.lane.b32.xlu0 %v1201, 64
      %v5709 = vpop.permute.xlu0 %5708
      %5710 = vrot.lane.b32.xlu0 %v1207, 64
      %v5711 = vpop.permute.xlu0 %5710
      %5712 = vrot.lane.b32.xlu0 %v1213, 64
      %v5713 = vpop.permute.xlu0 %5712
      %5714 = vrot.lane.b32.xlu0 %v1219, 64
      %v5715 = vpop.permute.xlu0 %5714
      %5716 = vrot.lane.b32.xlu0 %v1225, 64
      %v5717 = vpop.permute.xlu0 %5716
      %5718 = vrot.lane.b32.xlu0 %v1231, 64
      %v5719 = vpop.permute.xlu0 %5718
      %5720 = vrot.lane.b32.xlu0 %v1237, 64
      %v5721 = vpop.permute.xlu0 %5720
      %5722 = vrot.lane.b32.xlu0 %v1243, 64
      %v5723 = vpop.permute.xlu0 %5722
      %5724 = vrot.lane.b32.xlu0 %v1249, 64
      %v5725 = vpop.permute.xlu0 %5724
      %5726 = vrot.lane.b32.xlu0 %v1255, 64
      %v5727 = vpop.permute.xlu0 %5726
      %5728 = vrot.lane.b32.xlu0 %v1261, 64
      %v5729 = vpop.permute.xlu0 %5728
      %5730 = vrot.lane.b32.xlu0 %v1267, 64
      %v5731 = vpop.permute.xlu0 %5730
      %5732 = vrot.lane.b32.xlu0 %v1273, 64
      %v5733 = vpop.permute.xlu0 %5732
      %5750 = vmatprep.subr.mxu0 0.0
      %5751 = vmatpush1.msra.mxu0 %v5703
      %5752 = vmatprep.subr.mxu0 0.0
      %5753 = vmatpush1.msra.mxu0 %v5705
      %5754 = vmatprep.subr.mxu0 0.0
      %5755 = vmatpush1.msra.mxu0 %v5707
      %5756 = vmatprep.subr.mxu0 0.0
      %5757 = vmatpush1.msra.mxu0 %v5709
      %5758 = vmatprep.subr.mxu0 0.0
      %5759 = vmatpush1.msra.mxu0 %v5711
      %5760 = vmatprep.subr.mxu0 0.0
      %5761 = vmatpush1.msra.mxu0 %v5713
      %5762 = vmatprep.subr.mxu0 0.0
      %5763 = vmatpush1.msra.mxu0 %v5715
      %5764 = vmatprep.subr.mxu0 0.0
      %5765 = vmatpush1.msra.mxu0 %v5717
      %5766 = vmatprep.subr.mxu0 0.0
      %5767 = vmatpush1.msra.mxu0 %v5719
      %5768 = vmatprep.subr.mxu0 0.0
      %5769 = vmatpush1.msra.mxu0 %v5721
      %5770 = vmatprep.subr.mxu0 0.0
      %5771 = vmatpush1.msra.mxu0 %v5723
      %5772 = vmatprep.subr.mxu0 0.0
      %5773 = vmatpush1.msra.mxu0 %v5725
      %5774 = vmatprep.subr.mxu0 0.0
      %5775 = vmatpush1.msra.mxu0 %v5727
      %5776 = vmatprep.subr.mxu0 0.0
      %5777 = vmatpush1.msra.mxu0 %v5729
      %5778 = vmatprep.subr.mxu0 0.0
      %5779 = vmatpush1.msra.mxu0 %v5731
      %5780 = vmatprep.subr.mxu0 0.0
      %5781 = vmatpush1.msra.mxu0 %v5733
      %5782 = vmatprep.subr.mxu0 0.0
      %5783 = vmatpush1.msra.mxu0 0.0
      %5784 = vmatprep.subr.mxu0 0.0
      %5785 = vmatpush1.msra.mxu0 0.0
      %5786 = vmatprep.subr.mxu0 0.0
      %5787 = vmatpush1.msra.mxu0 0.0
      %5788 = vmatprep.subr.mxu0 0.0
      %5789 = vmatpush1.msra.mxu0 0.0
      %5790 = vmatprep.subr.mxu0 0.0
      %5791 = vmatpush1.msra.mxu0 0.0
      %5792 = vmatprep.subr.mxu0 0.0
      %5793 = vmatpush1.msra.mxu0 0.0
      %5794 = vmatprep.subr.mxu0 0.0
      %5795 = vmatpush1.msra.mxu0 0.0
      %5796 = vmatprep.subr.mxu0 0.0
      %5797 = vmatpush1.msra.mxu0 0.0
      %5798 = vmatprep.subr.mxu0 0.0
      %5799 = vmatpush1.msra.mxu0 0.0
      %5800 = vmatprep.subr.mxu0 0.0
      %5801 = vmatpush1.msra.mxu0 0.0
      %5802 = vmatprep.subr.mxu0 0.0
      %5803 = vmatpush1.msra.mxu0 0.0
      %5804 = vmatprep.subr.mxu0 0.0
      %5805 = vmatpush1.msra.mxu0 0.0
      %5806 = vmatprep.subr.mxu0 0.0
      %5807 = vmatpush1.msra.mxu0 0.0
      %5808 = vmatprep.subr.mxu0 0.0
      %5809 = vmatpush1.msra.mxu0 0.0
      %5810 = vmatprep.subr.mxu0 0.0
      %5811 = vmatpush1.msra.mxu0 0.0
      %5812 = vmatprep.subr.mxu0 0.0
      %5813 = vmatpush1.msra.mxu0 0.0
      %5814 = vmatprep.mubr.f32.mxu0 0.0
      %5815 = vmatmul.mubr.f32.gmra.mrb[0].mxu0 %v5655
      %v5816 = vpop.f32.mrb[0].mxu0
      %v5817 = vadd.f32 0.0, %v5816
      %v5818 = vpop.f32.mrb[0].mxu0
      %5819 = vmatprep.mubr.f32.mxu0 0.0
      %5820 = vmatmul.mubr.f32.gmra.mrb[0].mxu0 %v5657
      %v5821 = vpop.f32.mrb[0].mxu0
      %v5822 = vadd.f32 0.0, %v5821
      %v5823 = vpop.f32.mrb[0].mxu0
      %5824 = vmatprep.mubr.f32.mxu0 0.0
      %5825 = vmatmul.mubr.f32.gmra.mrb[0].mxu0 %v5659
      %v5826 = vpop.f32.mrb[0].mxu0
      %v5827 = vadd.f32 0.0, %v5826
      %v5828 = vpop.f32.mrb[0].mxu0
      %5829 = vmatprep.mubr.f32.mxu0 0.0
      %5830 = vmatmul.mubr.f32.gmra.mrb[0].mxu0 %v5661
      %v5831 = vpop.f32.mrb[0].mxu0
      %v5832 = vadd.f32 0.0, %v5831
      %v5833 = vpop.f32.mrb[0].mxu0
      %5834 = vmatprep.mubr.f32.mxu0 0.0
      %5835 = vmatmul.mubr.f32.gmra.mrb[0].mxu0 %v5663
      %v5836 = vpop.f32.mrb[0].mxu0
      %v5837 = vadd.f32 0.0, %v5836
      %v5838 = vpop.f32.mrb[0].mxu0
      %5839 = vmatprep.mubr.f32.mxu0 0.0
      %5840 = vmatmul.mubr.f32.gmra.mrb[0].mxu0 %v5665
      %v5841 = vpop.f32.mrb[0].mxu0
      %v5842 = vadd.f32 0.0, %v5841
      %v5843 = vpop.f32.mrb[0].mxu0
      %5844 = vmatprep.mubr.f32.mxu0 0.0
      %5845 = vmatmul.mubr.f32.gmra.mrb[0].mxu0 %v5667
      %v5846 = vpop.f32.mrb[0].mxu0
      %v5847 = vadd.f32 0.0, %v5846
      %v5848 = vpop.f32.mrb[0].mxu0
      %5849 = vmatprep.mubr.f32.mxu0 0.0
      %5850 = vmatmul.mubr.f32.gmra.mrb[0].mxu0 %v5669
      %v5851 = vpop.f32.mrb[0].mxu0
      %v5852 = vadd.f32 0.0, %v5851
      %v5853 = vpop.f32.mrb[0].mxu0
      %5854 = vmatprep.mubr.f32.mxu0 0.0
      %5855 = vmatmul.mubr.f32.gmra.mrb[0].mxu0 %v5671
      %v5856 = vpop.f32.mrb[0].mxu0
      %v5857 = vadd.f32 0.0, %v5856
      %v5858 = vpop.f32.mrb[0].mxu0
      %5859 = vmatprep.mubr.f32.mxu0 0.0
      %5860 = vmatmul.mubr.f32.gmra.mrb[0].mxu0 %v5673
      %v5861 = vpop.f32.mrb[0].mxu0
      %v5862 = vadd.f32 0.0, %v5861
      %v5863 = vpop.f32.mrb[0].mxu0
      %5864 = vmatprep.mubr.f32.mxu0 0.0
      %5865 = vmatmul.mubr.f32.gmra.mrb[0].mxu0 %v5675
      %v5866 = vpop.f32.mrb[0].mxu0
      %v5867 = vadd.f32 0.0, %v5866
      %v5868 = vpop.f32.mrb[0].mxu0
      %5869 = vmatprep.mubr.f32.mxu0 0.0
      %5870 = vmatmul.mubr.f32.gmra.mrb[0].mxu0 %v5677
      %v5871 = vpop.f32.mrb[0].mxu0
      %v5872 = vadd.f32 0.0, %v5871
      %v5873 = vpop.f32.mrb[0].mxu0
      %5874 = vmatprep.mubr.f32.mxu0 0.0
      %5875 = vmatmul.mubr.f32.gmra.mrb[0].mxu0 %v5679
      %v5876 = vpop.f32.mrb[0].mxu0
      %v5877 = vadd.f32 0.0, %v5876
      %v5878 = vpop.f32.mrb[0].mxu0
      %5879 = vmatprep.mubr.f32.mxu0 0.0
      %5880 = vmatmul.mubr.f32.gmra.mrb[0].mxu0 %v5681
      %v5881 = vpop.f32.mrb[0].mxu0
      %v5882 = vadd.f32 0.0, %v5881
      %v5883 = vpop.f32.mrb[0].mxu0
      %5884 = vmatprep.mubr.f32.mxu0 0.0
      %5885 = vmatmul.mubr.f32.gmra.mrb[0].mxu0 %v5683
      %v5886 = vpop.f32.mrb[0].mxu0
      %v5887 = vadd.f32 0.0, %v5886
      %v5888 = vpop.f32.mrb[0].mxu0
      %5889 = vmatprep.mubr.f32.mxu0 0.0
      %5890 = vmatmul.mubr.f32.gmra.mrb[0].mxu0 %v5685
      %v5891 = vpop.f32.mrb[0].mxu0
      %v5892 = vadd.f32 0.0, %v5891
      %v5893 = vpop.f32.mrb[0].mxu0
      %5894 = vdwg.mxu0
      %v5895 = vld [vmem:[%s2 + $0x140] sm:$0xff]
      %v5896 = vld [vmem:[%s2 + $0x148] sm:$0xff]
      %v5897 = vld [vmem:[%s2 + $0x150] sm:$0xff]
      %v5898 = vld [vmem:[%s2 + $0x158] sm:$0xff]
      %v5899 = vld [vmem:[%s2 + $0x160] sm:$0xff]
      %v5900 = vld [vmem:[%s2 + $0x168] sm:$0xff]
      %v5901 = vld [vmem:[%s2 + $0x170] sm:$0xff]
      %v5902 = vld [vmem:[%s2 + $0x178] sm:$0xff]
      %v5904 = vsel %vm1277, %v5817, 0
      %v5907 = vsel %vm1277, %v5822, 0
      %v5910 = vsel %vm1277, %v5827, 0
      %v5913 = vsel %vm1277, %v5832, 0
      %v5916 = vsel %vm1277, %v5837, 0
      %v5919 = vsel %vm1277, %v5842, 0
      %v5922 = vsel %vm1277, %v5847, 0
      %v5925 = vsel %vm1277, %v5852, 0
      %v5928 = vsel %vm1277, %v5857, 0
      %v5931 = vsel %vm1277, %v5862, 0
      %v5934 = vsel %vm1277, %v5867, 0
      %v5937 = vsel %vm1277, %v5872, 0
      %v5940 = vsel %vm1277, %v5877, 0
      %v5943 = vsel %vm1277, %v5882, 0
      %v5946 = vsel %vm1277, %v5887, 0
      %v5949 = vsel %vm1277, %v5892, 0
      %5951 = vmatprep.subr.mxu0 0.0
      %5952 = vmatpush1.msra.mxu0 %v5895
      %5953 = vmatprep.subr.mxu0 0.0
      %5954 = vmatpush1.msra.mxu0 %v5896
      %5955 = vmatprep.subr.mxu0 0.0
      %5956 = vmatpush1.msra.mxu0 %v5897
      %5957 = vmatprep.subr.mxu0 0.0
      %5958 = vmatpush1.msra.mxu0 %v5898
      %5959 = vmatprep.subr.mxu0 0.0
      %5960 = vmatpush1.msra.mxu0 %v5899
      %5961 = vmatprep.subr.mxu0 0.0
      %5962 = vmatpush1.msra.mxu0 %v5900
      %5963 = vmatprep.subr.mxu0 0.0
      %5964 = vmatpush1.msra.mxu0 %v5901
      %5965 = vmatprep.subr.mxu0 0.0
      %5966 = vmatpush1.msra.mxu0 %v5902
      %5967 = vmatprep.subr.mxu0 0.0
      %5968 = vmatpush1.msra.mxu0 0.0
      %5969 = vmatprep.subr.mxu0 0.0
      %5970 = vmatpush1.msra.mxu0 0.0
      %5971 = vmatprep.subr.mxu0 0.0
      %5972 = vmatpush1.msra.mxu0 0.0
      %5973 = vmatprep.subr.mxu0 0.0
      %5974 = vmatpush1.msra.mxu0 0.0
      %5975 = vmatprep.subr.mxu0 0.0
      %5976 = vmatpush1.msra.mxu0 0.0
      %5977 = vmatprep.subr.mxu0 0.0
      %5978 = vmatpush1.msra.mxu0 0.0
      %5979 = vmatprep.subr.mxu0 0.0
      %5980 = vmatpush1.msra.mxu0 0.0
      %5981 = vmatprep.subr.mxu0 0.0
      %5982 = vmatpush1.msra.mxu0 0.0
      %5983 = vmatprep.subr.mxu0 0.0
      %5984 = vmatpush1.msra.mxu0 0.0
      %5985 = vmatprep.subr.mxu0 0.0
      %5986 = vmatpush1.msra.mxu0 0.0
      %5987 = vmatprep.subr.mxu0 0.0
      %5988 = vmatpush1.msra.mxu0 0.0
      %5989 = vmatprep.subr.mxu0 0.0
      %5990 = vmatpush1.msra.mxu0 0.0
      %5991 = vmatprep.subr.mxu0 0.0
      %5992 = vmatpush1.msra.mxu0 0.0
      %5993 = vmatprep.subr.mxu0 0.0
      %5994 = vmatpush1.msra.mxu0 0.0
      %5995 = vmatprep.subr.mxu0 0.0
      %5996 = vmatpush1.msra.mxu0 0.0
      %5997 = vmatprep.subr.mxu0 0.0
      %5998 = vmatpush1.msra.mxu0 0.0
      %5999 = vmatprep.subr.mxu0 0.0
      %6000 = vmatpush1.msra.mxu0 0.0
      %6001 = vmatprep.subr.mxu0 0.0
      %6002 = vmatpush1.msra.mxu0 0.0
      %6003 = vmatprep.subr.mxu0 0.0
      %6004 = vmatpush1.msra.mxu0 0.0
      %6005 = vmatprep.subr.mxu0 0.0
      %6006 = vmatpush1.msra.mxu0 0.0
      %6007 = vmatprep.subr.mxu0 0.0
      %6008 = vmatpush1.msra.mxu0 0.0
      %6009 = vmatprep.subr.mxu0 0.0
      %6010 = vmatpush1.msra.mxu0 0.0
      %6011 = vmatprep.subr.mxu0 0.0
      %6012 = vmatpush1.msra.mxu0 0.0
      %6013 = vmatprep.subr.mxu0 0.0
      %6014 = vmatpush1.msra.mxu0 0.0
      %6015 = vmatprep.mubr.f32.mxu0 0.0
      %6016 = vmatmul.mubr.f32.gmra.mrb[0].mxu0 %v5904
      %v6017 = vpop.f32.mrb[0].mxu0
      %v6018 = vadd.f32 0.0, %v6017
      %v6019 = vpop.f32.mrb[0].mxu0
      %6020 = vmatprep.mubr.f32.mxu0 0.0
      %6021 = vmatmul.mubr.f32.gmra.mrb[0].mxu0 %v5907
      %v6022 = vpop.f32.mrb[0].mxu0
      %v6023 = vadd.f32 0.0, %v6022
      %v6024 = vpop.f32.mrb[0].mxu0
      %6025 = vmatprep.mubr.f32.mxu0 0.0
      %6026 = vmatmul.mubr.f32.gmra.mrb[0].mxu0 %v5910
      %v6027 = vpop.f32.mrb[0].mxu0
      %v6028 = vadd.f32 0.0, %v6027
      %v6029 = vpop.f32.mrb[0].mxu0
      %6030 = vmatprep.mubr.f32.mxu0 0.0
      %6031 = vmatmul.mubr.f32.gmra.mrb[0].mxu0 %v5913
      %v6032 = vpop.f32.mrb[0].mxu0
      %v6033 = vadd.f32 0.0, %v6032
      %v6034 = vpop.f32.mrb[0].mxu0
      %6035 = vmatprep.mubr.f32.mxu0 0.0
      %6036 = vmatmul.mubr.f32.gmra.mrb[0].mxu0 %v5916
      %v6037 = vpop.f32.mrb[0].mxu0
      %v6038 = vadd.f32 0.0, %v6037
      %v6039 = vpop.f32.mrb[0].mxu0
      %6040 = vmatprep.mubr.f32.mxu0 0.0
      %6041 = vmatmul.mubr.f32.gmra.mrb[0].mxu0 %v5919
      %v6042 = vpop.f32.mrb[0].mxu0
      %v6043 = vadd.f32 0.0, %v6042
      %v6044 = vpop.f32.mrb[0].mxu0
      %6045 = vmatprep.mubr.f32.mxu0 0.0
      %6046 = vmatmul.mubr.f32.gmra.mrb[0].mxu0 %v5922
      %v6047 = vpop.f32.mrb[0].mxu0
      %v6048 = vadd.f32 0.0, %v6047
      %v6049 = vpop.f32.mrb[0].mxu0
      %6050 = vmatprep.mubr.f32.mxu0 0.0
      %6051 = vmatmul.mubr.f32.gmra.mrb[0].mxu0 %v5925
      %v6052 = vpop.f32.mrb[0].mxu0
      %v6053 = vadd.f32 0.0, %v6052
      %v6054 = vpop.f32.mrb[0].mxu0
      %6055 = vmatprep.mubr.f32.mxu0 0.0
      %6056 = vmatmul.mubr.f32.gmra.mrb[0].mxu0 %v5928
      %v6057 = vpop.f32.mrb[0].mxu0
      %v6058 = vadd.f32 0.0, %v6057
      %v6059 = vpop.f32.mrb[0].mxu0
      %6060 = vmatprep.mubr.f32.mxu0 0.0
      %6061 = vmatmul.mubr.f32.gmra.mrb[0].mxu0 %v5931
      %v6062 = vpop.f32.mrb[0].mxu0
      %v6063 = vadd.f32 0.0, %v6062
      %v6064 = vpop.f32.mrb[0].mxu0
      %6065 = vmatprep.mubr.f32.mxu0 0.0
      %6066 = vmatmul.mubr.f32.gmra.mrb[0].mxu0 %v5934
      %v6067 = vpop.f32.mrb[0].mxu0
      %v6068 = vadd.f32 0.0, %v6067
      %v6069 = vpop.f32.mrb[0].mxu0
      %6070 = vmatprep.mubr.f32.mxu0 0.0
      %6071 = vmatmul.mubr.f32.gmra.mrb[0].mxu0 %v5937
      %v6072 = vpop.f32.mrb[0].mxu0
      %v6073 = vadd.f32 0.0, %v6072
      %v6074 = vpop.f32.mrb[0].mxu0
      %6075 = vmatprep.mubr.f32.mxu0 0.0
      %6076 = vmatmul.mubr.f32.gmra.mrb[0].mxu0 %v5940
      %v6077 = vpop.f32.mrb[0].mxu0
      %v6078 = vadd.f32 0.0, %v6077
      %v6079 = vpop.f32.mrb[0].mxu0
      %6080 = vmatprep.mubr.f32.mxu0 0.0
      %6081 = vmatmul.mubr.f32.gmra.mrb[0].mxu0 %v5943
      %v6082 = vpop.f32.mrb[0].mxu0
      %v6083 = vadd.f32 0.0, %v6082
      %v6084 = vpop.f32.mrb[0].mxu0
      %6085 = vmatprep.mubr.f32.mxu0 0.0
      %6086 = vmatmul.mubr.f32.gmra.mrb[0].mxu0 %v5946
      %v6087 = vpop.f32.mrb[0].mxu0
      %v6088 = vadd.f32 0.0, %v6087
      %v6089 = vpop.f32.mrb[0].mxu0
      %6090 = vmatprep.mubr.f32.mxu0 0.0
      %6091 = vmatmul.mubr.f32.gmra.mrb[0].mxu0 %v5949
      %v6092 = vpop.f32.mrb[0].mxu0
      %v6093 = vadd.f32 0.0, %v6092
      %v6094 = vpop.f32.mrb[0].mxu0
      %6095 = vdwg.mxu0
      %v6096 = vadd.f32 %v5237, %v6018
      %v6097 = vadd.f32 %v5238, %v6023
      %v6098 = vadd.f32 %v5239, %v6028
      %v6099 = vadd.f32 %v5240, %v6033
      %v6100 = vadd.f32 %v5241, %v6038
      %v6101 = vadd.f32 %v5242, %v6043
      %v6102 = vadd.f32 %v5243, %v6048
      %v6103 = vadd.f32 %v5244, %v6053
      %v6104 = vadd.f32 %v5245, %v6058
      %v6105 = vadd.f32 %v5246, %v6063
      %v6106 = vadd.f32 %v5247, %v6068
      %v6107 = vadd.f32 %v5248, %v6073
      %v6108 = vadd.f32 %v5249, %v6078
      %v6109 = vadd.f32 %v5250, %v6083
      %v6110 = vadd.f32 %v5251, %v6088
      %v6111 = vadd.f32 %v5252, %v6093
      %v6113 = vsel %vm1277, %v541, 0
      %v6116 = vsel %vm1277, %v547, 0
      %v6119 = vsel %vm1277, %v553, 0
      %v6122 = vsel %vm1277, %v559, 0
      %v6125 = vsel %vm1277, %v565, 0
      %v6128 = vsel %vm1277, %v571, 0
      %v6131 = vsel %vm1277, %v577, 0
      %v6134 = vsel %vm1277, %v583, 0
      %v6137 = vsel %vm1277, %v589, 0
      %v6140 = vsel %vm1277, %v595, 0
      %v6143 = vsel %vm1277, %v601, 0
      %v6146 = vsel %vm1277, %v607, 0
      %v6149 = vsel %vm1277, %v613, 0
      %v6152 = vsel %vm1277, %v619, 0
      %v6155 = vsel %vm1277, %v625, 0
      %v6158 = vsel %vm1277, %v631, 0
      %v6161 = vsel %vm1277, %v863, 0
      %v6164 = vsel %vm1277, %v869, 0
      %v6167 = vsel %vm1277, %v875, 0
      %v6170 = vsel %vm1277, %v881, 0
      %v6173 = vsel %vm1277, %v887, 0
      %v6176 = vsel %vm1277, %v893, 0
      %v6179 = vsel %vm1277, %v899, 0
      %v6182 = vsel %vm1277, %v905, 0
      %v6185 = vsel %vm1277, %v911, 0
      %v6188 = vsel %vm1277, %v917, 0
      %v6191 = vsel %vm1277, %v923, 0
      %v6194 = vsel %vm1277, %v929, 0
      %v6197 = vsel %vm1277, %v935, 0
      %v6200 = vsel %vm1277, %v941, 0
      %v6203 = vsel %vm1277, %v947, 0
      %v6206 = vsel %vm1277, %v953, 0
      %6208 = vmatprep.subr.mxu0 0.0
      %6209 = vmatpush1.xpose.msra.mxu0 %v6161
      %6210 = vmatprep.subr.mxu0 0.0
      %6211 = vmatpush1.xpose.msra.mxu0 %v6164
      %6212 = vmatprep.subr.mxu0 0.0
      %6213 = vmatpush1.xpose.msra.mxu0 %v6167
      %6214 = vmatprep.subr.mxu0 0.0
      %6215 = vmatpush1.xpose.msra.mxu0 %v6170
      %6216 = vmatprep.subr.mxu0 0.0
      %6217 = vmatpush1.xpose.msra.mxu0 %v6173
      %6218 = vmatprep.subr.mxu0 0.0
      %6219 = vmatpush1.xpose.msra.mxu0 %v6176
      %6220 = vmatprep.subr.mxu0 0.0
      %6221 = vmatpush1.xpose.msra.mxu0 %v6179
      %6222 = vmatprep.subr.mxu0 0.0
      %6223 = vmatpush1.xpose.msra.mxu0 %v6182
      %6224 = vmatprep.subr.mxu0 0.0
      %6225 = vmatpush1.xpose.msra.mxu0 %v6185
      %6226 = vmatprep.subr.mxu0 0.0
      %6227 = vmatpush1.xpose.msra.mxu0 %v6188
      %6228 = vmatprep.subr.mxu0 0.0
      %6229 = vmatpush1.xpose.msra.mxu0 %v6191
      %6230 = vmatprep.subr.mxu0 0.0
      %6231 = vmatpush1.xpose.msra.mxu0 %v6194
      %6232 = vmatprep.subr.mxu0 0.0
      %6233 = vmatpush1.xpose.msra.mxu0 %v6197
      %6234 = vmatprep.subr.mxu0 0.0
      %6235 = vmatpush1.xpose.msra.mxu0 %v6200
      %6236 = vmatprep.subr.mxu0 0.0
      %6237 = vmatpush1.xpose.msra.mxu0 %v6203
      %6238 = vmatprep.subr.mxu0 0.0
      %6239 = vmatpush1.xpose.msra.mxu0 %v6206
      %6240 = vmatprep.subr.mxu0 0.0
      %6241 = vmatpush1.xpose.msra.mxu0 0.0
      %6242 = vmatprep.subr.mxu0 0.0
      %6243 = vmatpush1.xpose.msra.mxu0 0.0
      %6244 = vmatprep.subr.mxu0 0.0
      %6245 = vmatpush1.xpose.msra.mxu0 0.0
      %6246 = vmatprep.subr.mxu0 0.0
      %6247 = vmatpush1.xpose.msra.mxu0 0.0
      %6248 = vmatprep.subr.mxu0 0.0
      %6249 = vmatpush1.xpose.msra.mxu0 0.0
      %6250 = vmatprep.subr.mxu0 0.0
      %6251 = vmatpush1.xpose.msra.mxu0 0.0
      %6252 = vmatprep.subr.mxu0 0.0
      %6253 = vmatpush1.xpose.msra.mxu0 0.0
      %6254 = vmatprep.subr.mxu0 0.0
      %6255 = vmatpush1.xpose.msra.mxu0 0.0
      %6256 = vmatprep.subr.mxu0 0.0
      %6257 = vmatpush1.xpose.msra.mxu0 0.0
      %6258 = vmatprep.subr.mxu0 0.0
      %6259 = vmatpush1.xpose.msra.mxu0 0.0
      %6260 = vmatprep.subr.mxu0 0.0
      %6261 = vmatpush1.xpose.msra.mxu0 0.0
      %6262 = vmatprep.subr.mxu0 0.0
      %6263 = vmatpush1.xpose.msra.mxu0 0.0
      %6264 = vmatprep.subr.mxu0 0.0
      %6265 = vmatpush1.xpose.msra.mxu0 0.0
      %6266 = vmatprep.subr.mxu0 0.0
      %6267 = vmatpush1.xpose.msra.mxu0 0.0
      %6268 = vmatprep.subr.mxu0 0.0
      %6269 = vmatpush1.xpose.msra.mxu0 0.0
      %6270 = vmatprep.subr.mxu0 0.0
      %6271 = vmatpush1.xpose.msra.mxu0 0.0
      %6272 = vmatprep.mubr.f32.mxu0 0.0
      %6273 = vmatmul.mubr.f32.gmra.mrb[0].mxu0 %v6113
      %v6274 = vpop.f32.mrb[0].mxu0
      %v6275 = vadd.f32 0.0, %v6274
      %v6276 = vpop.f32.mrb[0].mxu0
      %6277 = vmatprep.mubr.f32.mxu0 0.0
      %6278 = vmatmul.mubr.f32.gmra.mrb[0].mxu0 %v6116
      %v6279 = vpop.f32.mrb[0].mxu0
      %v6280 = vadd.f32 0.0, %v6279
      %v6281 = vpop.f32.mrb[0].mxu0
      %6282 = vmatprep.mubr.f32.mxu0 0.0
      %6283 = vmatmul.mubr.f32.gmra.mrb[0].mxu0 %v6119
      %v6284 = vpop.f32.mrb[0].mxu0
      %v6285 = vadd.f32 0.0, %v6284
      %v6286 = vpop.f32.mrb[0].mxu0
      %6287 = vmatprep.mubr.f32.mxu0 0.0
      %6288 = vmatmul.mubr.f32.gmra.mrb[0].mxu0 %v6122
      %v6289 = vpop.f32.mrb[0].mxu0
      %v6290 = vadd.f32 0.0, %v6289
      %v6291 = vpop.f32.mrb[0].mxu0
      %6292 = vmatprep.mubr.f32.mxu0 0.0
      %6293 = vmatmul.mubr.f32.gmra.mrb[0].mxu0 %v6125
      %v6294 = vpop.f32.mrb[0].mxu0
      %v6295 = vadd.f32 0.0, %v6294
      %v6296 = vpop.f32.mrb[0].mxu0
      %6297 = vmatprep.mubr.f32.mxu0 0.0
      %6298 = vmatmul.mubr.f32.gmra.mrb[0].mxu0 %v6128
      %v6299 = vpop.f32.mrb[0].mxu0
      %v6300 = vadd.f32 0.0, %v6299
      %v6301 = vpop.f32.mrb[0].mxu0
      %6302 = vmatprep.mubr.f32.mxu0 0.0
      %6303 = vmatmul.mubr.f32.gmra.mrb[0].mxu0 %v6131
      %v6304 = vpop.f32.mrb[0].mxu0
      %v6305 = vadd.f32 0.0, %v6304
      %v6306 = vpop.f32.mrb[0].mxu0
      %6307 = vmatprep.mubr.f32.mxu0 0.0
      %6308 = vmatmul.mubr.f32.gmra.mrb[0].mxu0 %v6134
      %v6309 = vpop.f32.mrb[0].mxu0
      %v6310 = vadd.f32 0.0, %v6309
      %v6311 = vpop.f32.mrb[0].mxu0
      %6312 = vmatprep.mubr.f32.mxu0 0.0
      %6313 = vmatmul.mubr.f32.gmra.mrb[0].mxu0 %v6137
      %v6314 = vpop.f32.mrb[0].mxu0
      %v6315 = vadd.f32 0.0, %v6314
      %v6316 = vpop.f32.mrb[0].mxu0
      %6317 = vmatprep.mubr.f32.mxu0 0.0
      %6318 = vmatmul.mubr.f32.gmra.mrb[0].mxu0 %v6140
      %v6319 = vpop.f32.mrb[0].mxu0
      %v6320 = vadd.f32 0.0, %v6319
      %v6321 = vpop.f32.mrb[0].mxu0
      %6322 = vmatprep.mubr.f32.mxu0 0.0
      %6323 = vmatmul.mubr.f32.gmra.mrb[0].mxu0 %v6143
      %v6324 = vpop.f32.mrb[0].mxu0
      %v6325 = vadd.f32 0.0, %v6324
      %v6326 = vpop.f32.mrb[0].mxu0
      %6327 = vmatprep.mubr.f32.mxu0 0.0
      %6328 = vmatmul.mubr.f32.gmra.mrb[0].mxu0 %v6146
      %v6329 = vpop.f32.mrb[0].mxu0
      %v6330 = vadd.f32 0.0, %v6329
      %v6331 = vpop.f32.mrb[0].mxu0
      %6332 = vmatprep.mubr.f32.mxu0 0.0
      %6333 = vmatmul.mubr.f32.gmra.mrb[0].mxu0 %v6149
      %v6334 = vpop.f32.mrb[0].mxu0
      %v6335 = vadd.f32 0.0, %v6334
      %v6336 = vpop.f32.mrb[0].mxu0
      %6337 = vmatprep.mubr.f32.mxu0 0.0
      %6338 = vmatmul.mubr.f32.gmra.mrb[0].mxu0 %v6152
      %v6339 = vpop.f32.mrb[0].mxu0
      %v6340 = vadd.f32 0.0, %v6339
      %v6341 = vpop.f32.mrb[0].mxu0
      %6342 = vmatprep.mubr.f32.mxu0 0.0
      %6343 = vmatmul.mubr.f32.gmra.mrb[0].mxu0 %v6155
      %v6344 = vpop.f32.mrb[0].mxu0
      %v6345 = vadd.f32 0.0, %v6344
      %v6346 = vpop.f32.mrb[0].mxu0
      %6347 = vmatprep.mubr.f32.mxu0 0.0
      %6348 = vmatmul.mubr.f32.gmra.mrb[0].mxu0 %v6158
      %v6349 = vpop.f32.mrb[0].mxu0
      %v6350 = vadd.f32 0.0, %v6349
      %v6351 = vpop.f32.mrb[0].mxu0
      %6352 = vdwg.mxu0
      %v6353 = vmul.f32 %v6275, 0.17677669
      %v6354 = vmul.f32 %v6280, 0.17677669
      %v6355 = vmul.f32 %v6285, 0.17677669
      %v6356 = vmul.f32 %v6290, 0.17677669
      %v6357 = vmul.f32 %v6295, 0.17677669
      %v6358 = vmul.f32 %v6300, 0.17677669
      %v6359 = vmul.f32 %v6305, 0.17677669
      %v6360 = vmul.f32 %v6310, 0.17677669
      %v6361 = vmul.f32 %v6315, 0.17677669
      %v6362 = vmul.f32 %v6320, 0.17677669
      %v6363 = vmul.f32 %v6325, 0.17677669
      %v6364 = vmul.f32 %v6330, 0.17677669
      %v6365 = vmul.f32 %v6335, 0.17677669
      %v6366 = vmul.f32 %v6340, 0.17677669
      %v6367 = vmul.f32 %v6345, 0.17677669
      %v6368 = vmul.f32 %v6350, 0.17677669
      %6369 = vmax.xlane.f32.xlu0 %v6353
      %v6370 = vpop.xlane.xlu0 %6369
      %6371 = vmax.xlane.f32.xlu0 %v6354
      %v6372 = vpop.xlane.xlu0 %6371
      %6373 = vmax.xlane.f32.xlu0 %v6355
      %v6374 = vpop.xlane.xlu0 %6373
      %6375 = vmax.xlane.f32.xlu0 %v6356
      %v6376 = vpop.xlane.xlu0 %6375
      %6377 = vmax.xlane.f32.xlu0 %v6357
      %v6378 = vpop.xlane.xlu0 %6377
      %6379 = vmax.xlane.f32.xlu0 %v6358
      %v6380 = vpop.xlane.xlu0 %6379
      %6381 = vmax.xlane.f32.xlu0 %v6359
      %v6382 = vpop.xlane.xlu0 %6381
      %6383 = vmax.xlane.f32.xlu0 %v6360
      %v6384 = vpop.xlane.xlu0 %6383
      %6385 = vmax.xlane.f32.xlu0 %v6361
      %v6386 = vpop.xlane.xlu0 %6385
      %6387 = vmax.xlane.f32.xlu0 %v6362
      %v6388 = vpop.xlane.xlu0 %6387
      %6389 = vmax.xlane.f32.xlu0 %v6363
      %v6390 = vpop.xlane.xlu0 %6389
      %6391 = vmax.xlane.f32.xlu0 %v6364
      %v6392 = vpop.xlane.xlu0 %6391
      %6393 = vmax.xlane.f32.xlu0 %v6365
      %v6394 = vpop.xlane.xlu0 %6393
      %6395 = vmax.xlane.f32.xlu0 %v6366
      %v6396 = vpop.xlane.xlu0 %6395
      %6397 = vmax.xlane.f32.xlu0 %v6367
      %v6398 = vpop.xlane.xlu0 %6397
      %6399 = vmax.xlane.f32.xlu0 %v6368
      %v6400 = vpop.xlane.xlu0 %6399
      %v6401 = vsub.f32 %v6353, %v6370
      %v6402 = vsub.f32 %v6354, %v6372
      %v6403 = vsub.f32 %v6355, %v6374
      %v6404 = vsub.f32 %v6356, %v6376
      %v6405 = vsub.f32 %v6357, %v6378
      %v6406 = vsub.f32 %v6358, %v6380
      %v6407 = vsub.f32 %v6359, %v6382
      %v6408 = vsub.f32 %v6360, %v6384
      %v6409 = vsub.f32 %v6361, %v6386
      %v6410 = vsub.f32 %v6362, %v6388
      %v6411 = vsub.f32 %v6363, %v6390
      %v6412 = vsub.f32 %v6364, %v6392
      %v6413 = vsub.f32 %v6365, %v6394
      %v6414 = vsub.f32 %v6366, %v6396
      %v6415 = vsub.f32 %v6367, %v6398
      %v6416 = vsub.f32 %v6368, %v6400
      %v6417 = vmul.f32 %v6401, 1.442695
      %v6418 = vpow.pop %v6417
      %v6419 = vmul.f32 %v6402, 1.442695
      %v6420 = vpow.pop %v6419
      %v6421 = vmul.f32 %v6403, 1.442695
      %v6422 = vpow.pop %v6421
      %v6423 = vmul.f32 %v6404, 1.442695
      %v6424 = vpow.pop %v6423
      %v6425 = vmul.f32 %v6405, 1.442695
      %v6426 = vpow.pop %v6425
      %v6427 = vmul.f32 %v6406, 1.442695
      %v6428 = vpow.pop %v6427
      %v6429 = vmul.f32 %v6407, 1.442695
      %v6430 = vpow.pop %v6429
      %v6431 = vmul.f32 %v6408, 1.442695
      %v6432 = vpow.pop %v6431
      %v6433 = vmul.f32 %v6409, 1.442695
      %v6434 = vpow.pop %v6433
      %v6435 = vmul.f32 %v6410, 1.442695
      %v6436 = vpow.pop %v6435
      %v6437 = vmul.f32 %v6411, 1.442695
      %v6438 = vpow.pop %v6437
      %v6439 = vmul.f32 %v6412, 1.442695
      %v6440 = vpow.pop %v6439
      %v6441 = vmul.f32 %v6413, 1.442695
      %v6442 = vpow.pop %v6441
      %v6443 = vmul.f32 %v6414, 1.442695
      %v6444 = vpow.pop %v6443
      %v6445 = vmul.f32 %v6415, 1.442695
      %v6446 = vpow.pop %v6445
      %v6447 = vmul.f32 %v6416, 1.442695
      %v6448 = vpow.pop %v6447
      %6449 = vadd.xlane.f32.xlu0 %v6418
      %v6450 = vpop.xlane.xlu0 %6449
      %6451 = vadd.xlane.f32.xlu0 %v6420
      %v6452 = vpop.xlane.xlu0 %6451
      %6453 = vadd.xlane.f32.xlu0 %v6422
      %v6454 = vpop.xlane.xlu0 %6453
      %6455 = vadd.xlane.f32.xlu0 %v6424
      %v6456 = vpop.xlane.xlu0 %6455
      %6457 = vadd.xlane.f32.xlu0 %v6426
      %v6458 = vpop.xlane.xlu0 %6457
      %6459 = vadd.xlane.f32.xlu0 %v6428
      %v6460 = vpop.xlane.xlu0 %6459
      %6461 = vadd.xlane.f32.xlu0 %v6430
      %v6462 = vpop.xlane.xlu0 %6461
      %6463 = vadd.xlane.f32.xlu0 %v6432
      %v6464 = vpop.xlane.xlu0 %6463
      %6465 = vadd.xlane.f32.xlu0 %v6434
      %v6466 = vpop.xlane.xlu0 %6465
      %6467 = vadd.xlane.f32.xlu0 %v6436
      %v6468 = vpop.xlane.xlu0 %6467
      %6469 = vadd.xlane.f32.xlu0 %v6438
      %v6470 = vpop.xlane.xlu0 %6469
      %6471 = vadd.xlane.f32.xlu0 %v6440
      %v6472 = vpop.xlane.xlu0 %6471
      %6473 = vadd.xlane.f32.xlu0 %v6442
      %v6474 = vpop.xlane.xlu0 %6473
      %6475 = vadd.xlane.f32.xlu0 %v6444
      %v6476 = vpop.xlane.xlu0 %6475
      %6477 = vadd.xlane.f32.xlu0 %v6446
      %v6478 = vpop.xlane.xlu0 %6477
      %6479 = vadd.xlane.f32.xlu0 %v6448
      %v6480 = vpop.xlane.xlu0 %6479
      %v6481 = vrcp.pop %v6450
      %v6482 = vmul.f32 %v6418, %v6481
      %v6483 = vrcp.pop %v6452
      %v6484 = vmul.f32 %v6420, %v6483
      %v6485 = vrcp.pop %v6454
      %v6486 = vmul.f32 %v6422, %v6485
      %v6487 = vrcp.pop %v6456
      %v6488 = vmul.f32 %v6424, %v6487
      %v6489 = vrcp.pop %v6458
      %v6490 = vmul.f32 %v6426, %v6489
      %v6491 = vrcp.pop %v6460
      %v6492 = vmul.f32 %v6428, %v6491
      %v6493 = vrcp.pop %v6462
      %v6494 = vmul.f32 %v6430, %v6493
      %v6495 = vrcp.pop %v6464
      %v6496 = vmul.f32 %v6432, %v6495
      %v6497 = vrcp.pop %v6466
      %v6498 = vmul.f32 %v6434, %v6497
      %v6499 = vrcp.pop %v6468
      %v6500 = vmul.f32 %v6436, %v6499
      %v6501 = vrcp.pop %v6470
      %v6502 = vmul.f32 %v6438, %v6501
      %v6503 = vrcp.pop %v6472
      %v6504 = vmul.f32 %v6440, %v6503
      %v6505 = vrcp.pop %v6474
      %v6506 = vmul.f32 %v6442, %v6505
      %v6507 = vrcp.pop %v6476
      %v6508 = vmul.f32 %v6444, %v6507
      %v6509 = vrcp.pop %v6478
      %v6510 = vmul.f32 %v6446, %v6509
      %v6511 = vrcp.pop %v6480
      %v6512 = vmul.f32 %v6448, %v6511
      %6513 = vmatprep.subr.mxu0 0.0
      %6514 = vmatpush1.msra.mxu0 %v1185
      %6515 = vmatprep.subr.mxu0 0.0
      %6516 = vmatpush1.msra.mxu0 %v1191
      %6517 = vmatprep.subr.mxu0 0.0
      %6518 = vmatpush1.msra.mxu0 %v1197
      %6519 = vmatprep.subr.mxu0 0.0
      %6520 = vmatpush1.msra.mxu0 %v1203
      %6521 = vmatprep.subr.mxu0 0.0
      %6522 = vmatpush1.msra.mxu0 %v1209
      %6523 = vmatprep.subr.mxu0 0.0
      %6524 = vmatpush1.msra.mxu0 %v1215
      %6525 = vmatprep.subr.mxu0 0.0
      %6526 = vmatpush1.msra.mxu0 %v1221
      %6527 = vmatprep.subr.mxu0 0.0
      %6528 = vmatpush1.msra.mxu0 %v1227
      %6529 = vmatprep.subr.mxu0 0.0
      %6530 = vmatpush1.msra.mxu0 %v1233
      %6531 = vmatprep.subr.mxu0 0.0
      %6532 = vmatpush1.msra.mxu0 %v1239
      %6533 = vmatprep.subr.mxu0 0.0
      %6534 = vmatpush1.msra.mxu0 %v1245
      %6535 = vmatprep.subr.mxu0 0.0
      %6536 = vmatpush1.msra.mxu0 %v1251
      %6537 = vmatprep.subr.mxu0 0.0
      %6538 = vmatpush1.msra.mxu0 %v1257
      %6539 = vmatprep.subr.mxu0 0.0
      %6540 = vmatpush1.msra.mxu0 %v1263
      %6541 = vmatprep.subr.mxu0 0.0
      %6542 = vmatpush1.msra.mxu0 %v1269
      %6543 = vmatprep.subr.mxu0 0.0
      %6544 = vmatpush1.msra.mxu0 %v1275
      %6545 = vmatprep.subr.mxu0 0.0
      %6546 = vmatpush1.msra.mxu0 0.0
      %6547 = vmatprep.subr.mxu0 0.0
      %6548 = vmatpush1.msra.mxu0 0.0
      %6549 = vmatprep.subr.mxu0 0.0
      %6550 = vmatpush1.msra.mxu0 0.0
      %6551 = vmatprep.subr.mxu0 0.0
      %6552 = vmatpush1.msra.mxu0 0.0
      %6553 = vmatprep.subr.mxu0 0.0
      %6554 = vmatpush1.msra.mxu0 0.0
      %6555 = vmatprep.subr.mxu0 0.0
      %6556 = vmatpush1.msra.mxu0 0.0
      %6557 = vmatprep.subr.mxu0 0.0
      %6558 = vmatpush1.msra.mxu0 0.0
      %6559 = vmatprep.subr.mxu0 0.0
      %6560 = vmatpush1.msra.mxu0 0.0
      %6561 = vmatprep.subr.mxu0 0.0
      %6562 = vmatpush1.msra.mxu0 0.0
      %6563 = vmatprep.subr.mxu0 0.0
      %6564 = vmatpush1.msra.mxu0 0.0
      %6565 = vmatprep.subr.mxu0 0.0
      %6566 = vmatpush1.msra.mxu0 0.0
      %6567 = vmatprep.subr.mxu0 0.0
      %6568 = vmatpush1.msra.mxu0 0.0
      %6569 = vmatprep.subr.mxu0 0.0
      %6570 = vmatpush1.msra.mxu0 0.0
      %6571 = vmatprep.subr.mxu0 0.0
      %6572 = vmatpush1.msra.mxu0 0.0
      %6573 = vmatprep.subr.mxu0 0.0
      %6574 = vmatpush1.msra.mxu0 0.0
      %6575 = vmatprep.subr.mxu0 0.0
      %6576 = vmatpush1.msra.mxu0 0.0
      %6577 = vmatprep.mubr.f32.mxu0 0.0
      %6578 = vmatmul.mubr.f32.gmra.mrb[0].mxu0 %v6482
      %v6579 = vpop.f32.mrb[0].mxu0
      %v6580 = vadd.f32 0.0, %v6579
      %v6581 = vpop.f32.mrb[0].mxu0
      %6582 = vmatprep.mubr.f32.mxu0 0.0
      %6583 = vmatmul.mubr.f32.gmra.mrb[0].mxu0 %v6484
      %v6584 = vpop.f32.mrb[0].mxu0
      %v6585 = vadd.f32 0.0, %v6584
      %v6586 = vpop.f32.mrb[0].mxu0
      %6587 = vmatprep.mubr.f32.mxu0 0.0
      %6588 = vmatmul.mubr.f32.gmra.mrb[0].mxu0 %v6486
      %v6589 = vpop.f32.mrb[0].mxu0
      %v6590 = vadd.f32 0.0, %v6589
      %v6591 = vpop.f32.mrb[0].mxu0
      %6592 = vmatprep.mubr.f32.mxu0 0.0
      %6593 = vmatmul.mubr.f32.gmra.mrb[0].mxu0 %v6488
      %v6594 = vpop.f32.mrb[0].mxu0
      %v6595 = vadd.f32 0.0, %v6594
      %v6596 = vpop.f32.mrb[0].mxu0
      %6597 = vmatprep.mubr.f32.mxu0 0.0
      %6598 = vmatmul.mubr.f32.gmra.mrb[0].mxu0 %v6490
      %v6599 = vpop.f32.mrb[0].mxu0
      %v6600 = vadd.f32 0.0, %v6599
      %v6601 = vpop.f32.mrb[0].mxu0
      %6602 = vmatprep.mubr.f32.mxu0 0.0
      %6603 = vmatmul.mubr.f32.gmra.mrb[0].mxu0 %v6492
      %v6604 = vpop.f32.mrb[0].mxu0
      %v6605 = vadd.f32 0.0, %v6604
      %v6606 = vpop.f32.mrb[0].mxu0
      %6607 = vmatprep.mubr.f32.mxu0 0.0
      %6608 = vmatmul.mubr.f32.gmra.mrb[0].mxu0 %v6494
      %v6609 = vpop.f32.mrb[0].mxu0
      %v6610 = vadd.f32 0.0, %v6609
      %v6611 = vpop.f32.mrb[0].mxu0
      %6612 = vmatprep.mubr.f32.mxu0 0.0
      %6613 = vmatmul.mubr.f32.gmra.mrb[0].mxu0 %v6496
      %v6614 = vpop.f32.mrb[0].mxu0
      %v6615 = vadd.f32 0.0, %v6614
      %v6616 = vpop.f32.mrb[0].mxu0
      %6617 = vmatprep.mubr.f32.mxu0 0.0
      %6618 = vmatmul.mubr.f32.gmra.mrb[0].mxu0 %v6498
      %v6619 = vpop.f32.mrb[0].mxu0
      %v6620 = vadd.f32 0.0, %v6619
      %v6621 = vpop.f32.mrb[0].mxu0
      %6622 = vmatprep.mubr.f32.mxu0 0.0
      %6623 = vmatmul.mubr.f32.gmra.mrb[0].mxu0 %v6500
      %v6624 = vpop.f32.mrb[0].mxu0
      %v6625 = vadd.f32 0.0, %v6624
      %v6626 = vpop.f32.mrb[0].mxu0
      %6627 = vmatprep.mubr.f32.mxu0 0.0
      %6628 = vmatmul.mubr.f32.gmra.mrb[0].mxu0 %v6502
      %v6629 = vpop.f32.mrb[0].mxu0
      %v6630 = vadd.f32 0.0, %v6629
      %v6631 = vpop.f32.mrb[0].mxu0
      %6632 = vmatprep.mubr.f32.mxu0 0.0
      %6633 = vmatmul.mubr.f32.gmra.mrb[0].mxu0 %v6504
      %v6634 = vpop.f32.mrb[0].mxu0
      %v6635 = vadd.f32 0.0, %v6634
      %v6636 = vpop.f32.mrb[0].mxu0
      %6637 = vmatprep.mubr.f32.mxu0 0.0
      %6638 = vmatmul.mubr.f32.gmra.mrb[0].mxu0 %v6506
      %v6639 = vpop.f32.mrb[0].mxu0
      %v6640 = vadd.f32 0.0, %v6639
      %v6641 = vpop.f32.mrb[0].mxu0
      %6642 = vmatprep.mubr.f32.mxu0 0.0
      %6643 = vmatmul.mubr.f32.gmra.mrb[0].mxu0 %v6508
      %v6644 = vpop.f32.mrb[0].mxu0
      %v6645 = vadd.f32 0.0, %v6644
      %v6646 = vpop.f32.mrb[0].mxu0
      %6647 = vmatprep.mubr.f32.mxu0 0.0
      %6648 = vmatmul.mubr.f32.gmra.mrb[0].mxu0 %v6510
      %v6649 = vpop.f32.mrb[0].mxu0
      %v6650 = vadd.f32 0.0, %v6649
      %v6651 = vpop.f32.mrb[0].mxu0
      %6652 = vmatprep.mubr.f32.mxu0 0.0
      %6653 = vmatmul.mubr.f32.gmra.mrb[0].mxu0 %v6512
      %v6654 = vpop.f32.mrb[0].mxu0
      %v6655 = vadd.f32 0.0, %v6654
      %v6656 = vpop.f32.mrb[0].mxu0
      %6657 = vdwg.mxu0
      %v6658 = vld [vmem:[%s2 + $0x180] sm:$0xff]
      %v6659 = vld [vmem:[%s2 + $0x188] sm:$0xff]
      %v6660 = vld [vmem:[%s2 + $0x190] sm:$0xff]
      %v6661 = vld [vmem:[%s2 + $0x198] sm:$0xff]
      %v6662 = vld [vmem:[%s2 + $0x1a0] sm:$0xff]
      %v6663 = vld [vmem:[%s2 + $0x1a8] sm:$0xff]
      %v6664 = vld [vmem:[%s2 + $0x1b0] sm:$0xff]
      %v6665 = vld [vmem:[%s2 + $0x1b8] sm:$0xff]
      %v6667 = vsel %vm1277, %v6580, 0
      %v6670 = vsel %vm1277, %v6585, 0
      %v6673 = vsel %vm1277, %v6590, 0
      %v6676 = vsel %vm1277, %v6595, 0
      %v6679 = vsel %vm1277, %v6600, 0
      %v6682 = vsel %vm1277, %v6605, 0
      %v6685 = vsel %vm1277, %v6610, 0
      %v6688 = vsel %vm1277, %v6615, 0
      %v6691 = vsel %vm1277, %v6620, 0
      %v6694 = vsel %vm1277, %v6625, 0
      %v6697 = vsel %vm1277, %v6630, 0
      %v6700 = vsel %vm1277, %v6635, 0
      %v6703 = vsel %vm1277, %v6640, 0
      %v6706 = vsel %vm1277, %v6645, 0
      %v6709 = vsel %vm1277, %v6650, 0
      %v6712 = vsel %vm1277, %v6655, 0
      %6714 = vmatprep.subr.mxu0 0.0
      %6715 = vmatpush1.msra.mxu0 %v6658
      %6716 = vmatprep.subr.mxu0 0.0
      %6717 = vmatpush1.msra.mxu0 %v6659
      %6718 = vmatprep.subr.mxu0 0.0
      %6719 = vmatpush1.msra.mxu0 %v6660
      %6720 = vmatprep.subr.mxu0 0.0
      %6721 = vmatpush1.msra.mxu0 %v6661
      %6722 = vmatprep.subr.mxu0 0.0
      %6723 = vmatpush1.msra.mxu0 %v6662
      %6724 = vmatprep.subr.mxu0 0.0
      %6725 = vmatpush1.msra.mxu0 %v6663
      %6726 = vmatprep.subr.mxu0 0.0
      %6727 = vmatpush1.msra.mxu0 %v6664
      %6728 = vmatprep.subr.mxu0 0.0
      %6729 = vmatpush1.msra.mxu0 %v6665
      %6730 = vmatprep.subr.mxu0 0.0
      %6731 = vmatpush1.msra.mxu0 0.0
      %6732 = vmatprep.subr.mxu0 0.0
      %6733 = vmatpush1.msra.mxu0 0.0
      %6734 = vmatprep.subr.mxu0 0.0
      %6735 = vmatpush1.msra.mxu0 0.0
      %6736 = vmatprep.subr.mxu0 0.0
      %6737 = vmatpush1.msra.mxu0 0.0
      %6738 = vmatprep.subr.mxu0 0.0
      %6739 = vmatpush1.msra.mxu0 0.0
      %6740 = vmatprep.subr.mxu0 0.0
      %6741 = vmatpush1.msra.mxu0 0.0
      %6742 = vmatprep.subr.mxu0 0.0
      %6743 = vmatpush1.msra.mxu0 0.0
      %6744 = vmatprep.subr.mxu0 0.0
      %6745 = vmatpush1.msra.mxu0 0.0
      %6746 = vmatprep.subr.mxu0 0.0
      %6747 = vmatpush1.msra.mxu0 0.0
      %6748 = vmatprep.subr.mxu0 0.0
      %6749 = vmatpush1.msra.mxu0 0.0
      %6750 = vmatprep.subr.mxu0 0.0
      %6751 = vmatpush1.msra.mxu0 0.0
      %6752 = vmatprep.subr.mxu0 0.0
      %6753 = vmatpush1.msra.mxu0 0.0
      %6754 = vmatprep.subr.mxu0 0.0
      %6755 = vmatpush1.msra.mxu0 0.0
      %6756 = vmatprep.subr.mxu0 0.0
      %6757 = vmatpush1.msra.mxu0 0.0
      %6758 = vmatprep.subr.mxu0 0.0
      %6759 = vmatpush1.msra.mxu0 0.0
      %6760 = vmatprep.subr.mxu0 0.0
      %6761 = vmatpush1.msra.mxu0 0.0
      %6762 = vmatprep.subr.mxu0 0.0
      %6763 = vmatpush1.msra.mxu0 0.0
      %6764 = vmatprep.subr.mxu0 0.0
      %6765 = vmatpush1.msra.mxu0 0.0
      %6766 = vmatprep.subr.mxu0 0.0
      %6767 = vmatpush1.msra.mxu0 0.0
      %6768 = vmatprep.subr.mxu0 0.0
      %6769 = vmatpush1.msra.mxu0 0.0
      %6770 = vmatprep.subr.mxu0 0.0
      %6771 = vmatpush1.msra.mxu0 0.0
      %6772 = vmatprep.subr.mxu0 0.0
      %6773 = vmatpush1.msra.mxu0 0.0
      %6774 = vmatprep.subr.mxu0 0.0
      %6775 = vmatpush1.msra.mxu0 0.0
      %6776 = vmatprep.subr.mxu0 0.0
      %6777 = vmatpush1.msra.mxu0 0.0
      %6778 = vmatprep.mubr.f32.mxu0 0.0
      %6779 = vmatmul.mubr.f32.gmra.mrb[0].mxu0 %v6667
      %v6780 = vpop.f32.mrb[0].mxu0
      %v6781 = vadd.f32 0.0, %v6780
      %v6782 = vpop.f32.mrb[0].mxu0
      %6783 = vmatprep.mubr.f32.mxu0 0.0
      %6784 = vmatmul.mubr.f32.gmra.mrb[0].mxu0 %v6670
      %v6785 = vpop.f32.mrb[0].mxu0
      %v6786 = vadd.f32 0.0, %v6785
      %v6787 = vpop.f32.mrb[0].mxu0
      %6788 = vmatprep.mubr.f32.mxu0 0.0
      %6789 = vmatmul.mubr.f32.gmra.mrb[0].mxu0 %v6673
      %v6790 = vpop.f32.mrb[0].mxu0
      %v6791 = vadd.f32 0.0, %v6790
      %v6792 = vpop.f32.mrb[0].mxu0
      %6793 = vmatprep.mubr.f32.mxu0 0.0
      %6794 = vmatmul.mubr.f32.gmra.mrb[0].mxu0 %v6676
      %v6795 = vpop.f32.mrb[0].mxu0
      %v6796 = vadd.f32 0.0, %v6795
      %v6797 = vpop.f32.mrb[0].mxu0
      %6798 = vmatprep.mubr.f32.mxu0 0.0
      %6799 = vmatmul.mubr.f32.gmra.mrb[0].mxu0 %v6679
      %v6800 = vpop.f32.mrb[0].mxu0
      %v6801 = vadd.f32 0.0, %v6800
      %v6802 = vpop.f32.mrb[0].mxu0
      %6803 = vmatprep.mubr.f32.mxu0 0.0
      %6804 = vmatmul.mubr.f32.gmra.mrb[0].mxu0 %v6682
      %v6805 = vpop.f32.mrb[0].mxu0
      %v6806 = vadd.f32 0.0, %v6805
      %v6807 = vpop.f32.mrb[0].mxu0
      %6808 = vmatprep.mubr.f32.mxu0 0.0
      %6809 = vmatmul.mubr.f32.gmra.mrb[0].mxu0 %v6685
      %v6810 = vpop.f32.mrb[0].mxu0
      %v6811 = vadd.f32 0.0, %v6810
      %v6812 = vpop.f32.mrb[0].mxu0
      %6813 = vmatprep.mubr.f32.mxu0 0.0
      %6814 = vmatmul.mubr.f32.gmra.mrb[0].mxu0 %v6688
      %v6815 = vpop.f32.mrb[0].mxu0
      %v6816 = vadd.f32 0.0, %v6815
      %v6817 = vpop.f32.mrb[0].mxu0
      %6818 = vmatprep.mubr.f32.mxu0 0.0
      %6819 = vmatmul.mubr.f32.gmra.mrb[0].mxu0 %v6691
      %v6820 = vpop.f32.mrb[0].mxu0
      %v6821 = vadd.f32 0.0, %v6820
      %v6822 = vpop.f32.mrb[0].mxu0
      %6823 = vmatprep.mubr.f32.mxu0 0.0
      %6824 = vmatmul.mubr.f32.gmra.mrb[0].mxu0 %v6694
      %v6825 = vpop.f32.mrb[0].mxu0
      %v6826 = vadd.f32 0.0, %v6825
      %v6827 = vpop.f32.mrb[0].mxu0
      %6828 = vmatprep.mubr.f32.mxu0 0.0
      %6829 = vmatmul.mubr.f32.gmra.mrb[0].mxu0 %v6697
      %v6830 = vpop.f32.mrb[0].mxu0
      %v6831 = vadd.f32 0.0, %v6830
      %v6832 = vpop.f32.mrb[0].mxu0
      %6833 = vmatprep.mubr.f32.mxu0 0.0
      %6834 = vmatmul.mubr.f32.gmra.mrb[0].mxu0 %v6700
      %v6835 = vpop.f32.mrb[0].mxu0
      %v6836 = vadd.f32 0.0, %v6835
      %v6837 = vpop.f32.mrb[0].mxu0
      %6838 = vmatprep.mubr.f32.mxu0 0.0
      %6839 = vmatmul.mubr.f32.gmra.mrb[0].mxu0 %v6703
      %v6840 = vpop.f32.mrb[0].mxu0
      %v6841 = vadd.f32 0.0, %v6840
      %v6842 = vpop.f32.mrb[0].mxu0
      %6843 = vmatprep.mubr.f32.mxu0 0.0
      %6844 = vmatmul.mubr.f32.gmra.mrb[0].mxu0 %v6706
      %v6845 = vpop.f32.mrb[0].mxu0
      %v6846 = vadd.f32 0.0, %v6845
      %v6847 = vpop.f32.mrb[0].mxu0
      %6848 = vmatprep.mubr.f32.mxu0 0.0
      %6849 = vmatmul.mubr.f32.gmra.mrb[0].mxu0 %v6709
      %v6850 = vpop.f32.mrb[0].mxu0
      %v6851 = vadd.f32 0.0, %v6850
      %v6852 = vpop.f32.mrb[0].mxu0
      %6853 = vmatprep.mubr.f32.mxu0 0.0
      %6854 = vmatmul.mubr.f32.gmra.mrb[0].mxu0 %v6712
      %v6855 = vpop.f32.mrb[0].mxu0
      %v6856 = vadd.f32 0.0, %v6855
      %v6857 = vpop.f32.mrb[0].mxu0
      %6858 = vdwg.mxu0
      %v6859 = vadd.f32 %v6096, %v6781
      %v6860 = vadd.f32 %v6097, %v6786
      %v6861 = vadd.f32 %v6098, %v6791
      %v6862 = vadd.f32 %v6099, %v6796
      %v6863 = vadd.f32 %v6100, %v6801
      %v6864 = vadd.f32 %v6101, %v6806
      %v6865 = vadd.f32 %v6102, %v6811
      %v6866 = vadd.f32 %v6103, %v6816
      %v6867 = vadd.f32 %v6104, %v6821
      %v6868 = vadd.f32 %v6105, %v6826
      %v6869 = vadd.f32 %v6106, %v6831
      %v6870 = vadd.f32 %v6107, %v6836
      %v6871 = vadd.f32 %v6108, %v6841
      %v6872 = vadd.f32 %v6109, %v6846
      %v6873 = vadd.f32 %v6110, %v6851
      %v6874 = vadd.f32 %v6111, %v6856
      %6875 = vrot.lane.b32.xlu0 %v541, 64
      %v6876 = vpop.permute.xlu0 %6875
      %6877 = vrot.lane.b32.xlu0 %v547, 64
      %v6878 = vpop.permute.xlu0 %6877
      %6879 = vrot.lane.b32.xlu0 %v553, 64
      %v6880 = vpop.permute.xlu0 %6879
      %6881 = vrot.lane.b32.xlu0 %v559, 64
      %v6882 = vpop.permute.xlu0 %6881
      %6883 = vrot.lane.b32.xlu0 %v565, 64
      %v6884 = vpop.permute.xlu0 %6883
      %6885 = vrot.lane.b32.xlu0 %v571, 64
      %v6886 = vpop.permute.xlu0 %6885
      %6887 = vrot.lane.b32.xlu0 %v577, 64
      %v6888 = vpop.permute.xlu0 %6887
      %6889 = vrot.lane.b32.xlu0 %v583, 64
      %v6890 = vpop.permute.xlu0 %6889
      %6891 = vrot.lane.b32.xlu0 %v589, 64
      %v6892 = vpop.permute.xlu0 %6891
      %6893 = vrot.lane.b32.xlu0 %v595, 64
      %v6894 = vpop.permute.xlu0 %6893
      %6895 = vrot.lane.b32.xlu0 %v601, 64
      %v6896 = vpop.permute.xlu0 %6895
      %6897 = vrot.lane.b32.xlu0 %v607, 64
      %v6898 = vpop.permute.xlu0 %6897
      %6899 = vrot.lane.b32.xlu0 %v613, 64
      %v6900 = vpop.permute.xlu0 %6899
      %6901 = vrot.lane.b32.xlu0 %v619, 64
      %v6902 = vpop.permute.xlu0 %6901
      %6903 = vrot.lane.b32.xlu0 %v625, 64
      %v6904 = vpop.permute.xlu0 %6903
      %6905 = vrot.lane.b32.xlu0 %v631, 64
      %v6906 = vpop.permute.xlu0 %6905
      %6907 = vrot.lane.b32.xlu0 %v863, 64
      %v6908 = vpop.permute.xlu0 %6907
      %6909 = vrot.lane.b32.xlu0 %v869, 64
      %v6910 = vpop.permute.xlu0 %6909
      %6911 = vrot.lane.b32.xlu0 %v875, 64
      %v6912 = vpop.permute.xlu0 %6911
      %6913 = vrot.lane.b32.xlu0 %v881, 64
      %v6914 = vpop.permute.xlu0 %6913
      %6915 = vrot.lane.b32.xlu0 %v887, 64
      %v6916 = vpop.permute.xlu0 %6915
      %6917 = vrot.lane.b32.xlu0 %v893, 64
      %v6918 = vpop.permute.xlu0 %6917
      %6919 = vrot.lane.b32.xlu0 %v899, 64
      %v6920 = vpop.permute.xlu0 %6919
      %6921 = vrot.lane.b32.xlu0 %v905, 64
      %v6922 = vpop.permute.xlu0 %6921
      %6923 = vrot.lane.b32.xlu0 %v911, 64
      %v6924 = vpop.permute.xlu0 %6923
      %6925 = vrot.lane.b32.xlu0 %v917, 64
      %v6926 = vpop.permute.xlu0 %6925
      %6927 = vrot.lane.b32.xlu0 %v923, 64
      %v6928 = vpop.permute.xlu0 %6927
      %6929 = vrot.lane.b32.xlu0 %v929, 64
      %v6930 = vpop.permute.xlu0 %6929
      %6931 = vrot.lane.b32.xlu0 %v935, 64
      %v6932 = vpop.permute.xlu0 %6931
      %6933 = vrot.lane.b32.xlu0 %v941, 64
      %v6934 = vpop.permute.xlu0 %6933
      %6935 = vrot.lane.b32.xlu0 %v947, 64
      %v6936 = vpop.permute.xlu0 %6935
      %6937 = vrot.lane.b32.xlu0 %v953, 64
      %v6938 = vpop.permute.xlu0 %6937
      %v6939 = vsel %vm1277, %v6876, 0
      %v6941 = vsel %vm1277, %v6878, 0
      %v6943 = vsel %vm1277, %v6880, 0
      %v6945 = vsel %vm1277, %v6882, 0
      %v6947 = vsel %vm1277, %v6884, 0
      %v6949 = vsel %vm1277, %v6886, 0
      %v6951 = vsel %vm1277, %v6888, 0
      %v6953 = vsel %vm1277, %v6890, 0
      %v6955 = vsel %vm1277, %v6892, 0
      %v6957 = vsel %vm1277, %v6894, 0
      %v6959 = vsel %vm1277, %v6896, 0
      %v6961 = vsel %vm1277, %v6898, 0
      %v6963 = vsel %vm1277, %v6900, 0
      %v6965 = vsel %vm1277, %v6902, 0
      %v6967 = vsel %vm1277, %v6904, 0
      %v6969 = vsel %vm1277, %v6906, 0
      %v6971 = vsel %vm1277, %v6908, 0
      %v6973 = vsel %vm1277, %v6910, 0
      %v6975 = vsel %vm1277, %v6912, 0
      %v6977 = vsel %vm1277, %v6914, 0
      %v6979 = vsel %vm1277, %v6916, 0
      %v6981 = vsel %vm1277, %v6918, 0
      %v6983 = vsel %vm1277, %v6920, 0
      %v6985 = vsel %vm1277, %v6922, 0
      %v6987 = vsel %vm1277, %v6924, 0
      %v6989 = vsel %vm1277, %v6926, 0
      %v6991 = vsel %vm1277, %v6928, 0
      %v6993 = vsel %vm1277, %v6930, 0
      %v6995 = vsel %vm1277, %v6932, 0
      %v6997 = vsel %vm1277, %v6934, 0
      %v6999 = vsel %vm1277, %v6936, 0
      %v7001 = vsel %vm1277, %v6938, 0
      %7003 = vmatprep.subr.mxu0 0.0
      %7004 = vmatpush1.xpose.msra.mxu0 %v6971
      %7005 = vmatprep.subr.mxu0 0.0
      %7006 = vmatpush1.xpose.msra.mxu0 %v6973
      %7007 = vmatprep.subr.mxu0 0.0
      %7008 = vmatpush1.xpose.msra.mxu0 %v6975
      %7009 = vmatprep.subr.mxu0 0.0
      %7010 = vmatpush1.xpose.msra.mxu0 %v6977
      %7011 = vmatprep.subr.mxu0 0.0
      %7012 = vmatpush1.xpose.msra.mxu0 %v6979
      %7013 = vmatprep.subr.mxu0 0.0
      %7014 = vmatpush1.xpose.msra.mxu0 %v6981
      %7015 = vmatprep.subr.mxu0 0.0
      %7016 = vmatpush1.xpose.msra.mxu0 %v6983
      %7017 = vmatprep.subr.mxu0 0.0
      %7018 = vmatpush1.xpose.msra.mxu0 %v6985
      %7019 = vmatprep.subr.mxu0 0.0
      %7020 = vmatpush1.xpose.msra.mxu0 %v6987
      %7021 = vmatprep.subr.mxu0 0.0
      %7022 = vmatpush1.xpose.msra.mxu0 %v6989
      %7023 = vmatprep.subr.mxu0 0.0
      %7024 = vmatpush1.xpose.msra.mxu0 %v6991
      %7025 = vmatprep.subr.mxu0 0.0
      %7026 = vmatpush1.xpose.msra.mxu0 %v6993
      %7027 = vmatprep.subr.mxu0 0.0
      %7028 = vmatpush1.xpose.msra.mxu0 %v6995
      %7029 = vmatprep.subr.mxu0 0.0
      %7030 = vmatpush1.xpose.msra.mxu0 %v6997
      %7031 = vmatprep.subr.mxu0 0.0
      %7032 = vmatpush1.xpose.msra.mxu0 %v6999
      %7033 = vmatprep.subr.mxu0 0.0
      %7034 = vmatpush1.xpose.msra.mxu0 %v7001
      %7035 = vmatprep.subr.mxu0 0.0
      %7036 = vmatpush1.xpose.msra.mxu0 0.0
      %7037 = vmatprep.subr.mxu0 0.0
      %7038 = vmatpush1.xpose.msra.mxu0 0.0
      %7039 = vmatprep.subr.mxu0 0.0
      %7040 = vmatpush1.xpose.msra.mxu0 0.0
      %7041 = vmatprep.subr.mxu0 0.0
      %7042 = vmatpush1.xpose.msra.mxu0 0.0
      %7043 = vmatprep.subr.mxu0 0.0
      %7044 = vmatpush1.xpose.msra.mxu0 0.0
      %7045 = vmatprep.subr.mxu0 0.0
      %7046 = vmatpush1.xpose.msra.mxu0 0.0
      %7047 = vmatprep.subr.mxu0 0.0
      %7048 = vmatpush1.xpose.msra.mxu0 0.0
      %7049 = vmatprep.subr.mxu0 0.0
      %7050 = vmatpush1.xpose.msra.mxu0 0.0
      %7051 = vmatprep.subr.mxu0 0.0
      %7052 = vmatpush1.xpose.msra.mxu0 0.0
      %7053 = vmatprep.subr.mxu0 0.0
      %7054 = vmatpush1.xpose.msra.mxu0 0.0
      %7055 = vmatprep.subr.mxu0 0.0
      %7056 = vmatpush1.xpose.msra.mxu0 0.0
      %7057 = vmatprep.subr.mxu0 0.0
      %7058 = vmatpush1.xpose.msra.mxu0 0.0
      %7059 = vmatprep.subr.mxu0 0.0
      %7060 = vmatpush1.xpose.msra.mxu0 0.0
      %7061 = vmatprep.subr.mxu0 0.0
      %7062 = vmatpush1.xpose.msra.mxu0 0.0
      %7063 = vmatprep.subr.mxu0 0.0
      %7064 = vmatpush1.xpose.msra.mxu0 0.0
      %7065 = vmatprep.subr.mxu0 0.0
      %7066 = vmatpush1.xpose.msra.mxu0 0.0
      %7067 = vmatprep.mubr.f32.mxu0 0.0
      %7068 = vmatmul.mubr.f32.gmra.mrb[0].mxu0 %v6939
      %v7069 = vpop.f32.mrb[0].mxu0
      %v7070 = vadd.f32 0.0, %v7069
      %v7071 = vpop.f32.mrb[0].mxu0
      %7072 = vmatprep.mubr.f32.mxu0 0.0
      %7073 = vmatmul.mubr.f32.gmra.mrb[0].mxu0 %v6941
      %v7074 = vpop.f32.mrb[0].mxu0
      %v7075 = vadd.f32 0.0, %v7074
      %v7076 = vpop.f32.mrb[0].mxu0
      %7077 = vmatprep.mubr.f32.mxu0 0.0
      %7078 = vmatmul.mubr.f32.gmra.mrb[0].mxu0 %v6943
      %v7079 = vpop.f32.mrb[0].mxu0
      %v7080 = vadd.f32 0.0, %v7079
      %v7081 = vpop.f32.mrb[0].mxu0
      %7082 = vmatprep.mubr.f32.mxu0 0.0
      %7083 = vmatmul.mubr.f32.gmra.mrb[0].mxu0 %v6945
      %v7084 = vpop.f32.mrb[0].mxu0
      %v7085 = vadd.f32 0.0, %v7084
      %v7086 = vpop.f32.mrb[0].mxu0
      %7087 = vmatprep.mubr.f32.mxu0 0.0
      %7088 = vmatmul.mubr.f32.gmra.mrb[0].mxu0 %v6947
      %v7089 = vpop.f32.mrb[0].mxu0
      %v7090 = vadd.f32 0.0, %v7089
      %v7091 = vpop.f32.mrb[0].mxu0
      %7092 = vmatprep.mubr.f32.mxu0 0.0
      %7093 = vmatmul.mubr.f32.gmra.mrb[0].mxu0 %v6949
      %v7094 = vpop.f32.mrb[0].mxu0
      %v7095 = vadd.f32 0.0, %v7094
      %v7096 = vpop.f32.mrb[0].mxu0
      %7097 = vmatprep.mubr.f32.mxu0 0.0
      %7098 = vmatmul.mubr.f32.gmra.mrb[0].mxu0 %v6951
      %v7099 = vpop.f32.mrb[0].mxu0
      %v7100 = vadd.f32 0.0, %v7099
      %v7101 = vpop.f32.mrb[0].mxu0
      %7102 = vmatprep.mubr.f32.mxu0 0.0
      %7103 = vmatmul.mubr.f32.gmra.mrb[0].mxu0 %v6953
      %v7104 = vpop.f32.mrb[0].mxu0
      %v7105 = vadd.f32 0.0, %v7104
      %v7106 = vpop.f32.mrb[0].mxu0
      %7107 = vmatprep.mubr.f32.mxu0 0.0
      %7108 = vmatmul.mubr.f32.gmra.mrb[0].mxu0 %v6955
      %v7109 = vpop.f32.mrb[0].mxu0
      %v7110 = vadd.f32 0.0, %v7109
      %v7111 = vpop.f32.mrb[0].mxu0
      %7112 = vmatprep.mubr.f32.mxu0 0.0
      %7113 = vmatmul.mubr.f32.gmra.mrb[0].mxu0 %v6957
      %v7114 = vpop.f32.mrb[0].mxu0
      %v7115 = vadd.f32 0.0, %v7114
      %v7116 = vpop.f32.mrb[0].mxu0
      %7117 = vmatprep.mubr.f32.mxu0 0.0
      %7118 = vmatmul.mubr.f32.gmra.mrb[0].mxu0 %v6959
      %v7119 = vpop.f32.mrb[0].mxu0
      %v7120 = vadd.f32 0.0, %v7119
      %v7121 = vpop.f32.mrb[0].mxu0
      %7122 = vmatprep.mubr.f32.mxu0 0.0
      %7123 = vmatmul.mubr.f32.gmra.mrb[0].mxu0 %v6961
      %v7124 = vpop.f32.mrb[0].mxu0
      %v7125 = vadd.f32 0.0, %v7124
      %v7126 = vpop.f32.mrb[0].mxu0
      %7127 = vmatprep.mubr.f32.mxu0 0.0
      %7128 = vmatmul.mubr.f32.gmra.mrb[0].mxu0 %v6963
      %v7129 = vpop.f32.mrb[0].mxu0
      %v7130 = vadd.f32 0.0, %v7129
      %v7131 = vpop.f32.mrb[0].mxu0
      %7132 = vmatprep.mubr.f32.mxu0 0.0
      %7133 = vmatmul.mubr.f32.gmra.mrb[0].mxu0 %v6965
      %v7134 = vpop.f32.mrb[0].mxu0
      %v7135 = vadd.f32 0.0, %v7134
      %v7136 = vpop.f32.mrb[0].mxu0
      %7137 = vmatprep.mubr.f32.mxu0 0.0
      %7138 = vmatmul.mubr.f32.gmra.mrb[0].mxu0 %v6967
      %v7139 = vpop.f32.mrb[0].mxu0
      %v7140 = vadd.f32 0.0, %v7139
      %v7141 = vpop.f32.mrb[0].mxu0
      %7142 = vmatprep.mubr.f32.mxu0 0.0
      %7143 = vmatmul.mubr.f32.gmra.mrb[0].mxu0 %v6969
      %v7144 = vpop.f32.mrb[0].mxu0
      %v7145 = vadd.f32 0.0, %v7144
      %v7146 = vpop.f32.mrb[0].mxu0
      %7147 = vdwg.mxu0
      %v7148 = vmul.f32 %v7070, 0.17677669
      %v7149 = vmul.f32 %v7075, 0.17677669
      %v7150 = vmul.f32 %v7080, 0.17677669
      %v7151 = vmul.f32 %v7085, 0.17677669
      %v7152 = vmul.f32 %v7090, 0.17677669
      %v7153 = vmul.f32 %v7095, 0.17677669
      %v7154 = vmul.f32 %v7100, 0.17677669
      %v7155 = vmul.f32 %v7105, 0.17677669
      %v7156 = vmul.f32 %v7110, 0.17677669
      %v7157 = vmul.f32 %v7115, 0.17677669
      %v7158 = vmul.f32 %v7120, 0.17677669
      %v7159 = vmul.f32 %v7125, 0.17677669
      %v7160 = vmul.f32 %v7130, 0.17677669
      %v7161 = vmul.f32 %v7135, 0.17677669
      %v7162 = vmul.f32 %v7140, 0.17677669
      %v7163 = vmul.f32 %v7145, 0.17677669
      %7164 = vmax.xlane.f32.xlu0 %v7148
      %v7165 = vpop.xlane.xlu0 %7164
      %7166 = vmax.xlane.f32.xlu0 %v7149
      %v7167 = vpop.xlane.xlu0 %7166
      %7168 = vmax.xlane.f32.xlu0 %v7150
      %v7169 = vpop.xlane.xlu0 %7168
      %7170 = vmax.xlane.f32.xlu0 %v7151
      %v7171 = vpop.xlane.xlu0 %7170
      %7172 = vmax.xlane.f32.xlu0 %v7152
      %v7173 = vpop.xlane.xlu0 %7172
      %7174 = vmax.xlane.f32.xlu0 %v7153
      %v7175 = vpop.xlane.xlu0 %7174
      %7176 = vmax.xlane.f32.xlu0 %v7154
      %v7177 = vpop.xlane.xlu0 %7176
      %7178 = vmax.xlane.f32.xlu0 %v7155
      %v7179 = vpop.xlane.xlu0 %7178
      %7180 = vmax.xlane.f32.xlu0 %v7156
      %v7181 = vpop.xlane.xlu0 %7180
      %7182 = vmax.xlane.f32.xlu0 %v7157
      %v7183 = vpop.xlane.xlu0 %7182
      %7184 = vmax.xlane.f32.xlu0 %v7158
      %v7185 = vpop.xlane.xlu0 %7184
      %7186 = vmax.xlane.f32.xlu0 %v7159
      %v7187 = vpop.xlane.xlu0 %7186
      %7188 = vmax.xlane.f32.xlu0 %v7160
      %v7189 = vpop.xlane.xlu0 %7188
      %7190 = vmax.xlane.f32.xlu0 %v7161
      %v7191 = vpop.xlane.xlu0 %7190
      %7192 = vmax.xlane.f32.xlu0 %v7162
      %v7193 = vpop.xlane.xlu0 %7192
      %7194 = vmax.xlane.f32.xlu0 %v7163
      %v7195 = vpop.xlane.xlu0 %7194
      %v7196 = vsub.f32 %v7148, %v7165
      %v7197 = vsub.f32 %v7149, %v7167
      %v7198 = vsub.f32 %v7150, %v7169
      %v7199 = vsub.f32 %v7151, %v7171
      %v7200 = vsub.f32 %v7152, %v7173
      %v7201 = vsub.f32 %v7153, %v7175
      %v7202 = vsub.f32 %v7154, %v7177
      %v7203 = vsub.f32 %v7155, %v7179
      %v7204 = vsub.f32 %v7156, %v7181
      %v7205 = vsub.f32 %v7157, %v7183
      %v7206 = vsub.f32 %v7158, %v7185
      %v7207 = vsub.f32 %v7159, %v7187
      %v7208 = vsub.f32 %v7160, %v7189
      %v7209 = vsub.f32 %v7161, %v7191
      %v7210 = vsub.f32 %v7162, %v7193
      %v7211 = vsub.f32 %v7163, %v7195
      %v7212 = vmul.f32 %v7196, 1.442695
      %v7213 = vpow.pop %v7212
      %v7214 = vmul.f32 %v7197, 1.442695
      %v7215 = vpow.pop %v7214
      %v7216 = vmul.f32 %v7198, 1.442695
      %v7217 = vpow.pop %v7216
      %v7218 = vmul.f32 %v7199, 1.442695
      %v7219 = vpow.pop %v7218
      %v7220 = vmul.f32 %v7200, 1.442695
      %v7221 = vpow.pop %v7220
      %v7222 = vmul.f32 %v7201, 1.442695
      %v7223 = vpow.pop %v7222
      %v7224 = vmul.f32 %v7202, 1.442695
      %v7225 = vpow.pop %v7224
      %v7226 = vmul.f32 %v7203, 1.442695
      %v7227 = vpow.pop %v7226
      %v7228 = vmul.f32 %v7204, 1.442695
      %v7229 = vpow.pop %v7228
      %v7230 = vmul.f32 %v7205, 1.442695
      %v7231 = vpow.pop %v7230
      %v7232 = vmul.f32 %v7206, 1.442695
      %v7233 = vpow.pop %v7232
      %v7234 = vmul.f32 %v7207, 1.442695
      %v7235 = vpow.pop %v7234
      %v7236 = vmul.f32 %v7208, 1.442695
      %v7237 = vpow.pop %v7236
      %v7238 = vmul.f32 %v7209, 1.442695
      %v7239 = vpow.pop %v7238
      %v7240 = vmul.f32 %v7210, 1.442695
      %v7241 = vpow.pop %v7240
      %v7242 = vmul.f32 %v7211, 1.442695
      %v7243 = vpow.pop %v7242
      %7244 = vadd.xlane.f32.xlu0 %v7213
      %v7245 = vpop.xlane.xlu0 %7244
      %7246 = vadd.xlane.f32.xlu0 %v7215
      %v7247 = vpop.xlane.xlu0 %7246
      %7248 = vadd.xlane.f32.xlu0 %v7217
      %v7249 = vpop.xlane.xlu0 %7248
      %7250 = vadd.xlane.f32.xlu0 %v7219
      %v7251 = vpop.xlane.xlu0 %7250
      %7252 = vadd.xlane.f32.xlu0 %v7221
      %v7253 = vpop.xlane.xlu0 %7252
      %7254 = vadd.xlane.f32.xlu0 %v7223
      %v7255 = vpop.xlane.xlu0 %7254
      %7256 = vadd.xlane.f32.xlu0 %v7225
      %v7257 = vpop.xlane.xlu0 %7256
      %7258 = vadd.xlane.f32.xlu0 %v7227
      %v7259 = vpop.xlane.xlu0 %7258
      %7260 = vadd.xlane.f32.xlu0 %v7229
      %v7261 = vpop.xlane.xlu0 %7260
      %7262 = vadd.xlane.f32.xlu0 %v7231
      %v7263 = vpop.xlane.xlu0 %7262
      %7264 = vadd.xlane.f32.xlu0 %v7233
      %v7265 = vpop.xlane.xlu0 %7264
      %7266 = vadd.xlane.f32.xlu0 %v7235
      %v7267 = vpop.xlane.xlu0 %7266
      %7268 = vadd.xlane.f32.xlu0 %v7237
      %v7269 = vpop.xlane.xlu0 %7268
      %7270 = vadd.xlane.f32.xlu0 %v7239
      %v7271 = vpop.xlane.xlu0 %7270
      %7272 = vadd.xlane.f32.xlu0 %v7241
      %v7273 = vpop.xlane.xlu0 %7272
      %7274 = vadd.xlane.f32.xlu0 %v7243
      %v7275 = vpop.xlane.xlu0 %7274
      %v7276 = vrcp.pop %v7245
      %v7277 = vmul.f32 %v7213, %v7276
      %v7278 = vrcp.pop %v7247
      %v7279 = vmul.f32 %v7215, %v7278
      %v7280 = vrcp.pop %v7249
      %v7281 = vmul.f32 %v7217, %v7280
      %v7282 = vrcp.pop %v7251
      %v7283 = vmul.f32 %v7219, %v7282
      %v7284 = vrcp.pop %v7253
      %v7285 = vmul.f32 %v7221, %v7284
      %v7286 = vrcp.pop %v7255
      %v7287 = vmul.f32 %v7223, %v7286
      %v7288 = vrcp.pop %v7257
      %v7289 = vmul.f32 %v7225, %v7288
      %v7290 = vrcp.pop %v7259
      %v7291 = vmul.f32 %v7227, %v7290
      %v7292 = vrcp.pop %v7261
      %v7293 = vmul.f32 %v7229, %v7292
      %v7294 = vrcp.pop %v7263
      %v7295 = vmul.f32 %v7231, %v7294
      %v7296 = vrcp.pop %v7265
      %v7297 = vmul.f32 %v7233, %v7296
      %v7298 = vrcp.pop %v7267
      %v7299 = vmul.f32 %v7235, %v7298
      %v7300 = vrcp.pop %v7269
      %v7301 = vmul.f32 %v7237, %v7300
      %v7302 = vrcp.pop %v7271
      %v7303 = vmul.f32 %v7239, %v7302
      %v7304 = vrcp.pop %v7273
      %v7305 = vmul.f32 %v7241, %v7304
      %v7306 = vrcp.pop %v7275
      %v7307 = vmul.f32 %v7243, %v7306
      %7324 = vrot.lane.b32.xlu0 %v1185, 64
      %v7325 = vpop.permute.xlu0 %7324
      %7326 = vrot.lane.b32.xlu0 %v1191, 64
      %v7327 = vpop.permute.xlu0 %7326
      %7328 = vrot.lane.b32.xlu0 %v1197, 64
      %v7329 = vpop.permute.xlu0 %7328
      %7330 = vrot.lane.b32.xlu0 %v1203, 64
      %v7331 = vpop.permute.xlu0 %7330
      %7332 = vrot.lane.b32.xlu0 %v1209, 64
      %v7333 = vpop.permute.xlu0 %7332
      %7334 = vrot.lane.b32.xlu0 %v1215, 64
      %v7335 = vpop.permute.xlu0 %7334
      %7336 = vrot.lane.b32.xlu0 %v1221, 64
      %v7337 = vpop.permute.xlu0 %7336
      %7338 = vrot.lane.b32.xlu0 %v1227, 64
      %v7339 = vpop.permute.xlu0 %7338
      %7340 = vrot.lane.b32.xlu0 %v1233, 64
      %v7341 = vpop.permute.xlu0 %7340
      %7342 = vrot.lane.b32.xlu0 %v1239, 64
      %v7343 = vpop.permute.xlu0 %7342
      %7344 = vrot.lane.b32.xlu0 %v1245, 64
      %v7345 = vpop.permute.xlu0 %7344
      %7346 = vrot.lane.b32.xlu0 %v1251, 64
      %v7347 = vpop.permute.xlu0 %7346
      %7348 = vrot.lane.b32.xlu0 %v1257, 64
      %v7349 = vpop.permute.xlu0 %7348
      %7350 = vrot.lane.b32.xlu0 %v1263, 64
      %v7351 = vpop.permute.xlu0 %7350
      %7352 = vrot.lane.b32.xlu0 %v1269, 64
      %v7353 = vpop.permute.xlu0 %7352
      %7354 = vrot.lane.b32.xlu0 %v1275, 64
      %v7355 = vpop.permute.xlu0 %7354
      %7372 = vmatprep.subr.mxu0 0.0
      %7373 = vmatpush1.msra.mxu0 %v7325
      %7374 = vmatprep.subr.mxu0 0.0
      %7375 = vmatpush1.msra.mxu0 %v7327
      %7376 = vmatprep.subr.mxu0 0.0
      %7377 = vmatpush1.msra.mxu0 %v7329
      %7378 = vmatprep.subr.mxu0 0.0
      %7379 = vmatpush1.msra.mxu0 %v7331
      %7380 = vmatprep.subr.mxu0 0.0
      %7381 = vmatpush1.msra.mxu0 %v7333
      %7382 = vmatprep.subr.mxu0 0.0
      %7383 = vmatpush1.msra.mxu0 %v7335
      %7384 = vmatprep.subr.mxu0 0.0
      %7385 = vmatpush1.msra.mxu0 %v7337
      %7386 = vmatprep.subr.mxu0 0.0
      %7387 = vmatpush1.msra.mxu0 %v7339
      %7388 = vmatprep.subr.mxu0 0.0
      %7389 = vmatpush1.msra.mxu0 %v7341
      %7390 = vmatprep.subr.mxu0 0.0
      %7391 = vmatpush1.msra.mxu0 %v7343
      %7392 = vmatprep.subr.mxu0 0.0
      %7393 = vmatpush1.msra.mxu0 %v7345
      %7394 = vmatprep.subr.mxu0 0.0
      %7395 = vmatpush1.msra.mxu0 %v7347
      %7396 = vmatprep.subr.mxu0 0.0
      %7397 = vmatpush1.msra.mxu0 %v7349
      %7398 = vmatprep.subr.mxu0 0.0
      %7399 = vmatpush1.msra.mxu0 %v7351
      %7400 = vmatprep.subr.mxu0 0.0
      %7401 = vmatpush1.msra.mxu0 %v7353
      %7402 = vmatprep.subr.mxu0 0.0
      %7403 = vmatpush1.msra.mxu0 %v7355
      %7404 = vmatprep.subr.mxu0 0.0
      %7405 = vmatpush1.msra.mxu0 0.0
      %7406 = vmatprep.subr.mxu0 0.0
      %7407 = vmatpush1.msra.mxu0 0.0
      %7408 = vmatprep.subr.mxu0 0.0
      %7409 = vmatpush1.msra.mxu0 0.0
      %7410 = vmatprep.subr.mxu0 0.0
      %7411 = vmatpush1.msra.mxu0 0.0
      %7412 = vmatprep.subr.mxu0 0.0
      %7413 = vmatpush1.msra.mxu0 0.0
      %7414 = vmatprep.subr.mxu0 0.0
      %7415 = vmatpush1.msra.mxu0 0.0
      %7416 = vmatprep.subr.mxu0 0.0
      %7417 = vmatpush1.msra.mxu0 0.0
      %7418 = vmatprep.subr.mxu0 0.0
      %7419 = vmatpush1.msra.mxu0 0.0
      %7420 = vmatprep.subr.mxu0 0.0
      %7421 = vmatpush1.msra.mxu0 0.0
      %7422 = vmatprep.subr.mxu0 0.0
      %7423 = vmatpush1.msra.mxu0 0.0
      %7424 = vmatprep.subr.mxu0 0.0
      %7425 = vmatpush1.msra.mxu0 0.0
      %7426 = vmatprep.subr.mxu0 0.0
      %7427 = vmatpush1.msra.mxu0 0.0
      %7428 = vmatprep.subr.mxu0 0.0
      %7429 = vmatpush1.msra.mxu0 0.0
      %7430 = vmatprep.subr.mxu0 0.0
      %7431 = vmatpush1.msra.mxu0 0.0
      %7432 = vmatprep.subr.mxu0 0.0
      %7433 = vmatpush1.msra.mxu0 0.0
      %7434 = vmatprep.subr.mxu0 0.0
      %7435 = vmatpush1.msra.mxu0 0.0
      %7436 = vmatprep.mubr.f32.mxu0 0.0
      %7437 = vmatmul.mubr.f32.gmra.mrb[0].mxu0 %v7277
      %v7438 = vpop.f32.mrb[0].mxu0
      %v7439 = vadd.f32 0.0, %v7438
      %v7440 = vpop.f32.mrb[0].mxu0
      %7441 = vmatprep.mubr.f32.mxu0 0.0
      %7442 = vmatmul.mubr.f32.gmra.mrb[0].mxu0 %v7279
      %v7443 = vpop.f32.mrb[0].mxu0
      %v7444 = vadd.f32 0.0, %v7443
      %v7445 = vpop.f32.mrb[0].mxu0
      %7446 = vmatprep.mubr.f32.mxu0 0.0
      %7447 = vmatmul.mubr.f32.gmra.mrb[0].mxu0 %v7281
      %v7448 = vpop.f32.mrb[0].mxu0
      %v7449 = vadd.f32 0.0, %v7448
      %v7450 = vpop.f32.mrb[0].mxu0
      %7451 = vmatprep.mubr.f32.mxu0 0.0
      %7452 = vmatmul.mubr.f32.gmra.mrb[0].mxu0 %v7283
      %v7453 = vpop.f32.mrb[0].mxu0
      %v7454 = vadd.f32 0.0, %v7453
      %v7455 = vpop.f32.mrb[0].mxu0
      %7456 = vmatprep.mubr.f32.mxu0 0.0
      %7457 = vmatmul.mubr.f32.gmra.mrb[0].mxu0 %v7285
      %v7458 = vpop.f32.mrb[0].mxu0
      %v7459 = vadd.f32 0.0, %v7458
      %v7460 = vpop.f32.mrb[0].mxu0
      %7461 = vmatprep.mubr.f32.mxu0 0.0
      %7462 = vmatmul.mubr.f32.gmra.mrb[0].mxu0 %v7287
      %v7463 = vpop.f32.mrb[0].mxu0
      %v7464 = vadd.f32 0.0, %v7463
      %v7465 = vpop.f32.mrb[0].mxu0
      %7466 = vmatprep.mubr.f32.mxu0 0.0
      %7467 = vmatmul.mubr.f32.gmra.mrb[0].mxu0 %v7289
      %v7468 = vpop.f32.mrb[0].mxu0
      %v7469 = vadd.f32 0.0, %v7468
      %v7470 = vpop.f32.mrb[0].mxu0
      %7471 = vmatprep.mubr.f32.mxu0 0.0
      %7472 = vmatmul.mubr.f32.gmra.mrb[0].mxu0 %v7291
      %v7473 = vpop.f32.mrb[0].mxu0
      %v7474 = vadd.f32 0.0, %v7473
      %v7475 = vpop.f32.mrb[0].mxu0
      %7476 = vmatprep.mubr.f32.mxu0 0.0
      %7477 = vmatmul.mubr.f32.gmra.mrb[0].mxu0 %v7293
      %v7478 = vpop.f32.mrb[0].mxu0
      %v7479 = vadd.f32 0.0, %v7478
      %v7480 = vpop.f32.mrb[0].mxu0
      %7481 = vmatprep.mubr.f32.mxu0 0.0
      %7482 = vmatmul.mubr.f32.gmra.mrb[0].mxu0 %v7295
      %v7483 = vpop.f32.mrb[0].mxu0
      %v7484 = vadd.f32 0.0, %v7483
      %v7485 = vpop.f32.mrb[0].mxu0
      %7486 = vmatprep.mubr.f32.mxu0 0.0
      %7487 = vmatmul.mubr.f32.gmra.mrb[0].mxu0 %v7297
      %v7488 = vpop.f32.mrb[0].mxu0
      %v7489 = vadd.f32 0.0, %v7488
      %v7490 = vpop.f32.mrb[0].mxu0
      %7491 = vmatprep.mubr.f32.mxu0 0.0
      %7492 = vmatmul.mubr.f32.gmra.mrb[0].mxu0 %v7299
      %v7493 = vpop.f32.mrb[0].mxu0
      %v7494 = vadd.f32 0.0, %v7493
      %v7495 = vpop.f32.mrb[0].mxu0
      %7496 = vmatprep.mubr.f32.mxu0 0.0
      %7497 = vmatmul.mubr.f32.gmra.mrb[0].mxu0 %v7301
      %v7498 = vpop.f32.mrb[0].mxu0
      %v7499 = vadd.f32 0.0, %v7498
      %v7500 = vpop.f32.mrb[0].mxu0
      %7501 = vmatprep.mubr.f32.mxu0 0.0
      %7502 = vmatmul.mubr.f32.gmra.mrb[0].mxu0 %v7303
      %v7503 = vpop.f32.mrb[0].mxu0
      %v7504 = vadd.f32 0.0, %v7503
      %v7505 = vpop.f32.mrb[0].mxu0
      %7506 = vmatprep.mubr.f32.mxu0 0.0
      %7507 = vmatmul.mubr.f32.gmra.mrb[0].mxu0 %v7305
      %v7508 = vpop.f32.mrb[0].mxu0
      %v7509 = vadd.f32 0.0, %v7508
      %v7510 = vpop.f32.mrb[0].mxu0
      %7511 = vmatprep.mubr.f32.mxu0 0.0
      %7512 = vmatmul.mubr.f32.gmra.mrb[0].mxu0 %v7307
      %v7513 = vpop.f32.mrb[0].mxu0
      %v7514 = vadd.f32 0.0, %v7513
      %v7515 = vpop.f32.mrb[0].mxu0
      %7516 = vdwg.mxu0
      %v7517 = vld [vmem:[%s2 + $0x1c0] sm:$0xff]
      %v7518 = vld [vmem:[%s2 + $0x1c8] sm:$0xff]
      %v7519 = vld [vmem:[%s2 + $0x1d0] sm:$0xff]
      %v7520 = vld [vmem:[%s2 + $0x1d8] sm:$0xff]
      %v7521 = vld [vmem:[%s2 + $0x1e0] sm:$0xff]
      %v7522 = vld [vmem:[%s2 + $0x1e8] sm:$0xff]
      %v7523 = vld [vmem:[%s2 + $0x1f0] sm:$0xff]
      %v7524 = vld [vmem:[%s2 + $0x1f8] sm:$0xff]
      %v7526 = vsel %vm1277, %v7439, 0
      %v7529 = vsel %vm1277, %v7444, 0
      %v7532 = vsel %vm1277, %v7449, 0
      %v7535 = vsel %vm1277, %v7454, 0
      %v7538 = vsel %vm1277, %v7459, 0
      %v7541 = vsel %vm1277, %v7464, 0
      %v7544 = vsel %vm1277, %v7469, 0
      %v7547 = vsel %vm1277, %v7474, 0
      %v7550 = vsel %vm1277, %v7479, 0
      %v7553 = vsel %vm1277, %v7484, 0
      %v7556 = vsel %vm1277, %v7489, 0
      %v7559 = vsel %vm1277, %v7494, 0
      %v7562 = vsel %vm1277, %v7499, 0
      %v7565 = vsel %vm1277, %v7504, 0
      %v7568 = vsel %vm1277, %v7509, 0
      %v7571 = vsel %vm1277, %v7514, 0
      %7573 = vmatprep.subr.mxu0 0.0
      %7574 = vmatpush1.msra.mxu0 %v7517
      %7575 = vmatprep.subr.mxu0 0.0
      %7576 = vmatpush1.msra.mxu0 %v7518
      %7577 = vmatprep.subr.mxu0 0.0
      %7578 = vmatpush1.msra.mxu0 %v7519
      %7579 = vmatprep.subr.mxu0 0.0
      %7580 = vmatpush1.msra.mxu0 %v7520
      %7581 = vmatprep.subr.mxu0 0.0
      %7582 = vmatpush1.msra.mxu0 %v7521
      %7583 = vmatprep.subr.mxu0 0.0
      %7584 = vmatpush1.msra.mxu0 %v7522
      %7585 = vmatprep.subr.mxu0 0.0
      %7586 = vmatpush1.msra.mxu0 %v7523
      %7587 = vmatprep.subr.mxu0 0.0
      %7588 = vmatpush1.msra.mxu0 %v7524
      %7589 = vmatprep.subr.mxu0 0.0
      %7590 = vmatpush1.msra.mxu0 0.0
      %7591 = vmatprep.subr.mxu0 0.0
      %7592 = vmatpush1.msra.mxu0 0.0
      %7593 = vmatprep.subr.mxu0 0.0
      %7594 = vmatpush1.msra.mxu0 0.0
      %7595 = vmatprep.subr.mxu0 0.0
      %7596 = vmatpush1.msra.mxu0 0.0
      %7597 = vmatprep.subr.mxu0 0.0
      %7598 = vmatpush1.msra.mxu0 0.0
      %7599 = vmatprep.subr.mxu0 0.0
      %7600 = vmatpush1.msra.mxu0 0.0
      %7601 = vmatprep.subr.mxu0 0.0
      %7602 = vmatpush1.msra.mxu0 0.0
      %7603 = vmatprep.subr.mxu0 0.0
      %7604 = vmatpush1.msra.mxu0 0.0
      %7605 = vmatprep.subr.mxu0 0.0
      %7606 = vmatpush1.msra.mxu0 0.0
      %7607 = vmatprep.subr.mxu0 0.0
      %7608 = vmatpush1.msra.mxu0 0.0
      %7609 = vmatprep.subr.mxu0 0.0
      %7610 = vmatpush1.msra.mxu0 0.0
      %7611 = vmatprep.subr.mxu0 0.0
      %7612 = vmatpush1.msra.mxu0 0.0
      %7613 = vmatprep.subr.mxu0 0.0
      %7614 = vmatpush1.msra.mxu0 0.0
      %7615 = vmatprep.subr.mxu0 0.0
      %7616 = vmatpush1.msra.mxu0 0.0
      %7617 = vmatprep.subr.mxu0 0.0
      %7618 = vmatpush1.msra.mxu0 0.0
      %7619 = vmatprep.subr.mxu0 0.0
      %7620 = vmatpush1.msra.mxu0 0.0
      %7621 = vmatprep.subr.mxu0 0.0
      %7622 = vmatpush1.msra.mxu0 0.0
      %7623 = vmatprep.subr.mxu0 0.0
      %7624 = vmatpush1.msra.mxu0 0.0
      %7625 = vmatprep.subr.mxu0 0.0
      %7626 = vmatpush1.msra.mxu0 0.0
      %7627 = vmatprep.subr.mxu0 0.0
      %7628 = vmatpush1.msra.mxu0 0.0
      %7629 = vmatprep.subr.mxu0 0.0
      %7630 = vmatpush1.msra.mxu0 0.0
      %7631 = vmatprep.subr.mxu0 0.0
      %7632 = vmatpush1.msra.mxu0 0.0
      %7633 = vmatprep.subr.mxu0 0.0
      %7634 = vmatpush1.msra.mxu0 0.0
      %7635 = vmatprep.subr.mxu0 0.0
      %7636 = vmatpush1.msra.mxu0 0.0
      %7637 = vmatprep.mubr.f32.mxu0 0.0
      %7638 = vmatmul.mubr.f32.gmra.mrb[0].mxu0 %v7526
      %v7639 = vpop.f32.mrb[0].mxu0
      %v7640 = vadd.f32 0.0, %v7639
      %v7641 = vpop.f32.mrb[0].mxu0
      %7642 = vmatprep.mubr.f32.mxu0 0.0
      %7643 = vmatmul.mubr.f32.gmra.mrb[0].mxu0 %v7529
      %v7644 = vpop.f32.mrb[0].mxu0
      %v7645 = vadd.f32 0.0, %v7644
      %v7646 = vpop.f32.mrb[0].mxu0
      %7647 = vmatprep.mubr.f32.mxu0 0.0
      %7648 = vmatmul.mubr.f32.gmra.mrb[0].mxu0 %v7532
      %v7649 = vpop.f32.mrb[0].mxu0
      %v7650 = vadd.f32 0.0, %v7649
      %v7651 = vpop.f32.mrb[0].mxu0
      %7652 = vmatprep.mubr.f32.mxu0 0.0
      %7653 = vmatmul.mubr.f32.gmra.mrb[0].mxu0 %v7535
      %v7654 = vpop.f32.mrb[0].mxu0
      %v7655 = vadd.f32 0.0, %v7654
      %v7656 = vpop.f32.mrb[0].mxu0
      %7657 = vmatprep.mubr.f32.mxu0 0.0
      %7658 = vmatmul.mubr.f32.gmra.mrb[0].mxu0 %v7538
      %v7659 = vpop.f32.mrb[0].mxu0
      %v7660 = vadd.f32 0.0, %v7659
      %v7661 = vpop.f32.mrb[0].mxu0
      %7662 = vmatprep.mubr.f32.mxu0 0.0
      %7663 = vmatmul.mubr.f32.gmra.mrb[0].mxu0 %v7541
      %v7664 = vpop.f32.mrb[0].mxu0
      %v7665 = vadd.f32 0.0, %v7664
      %v7666 = vpop.f32.mrb[0].mxu0
      %7667 = vmatprep.mubr.f32.mxu0 0.0
      %7668 = vmatmul.mubr.f32.gmra.mrb[0].mxu0 %v7544
      %v7669 = vpop.f32.mrb[0].mxu0
      %v7670 = vadd.f32 0.0, %v7669
      %v7671 = vpop.f32.mrb[0].mxu0
      %7672 = vmatprep.mubr.f32.mxu0 0.0
      %7673 = vmatmul.mubr.f32.gmra.mrb[0].mxu0 %v7547
      %v7674 = vpop.f32.mrb[0].mxu0
      %v7675 = vadd.f32 0.0, %v7674
      %v7676 = vpop.f32.mrb[0].mxu0
      %7677 = vmatprep.mubr.f32.mxu0 0.0
      %7678 = vmatmul.mubr.f32.gmra.mrb[0].mxu0 %v7550
      %v7679 = vpop.f32.mrb[0].mxu0
      %v7680 = vadd.f32 0.0, %v7679
      %v7681 = vpop.f32.mrb[0].mxu0
      %7682 = vmatprep.mubr.f32.mxu0 0.0
      %7683 = vmatmul.mubr.f32.gmra.mrb[0].mxu0 %v7553
      %v7684 = vpop.f32.mrb[0].mxu0
      %v7685 = vadd.f32 0.0, %v7684
      %v7686 = vpop.f32.mrb[0].mxu0
      %7687 = vmatprep.mubr.f32.mxu0 0.0
      %7688 = vmatmul.mubr.f32.gmra.mrb[0].mxu0 %v7556
      %v7689 = vpop.f32.mrb[0].mxu0
      %v7690 = vadd.f32 0.0, %v7689
      %v7691 = vpop.f32.mrb[0].mxu0
      %7692 = vmatprep.mubr.f32.mxu0 0.0
      %7693 = vmatmul.mubr.f32.gmra.mrb[0].mxu0 %v7559
      %v7694 = vpop.f32.mrb[0].mxu0
      %v7695 = vadd.f32 0.0, %v7694
      %v7696 = vpop.f32.mrb[0].mxu0
      %7697 = vmatprep.mubr.f32.mxu0 0.0
      %7698 = vmatmul.mubr.f32.gmra.mrb[0].mxu0 %v7562
      %v7699 = vpop.f32.mrb[0].mxu0
      %v7700 = vadd.f32 0.0, %v7699
      %v7701 = vpop.f32.mrb[0].mxu0
      %7702 = vmatprep.mubr.f32.mxu0 0.0
      %7703 = vmatmul.mubr.f32.gmra.mrb[0].mxu0 %v7565
      %v7704 = vpop.f32.mrb[0].mxu0
      %v7705 = vadd.f32 0.0, %v7704
      %v7706 = vpop.f32.mrb[0].mxu0
      %7707 = vmatprep.mubr.f32.mxu0 0.0
      %7708 = vmatmul.mubr.f32.gmra.mrb[0].mxu0 %v7568
      %v7709 = vpop.f32.mrb[0].mxu0
      %v7710 = vadd.f32 0.0, %v7709
      %v7711 = vpop.f32.mrb[0].mxu0
      %7712 = vmatprep.mubr.f32.mxu0 0.0
      %7713 = vmatmul.mubr.f32.gmra.mrb[0].mxu0 %v7571
      %v7714 = vpop.f32.mrb[0].mxu0
      %v7715 = vadd.f32 0.0, %v7714
      %v7716 = vpop.f32.mrb[0].mxu0
      %7717 = vdwg.mxu0
      %v7718 = vadd.f32 %v6859, %v7640
      %v7719 = vadd.f32 %v6860, %v7645
      %v7720 = vadd.f32 %v6861, %v7650
      %v7721 = vadd.f32 %v6862, %v7655
      %v7722 = vadd.f32 %v6863, %v7660
      %v7723 = vadd.f32 %v6864, %v7665
      %v7724 = vadd.f32 %v6865, %v7670
      %v7725 = vadd.f32 %v6866, %v7675
      %v7726 = vadd.f32 %v6867, %v7680
      %v7727 = vadd.f32 %v6868, %v7685
      %v7728 = vadd.f32 %v6869, %v7690
      %v7729 = vadd.f32 %v6870, %v7695
      %v7730 = vadd.f32 %v6871, %v7700
      %v7731 = vadd.f32 %v6872, %v7705
      %v7732 = vadd.f32 %v6873, %v7710
      %v7733 = vadd.f32 %v6874, %v7715
      %v7734 = vld [vmem:[%s3] sm:$0x1]
      %v7736 = vlaneseq
      %v7737 = vshrl.u32 %v7736, 7
      %v7738 = vsub.s32 0, %v7737
      %v7739 = vrot.slane %v7734, %v7738
      %v7741 = vadd.f32 %v7718, %v7739
      %v7742 = vadd.f32 %v7719, %v7739
      %v7743 = vadd.f32 %v7720, %v7739
      %v7744 = vadd.f32 %v7721, %v7739
      %v7745 = vadd.f32 %v7722, %v7739
      %v7746 = vadd.f32 %v7723, %v7739
      %v7747 = vadd.f32 %v7724, %v7739
      %v7748 = vadd.f32 %v7725, %v7739
      %v7749 = vadd.f32 %v7726, %v7739
      %v7750 = vadd.f32 %v7727, %v7739
      %v7751 = vadd.f32 %v7728, %v7739
      %v7752 = vadd.f32 %v7729, %v7739
      %v7753 = vadd.f32 %v7730, %v7739
      %v7754 = vadd.f32 %v7731, %v7739
      %v7755 = vadd.f32 %v7732, %v7739
      %v7756 = vadd.f32 %v7733, %v7739
      %7757 = vst.msk [vmem:[%s197] sm:$0xff] %vm262, %v7741
      %7758 = vst.msk [vmem:[%s197 + $0x8] sm:$0xff] %vm262, %v7742
      %7759 = vst.msk [vmem:[%s197 + $0x10] sm:$0xff] %vm262, %v7743
      %7760 = vst.msk [vmem:[%s197 + $0x18] sm:$0xff] %vm262, %v7744
      %7761 = vst.msk [vmem:[%s197 + $0x20] sm:$0xff] %vm262, %v7745
      %7762 = vst.msk [vmem:[%s197 + $0x28] sm:$0xff] %vm262, %v7746
      %7763 = vst.msk [vmem:[%s197 + $0x30] sm:$0xff] %vm262, %v7747
      %7764 = vst.msk [vmem:[%s197 + $0x38] sm:$0xff] %vm262, %v7748
      %7765 = vst.msk [vmem:[%s197 + $0x40] sm:$0xff] %vm262, %v7749
      %7766 = vst.msk [vmem:[%s197 + $0x48] sm:$0xff] %vm262, %v7750
      %7767 = vst.msk [vmem:[%s197 + $0x50] sm:$0xff] %vm262, %v7751
      %7768 = vst.msk [vmem:[%s197 + $0x58] sm:$0xff] %vm262, %v7752
      %7769 = vst.msk [vmem:[%s197 + $0x60] sm:$0xff] %vm262, %v7753
      %7770 = vst.msk [vmem:[%s197 + $0x68] sm:$0xff] %vm262, %v7754
      %7771 = vst.msk [vmem:[%s197 + $0x70] sm:$0xff] %vm262, %v7755
      %7772 = vst.msk [vmem:[%s197 + $0x78] sm:$0xff] %vm262, %v7756
      %p7773 = scmp.lt.s32.totalorder %s15, 1
      %s7774 = scalar_select %p7773, %s15, 1
      %s7775 = smul.addr %s7774, 16
      %s7776 = smul.addr %s7775, 8
      %s7777 = scalar_lea.vmem %s4, %s7776
      // Predicated region
      $region37: #{tpu_custom_call.1} parent=35 // pred_check
        %p7778 = pneg %p122
      $region38: #{tpu_custom_call.1} parent=35 // pred_check_branch
        %7780 = sbr.rel (%p7778) target = $region40
      $region39: #{tpu_custom_call.1} parent=35 // pred_region
        _
      $region40: #{tpu_custom_call.1} parent=35 // pred_fallthru
        _
    $region36: #{tpu_custom_call.1} parent=5 // pred_fallthru
      _
    %p7781 = scmp.le.s32.totalorder 2, %s10
    // Predicated region
    $region41: #{tpu_custom_call.1} parent=5 // pred_check
      %p7782 = pneg %p7781
    $region42: #{tpu_custom_call.1} parent=5 // pred_check_branch
      %7784 = sbr.rel (%p7782) target = $region44
    $region43: #{tpu_custom_call.1} parent=5 // pred_region
      %s7785 = ssub.s32 %s10, 2
      // Predicated region
      $region45: #{tpu_custom_call.1} parent=43 // pred_check
        %p7786 = pneg %p128
      $region46: #{tpu_custom_call.1} parent=43 // pred_check_branch
        %7788 = sbr.rel (%p7786) target = $region48
      $region47: #{tpu_custom_call.1} parent=43 // pred_region
        %p7789 = scmp.lt.s32.totalorder %s16, 1
        %s7790 = scalar_select %p7789, %s16, 1
        %s7791 = smul.addr %s7790, 16
        %s7792 = smul.addr %s7791, 8
        %s7793 = scalar_lea.vmem %s4, %s7792
      $region48: #{tpu_custom_call.1} parent=43 // pred_fallthru
        _
    $region44: #{tpu_custom_call.1} parent=5 // pred_fallthru
      _
  $region6: #{tpu_custom_call.1} parent=0 // loop_footer
    %s14 = sadd.s32 1, %s10
  $region7: #{tpu_custom_call.1} parent=0 // loop_footer_branch
    %9 = sbr.rel target = $region3
  $region8: #{tpu_custom_call.1} parent=0 // loop_exit
    _

</llo_original>
